<compile_context>
chip_gen: v6e
topology: v6e:2x2x1
jax: 0.10.0
libtpu: 0.0.40
codegen_flags: <defaults>
</compile_context>

<pallas_src>
import functools
import itertools

import jax
import jax.numpy as jnp
from jax.experimental import pallas as pl
from jax.experimental.pallas import tpu as pltpu

C_PAD = 128                                              # TPU lane width
NCLS_PAD = 8                                             # padded class rows (sublane tile)
_TAPS = tuple(itertools.product(range(3), range(3)))     # (dy, dx), t = dy*3+dx
_BN_EPS = 1e-5


# ---------------------------------------------------------------------------
# Fused kernel: conv1+bn1+relu -> maxpool -> conv2+relu -> conv3+bn3+relu -> fc
# One grid step per sample; everything stays in VMEM / vregs.
# ---------------------------------------------------------------------------

def _convnet_kernel(x_ref, w_ref, sb_ref, wfc_ref, out_ref, xp2_ref, *,
                    spatial, num_classes):
    H = W = spatial
    Ho, Wo = H // 2, W // 2

    def conv3x3(get_win, layer, scale, shift, h, w):
        """'same' 3x3 conv as 9 accumulating K=128 tap matmuls + affine + ReLU.

        get_win(dy, dx) -> (h, w, C_PAD) bf16 window of the zero-padded input.
        """
        p = h * w
        acc = jnp.zeros((p, C_PAD), jnp.float32)
        for t, (dy, dx) in enumerate(_TAPS):
            win = get_win(dy, dx)                                  # (h, w, C)
            acc = acc + jnp.dot(win.reshape(p, C_PAD), w_ref[layer, t],
                                preferred_element_type=jnp.float32)
        return jnp.maximum(acc * scale + shift, 0.0)               # f32 epilogue

    # conv1 + bn1 + relu — halo windows read straight from the pre-padded input
    y1 = conv3x3(lambda dy, dx: x_ref[0, dy:dy + H, dx:dx + W, :],
                 0, sb_ref[0:1, :], sb_ref[1:2, :], H, W)          # (H*W, C)

    # fused 2x2 / stride-2 max pool on the conv1 epilogue output (in vregs)
    y1 = y1.reshape(Ho, 2, Wo, 2, C_PAD)
    pooled = jnp.max(jnp.max(y1, axis=3), axis=1)                  # (Ho, Wo, C)

    # zero-bordered padded scratch shared by conv2/conv3 (border zeroed once
    # per grid step; only the interior is rewritten between the two convs)
    xp2_ref[...] = jnp.zeros((Ho + 2, Wo + 2, C_PAD), jnp.bfloat16)
    xp2_ref[1:Ho + 1, 1:Wo + 1, :] = pooled.astype(jnp.bfloat16)
    win2 = lambda dy, dx: xp2_ref[dy:dy + Ho, dx:dx + Wo, :]

    # conv2 + relu (no BN: scale == 1, shift == bias)
    y2 = conv3x3(win2, 1, sb_ref[2:3, :], sb_ref[3:4, :], Ho, Wo)  # (Ho*Wo, C)
    xp2_ref[1:Ho + 1, 1:Wo + 1, :] = y2.reshape(Ho, Wo, C_PAD).astype(jnp.bfloat16)

    # conv3 + bn3 + relu
    y3 = conv3x3(win2, 2, sb_ref[4:5, :], sb_ref[5:6, :], Ho, Wo)  # (Ho*Wo, C)

    # fused FC (6 real classes): per-class multiply + reduce (VPU/XLU), which
    # avoids any lane-relayouting flatten of y3; bias lives in sb row 6.
    lane = jax.lax.broadcasted_iota(jnp.int32, (1, C_PAD), 1)
    logits = sb_ref[6:7, :]                                        # (1, C_PAD)
    for o in range(num_classes):                                   # static unroll
        prod = y3 * wfc_ref[o]                                     # (Ho*Wo, C) f32
        z = jnp.sum(jnp.sum(prod, axis=1, keepdims=True),
                    axis=0, keepdims=True)                         # (1, 1)
        logits = logits + jnp.where(lane == o, z, 0.0)
    out_ref[0] = logits                                            # lane-dense store


# ---------------------------------------------------------------------------
# Forward pass
# ---------------------------------------------------------------------------

@functools.partial(jax.jit, static_argnames=("num_classes",))
def convnet_forward(x_nchw, p, *, num_classes=6):
    N, Cin, H, W = x_nchw.shape
    assert H == W and H % 2 == 0, "even spatial size required (MaxPool2d(2))"
    Ho, Wo = H // 2, W // 2
    P2 = Ho * Wo

    # One-time prep on the tiny raw input (it has to leave HBM anyway):
    # NCHW -> NHWC, spatial halo pad (conv1 padding=1), channel pad to the lane
    # width, cast to bf16.  XLA fuses this into one cheap op.
    x = jnp.transpose(x_nchw, (0, 2, 3, 1))
    x = jnp.pad(x, ((0, 0), (1, 1), (1, 1), (0, C_PAD - Cin))).astype(jnp.bfloat16)

    out = pl.pallas_call(
        functools.partial(_convnet_kernel, spatial=H, num_classes=num_classes),
        out_shape=jax.ShapeDtypeStruct((N, 1, C_PAD), jnp.float32),
        grid_spec=pltpu.PrefetchScalarGridSpec(
            num_scalar_prefetch=0,
            grid=(N,),
            in_specs=[
                pl.BlockSpec((1, H + 2, W + 2, C_PAD), lambda n: (n, 0, 0, 0)),
                pl.BlockSpec((3, 9, C_PAD, C_PAD), lambda n: (0, 0, 0, 0)),
                pl.BlockSpec((8, C_PAD), lambda n: (0, 0)),
                pl.BlockSpec((NCLS_PAD, P2, C_PAD), lambda n: (0, 0, 0)),
            ],
            out_specs=pl.BlockSpec((1, 1, C_PAD), lambda n: (n, 0, 0)),
            # Small padded-activation scratch for conv2/conv3 (~26 KiB at 16x16).
            scratch_shapes=[pltpu.VMEM((Ho + 2, Wo + 2, C_PAD), jnp.bfloat16)],
        ),
        compiler_params=pltpu.CompilerParams(
            dimension_semantics=("parallel",)),          # both TCs on v7x
    )(x, p["w"], p["sb"], p["wfc"])

    return out.reshape(N, C_PAD)[:, :num_classes]        # drop class padding


# ---------------------------------------------------------------------------
# Parameter folding / packing (one-time, outside the hot path)
# ---------------------------------------------------------------------------

def _fold_bn(gamma, beta, mean, var, conv_bias):
    """Fold eval-mode BatchNorm (+ preceding conv bias) into scale/shift."""
    scale = gamma * jax.lax.rsqrt(var + _BN_EPS)
    shift = beta + (conv_bias - mean) * scale
    return scale, shift


def _pad_row(v):
    return jnp.pad(v.astype(jnp.float32), (0, C_PAD - v.shape[0]))


def _prep_conv_w(w):
    """(3, 3, Cin, Cout) -> (9, C_PAD, C_PAD) bf16, zero-padded per-tap layout."""
    kh, kw, cin, cout = w.shape
    wp = jnp.pad(w, ((0, 0), (0, 0), (0, C_PAD - cin), (0, C_PAD - cout)))
    return wp.reshape(kh * kw, C_PAD, C_PAD).astype(jnp.bfloat16)


def prepare_params(params, *, spatial, num_classes=6):
    """One-time packing of PyTorch-layout params into kernel-friendly tensors."""
    assert spatial % 2 == 0 and num_classes <= NCLS_PAD
    s1, b1 = _fold_bn(params["bn1_gamma"], params["bn1_beta"],
                      params["bn1_mean"], params["bn1_var"], params["conv1_b"])
    s2, b2 = jnp.ones_like(params["conv2_b"]), params["conv2_b"]
    s3, b3 = _fold_bn(params["bn3_gamma"], params["bn3_beta"],
                      params["bn3_mean"], params["bn3_var"], params["conv3_b"])

    # Pack all per-channel vectors (+ FC bias) into one (8, 128) f32 operand.
    sb = jnp.stack([_pad_row(s1), _pad_row(b1), _pad_row(s2), _pad_row(b2),
                    _pad_row(s3), _pad_row(b3), _pad_row(params["fc_b"]),
                    jnp.zeros((C_PAD,), jnp.float32)], axis=0)

    # Pack the three conv weights into one (3, 9, 128, 128) bf16 operand.
    w_all = jnp.stack([_prep_conv_w(params["conv1_w"]),
                       _prep_conv_w(params["conv2_w"]),
                       _prep_conv_w(params["conv3_w"])], axis=0)

    hw = spatial // 2
    c3 = params["conv3_w"].shape[-1]                     # 32
    # fc_w rows are in PyTorch's (C, H, W) flatten order; rearrange per class to
    # the kernel's (H*W, C_padded) feature layout (no runtime transpose).
    wfc = params["fc_w"].reshape(c3, hw, hw, num_classes)          # (c, h, w, o)
    wfc = jnp.transpose(wfc, (3, 1, 2, 0))                         # (o, h, w, c)
    wfc = jnp.pad(wfc, ((0, NCLS_PAD - num_classes), (0, 0), (0, 0),
                        (0, C_PAD - c3)))
    wfc = wfc.reshape(NCLS_PAD, hw * hw, C_PAD).astype(jnp.float32)

    return {"w": w_all, "sb": sb, "wfc": wfc}


# ---------------------------------------------------------------------------
# Deterministic parameter construction, pure-JAX reference, demo
# ---------------------------------------------------------------------------

def make_params(key, spatial, num_classes=6):
    ks = jax.random.split(key, 16)
    hw = spatial // 2                                    # after maxpool
    fc_in = 32 * hw * hw
    f32 = jnp.float32

    def nrm(k, shape, scale):
        return (scale * jax.random.normal(k, shape)).astype(f32)

    return {
        "conv1_w": nrm(ks[0], (3, 3, 3, 12), 0.2),
        "conv1_b": nrm(ks[1], (12,), 0.1),
        "bn1_gamma": (1.0 + 0.1 * jax.random.normal(ks[2], (12,))).astype(f32),
        "bn1_beta": nrm(ks[3], (12,), 0.1),
        "bn1_mean": nrm(ks[4], (12,), 0.1),
        "bn1_var": (1.0 + 0.1 * jax.random.uniform(ks[5], (12,))).astype(f32),
        "conv2_w": nrm(ks[6], (3, 3, 12, 20), 0.1),
        "conv2_b": nrm(ks[7], (20,), 0.1),
        "conv3_w": nrm(ks[8], (3, 3, 20, 32), 0.1),
        "conv3_b": nrm(ks[9], (32,), 0.1),
        "bn3_gamma": (1.0 + 0.1 * jax.random.normal(ks[10], (32,))).astype(f32),
        "bn3_beta": nrm(ks[11], (32,), 0.1),
        "bn3_mean": nrm(ks[12], (32,), 0.1),
        "bn3_var": (1.0 + 0.1 * jax.random.uniform(ks[13], (32,))).astype(f32),
        "fc_w": nrm(ks[14], (fc_in, num_classes), 0.02),
        "fc_b": nrm(ks[15], (num_classes,), 0.1),
    }


def reference_forward(x_nchw, params):
    """Pure-JAX (f32) reference mirroring the PyTorch module in eval mode."""
    def conv(x, w_hwio, b):
        y = jax.lax.conv_general_dilated(
            x, w_hwio, window_strides=(1, 1), padding=((1, 1), (1, 1)),
            dimension_numbers=("NCHW", "HWIO", "NCHW"))
        return y + b[None, :, None, None]

    def bn(x, g, be, m, v):
        s = (g * jax.lax.rsqrt(v + _BN_EPS))[None, :, None, None]
        return (x - m[None, :, None, None]) * s + be[None, :, None, None]

    y = jax.nn.relu(bn(conv(x_nchw, params["conv1_w"], params["conv1_b"]),
                       params["bn1_gamma"], params["bn1_beta"],
                       params["bn1_mean"], params["bn1_var"]))
    y = jax.lax.reduce_window(y, -jnp.inf, jax.lax.max,
                              (1, 1, 2, 2), (1, 1, 2, 2), "VALID")
    y = jax.nn.relu(conv(y, params["conv2_w"], params["conv2_b"]))
    y = jax.nn.relu(bn(conv(y, params["conv3_w"], params["conv3_b"]),
                       params["bn3_gamma"], params["bn3_beta"],
                       params["bn3_mean"], params["bn3_var"]))
    flat = y.reshape(y.shape[0], -1)                     # PyTorch (C,H,W) flatten
    return flat @ params["fc_w"] + params["fc_b"]


if __name__ == "__main__":
    key = jax.random.PRNGKey(0)
    k_x, k_p = jax.random.split(key)

    BATCH, CH, SPATIAL, NUM_CLASSES = 2, 3, 16, 6
    x = jax.random.normal(k_x, (BATCH, CH, SPATIAL, SPATIAL), dtype=jnp.float32)  # NCHW
    params = make_params(k_p, SPATIAL, NUM_CLASSES)
    prepped = prepare_params(params, spatial=SPATIAL, num_classes=NUM_CLASSES)

    out = convnet_forward(x, prepped, num_classes=NUM_CLASSES)
    out = jax.block_until_ready(out)
    assert out.shape == (BATCH, NUM_CLASSES), out.shape
    assert bool(jnp.all(jnp.isfinite(out)))

    # Loose-tolerance check vs. the f32 reference (kernel matmuls run in bf16).
    ref = jax.block_until_ready(reference_forward(x, params))
    assert bool(jnp.allclose(out, ref, rtol=1e-1, atol=1e-1)), (out, ref)

    print("KERNEL_OK")
</pallas_src>

<mosaic_0001>
module attributes {stable_mosaic.version = 11 : i64} {
  func.func @_convnet_kernel(%arg0: i32, %arg1: memref<1x18x18x128xbf16, #tpu.memory_space<vmem>>, %arg2: memref<3x9x128x128xbf16, #tpu.memory_space<vmem>>, %arg3: memref<8x128xf32, #tpu.memory_space<vmem>>, %arg4: memref<8x64x128xf32, #tpu.memory_space<vmem>>, %arg5: memref<1x1x128xf32, #tpu.memory_space<vmem>>, %arg6: memref<10x10x128xbf16, #tpu.memory_space<vmem>>) attributes {dimension_semantics = [#tpu.dimension_semantics<parallel>], iteration_bounds = array<i64: 2>, scalar_prefetch = 0 : i64, scratch_operands = 1 : i64, tpu.core_type = #tpu.core_type<tc>, window_params = [{transform_indices = @transform_0, window_bounds = array<i64: 1, 18, 18, 128>}, {pipeline_mode = #tpu.pipeline_mode<synchronous>, transform_indices = @transform_1, window_bounds = array<i64: 3, 9, 128, 128>}, {pipeline_mode = #tpu.pipeline_mode<synchronous>, transform_indices = @transform_2, window_bounds = array<i64: 8, 128>}, {pipeline_mode = #tpu.pipeline_mode<synchronous>, transform_indices = @transform_3, window_bounds = array<i64: 8, 64, 128>}, {transform_indices = @transform_4, window_bounds = array<i64: 1, 1, 128>}]} {
    %c0 = arith.constant 0 : index
    %c0_0 = arith.constant 0 : index
    %0 = vector.load %arg3[%c0, %c0_0] : memref<8x128xf32, #tpu.memory_space<vmem>>, vector<1x128xf32>
    %c1 = arith.constant 1 : index
    %c0_1 = arith.constant 0 : index
    %1 = vector.load %arg3[%c1, %c0_1] : memref<8x128xf32, #tpu.memory_space<vmem>>, vector<1x128xf32>
    %cst = arith.constant 0.000000e+00 : f32
    %2 = vector.broadcast %cst : f32 to vector<256x128xf32>
    %c0_2 = arith.constant 0 : index
    %c0_3 = arith.constant 0 : index
    %c0_4 = arith.constant 0 : index
    %c0_5 = arith.constant 0 : index
    %3 = vector.load %arg1[%c0_2, %c0_3, %c0_4, %c0_5] : memref<1x18x18x128xbf16, #tpu.memory_space<vmem>>, vector<1x16x16x128xbf16>
    %4 = vector.shape_cast %3 : vector<1x16x16x128xbf16> to vector<16x16x128xbf16>
    %5 = vector.shape_cast %4 : vector<16x16x128xbf16> to vector<256x128xbf16>
    %c0_6 = arith.constant 0 : index
    %c0_7 = arith.constant 0 : index
    %c0_8 = arith.constant 0 : index
    %c0_9 = arith.constant 0 : index
    %6 = vector.load %arg2[%c0_6, %c0_7, %c0_8, %c0_9] : memref<3x9x128x128xbf16, #tpu.memory_space<vmem>>, vector<1x1x128x128xbf16>
    %7 = vector.shape_cast %6 : vector<1x1x128x128xbf16> to vector<128x128xbf16>
    %cst_10 = arith.constant dense<0.000000e+00> : vector<256x128xf32>
    %8 = tpu.matmul %5, %7, %cst_10 {dimension_numbers = #tpu.dot_dimension_numbers<[1], [0], [0], [1], [0, 0, 1, 1], [], []>} : vector<256x128xbf16>, vector<128x128xbf16>, vector<256x128xf32> -> vector<256x128xf32>
    %9 = arith.addf %2, %8 : vector<256x128xf32>
    %c0_11 = arith.constant 0 : index
    %c0_12 = arith.constant 0 : index
    %c1_13 = arith.constant 1 : index
    %c0_14 = arith.constant 0 : index
    %10 = vector.load %arg1[%c0_11, %c0_12, %c1_13, %c0_14] : memref<1x18x18x128xbf16, #tpu.memory_space<vmem>>, vector<1x16x16x128xbf16>
    %11 = vector.shape_cast %10 : vector<1x16x16x128xbf16> to vector<16x16x128xbf16>
    %12 = vector.shape_cast %11 : vector<16x16x128xbf16> to vector<256x128xbf16>
    %c0_15 = arith.constant 0 : index
    %c1_16 = arith.constant 1 : index
    %c0_17 = arith.constant 0 : index
    %c0_18 = arith.constant 0 : index
    %13 = vector.load %arg2[%c0_15, %c1_16, %c0_17, %c0_18] : memref<3x9x128x128xbf16, #tpu.memory_space<vmem>>, vector<1x1x128x128xbf16>
    %14 = vector.shape_cast %13 : vector<1x1x128x128xbf16> to vector<128x128xbf16>
    %cst_19 = arith.constant dense<0.000000e+00> : vector<256x128xf32>
    %15 = tpu.matmul %12, %14, %cst_19 {dimension_numbers = #tpu.dot_dimension_numbers<[1], [0], [0], [1], [0, 0, 1, 1], [], []>} : vector<256x128xbf16>, vector<128x128xbf16>, vector<256x128xf32> -> vector<256x128xf32>
    %16 = arith.addf %9, %15 : vector<256x128xf32>
    %c0_20 = arith.constant 0 : index
    %c0_21 = arith.constant 0 : index
    %c2 = arith.constant 2 : index
    %c0_22 = arith.constant 0 : index
    %17 = vector.load %arg1[%c0_20, %c0_21, %c2, %c0_22] : memref<1x18x18x128xbf16, #tpu.memory_space<vmem>>, vector<1x16x16x128xbf16>
    %18 = vector.shape_cast %17 : vector<1x16x16x128xbf16> to vector<16x16x128xbf16>
    %19 = vector.shape_cast %18 : vector<16x16x128xbf16> to vector<256x128xbf16>
    %c0_23 = arith.constant 0 : index
    %c2_24 = arith.constant 2 : index
    %c0_25 = arith.constant 0 : index
    %c0_26 = arith.constant 0 : index
    %20 = vector.load %arg2[%c0_23, %c2_24, %c0_25, %c0_26] : memref<3x9x128x128xbf16, #tpu.memory_space<vmem>>, vector<1x1x128x128xbf16>
    %21 = vector.shape_cast %20 : vector<1x1x128x128xbf16> to vector<128x128xbf16>
    %cst_27 = arith.constant dense<0.000000e+00> : vector<256x128xf32>
    %22 = tpu.matmul %19, %21, %cst_27 {dimension_numbers = #tpu.dot_dimension_numbers<[1], [0], [0], [1], [0, 0, 1, 1], [], []>} : vector<256x128xbf16>, vector<128x128xbf16>, vector<256x128xf32> -> vector<256x128xf32>
    %23 = arith.addf %16, %22 : vector<256x128xf32>
    %c0_28 = arith.constant 0 : index
    %c1_29 = arith.constant 1 : index
    %c0_30 = arith.constant 0 : index
    %c0_31 = arith.constant 0 : index
    %24 = vector.load %arg1[%c0_28, %c1_29, %c0_30, %c0_31] : memref<1x18x18x128xbf16, #tpu.memory_space<vmem>>, vector<1x16x16x128xbf16>
    %25 = vector.shape_cast %24 : vector<1x16x16x128xbf16> to vector<16x16x128xbf16>
    %26 = vector.shape_cast %25 : vector<16x16x128xbf16> to vector<256x128xbf16>
    %c0_32 = arith.constant 0 : index
    %c3 = arith.constant 3 : index
    %c0_33 = arith.constant 0 : index
    %c0_34 = arith.constant 0 : index
    %27 = vector.load %arg2[%c0_32, %c3, %c0_33, %c0_34] : memref<3x9x128x128xbf16, #tpu.memory_space<vmem>>, vector<1x1x128x128xbf16>
    %28 = vector.shape_cast %27 : vector<1x1x128x128xbf16> to vector<128x128xbf16>
    %cst_35 = arith.constant dense<0.000000e+00> : vector<256x128xf32>
    %29 = tpu.matmul %26, %28, %cst_35 {dimension_numbers = #tpu.dot_dimension_numbers<[1], [0], [0], [1], [0, 0, 1, 1], [], []>} : vector<256x128xbf16>, vector<128x128xbf16>, vector<256x128xf32> -> vector<256x128xf32>
    %30 = arith.addf %23, %29 : vector<256x128xf32>
    %c0_36 = arith.constant 0 : index
    %c1_37 = arith.constant 1 : index
    %c1_38 = arith.constant 1 : index
    %c0_39 = arith.constant 0 : index
    %31 = vector.load %arg1[%c0_36, %c1_37, %c1_38, %c0_39] : memref<1x18x18x128xbf16, #tpu.memory_space<vmem>>, vector<1x16x16x128xbf16>
    %32 = vector.shape_cast %31 : vector<1x16x16x128xbf16> to vector<16x16x128xbf16>
    %33 = vector.shape_cast %32 : vector<16x16x128xbf16> to vector<256x128xbf16>
    %c0_40 = arith.constant 0 : index
    %c4 = arith.constant 4 : index
    %c0_41 = arith.constant 0 : index
    %c0_42 = arith.constant 0 : index
    %34 = vector.load %arg2[%c0_40, %c4, %c0_41, %c0_42] : memref<3x9x128x128xbf16, #tpu.memory_space<vmem>>, vector<1x1x128x128xbf16>
    %35 = vector.shape_cast %34 : vector<1x1x128x128xbf16> to vector<128x128xbf16>
    %cst_43 = arith.constant dense<0.000000e+00> : vector<256x128xf32>
    %36 = tpu.matmul %33, %35, %cst_43 {dimension_numbers = #tpu.dot_dimension_numbers<[1], [0], [0], [1], [0, 0, 1, 1], [], []>} : vector<256x128xbf16>, vector<128x128xbf16>, vector<256x128xf32> -> vector<256x128xf32>
    %37 = arith.addf %30, %36 : vector<256x128xf32>
    %c0_44 = arith.constant 0 : index
    %c1_45 = arith.constant 1 : index
    %c2_46 = arith.constant 2 : index
    %c0_47 = arith.constant 0 : index
    %38 = vector.load %arg1[%c0_44, %c1_45, %c2_46, %c0_47] : memref<1x18x18x128xbf16, #tpu.memory_space<vmem>>, vector<1x16x16x128xbf16>
    %39 = vector.shape_cast %38 : vector<1x16x16x128xbf16> to vector<16x16x128xbf16>
    %40 = vector.shape_cast %39 : vector<16x16x128xbf16> to vector<256x128xbf16>
    %c0_48 = arith.constant 0 : index
    %c5 = arith.constant 5 : index
    %c0_49 = arith.constant 0 : index
    %c0_50 = arith.constant 0 : index
    %41 = vector.load %arg2[%c0_48, %c5, %c0_49, %c0_50] : memref<3x9x128x128xbf16, #tpu.memory_space<vmem>>, vector<1x1x128x128xbf16>
    %42 = vector.shape_cast %41 : vector<1x1x128x128xbf16> to vector<128x128xbf16>
    %cst_51 = arith.constant dense<0.000000e+00> : vector<256x128xf32>
    %43 = tpu.matmul %40, %42, %cst_51 {dimension_numbers = #tpu.dot_dimension_numbers<[1], [0], [0], [1], [0, 0, 1, 1], [], []>} : vector<256x128xbf16>, vector<128x128xbf16>, vector<256x128xf32> -> vector<256x128xf32>
    %44 = arith.addf %37, %43 : vector<256x128xf32>
    %c0_52 = arith.constant 0 : index
    %c2_53 = arith.constant 2 : index
    %c0_54 = arith.constant 0 : index
    %c0_55 = arith.constant 0 : index
    %45 = vector.load %arg1[%c0_52, %c2_53, %c0_54, %c0_55] : memref<1x18x18x128xbf16, #tpu.memory_space<vmem>>, vector<1x16x16x128xbf16>
    %46 = vector.shape_cast %45 : vector<1x16x16x128xbf16> to vector<16x16x128xbf16>
    %47 = vector.shape_cast %46 : vector<16x16x128xbf16> to vector<256x128xbf16>
    %c0_56 = arith.constant 0 : index
    %c6 = arith.constant 6 : index
    %c0_57 = arith.constant 0 : index
    %c0_58 = arith.constant 0 : index
    %48 = vector.load %arg2[%c0_56, %c6, %c0_57, %c0_58] : memref<3x9x128x128xbf16, #tpu.memory_space<vmem>>, vector<1x1x128x128xbf16>
    %49 = vector.shape_cast %48 : vector<1x1x128x128xbf16> to vector<128x128xbf16>
    %cst_59 = arith.constant dense<0.000000e+00> : vector<256x128xf32>
    %50 = tpu.matmul %47, %49, %cst_59 {dimension_numbers = #tpu.dot_dimension_numbers<[1], [0], [0], [1], [0, 0, 1, 1], [], []>} : vector<256x128xbf16>, vector<128x128xbf16>, vector<256x128xf32> -> vector<256x128xf32>
    %51 = arith.addf %44, %50 : vector<256x128xf32>
    %c0_60 = arith.constant 0 : index
    %c2_61 = arith.constant 2 : index
    %c1_62 = arith.constant 1 : index
    %c0_63 = arith.constant 0 : index
    %52 = vector.load %arg1[%c0_60, %c2_61, %c1_62, %c0_63] : memref<1x18x18x128xbf16, #tpu.memory_space<vmem>>, vector<1x16x16x128xbf16>
    %53 = vector.shape_cast %52 : vector<1x16x16x128xbf16> to vector<16x16x128xbf16>
    %54 = vector.shape_cast %53 : vector<16x16x128xbf16> to vector<256x128xbf16>
    %c0_64 = arith.constant 0 : index
    %c7 = arith.constant 7 : index
    %c0_65 = arith.constant 0 : index
    %c0_66 = arith.constant 0 : index
    %55 = vector.load %arg2[%c0_64, %c7, %c0_65, %c0_66] : memref<3x9x128x128xbf16, #tpu.memory_space<vmem>>, vector<1x1x128x128xbf16>
    %56 = vector.shape_cast %55 : vector<1x1x128x128xbf16> to vector<128x128xbf16>
    %cst_67 = arith.constant dense<0.000000e+00> : vector<256x128xf32>
    %57 = tpu.matmul %54, %56, %cst_67 {dimension_numbers = #tpu.dot_dimension_numbers<[1], [0], [0], [1], [0, 0, 1, 1], [], []>} : vector<256x128xbf16>, vector<128x128xbf16>, vector<256x128xf32> -> vector<256x128xf32>
    %58 = arith.addf %51, %57 : vector<256x128xf32>
    %c0_68 = arith.constant 0 : index
    %c2_69 = arith.constant 2 : index
    %c2_70 = arith.constant 2 : index
    %c0_71 = arith.constant 0 : index
    %59 = vector.load %arg1[%c0_68, %c2_69, %c2_70, %c0_71] : memref<1x18x18x128xbf16, #tpu.memory_space<vmem>>, vector<1x16x16x128xbf16>
    %60 = vector.shape_cast %59 : vector<1x16x16x128xbf16> to vector<16x16x128xbf16>
    %61 = vector.shape_cast %60 : vector<16x16x128xbf16> to vector<256x128xbf16>
    %c0_72 = arith.constant 0 : index
    %c8 = arith.constant 8 : index
    %c0_73 = arith.constant 0 : index
    %c0_74 = arith.constant 0 : index
    %62 = vector.load %arg2[%c0_72, %c8, %c0_73, %c0_74] : memref<3x9x128x128xbf16, #tpu.memory_space<vmem>>, vector<1x1x128x128xbf16>
    %63 = vector.shape_cast %62 : vector<1x1x128x128xbf16> to vector<128x128xbf16>
    %cst_75 = arith.constant dense<0.000000e+00> : vector<256x128xf32>
    %64 = tpu.matmul %61, %63, %cst_75 {dimension_numbers = #tpu.dot_dimension_numbers<[1], [0], [0], [1], [0, 0, 1, 1], [], []>} : vector<256x128xbf16>, vector<128x128xbf16>, vector<256x128xf32> -> vector<256x128xf32>
    %65 = arith.addf %58, %64 : vector<256x128xf32>
    %66 = vector.broadcast %0 : vector<1x128xf32> to vector<256x128xf32>
    %67 = arith.mulf %65, %66 : vector<256x128xf32>
    %68 = vector.broadcast %1 : vector<1x128xf32> to vector<256x128xf32>
    %69 = arith.addf %67, %68 : vector<256x128xf32>
    %cst_76 = arith.constant 0.000000e+00 : f32
    %70 = vector.broadcast %cst_76 : f32 to vector<256x128xf32>
    %71 = arith.maximumf %69, %70 : vector<256x128xf32>
    %72 = vector.shape_cast %71 : vector<256x128xf32> to vector<8x2x8x2x128xf32>
    %cst_77 = arith.constant dense<0xFF800000> : vector<8x2x8x128xf32>
    %73 = vector.multi_reduction <maximumf>, %72, %cst_77 [3] : vector<8x2x8x2x128xf32> to vector<8x2x8x128xf32>
    %cst_78 = arith.constant dense<0xFF800000> : vector<8x8x128xf32>
    %74 = vector.multi_reduction <maximumf>, %73, %cst_78 [1] : vector<8x2x8x128xf32> to vector<8x8x128xf32>
    %cst_79 = arith.constant 0.000000e+00 : bf16
    %75 = vector.broadcast %cst_79 : bf16 to vector<10x10x128xbf16>
    %c0_80 = arith.constant 0 : index
    %c0_81 = arith.constant 0 : index
    %c0_82 = arith.constant 0 : index
    %76 = vector.load %arg6[%c0_80, %c0_81, %c0_82] : memref<10x10x128xbf16, #tpu.memory_space<vmem>>, vector<10x10x128xbf16>
    tpu.vector_store %arg6[%c0_80, %c0_81, %c0_82], %75 {strides = array<i32>} : memref<10x10x128xbf16, #tpu.memory_space<vmem>>, vector<10x10x128xbf16>,
    %77 = arith.truncf %74 : vector<8x8x128xf32> to vector<8x8x128xbf16>
    %c1_83 = arith.constant 1 : index
    %c1_84 = arith.constant 1 : index
    %c0_85 = arith.constant 0 : index
    %78 = vector.load %arg6[%c1_83, %c1_84, %c0_85] : memref<10x10x128xbf16, #tpu.memory_space<vmem>>, vector<8x8x128xbf16>
    tpu.vector_store %arg6[%c1_83, %c1_84, %c0_85], %77 {strides = array<i32>} : memref<10x10x128xbf16, #tpu.memory_space<vmem>>, vector<8x8x128xbf16>,
    %c2_86 = arith.constant 2 : index
    %c0_87 = arith.constant 0 : index
    %79 = vector.load %arg3[%c2_86, %c0_87] : memref<8x128xf32, #tpu.memory_space<vmem>>, vector<1x128xf32>
    %c3_88 = arith.constant 3 : index
    %c0_89 = arith.constant 0 : index
    %80 = vector.load %arg3[%c3_88, %c0_89] : memref<8x128xf32, #tpu.memory_space<vmem>>, vector<1x128xf32>
    %cst_90 = arith.constant 0.000000e+00 : f32
    %81 = vector.broadcast %cst_90 : f32 to vector<64x128xf32>
    %c0_91 = arith.constant 0 : index
    %c0_92 = arith.constant 0 : index
    %c0_93 = arith.constant 0 : index
    %82 = vector.load %arg6[%c0_91, %c0_92, %c0_93] : memref<10x10x128xbf16, #tpu.memory_space<vmem>>, vector<8x8x128xbf16>
    %83 = vector.shape_cast %82 : vector<8x8x128xbf16> to vector<64x128xbf16>
    %c1_94 = arith.constant 1 : index
    %c0_95 = arith.constant 0 : index
    %c0_96 = arith.constant 0 : index
    %c0_97 = arith.constant 0 : index
    %84 = vector.load %arg2[%c1_94, %c0_95, %c0_96, %c0_97] : memref<3x9x128x128xbf16, #tpu.memory_space<vmem>>, vector<1x1x128x128xbf16>
    %85 = vector.shape_cast %84 : vector<1x1x128x128xbf16> to vector<128x128xbf16>
    %cst_98 = arith.constant dense<0.000000e+00> : vector<64x128xf32>
    %86 = tpu.matmul %83, %85, %cst_98 {dimension_numbers = #tpu.dot_dimension_numbers<[1], [0], [0], [1], [0, 0, 1, 1], [], []>} : vector<64x128xbf16>, vector<128x128xbf16>, vector<64x128xf32> -> vector<64x128xf32>
    %87 = arith.addf %81, %86 : vector<64x128xf32>
    %c0_99 = arith.constant 0 : index
    %c1_100 = arith.constant 1 : index
    %c0_101 = arith.constant 0 : index
    %88 = vector.load %arg6[%c0_99, %c1_100, %c0_101] : memref<10x10x128xbf16, #tpu.memory_space<vmem>>, vector<8x8x128xbf16>
    %89 = vector.shape_cast %88 : vector<8x8x128xbf16> to vector<64x128xbf16>
    %c1_102 = arith.constant 1 : index
    %c1_103 = arith.constant 1 : index
    %c0_104 = arith.constant 0 : index
    %c0_105 = arith.constant 0 : index
    %90 = vector.load %arg2[%c1_102, %c1_103, %c0_104, %c0_105] : memref<3x9x128x128xbf16, #tpu.memory_space<vmem>>, vector<1x1x128x128xbf16>
    %91 = vector.shape_cast %90 : vector<1x1x128x128xbf16> to vector<128x128xbf16>
    %cst_106 = arith.constant dense<0.000000e+00> : vector<64x128xf32>
    %92 = tpu.matmul %89, %91, %cst_106 {dimension_numbers = #tpu.dot_dimension_numbers<[1], [0], [0], [1], [0, 0, 1, 1], [], []>} : vector<64x128xbf16>, vector<128x128xbf16>, vector<64x128xf32> -> vector<64x128xf32>
    %93 = arith.addf %87, %92 : vector<64x128xf32>
    %c0_107 = arith.constant 0 : index
    %c2_108 = arith.constant 2 : index
    %c0_109 = arith.constant 0 : index
    %94 = vector.load %arg6[%c0_107, %c2_108, %c0_109] : memref<10x10x128xbf16, #tpu.memory_space<vmem>>, vector<8x8x128xbf16>
    %95 = vector.shape_cast %94 : vector<8x8x128xbf16> to vector<64x128xbf16>
    %c1_110 = arith.constant 1 : index
    %c2_111 = arith.constant 2 : index
    %c0_112 = arith.constant 0 : index
    %c0_113 = arith.constant 0 : index
    %96 = vector.load %arg2[%c1_110, %c2_111, %c0_112, %c0_113] : memref<3x9x128x128xbf16, #tpu.memory_space<vmem>>, vector<1x1x128x128xbf16>
    %97 = vector.shape_cast %96 : vector<1x1x128x128xbf16> to vector<128x128xbf16>
    %cst_114 = arith.constant dense<0.000000e+00> : vector<64x128xf32>
    %98 = tpu.matmul %95, %97, %cst_114 {dimension_numbers = #tpu.dot_dimension_numbers<[1], [0], [0], [1], [0, 0, 1, 1], [], []>} : vector<64x128xbf16>, vector<128x128xbf16>, vector<64x128xf32> -> vector<64x128xf32>
    %99 = arith.addf %93, %98 : vector<64x128xf32>
    %c1_115 = arith.constant 1 : index
    %c0_116 = arith.constant 0 : index
    %c0_117 = arith.constant 0 : index
    %100 = vector.load %arg6[%c1_115, %c0_116, %c0_117] : memref<10x10x128xbf16, #tpu.memory_space<vmem>>, vector<8x8x128xbf16>
    %101 = vector.shape_cast %100 : vector<8x8x128xbf16> to vector<64x128xbf16>
    %c1_118 = arith.constant 1 : index
    %c3_119 = arith.constant 3 : index
    %c0_120 = arith.constant 0 : index
    %c0_121 = arith.constant 0 : index
    %102 = vector.load %arg2[%c1_118, %c3_119, %c0_120, %c0_121] : memref<3x9x128x128xbf16, #tpu.memory_space<vmem>>, vector<1x1x128x128xbf16>
    %103 = vector.shape_cast %102 : vector<1x1x128x128xbf16> to vector<128x128xbf16>
    %cst_122 = arith.constant dense<0.000000e+00> : vector<64x128xf32>
    %104 = tpu.matmul %101, %103, %cst_122 {dimension_numbers = #tpu.dot_dimension_numbers<[1], [0], [0], [1], [0, 0, 1, 1], [], []>} : vector<64x128xbf16>, vector<128x128xbf16>, vector<64x128xf32> -> vector<64x128xf32>
    %105 = arith.addf %99, %104 : vector<64x128xf32>
    %c1_123 = arith.constant 1 : index
    %c1_124 = arith.constant 1 : index
    %c0_125 = arith.constant 0 : index
    %106 = vector.load %arg6[%c1_123, %c1_124, %c0_125] : memref<10x10x128xbf16, #tpu.memory_space<vmem>>, vector<8x8x128xbf16>
    %107 = vector.shape_cast %106 : vector<8x8x128xbf16> to vector<64x128xbf16>
    %c1_126 = arith.constant 1 : index
    %c4_127 = arith.constant 4 : index
    %c0_128 = arith.constant 0 : index
    %c0_129 = arith.constant 0 : index
    %108 = vector.load %arg2[%c1_126, %c4_127, %c0_128, %c0_129] : memref<3x9x128x128xbf16, #tpu.memory_space<vmem>>, vector<1x1x128x128xbf16>
    %109 = vector.shape_cast %108 : vector<1x1x128x128xbf16> to vector<128x128xbf16>
    %cst_130 = arith.constant dense<0.000000e+00> : vector<64x128xf32>
    %110 = tpu.matmul %107, %109, %cst_130 {dimension_numbers = #tpu.dot_dimension_numbers<[1], [0], [0], [1], [0, 0, 1, 1], [], []>} : vector<64x128xbf16>, vector<128x128xbf16>, vector<64x128xf32> -> vector<64x128xf32>
    %111 = arith.addf %105, %110 : vector<64x128xf32>
    %c1_131 = arith.constant 1 : index
    %c2_132 = arith.constant 2 : index
    %c0_133 = arith.constant 0 : index
    %112 = vector.load %arg6[%c1_131, %c2_132, %c0_133] : memref<10x10x128xbf16, #tpu.memory_space<vmem>>, vector<8x8x128xbf16>
    %113 = vector.shape_cast %112 : vector<8x8x128xbf16> to vector<64x128xbf16>
    %c1_134 = arith.constant 1 : index
    %c5_135 = arith.constant 5 : index
    %c0_136 = arith.constant 0 : index
    %c0_137 = arith.constant 0 : index
    %114 = vector.load %arg2[%c1_134, %c5_135, %c0_136, %c0_137] : memref<3x9x128x128xbf16, #tpu.memory_space<vmem>>, vector<1x1x128x128xbf16>
    %115 = vector.shape_cast %114 : vector<1x1x128x128xbf16> to vector<128x128xbf16>
    %cst_138 = arith.constant dense<0.000000e+00> : vector<64x128xf32>
    %116 = tpu.matmul %113, %115, %cst_138 {dimension_numbers = #tpu.dot_dimension_numbers<[1], [0], [0], [1], [0, 0, 1, 1], [], []>} : vector<64x128xbf16>, vector<128x128xbf16>, vector<64x128xf32> -> vector<64x128xf32>
    %117 = arith.addf %111, %116 : vector<64x128xf32>
    %c2_139 = arith.constant 2 : index
    %c0_140 = arith.constant 0 : index
    %c0_141 = arith.constant 0 : index
    %118 = vector.load %arg6[%c2_139, %c0_140, %c0_141] : memref<10x10x128xbf16, #tpu.memory_space<vmem>>, vector<8x8x128xbf16>
    %119 = vector.shape_cast %118 : vector<8x8x128xbf16> to vector<64x128xbf16>
    %c1_142 = arith.constant 1 : index
    %c6_143 = arith.constant 6 : index
    %c0_144 = arith.constant 0 : index
    %c0_145 = arith.constant 0 : index
    %120 = vector.load %arg2[%c1_142, %c6_143, %c0_144, %c0_145] : memref<3x9x128x128xbf16, #tpu.memory_space<vmem>>, vector<1x1x128x128xbf16>
    %121 = vector.shape_cast %120 : vector<1x1x128x128xbf16> to vector<128x128xbf16>
    %cst_146 = arith.constant dense<0.000000e+00> : vector<64x128xf32>
    %122 = tpu.matmul %119, %121, %cst_146 {dimension_numbers = #tpu.dot_dimension_numbers<[1], [0], [0], [1], [0, 0, 1, 1], [], []>} : vector<64x128xbf16>, vector<128x128xbf16>, vector<64x128xf32> -> vector<64x128xf32>
    %123 = arith.addf %117, %122 : vector<64x128xf32>
    %c2_147 = arith.constant 2 : index
    %c1_148 = arith.constant 1 : index
    %c0_149 = arith.constant 0 : index
    %124 = vector.load %arg6[%c2_147, %c1_148, %c0_149] : memref<10x10x128xbf16, #tpu.memory_space<vmem>>, vector<8x8x128xbf16>
    %125 = vector.shape_cast %124 : vector<8x8x128xbf16> to vector<64x128xbf16>
    %c1_150 = arith.constant 1 : index
    %c7_151 = arith.constant 7 : index
    %c0_152 = arith.constant 0 : index
    %c0_153 = arith.constant 0 : index
    %126 = vector.load %arg2[%c1_150, %c7_151, %c0_152, %c0_153] : memref<3x9x128x128xbf16, #tpu.memory_space<vmem>>, vector<1x1x128x128xbf16>
    %127 = vector.shape_cast %126 : vector<1x1x128x128xbf16> to vector<128x128xbf16>
    %cst_154 = arith.constant dense<0.000000e+00> : vector<64x128xf32>
    %128 = tpu.matmul %125, %127, %cst_154 {dimension_numbers = #tpu.dot_dimension_numbers<[1], [0], [0], [1], [0, 0, 1, 1], [], []>} : vector<64x128xbf16>, vector<128x128xbf16>, vector<64x128xf32> -> vector<64x128xf32>
    %129 = arith.addf %123, %128 : vector<64x128xf32>
    %c2_155 = arith.constant 2 : index
    %c2_156 = arith.constant 2 : index
    %c0_157 = arith.constant 0 : index
    %130 = vector.load %arg6[%c2_155, %c2_156, %c0_157] : memref<10x10x128xbf16, #tpu.memory_space<vmem>>, vector<8x8x128xbf16>
    %131 = vector.shape_cast %130 : vector<8x8x128xbf16> to vector<64x128xbf16>
    %c1_158 = arith.constant 1 : index
    %c8_159 = arith.constant 8 : index
    %c0_160 = arith.constant 0 : index
    %c0_161 = arith.constant 0 : index
    %132 = vector.load %arg2[%c1_158, %c8_159, %c0_160, %c0_161] : memref<3x9x128x128xbf16, #tpu.memory_space<vmem>>, vector<1x1x128x128xbf16>
    %133 = vector.shape_cast %132 : vector<1x1x128x128xbf16> to vector<128x128xbf16>
    %cst_162 = arith.constant dense<0.000000e+00> : vector<64x128xf32>
    %134 = tpu.matmul %131, %133, %cst_162 {dimension_numbers = #tpu.dot_dimension_numbers<[1], [0], [0], [1], [0, 0, 1, 1], [], []>} : vector<64x128xbf16>, vector<128x128xbf16>, vector<64x128xf32> -> vector<64x128xf32>
    %135 = arith.addf %129, %134 : vector<64x128xf32>
    %136 = vector.broadcast %79 : vector<1x128xf32> to vector<64x128xf32>
    %137 = arith.mulf %135, %136 : vector<64x128xf32>
    %138 = vector.broadcast %80 : vector<1x128xf32> to vector<64x128xf32>
    %139 = arith.addf %137, %138 : vector<64x128xf32>
    %cst_163 = arith.constant 0.000000e+00 : f32
    %140 = vector.broadcast %cst_163 : f32 to vector<64x128xf32>
    %141 = arith.maximumf %139, %140 : vector<64x128xf32>
    %142 = vector.shape_cast %141 : vector<64x128xf32> to vector<8x8x128xf32>
    %143 = arith.truncf %142 : vector<8x8x128xf32> to vector<8x8x128xbf16>
    %c1_164 = arith.constant 1 : index
    %c1_165 = arith.constant 1 : index
    %c0_166 = arith.constant 0 : index
    %144 = vector.load %arg6[%c1_164, %c1_165, %c0_166] : memref<10x10x128xbf16, #tpu.memory_space<vmem>>, vector<8x8x128xbf16>
    tpu.vector_store %arg6[%c1_164, %c1_165, %c0_166], %143 {strides = array<i32>} : memref<10x10x128xbf16, #tpu.memory_space<vmem>>, vector<8x8x128xbf16>,
    %c4_167 = arith.constant 4 : index
    %c0_168 = arith.constant 0 : index
    %145 = vector.load %arg3[%c4_167, %c0_168] : memref<8x128xf32, #tpu.memory_space<vmem>>, vector<1x128xf32>
    %c5_169 = arith.constant 5 : index
    %c0_170 = arith.constant 0 : index
    %146 = vector.load %arg3[%c5_169, %c0_170] : memref<8x128xf32, #tpu.memory_space<vmem>>, vector<1x128xf32>
    %cst_171 = arith.constant 0.000000e+00 : f32
    %147 = vector.broadcast %cst_171 : f32 to vector<64x128xf32>
    %c0_172 = arith.constant 0 : index
    %c0_173 = arith.constant 0 : index
    %c0_174 = arith.constant 0 : index
    %148 = vector.load %arg6[%c0_172, %c0_173, %c0_174] : memref<10x10x128xbf16, #tpu.memory_space<vmem>>, vector<8x8x128xbf16>
    %149 = vector.shape_cast %148 : vector<8x8x128xbf16> to vector<64x128xbf16>
    %c2_175 = arith.constant 2 : index
    %c0_176 = arith.constant 0 : index
    %c0_177 = arith.constant 0 : index
    %c0_178 = arith.constant 0 : index
    %150 = vector.load %arg2[%c2_175, %c0_176, %c0_177, %c0_178] : memref<3x9x128x128xbf16, #tpu.memory_space<vmem>>, vector<1x1x128x128xbf16>
    %151 = vector.shape_cast %150 : vector<1x1x128x128xbf16> to vector<128x128xbf16>
    %cst_179 = arith.constant dense<0.000000e+00> : vector<64x128xf32>
    %152 = tpu.matmul %149, %151, %cst_179 {dimension_numbers = #tpu.dot_dimension_numbers<[1], [0], [0], [1], [0, 0, 1, 1], [], []>} : vector<64x128xbf16>, vector<128x128xbf16>, vector<64x128xf32> -> vector<64x128xf32>
    %153 = arith.addf %147, %152 : vector<64x128xf32>
    %c0_180 = arith.constant 0 : index
    %c1_181 = arith.constant 1 : index
    %c0_182 = arith.constant 0 : index
    %154 = vector.load %arg6[%c0_180, %c1_181, %c0_182] : memref<10x10x128xbf16, #tpu.memory_space<vmem>>, vector<8x8x128xbf16>
    %155 = vector.shape_cast %154 : vector<8x8x128xbf16> to vector<64x128xbf16>
    %c2_183 = arith.constant 2 : index
    %c1_184 = arith.constant 1 : index
    %c0_185 = arith.constant 0 : index
    %c0_186 = arith.constant 0 : index
    %156 = vector.load %arg2[%c2_183, %c1_184, %c0_185, %c0_186] : memref<3x9x128x128xbf16, #tpu.memory_space<vmem>>, vector<1x1x128x128xbf16>
    %157 = vector.shape_cast %156 : vector<1x1x128x128xbf16> to vector<128x128xbf16>
    %cst_187 = arith.constant dense<0.000000e+00> : vector<64x128xf32>
    %158 = tpu.matmul %155, %157, %cst_187 {dimension_numbers = #tpu.dot_dimension_numbers<[1], [0], [0], [1], [0, 0, 1, 1], [], []>} : vector<64x128xbf16>, vector<128x128xbf16>, vector<64x128xf32> -> vector<64x128xf32>
    %159 = arith.addf %153, %158 : vector<64x128xf32>
    %c0_188 = arith.constant 0 : index
    %c2_189 = arith.constant 2 : index
    %c0_190 = arith.constant 0 : index
    %160 = vector.load %arg6[%c0_188, %c2_189, %c0_190] : memref<10x10x128xbf16, #tpu.memory_space<vmem>>, vector<8x8x128xbf16>
    %161 = vector.shape_cast %160 : vector<8x8x128xbf16> to vector<64x128xbf16>
    %c2_191 = arith.constant 2 : index
    %c2_192 = arith.constant 2 : index
    %c0_193 = arith.constant 0 : index
    %c0_194 = arith.constant 0 : index
    %162 = vector.load %arg2[%c2_191, %c2_192, %c0_193, %c0_194] : memref<3x9x128x128xbf16, #tpu.memory_space<vmem>>, vector<1x1x128x128xbf16>
    %163 = vector.shape_cast %162 : vector<1x1x128x128xbf16> to vector<128x128xbf16>
    %cst_195 = arith.constant dense<0.000000e+00> : vector<64x128xf32>
    %164 = tpu.matmul %161, %163, %cst_195 {dimension_numbers = #tpu.dot_dimension_numbers<[1], [0], [0], [1], [0, 0, 1, 1], [], []>} : vector<64x128xbf16>, vector<128x128xbf16>, vector<64x128xf32> -> vector<64x128xf32>
    %165 = arith.addf %159, %164 : vector<64x128xf32>
    %c1_196 = arith.constant 1 : index
    %c0_197 = arith.constant 0 : index
    %c0_198 = arith.constant 0 : index
    %166 = vector.load %arg6[%c1_196, %c0_197, %c0_198] : memref<10x10x128xbf16, #tpu.memory_space<vmem>>, vector<8x8x128xbf16>
    %167 = vector.shape_cast %166 : vector<8x8x128xbf16> to vector<64x128xbf16>
    %c2_199 = arith.constant 2 : index
    %c3_200 = arith.constant 3 : index
    %c0_201 = arith.constant 0 : index
    %c0_202 = arith.constant 0 : index
    %168 = vector.load %arg2[%c2_199, %c3_200, %c0_201, %c0_202] : memref<3x9x128x128xbf16, #tpu.memory_space<vmem>>, vector<1x1x128x128xbf16>
    %169 = vector.shape_cast %168 : vector<1x1x128x128xbf16> to vector<128x128xbf16>
    %cst_203 = arith.constant dense<0.000000e+00> : vector<64x128xf32>
    %170 = tpu.matmul %167, %169, %cst_203 {dimension_numbers = #tpu.dot_dimension_numbers<[1], [0], [0], [1], [0, 0, 1, 1], [], []>} : vector<64x128xbf16>, vector<128x128xbf16>, vector<64x128xf32> -> vector<64x128xf32>
    %171 = arith.addf %165, %170 : vector<64x128xf32>
    %c1_204 = arith.constant 1 : index
    %c1_205 = arith.constant 1 : index
    %c0_206 = arith.constant 0 : index
    %172 = vector.load %arg6[%c1_204, %c1_205, %c0_206] : memref<10x10x128xbf16, #tpu.memory_space<vmem>>, vector<8x8x128xbf16>
    %173 = vector.shape_cast %172 : vector<8x8x128xbf16> to vector<64x128xbf16>
    %c2_207 = arith.constant 2 : index
    %c4_208 = arith.constant 4 : index
    %c0_209 = arith.constant 0 : index
    %c0_210 = arith.constant 0 : index
    %174 = vector.load %arg2[%c2_207, %c4_208, %c0_209, %c0_210] : memref<3x9x128x128xbf16, #tpu.memory_space<vmem>>, vector<1x1x128x128xbf16>
    %175 = vector.shape_cast %174 : vector<1x1x128x128xbf16> to vector<128x128xbf16>
    %cst_211 = arith.constant dense<0.000000e+00> : vector<64x128xf32>
    %176 = tpu.matmul %173, %175, %cst_211 {dimension_numbers = #tpu.dot_dimension_numbers<[1], [0], [0], [1], [0, 0, 1, 1], [], []>} : vector<64x128xbf16>, vector<128x128xbf16>, vector<64x128xf32> -> vector<64x128xf32>
    %177 = arith.addf %171, %176 : vector<64x128xf32>
    %c1_212 = arith.constant 1 : index
    %c2_213 = arith.constant 2 : index
    %c0_214 = arith.constant 0 : index
    %178 = vector.load %arg6[%c1_212, %c2_213, %c0_214] : memref<10x10x128xbf16, #tpu.memory_space<vmem>>, vector<8x8x128xbf16>
    %179 = vector.shape_cast %178 : vector<8x8x128xbf16> to vector<64x128xbf16>
    %c2_215 = arith.constant 2 : index
    %c5_216 = arith.constant 5 : index
    %c0_217 = arith.constant 0 : index
    %c0_218 = arith.constant 0 : index
    %180 = vector.load %arg2[%c2_215, %c5_216, %c0_217, %c0_218] : memref<3x9x128x128xbf16, #tpu.memory_space<vmem>>, vector<1x1x128x128xbf16>
    %181 = vector.shape_cast %180 : vector<1x1x128x128xbf16> to vector<128x128xbf16>
    %cst_219 = arith.constant dense<0.000000e+00> : vector<64x128xf32>
    %182 = tpu.matmul %179, %181, %cst_219 {dimension_numbers = #tpu.dot_dimension_numbers<[1], [0], [0], [1], [0, 0, 1, 1], [], []>} : vector<64x128xbf16>, vector<128x128xbf16>, vector<64x128xf32> -> vector<64x128xf32>
    %183 = arith.addf %177, %182 : vector<64x128xf32>
    %c2_220 = arith.constant 2 : index
    %c0_221 = arith.constant 0 : index
    %c0_222 = arith.constant 0 : index
    %184 = vector.load %arg6[%c2_220, %c0_221, %c0_222] : memref<10x10x128xbf16, #tpu.memory_space<vmem>>, vector<8x8x128xbf16>
    %185 = vector.shape_cast %184 : vector<8x8x128xbf16> to vector<64x128xbf16>
    %c2_223 = arith.constant 2 : index
    %c6_224 = arith.constant 6 : index
    %c0_225 = arith.constant 0 : index
    %c0_226 = arith.constant 0 : index
    %186 = vector.load %arg2[%c2_223, %c6_224, %c0_225, %c0_226] : memref<3x9x128x128xbf16, #tpu.memory_space<vmem>>, vector<1x1x128x128xbf16>
    %187 = vector.shape_cast %186 : vector<1x1x128x128xbf16> to vector<128x128xbf16>
    %cst_227 = arith.constant dense<0.000000e+00> : vector<64x128xf32>
    %188 = tpu.matmul %185, %187, %cst_227 {dimension_numbers = #tpu.dot_dimension_numbers<[1], [0], [0], [1], [0, 0, 1, 1], [], []>} : vector<64x128xbf16>, vector<128x128xbf16>, vector<64x128xf32> -> vector<64x128xf32>
    %189 = arith.addf %183, %188 : vector<64x128xf32>
    %c2_228 = arith.constant 2 : index
    %c1_229 = arith.constant 1 : index
    %c0_230 = arith.constant 0 : index
    %190 = vector.load %arg6[%c2_228, %c1_229, %c0_230] : memref<10x10x128xbf16, #tpu.memory_space<vmem>>, vector<8x8x128xbf16>
    %191 = vector.shape_cast %190 : vector<8x8x128xbf16> to vector<64x128xbf16>
    %c2_231 = arith.constant 2 : index
    %c7_232 = arith.constant 7 : index
    %c0_233 = arith.constant 0 : index
    %c0_234 = arith.constant 0 : index
    %192 = vector.load %arg2[%c2_231, %c7_232, %c0_233, %c0_234] : memref<3x9x128x128xbf16, #tpu.memory_space<vmem>>, vector<1x1x128x128xbf16>
    %193 = vector.shape_cast %192 : vector<1x1x128x128xbf16> to vector<128x128xbf16>
    %cst_235 = arith.constant dense<0.000000e+00> : vector<64x128xf32>
    %194 = tpu.matmul %191, %193, %cst_235 {dimension_numbers = #tpu.dot_dimension_numbers<[1], [0], [0], [1], [0, 0, 1, 1], [], []>} : vector<64x128xbf16>, vector<128x128xbf16>, vector<64x128xf32> -> vector<64x128xf32>
    %195 = arith.addf %189, %194 : vector<64x128xf32>
    %c2_236 = arith.constant 2 : index
    %c2_237 = arith.constant 2 : index
    %c0_238 = arith.constant 0 : index
    %196 = vector.load %arg6[%c2_236, %c2_237, %c0_238] : memref<10x10x128xbf16, #tpu.memory_space<vmem>>, vector<8x8x128xbf16>
    %197 = vector.shape_cast %196 : vector<8x8x128xbf16> to vector<64x128xbf16>
    %c2_239 = arith.constant 2 : index
    %c8_240 = arith.constant 8 : index
    %c0_241 = arith.constant 0 : index
    %c0_242 = arith.constant 0 : index
    %198 = vector.load %arg2[%c2_239, %c8_240, %c0_241, %c0_242] : memref<3x9x128x128xbf16, #tpu.memory_space<vmem>>, vector<1x1x128x128xbf16>
    %199 = vector.shape_cast %198 : vector<1x1x128x128xbf16> to vector<128x128xbf16>
    %cst_243 = arith.constant dense<0.000000e+00> : vector<64x128xf32>
    %200 = tpu.matmul %197, %199, %cst_243 {dimension_numbers = #tpu.dot_dimension_numbers<[1], [0], [0], [1], [0, 0, 1, 1], [], []>} : vector<64x128xbf16>, vector<128x128xbf16>, vector<64x128xf32> -> vector<64x128xf32>
    %201 = arith.addf %195, %200 : vector<64x128xf32>
    %202 = vector.broadcast %145 : vector<1x128xf32> to vector<64x128xf32>
    %203 = arith.mulf %201, %202 : vector<64x128xf32>
    %204 = vector.broadcast %146 : vector<1x128xf32> to vector<64x128xf32>
    %205 = arith.addf %203, %204 : vector<64x128xf32>
    %cst_244 = arith.constant 0.000000e+00 : f32
    %206 = vector.broadcast %cst_244 : f32 to vector<64x128xf32>
    %207 = arith.maximumf %205, %206 : vector<64x128xf32>
    %208 = tpu.iota {dimensions = array<i32: 1>} : vector<1x128xi32>
    %c6_245 = arith.constant 6 : index
    %c0_246 = arith.constant 0 : index
    %209 = vector.load %arg3[%c6_245, %c0_246] : memref<8x128xf32, #tpu.memory_space<vmem>>, vector<1x128xf32>
    %c0_247 = arith.constant 0 : index
    %c0_248 = arith.constant 0 : index
    %c0_249 = arith.constant 0 : index
    %210 = vector.load %arg4[%c0_247, %c0_248, %c0_249] : memref<8x64x128xf32, #tpu.memory_space<vmem>>, vector<1x64x128xf32>
    %211 = vector.shape_cast %210 : vector<1x64x128xf32> to vector<64x128xf32>
    %212 = arith.mulf %207, %211 : vector<64x128xf32>
    %cst_250 = arith.constant dense<0.000000e+00> : vector<64xf32>
    %213 = vector.multi_reduction <add>, %212, %cst_250 [1] : vector<64x128xf32> to vector<64xf32>
    %214 = vector.shape_cast %213 : vector<64xf32> to vector<64x1xf32>
    %cst_251 = arith.constant dense<0.000000e+00> : vector<1xf32>
    %215 = vector.multi_reduction <add>, %214, %cst_251 [0] : vector<64x1xf32> to vector<1xf32>
    %216 = vector.shape_cast %215 : vector<1xf32> to vector<1x1xf32>
    %c0_i32 = arith.constant 0 : i32
    %217 = vector.broadcast %c0_i32 : i32 to vector<1x128xi32>
    %218 = arith.cmpi eq, %208, %217 : vector<1x128xi32>
    %cst_252 = arith.constant 0.000000e+00 : f32
    %219 = vector.shape_cast %216 : vector<1x1xf32> to vector<1x1xf32>
    %220 = vector.broadcast %219 : vector<1x1xf32> to vector<1x128xf32>
    %221 = vector.broadcast %cst_252 : f32 to vector<1x128xf32>
    %222 = arith.select %218, %220, %221 : vector<1x128xi1>, vector<1x128xf32>
    %223 = arith.addf %209, %222 : vector<1x128xf32>
    %c1_253 = arith.constant 1 : index
    %c0_254 = arith.constant 0 : index
    %c0_255 = arith.constant 0 : index
    %224 = vector.load %arg4[%c1_253, %c0_254, %c0_255] : memref<8x64x128xf32, #tpu.memory_space<vmem>>, vector<1x64x128xf32>
    %225 = vector.shape_cast %224 : vector<1x64x128xf32> to vector<64x128xf32>
    %226 = arith.mulf %207, %225 : vector<64x128xf32>
    %cst_256 = arith.constant dense<0.000000e+00> : vector<64xf32>
    %227 = vector.multi_reduction <add>, %226, %cst_256 [1] : vector<64x128xf32> to vector<64xf32>
    %228 = vector.shape_cast %227 : vector<64xf32> to vector<64x1xf32>
    %cst_257 = arith.constant dense<0.000000e+00> : vector<1xf32>
    %229 = vector.multi_reduction <add>, %228, %cst_257 [0] : vector<64x1xf32> to vector<1xf32>
    %230 = vector.shape_cast %229 : vector<1xf32> to vector<1x1xf32>
    %c1_i32 = arith.constant 1 : i32
    %231 = vector.broadcast %c1_i32 : i32 to vector<1x128xi32>
    %232 = arith.cmpi eq, %208, %231 : vector<1x128xi32>
    %cst_258 = arith.constant 0.000000e+00 : f32
    %233 = vector.shape_cast %230 : vector<1x1xf32> to vector<1x1xf32>
    %234 = vector.broadcast %233 : vector<1x1xf32> to vector<1x128xf32>
    %235 = vector.broadcast %cst_258 : f32 to vector<1x128xf32>
    %236 = arith.select %232, %234, %235 : vector<1x128xi1>, vector<1x128xf32>
    %237 = arith.addf %223, %236 : vector<1x128xf32>
    %c2_259 = arith.constant 2 : index
    %c0_260 = arith.constant 0 : index
    %c0_261 = arith.constant 0 : index
    %238 = vector.load %arg4[%c2_259, %c0_260, %c0_261] : memref<8x64x128xf32, #tpu.memory_space<vmem>>, vector<1x64x128xf32>
    %239 = vector.shape_cast %238 : vector<1x64x128xf32> to vector<64x128xf32>
    %240 = arith.mulf %207, %239 : vector<64x128xf32>
    %cst_262 = arith.constant dense<0.000000e+00> : vector<64xf32>
    %241 = vector.multi_reduction <add>, %240, %cst_262 [1] : vector<64x128xf32> to vector<64xf32>
    %242 = vector.shape_cast %241 : vector<64xf32> to vector<64x1xf32>
    %cst_263 = arith.constant dense<0.000000e+00> : vector<1xf32>
    %243 = vector.multi_reduction <add>, %242, %cst_263 [0] : vector<64x1xf32> to vector<1xf32>
    %244 = vector.shape_cast %243 : vector<1xf32> to vector<1x1xf32>
    %c2_i32 = arith.constant 2 : i32
    %245 = vector.broadcast %c2_i32 : i32 to vector<1x128xi32>
    %246 = arith.cmpi eq, %208, %245 : vector<1x128xi32>
    %cst_264 = arith.constant 0.000000e+00 : f32
    %247 = vector.shape_cast %244 : vector<1x1xf32> to vector<1x1xf32>
    %248 = vector.broadcast %247 : vector<1x1xf32> to vector<1x128xf32>
    %249 = vector.broadcast %cst_264 : f32 to vector<1x128xf32>
    %250 = arith.select %246, %248, %249 : vector<1x128xi1>, vector<1x128xf32>
    %251 = arith.addf %237, %250 : vector<1x128xf32>
    %c3_265 = arith.constant 3 : index
    %c0_266 = arith.constant 0 : index
    %c0_267 = arith.constant 0 : index
    %252 = vector.load %arg4[%c3_265, %c0_266, %c0_267] : memref<8x64x128xf32, #tpu.memory_space<vmem>>, vector<1x64x128xf32>
    %253 = vector.shape_cast %252 : vector<1x64x128xf32> to vector<64x128xf32>
    %254 = arith.mulf %207, %253 : vector<64x128xf32>
    %cst_268 = arith.constant dense<0.000000e+00> : vector<64xf32>
    %255 = vector.multi_reduction <add>, %254, %cst_268 [1] : vector<64x128xf32> to vector<64xf32>
    %256 = vector.shape_cast %255 : vector<64xf32> to vector<64x1xf32>
    %cst_269 = arith.constant dense<0.000000e+00> : vector<1xf32>
    %257 = vector.multi_reduction <add>, %256, %cst_269 [0] : vector<64x1xf32> to vector<1xf32>
    %258 = vector.shape_cast %257 : vector<1xf32> to vector<1x1xf32>
    %c3_i32 = arith.constant 3 : i32
    %259 = vector.broadcast %c3_i32 : i32 to vector<1x128xi32>
    %260 = arith.cmpi eq, %208, %259 : vector<1x128xi32>
    %cst_270 = arith.constant 0.000000e+00 : f32
    %261 = vector.shape_cast %258 : vector<1x1xf32> to vector<1x1xf32>
    %262 = vector.broadcast %261 : vector<1x1xf32> to vector<1x128xf32>
    %263 = vector.broadcast %cst_270 : f32 to vector<1x128xf32>
    %264 = arith.select %260, %262, %263 : vector<1x128xi1>, vector<1x128xf32>
    %265 = arith.addf %251, %264 : vector<1x128xf32>
    %c4_271 = arith.constant 4 : index
    %c0_272 = arith.constant 0 : index
    %c0_273 = arith.constant 0 : index
    %266 = vector.load %arg4[%c4_271, %c0_272, %c0_273] : memref<8x64x128xf32, #tpu.memory_space<vmem>>, vector<1x64x128xf32>
    %267 = vector.shape_cast %266 : vector<1x64x128xf32> to vector<64x128xf32>
    %268 = arith.mulf %207, %267 : vector<64x128xf32>
    %cst_274 = arith.constant dense<0.000000e+00> : vector<64xf32>
    %269 = vector.multi_reduction <add>, %268, %cst_274 [1] : vector<64x128xf32> to vector<64xf32>
    %270 = vector.shape_cast %269 : vector<64xf32> to vector<64x1xf32>
    %cst_275 = arith.constant dense<0.000000e+00> : vector<1xf32>
    %271 = vector.multi_reduction <add>, %270, %cst_275 [0] : vector<64x1xf32> to vector<1xf32>
    %272 = vector.shape_cast %271 : vector<1xf32> to vector<1x1xf32>
    %c4_i32 = arith.constant 4 : i32
    %273 = vector.broadcast %c4_i32 : i32 to vector<1x128xi32>
    %274 = arith.cmpi eq, %208, %273 : vector<1x128xi32>
    %cst_276 = arith.constant 0.000000e+00 : f32
    %275 = vector.shape_cast %272 : vector<1x1xf32> to vector<1x1xf32>
    %276 = vector.broadcast %275 : vector<1x1xf32> to vector<1x128xf32>
    %277 = vector.broadcast %cst_276 : f32 to vector<1x128xf32>
    %278 = arith.select %274, %276, %277 : vector<1x128xi1>, vector<1x128xf32>
    %279 = arith.addf %265, %278 : vector<1x128xf32>
    %c5_277 = arith.constant 5 : index
    %c0_278 = arith.constant 0 : index
    %c0_279 = arith.constant 0 : index
    %280 = vector.load %arg4[%c5_277, %c0_278, %c0_279] : memref<8x64x128xf32, #tpu.memory_space<vmem>>, vector<1x64x128xf32>
    %281 = vector.shape_cast %280 : vector<1x64x128xf32> to vector<64x128xf32>
    %282 = arith.mulf %207, %281 : vector<64x128xf32>
    %cst_280 = arith.constant dense<0.000000e+00> : vector<64xf32>
    %283 = vector.multi_reduction <add>, %282, %cst_280 [1] : vector<64x128xf32> to vector<64xf32>
    %284 = vector.shape_cast %283 : vector<64xf32> to vector<64x1xf32>
    %cst_281 = arith.constant dense<0.000000e+00> : vector<1xf32>
    %285 = vector.multi_reduction <add>, %284, %cst_281 [0] : vector<64x1xf32> to vector<1xf32>
    %286 = vector.shape_cast %285 : vector<1xf32> to vector<1x1xf32>
    %c5_i32 = arith.constant 5 : i32
    %287 = vector.broadcast %c5_i32 : i32 to vector<1x128xi32>
    %288 = arith.cmpi eq, %208, %287 : vector<1x128xi32>
    %cst_282 = arith.constant 0.000000e+00 : f32
    %289 = vector.shape_cast %286 : vector<1x1xf32> to vector<1x1xf32>
    %290 = vector.broadcast %289 : vector<1x1xf32> to vector<1x128xf32>
    %291 = vector.broadcast %cst_282 : f32 to vector<1x128xf32>
    %292 = arith.select %288, %290, %291 : vector<1x128xi1>, vector<1x128xf32>
    %293 = arith.addf %279, %292 : vector<1x128xf32>
    %c0_283 = arith.constant 0 : index
    %c0_284 = arith.constant 0 : index
    %c0_285 = arith.constant 0 : index
    %294 = vector.load %arg5[%c0_283, %c0_284, %c0_285] : memref<1x1x128xf32, #tpu.memory_space<vmem>>, vector<1x1x128xf32>
    %295 = vector.shape_cast %294 : vector<1x1x128xf32> to vector<1x128xf32>
    %296 = vector.shape_cast %293 : vector<1x128xf32> to vector<1x1x128xf32>
    tpu.vector_store %arg5[%c0_283, %c0_284, %c0_285], %296 {strides = array<i32>} : memref<1x1x128xf32, #tpu.memory_space<vmem>>, vector<1x1x128xf32>,
    return
  }
  func.func @transform_0(%arg0: i32) -> (i32, i32, i32, i32) {
    %c0_i32 = arith.constant 0 : i32
    %c0_i32_0 = arith.constant 0 : i32
    %c0_i32_1 = arith.constant 0 : i32
    %c0_i32_2 = arith.constant 0 : i32
    return %arg0, %c0_i32, %c0_i32_0, %c0_i32_1 : i32, i32, i32, i32
  }
  func.func @transform_1(%arg0: i32) -> (i32, i32, i32, i32) {
    %c0_i32 = arith.constant 0 : i32
    %c0_i32_0 = arith.constant 0 : i32
    %c0_i32_1 = arith.constant 0 : i32
    %c0_i32_2 = arith.constant 0 : i32
    %c0_i32_3 = arith.constant 0 : i32
    return %c0_i32, %c0_i32_0, %c0_i32_1, %c0_i32_2 : i32, i32, i32, i32
  }
  func.func @transform_2(%arg0: i32) -> (i32, i32) {
    %c0_i32 = arith.constant 0 : i32
    %c0_i32_0 = arith.constant 0 : i32
    %c0_i32_1 = arith.constant 0 : i32
    return %c0_i32, %c0_i32_0 : i32, i32
  }
  func.func @transform_3(%arg0: i32) -> (i32, i32, i32) {
    %c0_i32 = arith.constant 0 : i32
    %c0_i32_0 = arith.constant 0 : i32
    %c0_i32_1 = arith.constant 0 : i32
    %c0_i32_2 = arith.constant 0 : i32
    return %c0_i32, %c0_i32_0, %c0_i32_1 : i32, i32, i32
  }
  func.func @transform_4(%arg0: i32) -> (i32, i32, i32) {
    %c0_i32 = arith.constant 0 : i32
    %c0_i32_0 = arith.constant 0 : i32
    %c0_i32_1 = arith.constant 0 : i32
    return %arg0, %c0_i32, %c0_i32_0 : i32, i32, i32
  }
}

</mosaic_0001>

<llo_original>
// kernel: convnet_forward.1
$region0: #{convnet_forward.1}
  #allocation0 [shape = 'u32[]', space=smem, size = 0x4, offset = 0x4, fixed_abs, tag = 'smem constant byte address 0x4 - core index']
  #allocation1 [shape = 'u32[144,128]{1,0:T(1,128)}', space=vmem, size = 0x12000, scoped, tag = 'internal scratch']
  #allocation2 [shape = 'bf16[10,10,128]{2,1,0:T(8,128)(2,1)}', space=vmem, size = 0xa000, scoped, tag = 'scratch operand']
  %s0 = inlined_call_operand.vmem [shape: bf16[2,18,18,128], index: 0, kind: input, shape index: {}]
  %s1 = inlined_call_operand.hbm [shape: bf16[3,9,128,128], index: 1, kind: input, shape index: {}]
  %s2 = inlined_call_operand.vmem [shape: f32[8,128], index: 2, kind: input, shape index: {}]
  %s3 = inlined_call_operand.vmem [shape: f32[8,64,128], index: 3, kind: input, shape index: {}]
  %s4 = inlined_call_operand.hbm [shape: f32[2,1,128], index: 4, kind: output, shape index: {}]
  %s5 = sld [smem:[#allocation0]]
  $region53: #{convnet_forward.1} parent=0
    _
  %s7 = ssub.s32 1, %s5
  %s8 = scalar_select 0, %s7, %s5
  $region1: #{convnet_forward.1} parent=0
    #allocation3 [shape = 'u8[884736]{0}', space=vmem, size = 0xd8000, scoped, tag = 'input window, operand 1, single buffered']
    #allocation4 [shape = 's32[2]{0}', space=sflag, size = 0x8, scoped, tag = 'scoped memory for convnet_forward.1']
    #allocation5 [shape = 's32[2]{0}', space=sflag, size = 0x8, scoped, tag = 'scoped memory for convnet_forward.1']
    #allocation6 [shape = 'u8[1024]{0}', space=vmem, size = 0x400, scoped, tag = 'output window, operand 0']
    %9 = vsyncpa [#allocation4], 0
    %10 = vsyncpa [#allocation5], 0
    %s11 = scalar_lea.sflag [#allocation5], 1
    %12 = vsyncpa %s11, 0
    loop: start=0, step=1, limit=4
    $region2: #{convnet_forward.1} parent=1 // loop_pre_header
      _
    $region3: #{convnet_forward.1} parent=1 // loop_header
      %s14 = sphi 0, %s18
      %p15 = scmp.ge.s32.totalorder %s14, 4
      %s24 = sphi 0, %s26
      %s27 = sphi 0, %s24
      %s28 = sphi 0, %s27
      %s44 = sphi 0, %s28
      %s48 = sphi 0, %s48
      %s50 = sphi 0, %s48
      %s51 = sphi 0, %s50
      %s65 = sphi 0, %s51
      %s69 = sphi 0, %s69
      %s71 = sphi 0, %s69
      %s72 = sphi 0, %s71
      %s86 = sphi 0, %s72
      %s90 = sphi 0, %s90
      %s92 = sphi 0, %s90
      %s93 = sphi 0, %s92
      %s107 = sphi 0, %s93
      %s113 = sphi 0, %s115
      %s116 = sphi 0, %s113
      %s117 = sphi 0, %s116
      %s133 = sphi 0, %s117
    $region4: #{convnet_forward.1} parent=1 // loop_header_branch
      %17 = sbr.rel (%p15) target = $region8
    $region5: #{convnet_forward.1} parent=1 // loop_body
      %s19 = ssub.s32 %s14, 1
      %s20 = ssub.s32 %s14, 2
      %s21 = sadd.s32 %s14, 1
      %s22 = ssub.s32 %s14, %s21
      %p23 = scmp.eq.s32.totalorder %s22, 0
      %s25 = sadd.s32 %s24, 1
      %s26 = scalar_select %p23, %s24, %s25
      %p29 = pneg %p23
      %p30 = scmp.eq.s32.totalorder %s14, 1
      %p31 = por %p29, %p30
      %p32 = scmp.ne.s32.totalorder %s24, %s27
      %p33 = scmp.eq.s32.totalorder %s14, 0
      %p34 = por %p32, %p33
      %p35 = scmp.ne.s32.totalorder %s24, %s27
      %p36 = scmp.eq.s32.totalorder %s19, 1
      %p37 = por %p35, %p36
      %p38 = scmp.ne.s32.totalorder %s27, %s28
      %p39 = scmp.eq.s32.totalorder %s19, 0
      %p40 = por %p38, %p39
      %p41 = scmp.ne.s32.totalorder %s27, %s28
      %p42 = scmp.eq.s32.totalorder %s20, 1
      %p43 = por %p41, %p42
      %p45 = scmp.ne.s32.totalorder %s28, %s44
      %p46 = scmp.eq.s32.totalorder %s20, 0
      %p47 = por %p45, %p46
      %s49 = sadd.s32 %s48, 1
      %p52 = scmp.eq.s32.totalorder %s14, 1
      %p53 = scmp.ne.s32.totalorder %s48, %s50
      %p54 = scmp.eq.s32.totalorder %s14, 0
      %p55 = por %p53, %p54
      %p56 = scmp.ne.s32.totalorder %s48, %s50
      %p57 = scmp.eq.s32.totalorder %s19, 1
      %p58 = por %p56, %p57
      %p59 = scmp.ne.s32.totalorder %s50, %s51
      %p60 = scmp.eq.s32.totalorder %s19, 0
      %p61 = por %p59, %p60
      %p62 = scmp.ne.s32.totalorder %s50, %s51
      %p63 = scmp.eq.s32.totalorder %s20, 1
      %p64 = por %p62, %p63
      %p66 = scmp.ne.s32.totalorder %s51, %s65
      %p67 = scmp.eq.s32.totalorder %s20, 0
      %p68 = por %p66, %p67
      %s70 = sadd.s32 %s69, 1
      %p73 = scmp.eq.s32.totalorder %s14, 1
      %p74 = scmp.ne.s32.totalorder %s69, %s71
      %p75 = scmp.eq.s32.totalorder %s14, 0
      %p76 = por %p74, %p75
      %p77 = scmp.ne.s32.totalorder %s69, %s71
      %p78 = scmp.eq.s32.totalorder %s19, 1
      %p79 = por %p77, %p78
      %p80 = scmp.ne.s32.totalorder %s71, %s72
      %p81 = scmp.eq.s32.totalorder %s19, 0
      %p82 = por %p80, %p81
      %p83 = scmp.ne.s32.totalorder %s71, %s72
      %p84 = scmp.eq.s32.totalorder %s20, 1
      %p85 = por %p83, %p84
      %p87 = scmp.ne.s32.totalorder %s72, %s86
      %p88 = scmp.eq.s32.totalorder %s20, 0
      %p89 = por %p87, %p88
      %s91 = sadd.s32 %s90, 1
      %p94 = scmp.eq.s32.totalorder %s14, 1
      %p95 = scmp.ne.s32.totalorder %s90, %s92
      %p96 = scmp.eq.s32.totalorder %s14, 0
      %p97 = por %p95, %p96
      %p98 = scmp.ne.s32.totalorder %s90, %s92
      %p99 = scmp.eq.s32.totalorder %s19, 1
      %p100 = por %p98, %p99
      %p101 = scmp.ne.s32.totalorder %s92, %s93
      %p102 = scmp.eq.s32.totalorder %s19, 0
      %p103 = por %p101, %p102
      %p104 = scmp.ne.s32.totalorder %s92, %s93
      %p105 = scmp.eq.s32.totalorder %s20, 1
      %p106 = por %p104, %p105
      %p108 = scmp.ne.s32.totalorder %s93, %s107
      %p109 = scmp.eq.s32.totalorder %s20, 0
      %p110 = por %p108, %p109
      %s111 = ssub.s32 %s14, %s21
      %p112 = scmp.eq.s32.totalorder %s111, 0
      %s114 = sadd.s32 %s113, 1
      %s115 = scalar_select %p112, %s113, %s114
      %p118 = pneg %p112
      %p119 = scmp.eq.s32.totalorder %s14, 1
      %p120 = por %p118, %p119
      %p121 = scmp.ne.s32.totalorder %s113, %s116
      %p122 = scmp.eq.s32.totalorder %s14, 0
      %p123 = por %p121, %p122
      %p124 = scmp.ne.s32.totalorder %s113, %s116
      %p125 = scmp.eq.s32.totalorder %s19, 1
      %p126 = por %p124, %p125
      %p127 = scmp.ne.s32.totalorder %s116, %s117
      %p128 = scmp.eq.s32.totalorder %s19, 0
      %p129 = por %p127, %p128
      %p130 = scmp.ne.s32.totalorder %s116, %s117
      %p131 = scmp.eq.s32.totalorder %s20, 1
      %p132 = por %p130, %p131
      %p134 = scmp.ne.s32.totalorder %s117, %s133
      %p135 = scmp.eq.s32.totalorder %s20, 0
      %p136 = por %p134, %p135
      %p137 = scmp.le.s32.totalorder 1, %s14
      %p138 = scmp.lt.s32.totalorder %s14, 3
      %p139 = pnand %p137, %p138
      %p140 = pneg %p139
      // Predicated region
      $region9: #{convnet_forward.1} parent=5 // pred_check
        _
      $region10: #{convnet_forward.1} parent=5 // pred_check_branch
        %142 = sbr.rel (%p139) target = $region12
      $region11: #{convnet_forward.1} parent=5 // pred_region
        %s143 = ssub.s32 %s14, 1
        // Predicated region
        $region13: #{convnet_forward.1} parent=11 // pred_check
          %p144 = pneg %p61
        $region14: #{convnet_forward.1} parent=11 // pred_check_branch
          %146 = sbr.rel (%p144) target = $region16
        $region15: #{convnet_forward.1} parent=11 // pred_region
          %s148 = ssub.s32 27648, 27648
          %149 = vsyncadd [#allocation4], %s148
          %s150 = sshll.u32 [#allocation3], 4
          %s151 = int_to_ptr.vmem [resolvable:$true] %s150
          %156 = dma.hbm_to_vmem [thread:$0]  %s1, 27648, %s151, [#allocation4], 64, 64, 4
        $region16: #{convnet_forward.1} parent=11 // pred_fallthru
          _
        // Predicated region
        $region17: #{convnet_forward.1} parent=11 // pred_check
          %p157 = pneg %p82
        $region18: #{convnet_forward.1} parent=11 // pred_check_branch
          %159 = sbr.rel (%p157) target = $region20
        $region19: #{convnet_forward.1} parent=11 // pred_region
          _
        $region20: #{convnet_forward.1} parent=11 // pred_fallthru
          _
        // Predicated region
        $region21: #{convnet_forward.1} parent=11 // pred_check
          %p160 = pneg %p103
        $region22: #{convnet_forward.1} parent=11 // pred_check_branch
          %162 = sbr.rel (%p160) target = $region24
        $region23: #{convnet_forward.1} parent=11 // pred_region
          _
        $region24: #{convnet_forward.1} parent=11 // pred_fallthru
          _
      $region12: #{convnet_forward.1} parent=5 // pred_fallthru
        _
      %p163 = scmp.lt.s32.totalorder %s14, 2
      // Predicated region
      $region25: #{convnet_forward.1} parent=5 // pred_check
        %p164 = pneg %p163
      $region26: #{convnet_forward.1} parent=5 // pred_check_branch
        %166 = sbr.rel (%p164) target = $region28
      $region27: #{convnet_forward.1} parent=5 // pred_region
        // Predicated region
        $region29: #{convnet_forward.1} parent=27 // pred_check
          %p167 = pneg %p34
        $region30: #{convnet_forward.1} parent=27 // pred_check_branch
          %169 = sbr.rel (%p167) target = $region32
        $region31: #{convnet_forward.1} parent=27 // pred_region
          %p170 = scmp.lt.s32.totalorder %s14, 1
          %s171 = scalar_select %p170, %s14, 1
          %s172 = smul.addr %s171, 54
          %s173 = smul.addr %s172, 4
          %s174 = scalar_lea.vmem %s0, %s173
        $region32: #{convnet_forward.1} parent=27 // pred_fallthru
          _
      $region28: #{convnet_forward.1} parent=5 // pred_fallthru
        _
      %p175 = scmp.le.s32.totalorder 1, %s14
      %p176 = scmp.lt.s32.totalorder %s14, 3
      %p177 = pnand %p175, %p176
      %p178 = pneg %p177
      // Predicated region
      $region33: #{convnet_forward.1} parent=5 // pred_check
        _
      $region34: #{convnet_forward.1} parent=5 // pred_check_branch
        %180 = sbr.rel (%p177) target = $region36
      $region35: #{convnet_forward.1} parent=5 // pred_region
        %s181 = ssub.s32 %s14, 1
        // Predicated region
        $region37: #{convnet_forward.1} parent=35 // pred_check
          %p182 = pneg %p61
        $region38: #{convnet_forward.1} parent=35 // pred_check_branch
          %184 = sbr.rel (%p182) target = $region40
        $region39: #{convnet_forward.1} parent=35 // pred_region
          %185 = dma.done [#allocation4], 27648
        $region40: #{convnet_forward.1} parent=35 // pred_fallthru
          _
        %p186 = scmp.lt.s32.totalorder %s19, 1
        %s187 = scalar_select %p186, %s19, 1
        %s188 = smul.addr %s187, 54
        %s189 = smul.addr %s188, 4
        %s190 = scalar_lea.vmem %s0, %s189
        %p191 = pneg %p40
        %p192 = pneg %p37
        %p193 = pneg %p61
        %p194 = pneg %p58
        %p195 = pneg %p82
        %p196 = pneg %p79
        %p197 = pneg %p103
        %p198 = pneg %p100
        %p199 = pneg %p129
        %p200 = pneg %p126
        %s201 = sand.u32 %s116, 1
        %s202 = scalar_lea.sflag [#allocation5], %s201
        %s203 = sand.u32 %s116, 1
        %s204 = scalar_lea.vmem [#allocation6], %s203
        %p205 = scmp.lt.s32.totalorder %s19, 1
        %s206 = scalar_select %p205, %s19, 1
        %s207 = smul.addr %s206, 54
        %s208 = smul.addr %s207, 4
        %s209 = scalar_lea.vmem %s0, %s208
        %v211 = vld [vmem:[%s2] sm:$0x1]
        %v212 = vld [vmem:[%s2 + $0x1] sm:$0x1]
        %v213 = vld [vmem:[%s209] sm:$0xf]
        %v214 = vld [vmem:[%s209 + $0x4] sm:$0xf]
        %v215 = vld [vmem:[%s209 + $0xc] sm:$0xf]
        %v216 = vld [vmem:[%s209 + $0x10] sm:$0xf]
        %v217 = vld [vmem:[%s209 + $0x18] sm:$0xf]
        %v218 = vld [vmem:[%s209 + $0x1c] sm:$0xf]
        %v219 = vld [vmem:[%s209 + $0x24] sm:$0xf]
        %v220 = vld [vmem:[%s209 + $0x28] sm:$0xf]
        %v221 = vld [vmem:[%s209 + $0x30] sm:$0xf]
        %v222 = vld [vmem:[%s209 + $0x34] sm:$0xf]
        %v223 = vld [vmem:[%s209 + $0x3c] sm:$0xf]
        %v224 = vld [vmem:[%s209 + $0x40] sm:$0xf]
        %v225 = vld [vmem:[%s209 + $0x48] sm:$0xf]
        %v226 = vld [vmem:[%s209 + $0x4c] sm:$0xf]
        %v227 = vld [vmem:[%s209 + $0x54] sm:$0xf]
        %v228 = vld [vmem:[%s209 + $0x58] sm:$0xf]
        %v229 = vld [vmem:[%s209 + $0x60] sm:$0xf]
        %v230 = vld [vmem:[%s209 + $0x64] sm:$0xf]
        %v231 = vld [vmem:[%s209 + $0x6c] sm:$0xf]
        %v232 = vld [vmem:[%s209 + $0x70] sm:$0xf]
        %v233 = vld [vmem:[%s209 + $0x78] sm:$0xf]
        %v234 = vld [vmem:[%s209 + $0x7c] sm:$0xf]
        %v235 = vld [vmem:[%s209 + $0x84] sm:$0xf]
        %v236 = vld [vmem:[%s209 + $0x88] sm:$0xf]
        %v237 = vld [vmem:[%s209 + $0x90] sm:$0xf]
        %v238 = vld [vmem:[%s209 + $0x94] sm:$0xf]
        %v239 = vld [vmem:[%s209 + $0x9c] sm:$0xf]
        %v240 = vld [vmem:[%s209 + $0xa0] sm:$0xf]
        %v241 = vld [vmem:[%s209 + $0xa8] sm:$0xf]
        %v242 = vld [vmem:[%s209 + $0xac] sm:$0xf]
        %v243 = vld [vmem:[%s209 + $0xb4] sm:$0xf]
        %v244 = vld [vmem:[%s209 + $0xb8] sm:$0xf]
        %v245 = vld [vmem:[#allocation3] sm:$0xf]
        %v246 = vld [vmem:[#allocation3 + $0x4] sm:$0xf]
        %v247 = vld [vmem:[#allocation3 + $0x8] sm:$0xf]
        %v248 = vld [vmem:[#allocation3 + $0xc] sm:$0xf]
        %v249 = vld [vmem:[#allocation3 + $0x10] sm:$0xf]
        %v250 = vld [vmem:[#allocation3 + $0x14] sm:$0xf]
        %v251 = vld [vmem:[#allocation3 + $0x18] sm:$0xf]
        %v252 = vld [vmem:[#allocation3 + $0x1c] sm:$0xf]
        %v253 = vld [vmem:[#allocation3 + $0x20] sm:$0xf]
        %v254 = vld [vmem:[#allocation3 + $0x24] sm:$0xf]
        %v255 = vld [vmem:[#allocation3 + $0x28] sm:$0xf]
        %v256 = vld [vmem:[#allocation3 + $0x2c] sm:$0xf]
        %v257 = vld [vmem:[#allocation3 + $0x30] sm:$0xf]
        %v258 = vld [vmem:[#allocation3 + $0x34] sm:$0xf]
        %v259 = vld [vmem:[#allocation3 + $0x38] sm:$0xf]
        %v260 = vld [vmem:[#allocation3 + $0x3c] sm:$0xf]
        %v261 = vld [vmem:[%s209 + $0x8] sm:$0x1]
        %v262 = vld [vmem:[%s209 + $0x14] sm:$0x1]
        %v263 = vld [vmem:[%s209 + $0x20] sm:$0x1]
        %v264 = vld [vmem:[%s209 + $0x2c] sm:$0x1]
        %v265 = vld [vmem:[%s209 + $0x38] sm:$0x1]
        %v266 = vld [vmem:[%s209 + $0x44] sm:$0x1]
        %v267 = vld [vmem:[%s209 + $0x50] sm:$0x1]
        %v268 = vld [vmem:[%s209 + $0x5c] sm:$0x1]
        %v269 = vld [vmem:[%s209 + $0x68] sm:$0x1]
        %v270 = vld [vmem:[%s209 + $0x74] sm:$0x1]
        %v271 = vld [vmem:[%s209 + $0x80] sm:$0x1]
        %v272 = vld [vmem:[%s209 + $0x8c] sm:$0x1]
        %v273 = vld [vmem:[%s209 + $0x98] sm:$0x1]
        %v274 = vld [vmem:[%s209 + $0xa4] sm:$0x1]
        %v275 = vld [vmem:[%s209 + $0xb0] sm:$0x1]
        %v276 = vld [vmem:[%s209 + $0xbc] sm:$0x1]
        %vm277 = vsmask.f32 3328
        %vm278 = vsmask.f32 7440
        %vm279 = vmor %vm277, %vm278
        %v281 = vshrl.u32 %v213, 16
        %v283 = vrot.slane %v281, 4
        %v284 = vshll.u32 %v213, 16
        %v286 = vrot.slane %v284, 5
        %v287 = vor.u32 %v283, %v286
        %v288 = vrot.slane %v287, 4
        %v290 = vshll.u32 %v214, 16
        %v292 = vrot.slane %v290, 5
        %v293 = vsel %vm279, %v288, %v292
        %v294 = vshrl.u32 %v214, 16
        %v296 = vrot.slane %v294, 4
        %v297 = vor.u32 %v296, %v292
        %v298 = vrot.slane %v297, 4
        %v300 = vshll.u32 %v261, 16
        %v302 = vrot.slane %v300, 5
        %v303 = vsel %vm279, %v298, %v302
        %v305 = vshrl.u32 %v215, 16
        %v307 = vrot.slane %v305, 4
        %v308 = vshll.u32 %v215, 16
        %v310 = vrot.slane %v308, 5
        %v311 = vor.u32 %v307, %v310
        %v312 = vrot.slane %v311, 4
        %v314 = vshll.u32 %v216, 16
        %v316 = vrot.slane %v314, 5
        %v317 = vsel %vm279, %v312, %v316
        %v318 = vshrl.u32 %v216, 16
        %v320 = vrot.slane %v318, 4
        %v321 = vor.u32 %v320, %v316
        %v322 = vrot.slane %v321, 4
        %v324 = vshll.u32 %v262, 16
        %v326 = vrot.slane %v324, 5
        %v327 = vsel %vm279, %v322, %v326
        %v329 = vshrl.u32 %v217, 16
        %v331 = vrot.slane %v329, 4
        %v332 = vshll.u32 %v217, 16
        %v334 = vrot.slane %v332, 5
        %v335 = vor.u32 %v331, %v334
        %v336 = vrot.slane %v335, 4
        %v338 = vshll.u32 %v218, 16
        %v340 = vrot.slane %v338, 5
        %v341 = vsel %vm279, %v336, %v340
        %v342 = vshrl.u32 %v218, 16
        %v344 = vrot.slane %v342, 4
        %v345 = vor.u32 %v344, %v340
        %v346 = vrot.slane %v345, 4
        %v348 = vshll.u32 %v263, 16
        %v350 = vrot.slane %v348, 5
        %v351 = vsel %vm279, %v346, %v350
        %v353 = vshrl.u32 %v219, 16
        %v355 = vrot.slane %v353, 4
        %v356 = vshll.u32 %v219, 16
        %v358 = vrot.slane %v356, 5
        %v359 = vor.u32 %v355, %v358
        %v360 = vrot.slane %v359, 4
        %v362 = vshll.u32 %v220, 16
        %v364 = vrot.slane %v362, 5
        %v365 = vsel %vm279, %v360, %v364
        %v366 = vshrl.u32 %v220, 16
        %v368 = vrot.slane %v366, 4
        %v369 = vor.u32 %v368, %v364
        %v370 = vrot.slane %v369, 4
        %v372 = vshll.u32 %v264, 16
        %v374 = vrot.slane %v372, 5
        %v375 = vsel %vm279, %v370, %v374
        %v377 = vshrl.u32 %v221, 16
        %v379 = vrot.slane %v377, 4
        %v380 = vshll.u32 %v221, 16
        %v382 = vrot.slane %v380, 5
        %v383 = vor.u32 %v379, %v382
        %v384 = vrot.slane %v383, 4
        %v386 = vshll.u32 %v222, 16
        %v388 = vrot.slane %v386, 5
        %v389 = vsel %vm279, %v384, %v388
        %v390 = vshrl.u32 %v222, 16
        %v392 = vrot.slane %v390, 4
        %v393 = vor.u32 %v392, %v388
        %v394 = vrot.slane %v393, 4
        %v396 = vshll.u32 %v265, 16
        %v398 = vrot.slane %v396, 5
        %v399 = vsel %vm279, %v394, %v398
        %v401 = vshrl.u32 %v223, 16
        %v403 = vrot.slane %v401, 4
        %v404 = vshll.u32 %v223, 16
        %v406 = vrot.slane %v404, 5
        %v407 = vor.u32 %v403, %v406
        %v408 = vrot.slane %v407, 4
        %v410 = vshll.u32 %v224, 16
        %v412 = vrot.slane %v410, 5
        %v413 = vsel %vm279, %v408, %v412
        %v414 = vshrl.u32 %v224, 16
        %v416 = vrot.slane %v414, 4
        %v417 = vor.u32 %v416, %v412
        %v418 = vrot.slane %v417, 4
        %v420 = vshll.u32 %v266, 16
        %v422 = vrot.slane %v420, 5
        %v423 = vsel %vm279, %v418, %v422
        %v425 = vshrl.u32 %v225, 16
        %v427 = vrot.slane %v425, 4
        %v428 = vshll.u32 %v225, 16
        %v430 = vrot.slane %v428, 5
        %v431 = vor.u32 %v427, %v430
        %v432 = vrot.slane %v431, 4
        %v434 = vshll.u32 %v226, 16
        %v436 = vrot.slane %v434, 5
        %v437 = vsel %vm279, %v432, %v436
        %v438 = vshrl.u32 %v226, 16
        %v440 = vrot.slane %v438, 4
        %v441 = vor.u32 %v440, %v436
        %v442 = vrot.slane %v441, 4
        %v444 = vshll.u32 %v267, 16
        %v446 = vrot.slane %v444, 5
        %v447 = vsel %vm279, %v442, %v446
        %v449 = vshrl.u32 %v227, 16
        %v451 = vrot.slane %v449, 4
        %v452 = vshll.u32 %v227, 16
        %v454 = vrot.slane %v452, 5
        %v455 = vor.u32 %v451, %v454
        %v456 = vrot.slane %v455, 4
        %v458 = vshll.u32 %v228, 16
        %v460 = vrot.slane %v458, 5
        %v461 = vsel %vm279, %v456, %v460
        %v462 = vshrl.u32 %v228, 16
        %v464 = vrot.slane %v462, 4
        %v465 = vor.u32 %v464, %v460
        %v466 = vrot.slane %v465, 4
        %v468 = vshll.u32 %v268, 16
        %v470 = vrot.slane %v468, 5
        %v471 = vsel %vm279, %v466, %v470
        %v473 = vshrl.u32 %v229, 16
        %v475 = vrot.slane %v473, 4
        %v476 = vshll.u32 %v229, 16
        %v478 = vrot.slane %v476, 5
        %v479 = vor.u32 %v475, %v478
        %v480 = vrot.slane %v479, 4
        %v482 = vshll.u32 %v230, 16
        %v484 = vrot.slane %v482, 5
        %v485 = vsel %vm279, %v480, %v484
        %v486 = vshrl.u32 %v230, 16
        %v488 = vrot.slane %v486, 4
        %v489 = vor.u32 %v488, %v484
        %v490 = vrot.slane %v489, 4
        %v492 = vshll.u32 %v269, 16
        %v494 = vrot.slane %v492, 5
        %v495 = vsel %vm279, %v490, %v494
        %v497 = vshrl.u32 %v231, 16
        %v499 = vrot.slane %v497, 4
        %v500 = vshll.u32 %v231, 16
        %v502 = vrot.slane %v500, 5
        %v503 = vor.u32 %v499, %v502
        %v504 = vrot.slane %v503, 4
        %v506 = vshll.u32 %v232, 16
        %v508 = vrot.slane %v506, 5
        %v509 = vsel %vm279, %v504, %v508
        %v510 = vshrl.u32 %v232, 16
        %v512 = vrot.slane %v510, 4
        %v513 = vor.u32 %v512, %v508
        %v514 = vrot.slane %v513, 4
        %v516 = vshll.u32 %v270, 16
        %v518 = vrot.slane %v516, 5
        %v519 = vsel %vm279, %v514, %v518
        %v521 = vshrl.u32 %v233, 16
        %v523 = vrot.slane %v521, 4
        %v524 = vshll.u32 %v233, 16
        %v526 = vrot.slane %v524, 5
        %v527 = vor.u32 %v523, %v526
        %v528 = vrot.slane %v527, 4
        %v530 = vshll.u32 %v234, 16
        %v532 = vrot.slane %v530, 5
        %v533 = vsel %vm279, %v528, %v532
        %v534 = vshrl.u32 %v234, 16
        %v536 = vrot.slane %v534, 4
        %v537 = vor.u32 %v536, %v532
        %v538 = vrot.slane %v537, 4
        %v540 = vshll.u32 %v271, 16
        %v542 = vrot.slane %v540, 5
        %v543 = vsel %vm279, %v538, %v542
        %v545 = vshrl.u32 %v235, 16
        %v547 = vrot.slane %v545, 4
        %v548 = vshll.u32 %v235, 16
        %v550 = vrot.slane %v548, 5
        %v551 = vor.u32 %v547, %v550
        %v552 = vrot.slane %v551, 4
        %v554 = vshll.u32 %v236, 16
        %v556 = vrot.slane %v554, 5
        %v557 = vsel %vm279, %v552, %v556
        %v558 = vshrl.u32 %v236, 16
        %v560 = vrot.slane %v558, 4
        %v561 = vor.u32 %v560, %v556
        %v562 = vrot.slane %v561, 4
        %v564 = vshll.u32 %v272, 16
        %v566 = vrot.slane %v564, 5
        %v567 = vsel %vm279, %v562, %v566
        %v569 = vshrl.u32 %v237, 16
        %v571 = vrot.slane %v569, 4
        %v572 = vshll.u32 %v237, 16
        %v574 = vrot.slane %v572, 5
        %v575 = vor.u32 %v571, %v574
        %v576 = vrot.slane %v575, 4
        %v578 = vshll.u32 %v238, 16
        %v580 = vrot.slane %v578, 5
        %v581 = vsel %vm279, %v576, %v580
        %v582 = vshrl.u32 %v238, 16
        %v584 = vrot.slane %v582, 4
        %v585 = vor.u32 %v584, %v580
        %v586 = vrot.slane %v585, 4
        %v588 = vshll.u32 %v273, 16
        %v590 = vrot.slane %v588, 5
        %v591 = vsel %vm279, %v586, %v590
        %v593 = vshrl.u32 %v239, 16
        %v595 = vrot.slane %v593, 4
        %v596 = vshll.u32 %v239, 16
        %v598 = vrot.slane %v596, 5
        %v599 = vor.u32 %v595, %v598
        %v600 = vrot.slane %v599, 4
        %v602 = vshll.u32 %v240, 16
        %v604 = vrot.slane %v602, 5
        %v605 = vsel %vm279, %v600, %v604
        %v606 = vshrl.u32 %v240, 16
        %v608 = vrot.slane %v606, 4
        %v609 = vor.u32 %v608, %v604
        %v610 = vrot.slane %v609, 4
        %v612 = vshll.u32 %v274, 16
        %v614 = vrot.slane %v612, 5
        %v615 = vsel %vm279, %v610, %v614
        %v617 = vshrl.u32 %v241, 16
        %v619 = vrot.slane %v617, 4
        %v620 = vshll.u32 %v241, 16
        %v622 = vrot.slane %v620, 5
        %v623 = vor.u32 %v619, %v622
        %v624 = vrot.slane %v623, 4
        %v626 = vshll.u32 %v242, 16
        %v628 = vrot.slane %v626, 5
        %v629 = vsel %vm279, %v624, %v628
        %v630 = vshrl.u32 %v242, 16
        %v632 = vrot.slane %v630, 4
        %v633 = vor.u32 %v632, %v628
        %v634 = vrot.slane %v633, 4
        %v636 = vshll.u32 %v275, 16
        %v638 = vrot.slane %v636, 5
        %v639 = vsel %vm279, %v634, %v638
        %v641 = vshrl.u32 %v243, 16
        %v643 = vrot.slane %v641, 4
        %v644 = vshll.u32 %v243, 16
        %v646 = vrot.slane %v644, 5
        %v647 = vor.u32 %v643, %v646
        %v648 = vrot.slane %v647, 4
        %v650 = vshll.u32 %v244, 16
        %v652 = vrot.slane %v650, 5
        %v653 = vsel %vm279, %v648, %v652
        %v654 = vshrl.u32 %v244, 16
        %v656 = vrot.slane %v654, 4
        %v657 = vor.u32 %v656, %v652
        %v658 = vrot.slane %v657, 4
        %v660 = vshll.u32 %v276, 16
        %v662 = vrot.slane %v660, 5
        %v663 = vsel %vm279, %v658, %v662
        %s664 = scalar_lea.vmem [#allocation3], 64
        %v665 = vld [vmem:[%s664] sm:$0xf]
        %v666 = vld [vmem:[%s664 + $0x4] sm:$0xf]
        %v667 = vld [vmem:[%s664 + $0x8] sm:$0xf]
        %v668 = vld [vmem:[%s664 + $0xc] sm:$0xf]
        %v669 = vld [vmem:[%s664 + $0x10] sm:$0xf]
        %v670 = vld [vmem:[%s664 + $0x14] sm:$0xf]
        %v671 = vld [vmem:[%s664 + $0x18] sm:$0xf]
        %v672 = vld [vmem:[%s664 + $0x1c] sm:$0xf]
        %v673 = vld [vmem:[%s664 + $0x20] sm:$0xf]
        %v674 = vld [vmem:[%s664 + $0x24] sm:$0xf]
        %v675 = vld [vmem:[%s664 + $0x28] sm:$0xf]
        %v676 = vld [vmem:[%s664 + $0x2c] sm:$0xf]
        %v677 = vld [vmem:[%s664 + $0x30] sm:$0xf]
        %v678 = vld [vmem:[%s664 + $0x34] sm:$0xf]
        %v679 = vld [vmem:[%s664 + $0x38] sm:$0xf]
        %v680 = vld [vmem:[%s664 + $0x3c] sm:$0xf]
        %v681 = vunpack.c.l.b16 %v293
        %v682 = vunpack.c.l.b16 %v303
        %v683 = vunpack.c.l.b16 %v317
        %v684 = vunpack.c.l.b16 %v327
        %v685 = vunpack.c.l.b16 %v341
        %v686 = vunpack.c.l.b16 %v351
        %v687 = vunpack.c.l.b16 %v365
        %v688 = vunpack.c.l.b16 %v375
        %v689 = vunpack.c.l.b16 %v389
        %v690 = vunpack.c.l.b16 %v399
        %v691 = vunpack.c.l.b16 %v413
        %v692 = vunpack.c.l.b16 %v423
        %v693 = vunpack.c.l.b16 %v437
        %v694 = vunpack.c.l.b16 %v447
        %v695 = vunpack.c.l.b16 %v461
        %v696 = vunpack.c.l.b16 %v471
        %v697 = vunpack.c.l.b16 %v485
        %v698 = vunpack.c.l.b16 %v495
        %v699 = vunpack.c.l.b16 %v509
        %v700 = vunpack.c.l.b16 %v519
        %v701 = vunpack.c.l.b16 %v533
        %v702 = vunpack.c.l.b16 %v543
        %v703 = vunpack.c.l.b16 %v557
        %v704 = vunpack.c.l.b16 %v567
        %v705 = vunpack.c.l.b16 %v581
        %v706 = vunpack.c.l.b16 %v591
        %v707 = vunpack.c.l.b16 %v605
        %v708 = vunpack.c.l.b16 %v615
        %v709 = vunpack.c.l.b16 %v629
        %v710 = vunpack.c.l.b16 %v639
        %v711 = vunpack.c.l.b16 %v653
        %v712 = vunpack.c.l.b16 %v663
        %v713 = vpack.c.b16 %v682, %v681
        %v714 = vpack.c.b16 %v684, %v683
        %v715 = vpack.c.b16 %v686, %v685
        %v716 = vpack.c.b16 %v688, %v687
        %v717 = vpack.c.b16 %v690, %v689
        %v718 = vpack.c.b16 %v692, %v691
        %v719 = vpack.c.b16 %v694, %v693
        %v720 = vpack.c.b16 %v696, %v695
        %v721 = vpack.c.b16 %v698, %v697
        %v722 = vpack.c.b16 %v700, %v699
        %v723 = vpack.c.b16 %v702, %v701
        %v724 = vpack.c.b16 %v704, %v703
        %v725 = vpack.c.b16 %v706, %v705
        %v726 = vpack.c.b16 %v708, %v707
        %v727 = vpack.c.b16 %v710, %v709
        %v728 = vpack.c.b16 %v712, %v711
        %v761 = vunpack.c.l.b16 %v665
        %v762 = vunpack.c.l.b16 %v666
        %v763 = vunpack.c.l.b16 %v667
        %v764 = vunpack.c.l.b16 %v668
        %v765 = vunpack.c.l.b16 %v669
        %v766 = vunpack.c.l.b16 %v670
        %v767 = vunpack.c.l.b16 %v671
        %v768 = vunpack.c.l.b16 %v672
        %v769 = vunpack.c.l.b16 %v673
        %v770 = vunpack.c.l.b16 %v674
        %v771 = vunpack.c.l.b16 %v675
        %v772 = vunpack.c.l.b16 %v676
        %v773 = vunpack.c.l.b16 %v677
        %v774 = vunpack.c.l.b16 %v678
        %v775 = vunpack.c.l.b16 %v679
        %v776 = vunpack.c.l.b16 %v680
        %v777 = vpack.c.b16 %v762, %v761
        %v778 = vpack.c.b16 %v764, %v763
        %v779 = vpack.c.b16 %v766, %v765
        %v780 = vpack.c.b16 %v768, %v767
        %v781 = vpack.c.b16 %v770, %v769
        %v782 = vpack.c.b16 %v772, %v771
        %v783 = vpack.c.b16 %v774, %v773
        %v784 = vpack.c.b16 %v776, %v775
        %793 = vmatprep.subr.bf16.mxu0 0
        %794 = vmatpush1.bf16.msra.mxu0 %v784
        %795 = vmatprep.subr.bf16.mxu0 0
        %796 = vmatpush1.bf16.msra.mxu0 %v783
        %797 = vmatprep.subr.bf16.mxu0 0
        %798 = vmatpush1.bf16.msra.mxu0 %v782
        %799 = vmatprep.subr.bf16.mxu0 0
        %800 = vmatpush1.bf16.msra.mxu0 %v781
        %801 = vmatprep.subr.bf16.mxu0 0
        %802 = vmatpush1.bf16.msra.mxu0 %v780
        %803 = vmatprep.subr.bf16.mxu0 0
        %804 = vmatpush1.bf16.msra.mxu0 %v779
        %805 = vmatprep.subr.bf16.mxu0 0
        %806 = vmatpush1.bf16.msra.mxu0 %v778
        %807 = vmatprep.subr.bf16.mxu0 0
        %808 = vmatpush1.bf16.msra.mxu0 %v777
        %809 = vmatprep.subr.bf16.mxu0 0
        %810 = vmatpush2.bf16.msra.mxu0 0
        %811 = vmatprep.subr.bf16.mxu0 0
        %812 = vmatpush2.bf16.msra.mxu0 0
        %813 = vmatprep.subr.bf16.mxu0 0
        %814 = vmatpush2.bf16.msra.mxu0 0
        %815 = vmatprep.subr.bf16.mxu0 0
        %816 = vmatpush2.bf16.msra.mxu0 0
        %817 = vmatprep.subr.bf16.mxu0 0
        %818 = vmatpush2.bf16.msra.mxu0 0
        %819 = vmatprep.subr.bf16.mxu0 0
        %820 = vmatpush2.bf16.msra.mxu0 0
        %821 = vmatprep.subr.bf16.mxu0 0
        %822 = vmatpush2.bf16.msra.mxu0 0
        %823 = vmatprep.subr.bf16.mxu0 0
        %824 = vmatpush2.bf16.msra.mxu0 0
        %825 = vmatprep.mubr.bf16.mxu0 0
        %826 = vmatmul.mubr.bf16.gmra.mxu0 %v713
        %v827 = vpop.f32.mrf.mxu0
        %v828 = vadd.f32 0.0, %v827
        %v829 = vpop.f32.mrf.mxu0
        %v830 = vpop.f32.mrf.mxu0
        %v831 = vadd.f32 0.0, %v830
        %v832 = vpop.f32.mrf.mxu0
        %833 = vmatprep.mubr.bf16.mxu0 0
        %834 = vmatmul.mubr.bf16.gmra.mxu0 %v714
        %v835 = vpop.f32.mrf.mxu0
        %v836 = vadd.f32 0.0, %v835
        %v837 = vpop.f32.mrf.mxu0
        %v838 = vpop.f32.mrf.mxu0
        %v839 = vadd.f32 0.0, %v838
        %v840 = vpop.f32.mrf.mxu0
        %841 = vmatprep.mubr.bf16.mxu0 0
        %842 = vmatmul.mubr.bf16.gmra.mxu0 %v715
        %v843 = vpop.f32.mrf.mxu0
        %v844 = vadd.f32 0.0, %v843
        %v845 = vpop.f32.mrf.mxu0
        %v846 = vpop.f32.mrf.mxu0
        %v847 = vadd.f32 0.0, %v846
        %v848 = vpop.f32.mrf.mxu0
        %849 = vmatprep.mubr.bf16.mxu0 0
        %850 = vmatmul.mubr.bf16.gmra.mxu0 %v716
        %v851 = vpop.f32.mrf.mxu0
        %v852 = vadd.f32 0.0, %v851
        %v853 = vpop.f32.mrf.mxu0
        %v854 = vpop.f32.mrf.mxu0
        %v855 = vadd.f32 0.0, %v854
        %v856 = vpop.f32.mrf.mxu0
        %857 = vmatprep.mubr.bf16.mxu0 0
        %858 = vmatmul.mubr.bf16.gmra.mxu0 %v717
        %v859 = vpop.f32.mrf.mxu0
        %v860 = vadd.f32 0.0, %v859
        %v861 = vpop.f32.mrf.mxu0
        %v862 = vpop.f32.mrf.mxu0
        %v863 = vadd.f32 0.0, %v862
        %v864 = vpop.f32.mrf.mxu0
        %865 = vmatprep.mubr.bf16.mxu0 0
        %866 = vmatmul.mubr.bf16.gmra.mxu0 %v718
        %v867 = vpop.f32.mrf.mxu0
        %v868 = vadd.f32 0.0, %v867
        %v869 = vpop.f32.mrf.mxu0
        %v870 = vpop.f32.mrf.mxu0
        %v871 = vadd.f32 0.0, %v870
        %v872 = vpop.f32.mrf.mxu0
        %873 = vmatprep.mubr.bf16.mxu0 0
        %874 = vmatmul.mubr.bf16.gmra.mxu0 %v719
        %v875 = vpop.f32.mrf.mxu0
        %v876 = vadd.f32 0.0, %v875
        %v877 = vpop.f32.mrf.mxu0
        %v878 = vpop.f32.mrf.mxu0
        %v879 = vadd.f32 0.0, %v878
        %v880 = vpop.f32.mrf.mxu0
        %881 = vmatprep.mubr.bf16.mxu0 0
        %882 = vmatmul.mubr.bf16.gmra.mxu0 %v720
        %v883 = vpop.f32.mrf.mxu0
        %v884 = vadd.f32 0.0, %v883
        %v885 = vpop.f32.mrf.mxu0
        %v886 = vpop.f32.mrf.mxu0
        %v887 = vadd.f32 0.0, %v886
        %v888 = vpop.f32.mrf.mxu0
        %889 = vmatprep.mubr.bf16.mxu0 0
        %890 = vmatmul.mubr.bf16.gmra.mxu0 %v721
        %v891 = vpop.f32.mrf.mxu0
        %v892 = vadd.f32 0.0, %v891
        %v893 = vpop.f32.mrf.mxu0
        %v894 = vpop.f32.mrf.mxu0
        %v895 = vadd.f32 0.0, %v894
        %v896 = vpop.f32.mrf.mxu0
        %897 = vmatprep.mubr.bf16.mxu0 0
        %898 = vmatmul.mubr.bf16.gmra.mxu0 %v722
        %v899 = vpop.f32.mrf.mxu0
        %v900 = vadd.f32 0.0, %v899
        %v901 = vpop.f32.mrf.mxu0
        %v902 = vpop.f32.mrf.mxu0
        %v903 = vadd.f32 0.0, %v902
        %v904 = vpop.f32.mrf.mxu0
        %905 = vmatprep.mubr.bf16.mxu0 0
        %906 = vmatmul.mubr.bf16.gmra.mxu0 %v723
        %v907 = vpop.f32.mrf.mxu0
        %v908 = vadd.f32 0.0, %v907
        %v909 = vpop.f32.mrf.mxu0
        %v910 = vpop.f32.mrf.mxu0
        %v911 = vadd.f32 0.0, %v910
        %v912 = vpop.f32.mrf.mxu0
        %913 = vmatprep.mubr.bf16.mxu0 0
        %914 = vmatmul.mubr.bf16.gmra.mxu0 %v724
        %v915 = vpop.f32.mrf.mxu0
        %v916 = vadd.f32 0.0, %v915
        %v917 = vpop.f32.mrf.mxu0
        %v918 = vpop.f32.mrf.mxu0
        %v919 = vadd.f32 0.0, %v918
        %v920 = vpop.f32.mrf.mxu0
        %921 = vmatprep.mubr.bf16.mxu0 0
        %922 = vmatmul.mubr.bf16.gmra.mxu0 %v725
        %v923 = vpop.f32.mrf.mxu0
        %v924 = vadd.f32 0.0, %v923
        %v925 = vpop.f32.mrf.mxu0
        %v926 = vpop.f32.mrf.mxu0
        %v927 = vadd.f32 0.0, %v926
        %v928 = vpop.f32.mrf.mxu0
        %929 = vmatprep.mubr.bf16.mxu0 0
        %930 = vmatmul.mubr.bf16.gmra.mxu0 %v726
        %v931 = vpop.f32.mrf.mxu0
        %v932 = vadd.f32 0.0, %v931
        %v933 = vpop.f32.mrf.mxu0
        %v934 = vpop.f32.mrf.mxu0
        %v935 = vadd.f32 0.0, %v934
        %v936 = vpop.f32.mrf.mxu0
        %937 = vmatprep.mubr.bf16.mxu0 0
        %938 = vmatmul.mubr.bf16.gmra.mxu0 %v727
        %v939 = vpop.f32.mrf.mxu0
        %v940 = vadd.f32 0.0, %v939
        %v941 = vpop.f32.mrf.mxu0
        %v942 = vpop.f32.mrf.mxu0
        %v943 = vadd.f32 0.0, %v942
        %v944 = vpop.f32.mrf.mxu0
        %945 = vmatprep.mubr.bf16.mxu0 0
        %946 = vmatmul.mubr.bf16.gmra.mxu0 %v728
        %v947 = vpop.f32.mrf.mxu0
        %v948 = vadd.f32 0.0, %v947
        %v949 = vpop.f32.mrf.mxu0
        %v950 = vpop.f32.mrf.mxu0
        %v951 = vadd.f32 0.0, %v950
        %v952 = vpop.f32.mrf.mxu0
        %953 = vdwg.mxu0
        %v986 = vunpack.c.l.b16 %v213
        %v987 = vunpack.c.l.b16 %v214
        %v988 = vunpack.c.l.b16 %v215
        %v989 = vunpack.c.l.b16 %v216
        %v990 = vunpack.c.l.b16 %v217
        %v991 = vunpack.c.l.b16 %v218
        %v992 = vunpack.c.l.b16 %v219
        %v993 = vunpack.c.l.b16 %v220
        %v994 = vunpack.c.l.b16 %v221
        %v995 = vunpack.c.l.b16 %v222
        %v996 = vunpack.c.l.b16 %v223
        %v997 = vunpack.c.l.b16 %v224
        %v998 = vunpack.c.l.b16 %v225
        %v999 = vunpack.c.l.b16 %v226
        %v1000 = vunpack.c.l.b16 %v227
        %v1001 = vunpack.c.l.b16 %v228
        %v1002 = vunpack.c.l.b16 %v229
        %v1003 = vunpack.c.l.b16 %v230
        %v1004 = vunpack.c.l.b16 %v231
        %v1005 = vunpack.c.l.b16 %v232
        %v1006 = vunpack.c.l.b16 %v233
        %v1007 = vunpack.c.l.b16 %v234
        %v1008 = vunpack.c.l.b16 %v235
        %v1009 = vunpack.c.l.b16 %v236
        %v1010 = vunpack.c.l.b16 %v237
        %v1011 = vunpack.c.l.b16 %v238
        %v1012 = vunpack.c.l.b16 %v239
        %v1013 = vunpack.c.l.b16 %v240
        %v1014 = vunpack.c.l.b16 %v241
        %v1015 = vunpack.c.l.b16 %v242
        %v1016 = vunpack.c.l.b16 %v243
        %v1017 = vunpack.c.l.b16 %v244
        %v1018 = vpack.c.b16 %v987, %v986
        %v1019 = vpack.c.b16 %v989, %v988
        %v1020 = vpack.c.b16 %v991, %v990
        %v1021 = vpack.c.b16 %v993, %v992
        %v1022 = vpack.c.b16 %v995, %v994
        %v1023 = vpack.c.b16 %v997, %v996
        %v1024 = vpack.c.b16 %v999, %v998
        %v1025 = vpack.c.b16 %v1001, %v1000
        %v1026 = vpack.c.b16 %v1003, %v1002
        %v1027 = vpack.c.b16 %v1005, %v1004
        %v1028 = vpack.c.b16 %v1007, %v1006
        %v1029 = vpack.c.b16 %v1009, %v1008
        %v1030 = vpack.c.b16 %v1011, %v1010
        %v1031 = vpack.c.b16 %v1013, %v1012
        %v1032 = vpack.c.b16 %v1015, %v1014
        %v1033 = vpack.c.b16 %v1017, %v1016
        %v1066 = vunpack.c.l.b16 %v245
        %v1067 = vunpack.c.l.b16 %v246
        %v1068 = vunpack.c.l.b16 %v247
        %v1069 = vunpack.c.l.b16 %v248
        %v1070 = vunpack.c.l.b16 %v249
        %v1071 = vunpack.c.l.b16 %v250
        %v1072 = vunpack.c.l.b16 %v251
        %v1073 = vunpack.c.l.b16 %v252
        %v1074 = vunpack.c.l.b16 %v253
        %v1075 = vunpack.c.l.b16 %v254
        %v1076 = vunpack.c.l.b16 %v255
        %v1077 = vunpack.c.l.b16 %v256
        %v1078 = vunpack.c.l.b16 %v257
        %v1079 = vunpack.c.l.b16 %v258
        %v1080 = vunpack.c.l.b16 %v259
        %v1081 = vunpack.c.l.b16 %v260
        %v1082 = vpack.c.b16 %v1067, %v1066
        %v1083 = vpack.c.b16 %v1069, %v1068
        %v1084 = vpack.c.b16 %v1071, %v1070
        %v1085 = vpack.c.b16 %v1073, %v1072
        %v1086 = vpack.c.b16 %v1075, %v1074
        %v1087 = vpack.c.b16 %v1077, %v1076
        %v1088 = vpack.c.b16 %v1079, %v1078
        %v1089 = vpack.c.b16 %v1081, %v1080
        %1098 = vmatprep.subr.bf16.mxu0 0
        %1099 = vmatpush1.bf16.msra.mxu0 %v1089
        %1100 = vmatprep.subr.bf16.mxu0 0
        %1101 = vmatpush1.bf16.msra.mxu0 %v1088
        %1102 = vmatprep.subr.bf16.mxu0 0
        %1103 = vmatpush1.bf16.msra.mxu0 %v1087
        %1104 = vmatprep.subr.bf16.mxu0 0
        %1105 = vmatpush1.bf16.msra.mxu0 %v1086
        %1106 = vmatprep.subr.bf16.mxu0 0
        %1107 = vmatpush1.bf16.msra.mxu0 %v1085
        %1108 = vmatprep.subr.bf16.mxu0 0
        %1109 = vmatpush1.bf16.msra.mxu0 %v1084
        %1110 = vmatprep.subr.bf16.mxu0 0
        %1111 = vmatpush1.bf16.msra.mxu0 %v1083
        %1112 = vmatprep.subr.bf16.mxu0 0
        %1113 = vmatpush1.bf16.msra.mxu0 %v1082
        %1114 = vmatprep.subr.bf16.mxu0 0
        %1115 = vmatpush2.bf16.msra.mxu0 0
        %1116 = vmatprep.subr.bf16.mxu0 0
        %1117 = vmatpush2.bf16.msra.mxu0 0
        %1118 = vmatprep.subr.bf16.mxu0 0
        %1119 = vmatpush2.bf16.msra.mxu0 0
        %1120 = vmatprep.subr.bf16.mxu0 0
        %1121 = vmatpush2.bf16.msra.mxu0 0
        %1122 = vmatprep.subr.bf16.mxu0 0
        %1123 = vmatpush2.bf16.msra.mxu0 0
        %1124 = vmatprep.subr.bf16.mxu0 0
        %1125 = vmatpush2.bf16.msra.mxu0 0
        %1126 = vmatprep.subr.bf16.mxu0 0
        %1127 = vmatpush2.bf16.msra.mxu0 0
        %1128 = vmatprep.subr.bf16.mxu0 0
        %1129 = vmatpush2.bf16.msra.mxu0 0
        %1130 = vmatprep.mubr.bf16.mxu0 0
        %1131 = vmatmul.mubr.bf16.gmra.mxu0 %v1018
        %v1132 = vpop.f32.mrf.mxu0
        %v1133 = vadd.f32 %v828, %v1132
        %v1134 = vpop.f32.mrf.mxu0
        %v1135 = vpop.f32.mrf.mxu0
        %v1136 = vadd.f32 %v831, %v1135
        %v1137 = vpop.f32.mrf.mxu0
        %1138 = vmatprep.mubr.bf16.mxu0 0
        %1139 = vmatmul.mubr.bf16.gmra.mxu0 %v1019
        %v1140 = vpop.f32.mrf.mxu0
        %v1141 = vadd.f32 %v836, %v1140
        %v1142 = vpop.f32.mrf.mxu0
        %v1143 = vpop.f32.mrf.mxu0
        %v1144 = vadd.f32 %v839, %v1143
        %v1145 = vpop.f32.mrf.mxu0
        %1146 = vmatprep.mubr.bf16.mxu0 0
        %1147 = vmatmul.mubr.bf16.gmra.mxu0 %v1020
        %v1148 = vpop.f32.mrf.mxu0
        %v1149 = vadd.f32 %v844, %v1148
        %v1150 = vpop.f32.mrf.mxu0
        %v1151 = vpop.f32.mrf.mxu0
        %v1152 = vadd.f32 %v847, %v1151
        %v1153 = vpop.f32.mrf.mxu0
        %1154 = vmatprep.mubr.bf16.mxu0 0
        %1155 = vmatmul.mubr.bf16.gmra.mxu0 %v1021
        %v1156 = vpop.f32.mrf.mxu0
        %v1157 = vadd.f32 %v852, %v1156
        %v1158 = vpop.f32.mrf.mxu0
        %v1159 = vpop.f32.mrf.mxu0
        %v1160 = vadd.f32 %v855, %v1159
        %v1161 = vpop.f32.mrf.mxu0
        %1162 = vmatprep.mubr.bf16.mxu0 0
        %1163 = vmatmul.mubr.bf16.gmra.mxu0 %v1022
        %v1164 = vpop.f32.mrf.mxu0
        %v1165 = vadd.f32 %v860, %v1164
        %v1166 = vpop.f32.mrf.mxu0
        %v1167 = vpop.f32.mrf.mxu0
        %v1168 = vadd.f32 %v863, %v1167
        %v1169 = vpop.f32.mrf.mxu0
        %1170 = vmatprep.mubr.bf16.mxu0 0
        %1171 = vmatmul.mubr.bf16.gmra.mxu0 %v1023
        %v1172 = vpop.f32.mrf.mxu0
        %v1173 = vadd.f32 %v868, %v1172
        %v1174 = vpop.f32.mrf.mxu0
        %v1175 = vpop.f32.mrf.mxu0
        %v1176 = vadd.f32 %v871, %v1175
        %v1177 = vpop.f32.mrf.mxu0
        %1178 = vmatprep.mubr.bf16.mxu0 0
        %1179 = vmatmul.mubr.bf16.gmra.mxu0 %v1024
        %v1180 = vpop.f32.mrf.mxu0
        %v1181 = vadd.f32 %v876, %v1180
        %v1182 = vpop.f32.mrf.mxu0
        %v1183 = vpop.f32.mrf.mxu0
        %v1184 = vadd.f32 %v879, %v1183
        %v1185 = vpop.f32.mrf.mxu0
        %1186 = vmatprep.mubr.bf16.mxu0 0
        %1187 = vmatmul.mubr.bf16.gmra.mxu0 %v1025
        %v1188 = vpop.f32.mrf.mxu0
        %v1189 = vadd.f32 %v884, %v1188
        %v1190 = vpop.f32.mrf.mxu0
        %v1191 = vpop.f32.mrf.mxu0
        %v1192 = vadd.f32 %v887, %v1191
        %v1193 = vpop.f32.mrf.mxu0
        %1194 = vmatprep.mubr.bf16.mxu0 0
        %1195 = vmatmul.mubr.bf16.gmra.mxu0 %v1026
        %v1196 = vpop.f32.mrf.mxu0
        %v1197 = vadd.f32 %v892, %v1196
        %v1198 = vpop.f32.mrf.mxu0
        %v1199 = vpop.f32.mrf.mxu0
        %v1200 = vadd.f32 %v895, %v1199
        %v1201 = vpop.f32.mrf.mxu0
        %1202 = vmatprep.mubr.bf16.mxu0 0
        %1203 = vmatmul.mubr.bf16.gmra.mxu0 %v1027
        %v1204 = vpop.f32.mrf.mxu0
        %v1205 = vadd.f32 %v900, %v1204
        %v1206 = vpop.f32.mrf.mxu0
        %v1207 = vpop.f32.mrf.mxu0
        %v1208 = vadd.f32 %v903, %v1207
        %v1209 = vpop.f32.mrf.mxu0
        %1210 = vmatprep.mubr.bf16.mxu0 0
        %1211 = vmatmul.mubr.bf16.gmra.mxu0 %v1028
        %v1212 = vpop.f32.mrf.mxu0
        %v1213 = vadd.f32 %v908, %v1212
        %v1214 = vpop.f32.mrf.mxu0
        %v1215 = vpop.f32.mrf.mxu0
        %v1216 = vadd.f32 %v911, %v1215
        %v1217 = vpop.f32.mrf.mxu0
        %1218 = vmatprep.mubr.bf16.mxu0 0
        %1219 = vmatmul.mubr.bf16.gmra.mxu0 %v1029
        %v1220 = vpop.f32.mrf.mxu0
        %v1221 = vadd.f32 %v916, %v1220
        %v1222 = vpop.f32.mrf.mxu0
        %v1223 = vpop.f32.mrf.mxu0
        %v1224 = vadd.f32 %v919, %v1223
        %v1225 = vpop.f32.mrf.mxu0
        %1226 = vmatprep.mubr.bf16.mxu0 0
        %1227 = vmatmul.mubr.bf16.gmra.mxu0 %v1030
        %v1228 = vpop.f32.mrf.mxu0
        %v1229 = vadd.f32 %v924, %v1228
        %v1230 = vpop.f32.mrf.mxu0
        %v1231 = vpop.f32.mrf.mxu0
        %v1232 = vadd.f32 %v927, %v1231
        %v1233 = vpop.f32.mrf.mxu0
        %1234 = vmatprep.mubr.bf16.mxu0 0
        %1235 = vmatmul.mubr.bf16.gmra.mxu0 %v1031
        %v1236 = vpop.f32.mrf.mxu0
        %v1237 = vadd.f32 %v932, %v1236
        %v1238 = vpop.f32.mrf.mxu0
        %v1239 = vpop.f32.mrf.mxu0
        %v1240 = vadd.f32 %v935, %v1239
        %v1241 = vpop.f32.mrf.mxu0
        %1242 = vmatprep.mubr.bf16.mxu0 0
        %1243 = vmatmul.mubr.bf16.gmra.mxu0 %v1032
        %v1244 = vpop.f32.mrf.mxu0
        %v1245 = vadd.f32 %v940, %v1244
        %v1246 = vpop.f32.mrf.mxu0
        %v1247 = vpop.f32.mrf.mxu0
        %v1248 = vadd.f32 %v943, %v1247
        %v1249 = vpop.f32.mrf.mxu0
        %1250 = vmatprep.mubr.bf16.mxu0 0
        %1251 = vmatmul.mubr.bf16.gmra.mxu0 %v1033
        %v1252 = vpop.f32.mrf.mxu0
        %v1253 = vadd.f32 %v948, %v1252
        %v1254 = vpop.f32.mrf.mxu0
        %v1255 = vpop.f32.mrf.mxu0
        %v1256 = vadd.f32 %v951, %v1255
        %v1257 = vpop.f32.mrf.mxu0
        %1258 = vdwg.mxu0
        %v1259 = vld [vmem:[%s209] sm:$0xe]
        %v1260 = vld [vmem:[%s209 + $0xc] sm:$0xe]
        %v1261 = vld [vmem:[%s209 + $0x18] sm:$0xe]
        %v1262 = vld [vmem:[%s209 + $0x24] sm:$0xe]
        %v1263 = vld [vmem:[%s209 + $0x30] sm:$0xe]
        %v1264 = vld [vmem:[%s209 + $0x3c] sm:$0xe]
        %v1265 = vld [vmem:[%s209 + $0x48] sm:$0xe]
        %v1266 = vld [vmem:[%s209 + $0x54] sm:$0xe]
        %v1267 = vld [vmem:[%s209 + $0x60] sm:$0xe]
        %v1268 = vld [vmem:[%s209 + $0x6c] sm:$0xe]
        %v1269 = vld [vmem:[%s209 + $0x78] sm:$0xe]
        %v1270 = vld [vmem:[%s209 + $0x84] sm:$0xe]
        %v1271 = vld [vmem:[%s209 + $0x90] sm:$0xe]
        %v1272 = vld [vmem:[%s209 + $0x9c] sm:$0xe]
        %v1273 = vld [vmem:[%s209 + $0xa8] sm:$0xe]
        %v1274 = vld [vmem:[%s209 + $0xb4] sm:$0xe]
        %vm1307 = vcmask 1042432
        %vm1308 = vcmask 1046532
        %vm1309 = vmor %vm1307, %vm1308
        %v1310 = vrot.slane %v1259, 5
        %v1311 = vrot.slane %v1310, 4
        %v1312 = vrot.slane %v214, 5
        %v1313 = vsel %vm1309, %v1311, %v1312
        %v1314 = vrot.slane %v1312, 4
        %v1315 = vrot.slane %v261, 5
        %v1316 = vsel %vm1309, %v1314, %v1315
        %v1317 = vrot.slane %v1260, 5
        %v1318 = vrot.slane %v1317, 4
        %v1319 = vrot.slane %v216, 5
        %v1320 = vsel %vm1309, %v1318, %v1319
        %v1321 = vrot.slane %v1319, 4
        %v1322 = vrot.slane %v262, 5
        %v1323 = vsel %vm1309, %v1321, %v1322
        %v1324 = vrot.slane %v1261, 5
        %v1325 = vrot.slane %v1324, 4
        %v1326 = vrot.slane %v218, 5
        %v1327 = vsel %vm1309, %v1325, %v1326
        %v1328 = vrot.slane %v1326, 4
        %v1329 = vrot.slane %v263, 5
        %v1330 = vsel %vm1309, %v1328, %v1329
        %v1331 = vrot.slane %v1262, 5
        %v1332 = vrot.slane %v1331, 4
        %v1333 = vrot.slane %v220, 5
        %v1334 = vsel %vm1309, %v1332, %v1333
        %v1335 = vrot.slane %v1333, 4
        %v1336 = vrot.slane %v264, 5
        %v1337 = vsel %vm1309, %v1335, %v1336
        %v1338 = vrot.slane %v1263, 5
        %v1339 = vrot.slane %v1338, 4
        %v1340 = vrot.slane %v222, 5
        %v1341 = vsel %vm1309, %v1339, %v1340
        %v1342 = vrot.slane %v1340, 4
        %v1343 = vrot.slane %v265, 5
        %v1344 = vsel %vm1309, %v1342, %v1343
        %v1345 = vrot.slane %v1264, 5
        %v1346 = vrot.slane %v1345, 4
        %v1347 = vrot.slane %v224, 5
        %v1348 = vsel %vm1309, %v1346, %v1347
        %v1349 = vrot.slane %v1347, 4
        %v1350 = vrot.slane %v266, 5
        %v1351 = vsel %vm1309, %v1349, %v1350
        %v1352 = vrot.slane %v1265, 5
        %v1353 = vrot.slane %v1352, 4
        %v1354 = vrot.slane %v226, 5
        %v1355 = vsel %vm1309, %v1353, %v1354
        %v1356 = vrot.slane %v1354, 4
        %v1357 = vrot.slane %v267, 5
        %v1358 = vsel %vm1309, %v1356, %v1357
        %v1359 = vrot.slane %v1266, 5
        %v1360 = vrot.slane %v1359, 4
        %v1361 = vrot.slane %v228, 5
        %v1362 = vsel %vm1309, %v1360, %v1361
        %v1363 = vrot.slane %v1361, 4
        %v1364 = vrot.slane %v268, 5
        %v1365 = vsel %vm1309, %v1363, %v1364
        %v1366 = vrot.slane %v1267, 5
        %v1367 = vrot.slane %v1366, 4
        %v1368 = vrot.slane %v230, 5
        %v1369 = vsel %vm1309, %v1367, %v1368
        %v1370 = vrot.slane %v1368, 4
        %v1371 = vrot.slane %v269, 5
        %v1372 = vsel %vm1309, %v1370, %v1371
        %v1373 = vrot.slane %v1268, 5
        %v1374 = vrot.slane %v1373, 4
        %v1375 = vrot.slane %v232, 5
        %v1376 = vsel %vm1309, %v1374, %v1375
        %v1377 = vrot.slane %v1375, 4
        %v1378 = vrot.slane %v270, 5
        %v1379 = vsel %vm1309, %v1377, %v1378
        %v1380 = vrot.slane %v1269, 5
        %v1381 = vrot.slane %v1380, 4
        %v1382 = vrot.slane %v234, 5
        %v1383 = vsel %vm1309, %v1381, %v1382
        %v1384 = vrot.slane %v1382, 4
        %v1385 = vrot.slane %v271, 5
        %v1386 = vsel %vm1309, %v1384, %v1385
        %v1387 = vrot.slane %v1270, 5
        %v1388 = vrot.slane %v1387, 4
        %v1389 = vrot.slane %v236, 5
        %v1390 = vsel %vm1309, %v1388, %v1389
        %v1391 = vrot.slane %v1389, 4
        %v1392 = vrot.slane %v272, 5
        %v1393 = vsel %vm1309, %v1391, %v1392
        %v1394 = vrot.slane %v1271, 5
        %v1395 = vrot.slane %v1394, 4
        %v1396 = vrot.slane %v238, 5
        %v1397 = vsel %vm1309, %v1395, %v1396
        %v1398 = vrot.slane %v1396, 4
        %v1399 = vrot.slane %v273, 5
        %v1400 = vsel %vm1309, %v1398, %v1399
        %v1401 = vrot.slane %v1272, 5
        %v1402 = vrot.slane %v1401, 4
        %v1403 = vrot.slane %v240, 5
        %v1404 = vsel %vm1309, %v1402, %v1403
        %v1405 = vrot.slane %v1403, 4
        %v1406 = vrot.slane %v274, 5
        %v1407 = vsel %vm1309, %v1405, %v1406
        %v1408 = vrot.slane %v1273, 5
        %v1409 = vrot.slane %v1408, 4
        %v1410 = vrot.slane %v242, 5
        %v1411 = vsel %vm1309, %v1409, %v1410
        %v1412 = vrot.slane %v1410, 4
        %v1413 = vrot.slane %v275, 5
        %v1414 = vsel %vm1309, %v1412, %v1413
        %v1415 = vrot.slane %v1274, 5
        %v1416 = vrot.slane %v1415, 4
        %v1417 = vrot.slane %v244, 5
        %v1418 = vsel %vm1309, %v1416, %v1417
        %v1419 = vrot.slane %v1417, 4
        %v1420 = vrot.slane %v276, 5
        %v1421 = vsel %vm1309, %v1419, %v1420
        %s1422 = scalar_lea.vmem [#allocation3], 128
        %v1423 = vld [vmem:[%s1422] sm:$0xf]
        %v1424 = vld [vmem:[%s1422 + $0x4] sm:$0xf]
        %v1425 = vld [vmem:[%s1422 + $0x8] sm:$0xf]
        %v1426 = vld [vmem:[%s1422 + $0xc] sm:$0xf]
        %v1427 = vld [vmem:[%s1422 + $0x10] sm:$0xf]
        %v1428 = vld [vmem:[%s1422 + $0x14] sm:$0xf]
        %v1429 = vld [vmem:[%s1422 + $0x18] sm:$0xf]
        %v1430 = vld [vmem:[%s1422 + $0x1c] sm:$0xf]
        %v1431 = vld [vmem:[%s1422 + $0x20] sm:$0xf]
        %v1432 = vld [vmem:[%s1422 + $0x24] sm:$0xf]
        %v1433 = vld [vmem:[%s1422 + $0x28] sm:$0xf]
        %v1434 = vld [vmem:[%s1422 + $0x2c] sm:$0xf]
        %v1435 = vld [vmem:[%s1422 + $0x30] sm:$0xf]
        %v1436 = vld [vmem:[%s1422 + $0x34] sm:$0xf]
        %v1437 = vld [vmem:[%s1422 + $0x38] sm:$0xf]
        %v1438 = vld [vmem:[%s1422 + $0x3c] sm:$0xf]
        %v1439 = vunpack.c.l.b16 %v1313
        %v1440 = vunpack.c.l.b16 %v1316
        %v1441 = vunpack.c.l.b16 %v1320
        %v1442 = vunpack.c.l.b16 %v1323
        %v1443 = vunpack.c.l.b16 %v1327
        %v1444 = vunpack.c.l.b16 %v1330
        %v1445 = vunpack.c.l.b16 %v1334
        %v1446 = vunpack.c.l.b16 %v1337
        %v1447 = vunpack.c.l.b16 %v1341
        %v1448 = vunpack.c.l.b16 %v1344
        %v1449 = vunpack.c.l.b16 %v1348
        %v1450 = vunpack.c.l.b16 %v1351
        %v1451 = vunpack.c.l.b16 %v1355
        %v1452 = vunpack.c.l.b16 %v1358
        %v1453 = vunpack.c.l.b16 %v1362
        %v1454 = vunpack.c.l.b16 %v1365
        %v1455 = vunpack.c.l.b16 %v1369
        %v1456 = vunpack.c.l.b16 %v1372
        %v1457 = vunpack.c.l.b16 %v1376
        %v1458 = vunpack.c.l.b16 %v1379
        %v1459 = vunpack.c.l.b16 %v1383
        %v1460 = vunpack.c.l.b16 %v1386
        %v1461 = vunpack.c.l.b16 %v1390
        %v1462 = vunpack.c.l.b16 %v1393
        %v1463 = vunpack.c.l.b16 %v1397
        %v1464 = vunpack.c.l.b16 %v1400
        %v1465 = vunpack.c.l.b16 %v1404
        %v1466 = vunpack.c.l.b16 %v1407
        %v1467 = vunpack.c.l.b16 %v1411
        %v1468 = vunpack.c.l.b16 %v1414
        %v1469 = vunpack.c.l.b16 %v1418
        %v1470 = vunpack.c.l.b16 %v1421
        %v1471 = vpack.c.b16 %v1440, %v1439
        %v1472 = vpack.c.b16 %v1442, %v1441
        %v1473 = vpack.c.b16 %v1444, %v1443
        %v1474 = vpack.c.b16 %v1446, %v1445
        %v1475 = vpack.c.b16 %v1448, %v1447
        %v1476 = vpack.c.b16 %v1450, %v1449
        %v1477 = vpack.c.b16 %v1452, %v1451
        %v1478 = vpack.c.b16 %v1454, %v1453
        %v1479 = vpack.c.b16 %v1456, %v1455
        %v1480 = vpack.c.b16 %v1458, %v1457
        %v1481 = vpack.c.b16 %v1460, %v1459
        %v1482 = vpack.c.b16 %v1462, %v1461
        %v1483 = vpack.c.b16 %v1464, %v1463
        %v1484 = vpack.c.b16 %v1466, %v1465
        %v1485 = vpack.c.b16 %v1468, %v1467
        %v1486 = vpack.c.b16 %v1470, %v1469
        %v1519 = vunpack.c.l.b16 %v1423
        %v1520 = vunpack.c.l.b16 %v1424
        %v1521 = vunpack.c.l.b16 %v1425
        %v1522 = vunpack.c.l.b16 %v1426
        %v1523 = vunpack.c.l.b16 %v1427
        %v1524 = vunpack.c.l.b16 %v1428
        %v1525 = vunpack.c.l.b16 %v1429
        %v1526 = vunpack.c.l.b16 %v1430
        %v1527 = vunpack.c.l.b16 %v1431
        %v1528 = vunpack.c.l.b16 %v1432
        %v1529 = vunpack.c.l.b16 %v1433
        %v1530 = vunpack.c.l.b16 %v1434
        %v1531 = vunpack.c.l.b16 %v1435
        %v1532 = vunpack.c.l.b16 %v1436
        %v1533 = vunpack.c.l.b16 %v1437
        %v1534 = vunpack.c.l.b16 %v1438
        %v1535 = vpack.c.b16 %v1520, %v1519
        %v1536 = vpack.c.b16 %v1522, %v1521
        %v1537 = vpack.c.b16 %v1524, %v1523
        %v1538 = vpack.c.b16 %v1526, %v1525
        %v1539 = vpack.c.b16 %v1528, %v1527
        %v1540 = vpack.c.b16 %v1530, %v1529
        %v1541 = vpack.c.b16 %v1532, %v1531
        %v1542 = vpack.c.b16 %v1534, %v1533
        %1551 = vmatprep.subr.bf16.mxu0 0
        %1552 = vmatpush1.bf16.msra.mxu0 %v1542
        %1553 = vmatprep.subr.bf16.mxu0 0
        %1554 = vmatpush1.bf16.msra.mxu0 %v1541
        %1555 = vmatprep.subr.bf16.mxu0 0
        %1556 = vmatpush1.bf16.msra.mxu0 %v1540
        %1557 = vmatprep.subr.bf16.mxu0 0
        %1558 = vmatpush1.bf16.msra.mxu0 %v1539
        %1559 = vmatprep.subr.bf16.mxu0 0
        %1560 = vmatpush1.bf16.msra.mxu0 %v1538
        %1561 = vmatprep.subr.bf16.mxu0 0
        %1562 = vmatpush1.bf16.msra.mxu0 %v1537
        %1563 = vmatprep.subr.bf16.mxu0 0
        %1564 = vmatpush1.bf16.msra.mxu0 %v1536
        %1565 = vmatprep.subr.bf16.mxu0 0
        %1566 = vmatpush1.bf16.msra.mxu0 %v1535
        %1567 = vmatprep.subr.bf16.mxu0 0
        %1568 = vmatpush2.bf16.msra.mxu0 0
        %1569 = vmatprep.subr.bf16.mxu0 0
        %1570 = vmatpush2.bf16.msra.mxu0 0
        %1571 = vmatprep.subr.bf16.mxu0 0
        %1572 = vmatpush2.bf16.msra.mxu0 0
        %1573 = vmatprep.subr.bf16.mxu0 0
        %1574 = vmatpush2.bf16.msra.mxu0 0
        %1575 = vmatprep.subr.bf16.mxu0 0
        %1576 = vmatpush2.bf16.msra.mxu0 0
        %1577 = vmatprep.subr.bf16.mxu0 0
        %1578 = vmatpush2.bf16.msra.mxu0 0
        %1579 = vmatprep.subr.bf16.mxu0 0
        %1580 = vmatpush2.bf16.msra.mxu0 0
        %1581 = vmatprep.subr.bf16.mxu0 0
        %1582 = vmatpush2.bf16.msra.mxu0 0
        %1583 = vmatprep.mubr.bf16.mxu0 0
        %1584 = vmatmul.mubr.bf16.gmra.mxu0 %v1471
        %v1585 = vpop.f32.mrf.mxu0
        %v1586 = vadd.f32 0.0, %v1585
        %v1587 = vpop.f32.mrf.mxu0
        %v1588 = vpop.f32.mrf.mxu0
        %v1589 = vadd.f32 0.0, %v1588
        %v1590 = vpop.f32.mrf.mxu0
        %1591 = vmatprep.mubr.bf16.mxu0 0
        %1592 = vmatmul.mubr.bf16.gmra.mxu0 %v1472
        %v1593 = vpop.f32.mrf.mxu0
        %v1594 = vadd.f32 0.0, %v1593
        %v1595 = vpop.f32.mrf.mxu0
        %v1596 = vpop.f32.mrf.mxu0
        %v1597 = vadd.f32 0.0, %v1596
        %v1598 = vpop.f32.mrf.mxu0
        %1599 = vmatprep.mubr.bf16.mxu0 0
        %1600 = vmatmul.mubr.bf16.gmra.mxu0 %v1473
        %v1601 = vpop.f32.mrf.mxu0
        %v1602 = vadd.f32 0.0, %v1601
        %v1603 = vpop.f32.mrf.mxu0
        %v1604 = vpop.f32.mrf.mxu0
        %v1605 = vadd.f32 0.0, %v1604
        %v1606 = vpop.f32.mrf.mxu0
        %1607 = vmatprep.mubr.bf16.mxu0 0
        %1608 = vmatmul.mubr.bf16.gmra.mxu0 %v1474
        %v1609 = vpop.f32.mrf.mxu0
        %v1610 = vadd.f32 0.0, %v1609
        %v1611 = vpop.f32.mrf.mxu0
        %v1612 = vpop.f32.mrf.mxu0
        %v1613 = vadd.f32 0.0, %v1612
        %v1614 = vpop.f32.mrf.mxu0
        %1615 = vmatprep.mubr.bf16.mxu0 0
        %1616 = vmatmul.mubr.bf16.gmra.mxu0 %v1475
        %v1617 = vpop.f32.mrf.mxu0
        %v1618 = vadd.f32 0.0, %v1617
        %v1619 = vpop.f32.mrf.mxu0
        %v1620 = vpop.f32.mrf.mxu0
        %v1621 = vadd.f32 0.0, %v1620
        %v1622 = vpop.f32.mrf.mxu0
        %1623 = vmatprep.mubr.bf16.mxu0 0
        %1624 = vmatmul.mubr.bf16.gmra.mxu0 %v1476
        %v1625 = vpop.f32.mrf.mxu0
        %v1626 = vadd.f32 0.0, %v1625
        %v1627 = vpop.f32.mrf.mxu0
        %v1628 = vpop.f32.mrf.mxu0
        %v1629 = vadd.f32 0.0, %v1628
        %v1630 = vpop.f32.mrf.mxu0
        %1631 = vmatprep.mubr.bf16.mxu0 0
        %1632 = vmatmul.mubr.bf16.gmra.mxu0 %v1477
        %v1633 = vpop.f32.mrf.mxu0
        %v1634 = vadd.f32 0.0, %v1633
        %v1635 = vpop.f32.mrf.mxu0
        %v1636 = vpop.f32.mrf.mxu0
        %v1637 = vadd.f32 0.0, %v1636
        %v1638 = vpop.f32.mrf.mxu0
        %1639 = vmatprep.mubr.bf16.mxu0 0
        %1640 = vmatmul.mubr.bf16.gmra.mxu0 %v1478
        %v1641 = vpop.f32.mrf.mxu0
        %v1642 = vadd.f32 0.0, %v1641
        %v1643 = vpop.f32.mrf.mxu0
        %v1644 = vpop.f32.mrf.mxu0
        %v1645 = vadd.f32 0.0, %v1644
        %v1646 = vpop.f32.mrf.mxu0
        %1647 = vmatprep.mubr.bf16.mxu0 0
        %1648 = vmatmul.mubr.bf16.gmra.mxu0 %v1479
        %v1649 = vpop.f32.mrf.mxu0
        %v1650 = vadd.f32 0.0, %v1649
        %v1651 = vpop.f32.mrf.mxu0
        %v1652 = vpop.f32.mrf.mxu0
        %v1653 = vadd.f32 0.0, %v1652
        %v1654 = vpop.f32.mrf.mxu0
        %1655 = vmatprep.mubr.bf16.mxu0 0
        %1656 = vmatmul.mubr.bf16.gmra.mxu0 %v1480
        %v1657 = vpop.f32.mrf.mxu0
        %v1658 = vadd.f32 0.0, %v1657
        %v1659 = vpop.f32.mrf.mxu0
        %v1660 = vpop.f32.mrf.mxu0
        %v1661 = vadd.f32 0.0, %v1660
        %v1662 = vpop.f32.mrf.mxu0
        %1663 = vmatprep.mubr.bf16.mxu0 0
        %1664 = vmatmul.mubr.bf16.gmra.mxu0 %v1481
        %v1665 = vpop.f32.mrf.mxu0
        %v1666 = vadd.f32 0.0, %v1665
        %v1667 = vpop.f32.mrf.mxu0
        %v1668 = vpop.f32.mrf.mxu0
        %v1669 = vadd.f32 0.0, %v1668
        %v1670 = vpop.f32.mrf.mxu0
        %1671 = vmatprep.mubr.bf16.mxu0 0
        %1672 = vmatmul.mubr.bf16.gmra.mxu0 %v1482
        %v1673 = vpop.f32.mrf.mxu0
        %v1674 = vadd.f32 0.0, %v1673
        %v1675 = vpop.f32.mrf.mxu0
        %v1676 = vpop.f32.mrf.mxu0
        %v1677 = vadd.f32 0.0, %v1676
        %v1678 = vpop.f32.mrf.mxu0
        %1679 = vmatprep.mubr.bf16.mxu0 0
        %1680 = vmatmul.mubr.bf16.gmra.mxu0 %v1483
        %v1681 = vpop.f32.mrf.mxu0
        %v1682 = vadd.f32 0.0, %v1681
        %v1683 = vpop.f32.mrf.mxu0
        %v1684 = vpop.f32.mrf.mxu0
        %v1685 = vadd.f32 0.0, %v1684
        %v1686 = vpop.f32.mrf.mxu0
        %1687 = vmatprep.mubr.bf16.mxu0 0
        %1688 = vmatmul.mubr.bf16.gmra.mxu0 %v1484
        %v1689 = vpop.f32.mrf.mxu0
        %v1690 = vadd.f32 0.0, %v1689
        %v1691 = vpop.f32.mrf.mxu0
        %v1692 = vpop.f32.mrf.mxu0
        %v1693 = vadd.f32 0.0, %v1692
        %v1694 = vpop.f32.mrf.mxu0
        %1695 = vmatprep.mubr.bf16.mxu0 0
        %1696 = vmatmul.mubr.bf16.gmra.mxu0 %v1485
        %v1697 = vpop.f32.mrf.mxu0
        %v1698 = vadd.f32 0.0, %v1697
        %v1699 = vpop.f32.mrf.mxu0
        %v1700 = vpop.f32.mrf.mxu0
        %v1701 = vadd.f32 0.0, %v1700
        %v1702 = vpop.f32.mrf.mxu0
        %1703 = vmatprep.mubr.bf16.mxu0 0
        %1704 = vmatmul.mubr.bf16.gmra.mxu0 %v1486
        %v1705 = vpop.f32.mrf.mxu0
        %v1706 = vadd.f32 0.0, %v1705
        %v1707 = vpop.f32.mrf.mxu0
        %v1708 = vpop.f32.mrf.mxu0
        %v1709 = vadd.f32 0.0, %v1708
        %v1710 = vpop.f32.mrf.mxu0
        %1711 = vdwg.mxu0
        %v1712 = vadd.f32 %v1133, %v1586
        %v1713 = vadd.f32 %v1136, %v1589
        %v1714 = vadd.f32 %v1141, %v1594
        %v1715 = vadd.f32 %v1144, %v1597
        %v1716 = vadd.f32 %v1149, %v1602
        %v1717 = vadd.f32 %v1152, %v1605
        %v1718 = vadd.f32 %v1157, %v1610
        %v1719 = vadd.f32 %v1160, %v1613
        %v1720 = vadd.f32 %v1165, %v1618
        %v1721 = vadd.f32 %v1168, %v1621
        %v1722 = vadd.f32 %v1173, %v1626
        %v1723 = vadd.f32 %v1176, %v1629
        %v1724 = vadd.f32 %v1181, %v1634
        %v1725 = vadd.f32 %v1184, %v1637
        %v1726 = vadd.f32 %v1189, %v1642
        %v1727 = vadd.f32 %v1192, %v1645
        %v1728 = vadd.f32 %v1197, %v1650
        %v1729 = vadd.f32 %v1200, %v1653
        %v1730 = vadd.f32 %v1205, %v1658
        %v1731 = vadd.f32 %v1208, %v1661
        %v1732 = vadd.f32 %v1213, %v1666
        %v1733 = vadd.f32 %v1216, %v1669
        %v1734 = vadd.f32 %v1221, %v1674
        %v1735 = vadd.f32 %v1224, %v1677
        %v1736 = vadd.f32 %v1229, %v1682
        %v1737 = vadd.f32 %v1232, %v1685
        %v1738 = vadd.f32 %v1237, %v1690
        %v1739 = vadd.f32 %v1240, %v1693
        %v1740 = vadd.f32 %v1245, %v1698
        %v1741 = vadd.f32 %v1248, %v1701
        %v1742 = vadd.f32 %v1253, %v1706
        %v1743 = vadd.f32 %v1256, %v1709
        %s1744 = scalar_lea.vmem %s209, 12
        %v1745 = vld [vmem:[%s1744] sm:$0xf]
        %v1746 = vld [vmem:[%s1744 + $0x4] sm:$0xf]
        %v1747 = vld [vmem:[%s1744 + $0xc] sm:$0xf]
        %v1748 = vld [vmem:[%s1744 + $0x10] sm:$0xf]
        %v1749 = vld [vmem:[%s1744 + $0x18] sm:$0xf]
        %v1750 = vld [vmem:[%s1744 + $0x1c] sm:$0xf]
        %v1751 = vld [vmem:[%s1744 + $0x24] sm:$0xf]
        %v1752 = vld [vmem:[%s1744 + $0x28] sm:$0xf]
        %v1753 = vld [vmem:[%s1744 + $0x30] sm:$0xf]
        %v1754 = vld [vmem:[%s1744 + $0x34] sm:$0xf]
        %v1755 = vld [vmem:[%s1744 + $0x3c] sm:$0xf]
        %v1756 = vld [vmem:[%s1744 + $0x40] sm:$0xf]
        %v1757 = vld [vmem:[%s1744 + $0x48] sm:$0xf]
        %v1758 = vld [vmem:[%s1744 + $0x4c] sm:$0xf]
        %v1759 = vld [vmem:[%s1744 + $0x54] sm:$0xf]
        %v1760 = vld [vmem:[%s1744 + $0x58] sm:$0xf]
        %v1761 = vld [vmem:[%s1744 + $0x60] sm:$0xf]
        %v1762 = vld [vmem:[%s1744 + $0x64] sm:$0xf]
        %v1763 = vld [vmem:[%s1744 + $0x6c] sm:$0xf]
        %v1764 = vld [vmem:[%s1744 + $0x70] sm:$0xf]
        %v1765 = vld [vmem:[%s1744 + $0x78] sm:$0xf]
        %v1766 = vld [vmem:[%s1744 + $0x7c] sm:$0xf]
        %v1767 = vld [vmem:[%s1744 + $0x84] sm:$0xf]
        %v1768 = vld [vmem:[%s1744 + $0x88] sm:$0xf]
        %v1769 = vld [vmem:[%s1744 + $0x90] sm:$0xf]
        %v1770 = vld [vmem:[%s1744 + $0x94] sm:$0xf]
        %v1771 = vld [vmem:[%s1744 + $0x9c] sm:$0xf]
        %v1772 = vld [vmem:[%s1744 + $0xa0] sm:$0xf]
        %v1773 = vld [vmem:[%s1744 + $0xa8] sm:$0xf]
        %v1774 = vld [vmem:[%s1744 + $0xac] sm:$0xf]
        %v1775 = vld [vmem:[%s1744 + $0xb4] sm:$0xf]
        %v1776 = vld [vmem:[%s1744 + $0xb8] sm:$0xf]
        %s1777 = scalar_lea.vmem [#allocation3], 192
        %v1778 = vld [vmem:[%s1777] sm:$0xf]
        %v1779 = vld [vmem:[%s1777 + $0x4] sm:$0xf]
        %v1780 = vld [vmem:[%s1777 + $0x8] sm:$0xf]
        %v1781 = vld [vmem:[%s1777 + $0xc] sm:$0xf]
        %v1782 = vld [vmem:[%s1777 + $0x10] sm:$0xf]
        %v1783 = vld [vmem:[%s1777 + $0x14] sm:$0xf]
        %v1784 = vld [vmem:[%s1777 + $0x18] sm:$0xf]
        %v1785 = vld [vmem:[%s1777 + $0x1c] sm:$0xf]
        %v1786 = vld [vmem:[%s1777 + $0x20] sm:$0xf]
        %v1787 = vld [vmem:[%s1777 + $0x24] sm:$0xf]
        %v1788 = vld [vmem:[%s1777 + $0x28] sm:$0xf]
        %v1789 = vld [vmem:[%s1777 + $0x2c] sm:$0xf]
        %v1790 = vld [vmem:[%s1777 + $0x30] sm:$0xf]
        %v1791 = vld [vmem:[%s1777 + $0x34] sm:$0xf]
        %v1792 = vld [vmem:[%s1777 + $0x38] sm:$0xf]
        %v1793 = vld [vmem:[%s1777 + $0x3c] sm:$0xf]
        %v1826 = vunpack.c.l.b16 %v1745
        %v1827 = vunpack.c.l.b16 %v1746
        %v1828 = vunpack.c.l.b16 %v1747
        %v1829 = vunpack.c.l.b16 %v1748
        %v1830 = vunpack.c.l.b16 %v1749
        %v1831 = vunpack.c.l.b16 %v1750
        %v1832 = vunpack.c.l.b16 %v1751
        %v1833 = vunpack.c.l.b16 %v1752
        %v1834 = vunpack.c.l.b16 %v1753
        %v1835 = vunpack.c.l.b16 %v1754
        %v1836 = vunpack.c.l.b16 %v1755
        %v1837 = vunpack.c.l.b16 %v1756
        %v1838 = vunpack.c.l.b16 %v1757
        %v1839 = vunpack.c.l.b16 %v1758
        %v1840 = vunpack.c.l.b16 %v1759
        %v1841 = vunpack.c.l.b16 %v1760
        %v1842 = vunpack.c.l.b16 %v1761
        %v1843 = vunpack.c.l.b16 %v1762
        %v1844 = vunpack.c.l.b16 %v1763
        %v1845 = vunpack.c.l.b16 %v1764
        %v1846 = vunpack.c.l.b16 %v1765
        %v1847 = vunpack.c.l.b16 %v1766
        %v1848 = vunpack.c.l.b16 %v1767
        %v1849 = vunpack.c.l.b16 %v1768
        %v1850 = vunpack.c.l.b16 %v1769
        %v1851 = vunpack.c.l.b16 %v1770
        %v1852 = vunpack.c.l.b16 %v1771
        %v1853 = vunpack.c.l.b16 %v1772
        %v1854 = vunpack.c.l.b16 %v1773
        %v1855 = vunpack.c.l.b16 %v1774
        %v1856 = vunpack.c.l.b16 %v1775
        %v1857 = vunpack.c.l.b16 %v1776
        %v1858 = vpack.c.b16 %v1827, %v1826
        %v1859 = vpack.c.b16 %v1829, %v1828
        %v1860 = vpack.c.b16 %v1831, %v1830
        %v1861 = vpack.c.b16 %v1833, %v1832
        %v1862 = vpack.c.b16 %v1835, %v1834
        %v1863 = vpack.c.b16 %v1837, %v1836
        %v1864 = vpack.c.b16 %v1839, %v1838
        %v1865 = vpack.c.b16 %v1841, %v1840
        %v1866 = vpack.c.b16 %v1843, %v1842
        %v1867 = vpack.c.b16 %v1845, %v1844
        %v1868 = vpack.c.b16 %v1847, %v1846
        %v1869 = vpack.c.b16 %v1849, %v1848
        %v1870 = vpack.c.b16 %v1851, %v1850
        %v1871 = vpack.c.b16 %v1853, %v1852
        %v1872 = vpack.c.b16 %v1855, %v1854
        %v1873 = vpack.c.b16 %v1857, %v1856
        %v1906 = vunpack.c.l.b16 %v1778
        %v1907 = vunpack.c.l.b16 %v1779
        %v1908 = vunpack.c.l.b16 %v1780
        %v1909 = vunpack.c.l.b16 %v1781
        %v1910 = vunpack.c.l.b16 %v1782
        %v1911 = vunpack.c.l.b16 %v1783
        %v1912 = vunpack.c.l.b16 %v1784
        %v1913 = vunpack.c.l.b16 %v1785
        %v1914 = vunpack.c.l.b16 %v1786
        %v1915 = vunpack.c.l.b16 %v1787
        %v1916 = vunpack.c.l.b16 %v1788
        %v1917 = vunpack.c.l.b16 %v1789
        %v1918 = vunpack.c.l.b16 %v1790
        %v1919 = vunpack.c.l.b16 %v1791
        %v1920 = vunpack.c.l.b16 %v1792
        %v1921 = vunpack.c.l.b16 %v1793
        %v1922 = vpack.c.b16 %v1907, %v1906
        %v1923 = vpack.c.b16 %v1909, %v1908
        %v1924 = vpack.c.b16 %v1911, %v1910
        %v1925 = vpack.c.b16 %v1913, %v1912
        %v1926 = vpack.c.b16 %v1915, %v1914
        %v1927 = vpack.c.b16 %v1917, %v1916
        %v1928 = vpack.c.b16 %v1919, %v1918
        %v1929 = vpack.c.b16 %v1921, %v1920
        %1938 = vmatprep.subr.bf16.mxu0 0
        %1939 = vmatpush1.bf16.msra.mxu0 %v1929
        %1940 = vmatprep.subr.bf16.mxu0 0
        %1941 = vmatpush1.bf16.msra.mxu0 %v1928
        %1942 = vmatprep.subr.bf16.mxu0 0
        %1943 = vmatpush1.bf16.msra.mxu0 %v1927
        %1944 = vmatprep.subr.bf16.mxu0 0
        %1945 = vmatpush1.bf16.msra.mxu0 %v1926
        %1946 = vmatprep.subr.bf16.mxu0 0
        %1947 = vmatpush1.bf16.msra.mxu0 %v1925
        %1948 = vmatprep.subr.bf16.mxu0 0
        %1949 = vmatpush1.bf16.msra.mxu0 %v1924
        %1950 = vmatprep.subr.bf16.mxu0 0
        %1951 = vmatpush1.bf16.msra.mxu0 %v1923
        %1952 = vmatprep.subr.bf16.mxu0 0
        %1953 = vmatpush1.bf16.msra.mxu0 %v1922
        %1954 = vmatprep.subr.bf16.mxu0 0
        %1955 = vmatpush2.bf16.msra.mxu0 0
        %1956 = vmatprep.subr.bf16.mxu0 0
        %1957 = vmatpush2.bf16.msra.mxu0 0
        %1958 = vmatprep.subr.bf16.mxu0 0
        %1959 = vmatpush2.bf16.msra.mxu0 0
        %1960 = vmatprep.subr.bf16.mxu0 0
        %1961 = vmatpush2.bf16.msra.mxu0 0
        %1962 = vmatprep.subr.bf16.mxu0 0
        %1963 = vmatpush2.bf16.msra.mxu0 0
        %1964 = vmatprep.subr.bf16.mxu0 0
        %1965 = vmatpush2.bf16.msra.mxu0 0
        %1966 = vmatprep.subr.bf16.mxu0 0
        %1967 = vmatpush2.bf16.msra.mxu0 0
        %1968 = vmatprep.subr.bf16.mxu0 0
        %1969 = vmatpush2.bf16.msra.mxu0 0
        %1970 = vmatprep.mubr.bf16.mxu0 0
        %1971 = vmatmul.mubr.bf16.gmra.mxu0 %v1858
        %v1972 = vpop.f32.mrf.mxu0
        %v1973 = vadd.f32 0.0, %v1972
        %v1974 = vpop.f32.mrf.mxu0
        %v1975 = vpop.f32.mrf.mxu0
        %v1976 = vadd.f32 0.0, %v1975
        %v1977 = vpop.f32.mrf.mxu0
        %1978 = vmatprep.mubr.bf16.mxu0 0
        %1979 = vmatmul.mubr.bf16.gmra.mxu0 %v1859
        %v1980 = vpop.f32.mrf.mxu0
        %v1981 = vadd.f32 0.0, %v1980
        %v1982 = vpop.f32.mrf.mxu0
        %v1983 = vpop.f32.mrf.mxu0
        %v1984 = vadd.f32 0.0, %v1983
        %v1985 = vpop.f32.mrf.mxu0
        %1986 = vmatprep.mubr.bf16.mxu0 0
        %1987 = vmatmul.mubr.bf16.gmra.mxu0 %v1860
        %v1988 = vpop.f32.mrf.mxu0
        %v1989 = vadd.f32 0.0, %v1988
        %v1990 = vpop.f32.mrf.mxu0
        %v1991 = vpop.f32.mrf.mxu0
        %v1992 = vadd.f32 0.0, %v1991
        %v1993 = vpop.f32.mrf.mxu0
        %1994 = vmatprep.mubr.bf16.mxu0 0
        %1995 = vmatmul.mubr.bf16.gmra.mxu0 %v1861
        %v1996 = vpop.f32.mrf.mxu0
        %v1997 = vadd.f32 0.0, %v1996
        %v1998 = vpop.f32.mrf.mxu0
        %v1999 = vpop.f32.mrf.mxu0
        %v2000 = vadd.f32 0.0, %v1999
        %v2001 = vpop.f32.mrf.mxu0
        %2002 = vmatprep.mubr.bf16.mxu0 0
        %2003 = vmatmul.mubr.bf16.gmra.mxu0 %v1862
        %v2004 = vpop.f32.mrf.mxu0
        %v2005 = vadd.f32 0.0, %v2004
        %v2006 = vpop.f32.mrf.mxu0
        %v2007 = vpop.f32.mrf.mxu0
        %v2008 = vadd.f32 0.0, %v2007
        %v2009 = vpop.f32.mrf.mxu0
        %2010 = vmatprep.mubr.bf16.mxu0 0
        %2011 = vmatmul.mubr.bf16.gmra.mxu0 %v1863
        %v2012 = vpop.f32.mrf.mxu0
        %v2013 = vadd.f32 0.0, %v2012
        %v2014 = vpop.f32.mrf.mxu0
        %v2015 = vpop.f32.mrf.mxu0
        %v2016 = vadd.f32 0.0, %v2015
        %v2017 = vpop.f32.mrf.mxu0
        %2018 = vmatprep.mubr.bf16.mxu0 0
        %2019 = vmatmul.mubr.bf16.gmra.mxu0 %v1864
        %v2020 = vpop.f32.mrf.mxu0
        %v2021 = vadd.f32 0.0, %v2020
        %v2022 = vpop.f32.mrf.mxu0
        %v2023 = vpop.f32.mrf.mxu0
        %v2024 = vadd.f32 0.0, %v2023
        %v2025 = vpop.f32.mrf.mxu0
        %2026 = vmatprep.mubr.bf16.mxu0 0
        %2027 = vmatmul.mubr.bf16.gmra.mxu0 %v1865
        %v2028 = vpop.f32.mrf.mxu0
        %v2029 = vadd.f32 0.0, %v2028
        %v2030 = vpop.f32.mrf.mxu0
        %v2031 = vpop.f32.mrf.mxu0
        %v2032 = vadd.f32 0.0, %v2031
        %v2033 = vpop.f32.mrf.mxu0
        %2034 = vmatprep.mubr.bf16.mxu0 0
        %2035 = vmatmul.mubr.bf16.gmra.mxu0 %v1866
        %v2036 = vpop.f32.mrf.mxu0
        %v2037 = vadd.f32 0.0, %v2036
        %v2038 = vpop.f32.mrf.mxu0
        %v2039 = vpop.f32.mrf.mxu0
        %v2040 = vadd.f32 0.0, %v2039
        %v2041 = vpop.f32.mrf.mxu0
        %2042 = vmatprep.mubr.bf16.mxu0 0
        %2043 = vmatmul.mubr.bf16.gmra.mxu0 %v1867
        %v2044 = vpop.f32.mrf.mxu0
        %v2045 = vadd.f32 0.0, %v2044
        %v2046 = vpop.f32.mrf.mxu0
        %v2047 = vpop.f32.mrf.mxu0
        %v2048 = vadd.f32 0.0, %v2047
        %v2049 = vpop.f32.mrf.mxu0
        %2050 = vmatprep.mubr.bf16.mxu0 0
        %2051 = vmatmul.mubr.bf16.gmra.mxu0 %v1868
        %v2052 = vpop.f32.mrf.mxu0
        %v2053 = vadd.f32 0.0, %v2052
        %v2054 = vpop.f32.mrf.mxu0
        %v2055 = vpop.f32.mrf.mxu0
        %v2056 = vadd.f32 0.0, %v2055
        %v2057 = vpop.f32.mrf.mxu0
        %2058 = vmatprep.mubr.bf16.mxu0 0
        %2059 = vmatmul.mubr.bf16.gmra.mxu0 %v1869
        %v2060 = vpop.f32.mrf.mxu0
        %v2061 = vadd.f32 0.0, %v2060
        %v2062 = vpop.f32.mrf.mxu0
        %v2063 = vpop.f32.mrf.mxu0
        %v2064 = vadd.f32 0.0, %v2063
        %v2065 = vpop.f32.mrf.mxu0
        %2066 = vmatprep.mubr.bf16.mxu0 0
        %2067 = vmatmul.mubr.bf16.gmra.mxu0 %v1870
        %v2068 = vpop.f32.mrf.mxu0
        %v2069 = vadd.f32 0.0, %v2068
        %v2070 = vpop.f32.mrf.mxu0
        %v2071 = vpop.f32.mrf.mxu0
        %v2072 = vadd.f32 0.0, %v2071
        %v2073 = vpop.f32.mrf.mxu0
        %2074 = vmatprep.mubr.bf16.mxu0 0
        %2075 = vmatmul.mubr.bf16.gmra.mxu0 %v1871
        %v2076 = vpop.f32.mrf.mxu0
        %v2077 = vadd.f32 0.0, %v2076
        %v2078 = vpop.f32.mrf.mxu0
        %v2079 = vpop.f32.mrf.mxu0
        %v2080 = vadd.f32 0.0, %v2079
        %v2081 = vpop.f32.mrf.mxu0
        %2082 = vmatprep.mubr.bf16.mxu0 0
        %2083 = vmatmul.mubr.bf16.gmra.mxu0 %v1872
        %v2084 = vpop.f32.mrf.mxu0
        %v2085 = vadd.f32 0.0, %v2084
        %v2086 = vpop.f32.mrf.mxu0
        %v2087 = vpop.f32.mrf.mxu0
        %v2088 = vadd.f32 0.0, %v2087
        %v2089 = vpop.f32.mrf.mxu0
        %2090 = vmatprep.mubr.bf16.mxu0 0
        %2091 = vmatmul.mubr.bf16.gmra.mxu0 %v1873
        %v2092 = vpop.f32.mrf.mxu0
        %v2093 = vadd.f32 0.0, %v2092
        %v2094 = vpop.f32.mrf.mxu0
        %v2095 = vpop.f32.mrf.mxu0
        %v2096 = vadd.f32 0.0, %v2095
        %v2097 = vpop.f32.mrf.mxu0
        %2098 = vdwg.mxu0
        %v2099 = vadd.f32 %v1712, %v1973
        %v2100 = vadd.f32 %v1713, %v1976
        %v2101 = vadd.f32 %v1714, %v1981
        %v2102 = vadd.f32 %v1715, %v1984
        %v2103 = vadd.f32 %v1716, %v1989
        %v2104 = vadd.f32 %v1717, %v1992
        %v2105 = vadd.f32 %v1718, %v1997
        %v2106 = vadd.f32 %v1719, %v2000
        %v2107 = vadd.f32 %v1720, %v2005
        %v2108 = vadd.f32 %v1721, %v2008
        %v2109 = vadd.f32 %v1722, %v2013
        %v2110 = vadd.f32 %v1723, %v2016
        %v2111 = vadd.f32 %v1724, %v2021
        %v2112 = vadd.f32 %v1725, %v2024
        %v2113 = vadd.f32 %v1726, %v2029
        %v2114 = vadd.f32 %v1727, %v2032
        %v2115 = vadd.f32 %v1728, %v2037
        %v2116 = vadd.f32 %v1729, %v2040
        %v2117 = vadd.f32 %v1730, %v2045
        %v2118 = vadd.f32 %v1731, %v2048
        %v2119 = vadd.f32 %v1732, %v2053
        %v2120 = vadd.f32 %v1733, %v2056
        %v2121 = vadd.f32 %v1734, %v2061
        %v2122 = vadd.f32 %v1735, %v2064
        %v2123 = vadd.f32 %v1736, %v2069
        %v2124 = vadd.f32 %v1737, %v2072
        %v2125 = vadd.f32 %v1738, %v2077
        %v2126 = vadd.f32 %v1739, %v2080
        %v2127 = vadd.f32 %v1740, %v2085
        %v2128 = vadd.f32 %v1741, %v2088
        %v2129 = vadd.f32 %v1742, %v2093
        %v2130 = vadd.f32 %v1743, %v2096
        %v2131 = vld [vmem:[%s1744] sm:$0xf]
        %v2132 = vld [vmem:[%s1744 + $0x4] sm:$0xf]
        %v2133 = vld [vmem:[%s1744 + $0x8] sm:$0x1]
        %v2134 = vld [vmem:[%s1744 + $0xc] sm:$0xf]
        %v2135 = vld [vmem:[%s1744 + $0x10] sm:$0xf]
        %v2136 = vld [vmem:[%s1744 + $0x14] sm:$0x1]
        %v2137 = vld [vmem:[%s1744 + $0x18] sm:$0xf]
        %v2138 = vld [vmem:[%s1744 + $0x1c] sm:$0xf]
        %v2139 = vld [vmem:[%s1744 + $0x20] sm:$0x1]
        %v2140 = vld [vmem:[%s1744 + $0x24] sm:$0xf]
        %v2141 = vld [vmem:[%s1744 + $0x28] sm:$0xf]
        %v2142 = vld [vmem:[%s1744 + $0x2c] sm:$0x1]
        %v2143 = vld [vmem:[%s1744 + $0x30] sm:$0xf]
        %v2144 = vld [vmem:[%s1744 + $0x34] sm:$0xf]
        %v2145 = vld [vmem:[%s1744 + $0x38] sm:$0x1]
        %v2146 = vld [vmem:[%s1744 + $0x3c] sm:$0xf]
        %v2147 = vld [vmem:[%s1744 + $0x40] sm:$0xf]
        %v2148 = vld [vmem:[%s1744 + $0x44] sm:$0x1]
        %v2149 = vld [vmem:[%s1744 + $0x48] sm:$0xf]
        %v2150 = vld [vmem:[%s1744 + $0x4c] sm:$0xf]
        %v2151 = vld [vmem:[%s1744 + $0x50] sm:$0x1]
        %v2152 = vld [vmem:[%s1744 + $0x54] sm:$0xf]
        %v2153 = vld [vmem:[%s1744 + $0x58] sm:$0xf]
        %v2154 = vld [vmem:[%s1744 + $0x5c] sm:$0x1]
        %v2155 = vld [vmem:[%s1744 + $0x60] sm:$0xf]
        %v2156 = vld [vmem:[%s1744 + $0x64] sm:$0xf]
        %v2157 = vld [vmem:[%s1744 + $0x68] sm:$0x1]
        %v2158 = vld [vmem:[%s1744 + $0x6c] sm:$0xf]
        %v2159 = vld [vmem:[%s1744 + $0x70] sm:$0xf]
        %v2160 = vld [vmem:[%s1744 + $0x74] sm:$0x1]
        %v2161 = vld [vmem:[%s1744 + $0x78] sm:$0xf]
        %v2162 = vld [vmem:[%s1744 + $0x7c] sm:$0xf]
        %v2163 = vld [vmem:[%s1744 + $0x80] sm:$0x1]
        %v2164 = vld [vmem:[%s1744 + $0x84] sm:$0xf]
        %v2165 = vld [vmem:[%s1744 + $0x88] sm:$0xf]
        %v2166 = vld [vmem:[%s1744 + $0x8c] sm:$0x1]
        %v2167 = vld [vmem:[%s1744 + $0x90] sm:$0xf]
        %v2168 = vld [vmem:[%s1744 + $0x94] sm:$0xf]
        %v2169 = vld [vmem:[%s1744 + $0x98] sm:$0x1]
        %v2170 = vld [vmem:[%s1744 + $0x9c] sm:$0xf]
        %v2171 = vld [vmem:[%s1744 + $0xa0] sm:$0xf]
        %v2172 = vld [vmem:[%s1744 + $0xa4] sm:$0x1]
        %v2173 = vld [vmem:[%s1744 + $0xa8] sm:$0xf]
        %v2174 = vld [vmem:[%s1744 + $0xac] sm:$0xf]
        %v2175 = vld [vmem:[%s1744 + $0xb0] sm:$0x1]
        %v2176 = vld [vmem:[%s1744 + $0xb4] sm:$0xf]
        %v2177 = vld [vmem:[%s1744 + $0xb8] sm:$0xf]
        %v2178 = vld [vmem:[%s1744 + $0xbc] sm:$0x1]
        %v2180 = vshrl.u32 %v2131, 16
        %v2182 = vrot.slane %v2180, 4
        %v2183 = vshll.u32 %v2131, 16
        %v2185 = vrot.slane %v2183, 5
        %v2186 = vor.u32 %v2182, %v2185
        %v2187 = vrot.slane %v2186, 4
        %v2189 = vshll.u32 %v2132, 16
        %v2191 = vrot.slane %v2189, 5
        %v2192 = vsel %vm279, %v2187, %v2191
        %v2193 = vshrl.u32 %v2132, 16
        %v2195 = vrot.slane %v2193, 4
        %v2196 = vor.u32 %v2195, %v2191
        %v2197 = vrot.slane %v2196, 4
        %v2199 = vshll.u32 %v2133, 16
        %v2201 = vrot.slane %v2199, 5
        %v2202 = vsel %vm279, %v2197, %v2201
        %v2204 = vshrl.u32 %v2134, 16
        %v2206 = vrot.slane %v2204, 4
        %v2207 = vshll.u32 %v2134, 16
        %v2209 = vrot.slane %v2207, 5
        %v2210 = vor.u32 %v2206, %v2209
        %v2211 = vrot.slane %v2210, 4
        %v2213 = vshll.u32 %v2135, 16
        %v2215 = vrot.slane %v2213, 5
        %v2216 = vsel %vm279, %v2211, %v2215
        %v2217 = vshrl.u32 %v2135, 16
        %v2219 = vrot.slane %v2217, 4
        %v2220 = vor.u32 %v2219, %v2215
        %v2221 = vrot.slane %v2220, 4
        %v2223 = vshll.u32 %v2136, 16
        %v2225 = vrot.slane %v2223, 5
        %v2226 = vsel %vm279, %v2221, %v2225
        %v2228 = vshrl.u32 %v2137, 16
        %v2230 = vrot.slane %v2228, 4
        %v2231 = vshll.u32 %v2137, 16
        %v2233 = vrot.slane %v2231, 5
        %v2234 = vor.u32 %v2230, %v2233
        %v2235 = vrot.slane %v2234, 4
        %v2237 = vshll.u32 %v2138, 16
        %v2239 = vrot.slane %v2237, 5
        %v2240 = vsel %vm279, %v2235, %v2239
        %v2241 = vshrl.u32 %v2138, 16
        %v2243 = vrot.slane %v2241, 4
        %v2244 = vor.u32 %v2243, %v2239
        %v2245 = vrot.slane %v2244, 4
        %v2247 = vshll.u32 %v2139, 16
        %v2249 = vrot.slane %v2247, 5
        %v2250 = vsel %vm279, %v2245, %v2249
        %v2252 = vshrl.u32 %v2140, 16
        %v2254 = vrot.slane %v2252, 4
        %v2255 = vshll.u32 %v2140, 16
        %v2257 = vrot.slane %v2255, 5
        %v2258 = vor.u32 %v2254, %v2257
        %v2259 = vrot.slane %v2258, 4
        %v2261 = vshll.u32 %v2141, 16
        %v2263 = vrot.slane %v2261, 5
        %v2264 = vsel %vm279, %v2259, %v2263
        %v2265 = vshrl.u32 %v2141, 16
        %v2267 = vrot.slane %v2265, 4
        %v2268 = vor.u32 %v2267, %v2263
        %v2269 = vrot.slane %v2268, 4
        %v2271 = vshll.u32 %v2142, 16
        %v2273 = vrot.slane %v2271, 5
        %v2274 = vsel %vm279, %v2269, %v2273
        %v2276 = vshrl.u32 %v2143, 16
        %v2278 = vrot.slane %v2276, 4
        %v2279 = vshll.u32 %v2143, 16
        %v2281 = vrot.slane %v2279, 5
        %v2282 = vor.u32 %v2278, %v2281
        %v2283 = vrot.slane %v2282, 4
        %v2285 = vshll.u32 %v2144, 16
        %v2287 = vrot.slane %v2285, 5
        %v2288 = vsel %vm279, %v2283, %v2287
        %v2289 = vshrl.u32 %v2144, 16
        %v2291 = vrot.slane %v2289, 4
        %v2292 = vor.u32 %v2291, %v2287
        %v2293 = vrot.slane %v2292, 4
        %v2295 = vshll.u32 %v2145, 16
        %v2297 = vrot.slane %v2295, 5
        %v2298 = vsel %vm279, %v2293, %v2297
        %v2300 = vshrl.u32 %v2146, 16
        %v2302 = vrot.slane %v2300, 4
        %v2303 = vshll.u32 %v2146, 16
        %v2305 = vrot.slane %v2303, 5
        %v2306 = vor.u32 %v2302, %v2305
        %v2307 = vrot.slane %v2306, 4
        %v2309 = vshll.u32 %v2147, 16
        %v2311 = vrot.slane %v2309, 5
        %v2312 = vsel %vm279, %v2307, %v2311
        %v2313 = vshrl.u32 %v2147, 16
        %v2315 = vrot.slane %v2313, 4
        %v2316 = vor.u32 %v2315, %v2311
        %v2317 = vrot.slane %v2316, 4
        %v2319 = vshll.u32 %v2148, 16
        %v2321 = vrot.slane %v2319, 5
        %v2322 = vsel %vm279, %v2317, %v2321
        %v2324 = vshrl.u32 %v2149, 16
        %v2326 = vrot.slane %v2324, 4
        %v2327 = vshll.u32 %v2149, 16
        %v2329 = vrot.slane %v2327, 5
        %v2330 = vor.u32 %v2326, %v2329
        %v2331 = vrot.slane %v2330, 4
        %v2333 = vshll.u32 %v2150, 16
        %v2335 = vrot.slane %v2333, 5
        %v2336 = vsel %vm279, %v2331, %v2335
        %v2337 = vshrl.u32 %v2150, 16
        %v2339 = vrot.slane %v2337, 4
        %v2340 = vor.u32 %v2339, %v2335
        %v2341 = vrot.slane %v2340, 4
        %v2343 = vshll.u32 %v2151, 16
        %v2345 = vrot.slane %v2343, 5
        %v2346 = vsel %vm279, %v2341, %v2345
        %v2348 = vshrl.u32 %v2152, 16
        %v2350 = vrot.slane %v2348, 4
        %v2351 = vshll.u32 %v2152, 16
        %v2353 = vrot.slane %v2351, 5
        %v2354 = vor.u32 %v2350, %v2353
        %v2355 = vrot.slane %v2354, 4
        %v2357 = vshll.u32 %v2153, 16
        %v2359 = vrot.slane %v2357, 5
        %v2360 = vsel %vm279, %v2355, %v2359
        %v2361 = vshrl.u32 %v2153, 16
        %v2363 = vrot.slane %v2361, 4
        %v2364 = vor.u32 %v2363, %v2359
        %v2365 = vrot.slane %v2364, 4
        %v2367 = vshll.u32 %v2154, 16
        %v2369 = vrot.slane %v2367, 5
        %v2370 = vsel %vm279, %v2365, %v2369
        %v2372 = vshrl.u32 %v2155, 16
        %v2374 = vrot.slane %v2372, 4
        %v2375 = vshll.u32 %v2155, 16
        %v2377 = vrot.slane %v2375, 5
        %v2378 = vor.u32 %v2374, %v2377
        %v2379 = vrot.slane %v2378, 4
        %v2381 = vshll.u32 %v2156, 16
        %v2383 = vrot.slane %v2381, 5
        %v2384 = vsel %vm279, %v2379, %v2383
        %v2385 = vshrl.u32 %v2156, 16
        %v2387 = vrot.slane %v2385, 4
        %v2388 = vor.u32 %v2387, %v2383
        %v2389 = vrot.slane %v2388, 4
        %v2391 = vshll.u32 %v2157, 16
        %v2393 = vrot.slane %v2391, 5
        %v2394 = vsel %vm279, %v2389, %v2393
        %v2396 = vshrl.u32 %v2158, 16
        %v2398 = vrot.slane %v2396, 4
        %v2399 = vshll.u32 %v2158, 16
        %v2401 = vrot.slane %v2399, 5
        %v2402 = vor.u32 %v2398, %v2401
        %v2403 = vrot.slane %v2402, 4
        %v2405 = vshll.u32 %v2159, 16
        %v2407 = vrot.slane %v2405, 5
        %v2408 = vsel %vm279, %v2403, %v2407
        %v2409 = vshrl.u32 %v2159, 16
        %v2411 = vrot.slane %v2409, 4
        %v2412 = vor.u32 %v2411, %v2407
        %v2413 = vrot.slane %v2412, 4
        %v2415 = vshll.u32 %v2160, 16
        %v2417 = vrot.slane %v2415, 5
        %v2418 = vsel %vm279, %v2413, %v2417
        %v2420 = vshrl.u32 %v2161, 16
        %v2422 = vrot.slane %v2420, 4
        %v2423 = vshll.u32 %v2161, 16
        %v2425 = vrot.slane %v2423, 5
        %v2426 = vor.u32 %v2422, %v2425
        %v2427 = vrot.slane %v2426, 4
        %v2429 = vshll.u32 %v2162, 16
        %v2431 = vrot.slane %v2429, 5
        %v2432 = vsel %vm279, %v2427, %v2431
        %v2433 = vshrl.u32 %v2162, 16
        %v2435 = vrot.slane %v2433, 4
        %v2436 = vor.u32 %v2435, %v2431
        %v2437 = vrot.slane %v2436, 4
        %v2439 = vshll.u32 %v2163, 16
        %v2441 = vrot.slane %v2439, 5
        %v2442 = vsel %vm279, %v2437, %v2441
        %v2444 = vshrl.u32 %v2164, 16
        %v2446 = vrot.slane %v2444, 4
        %v2447 = vshll.u32 %v2164, 16
        %v2449 = vrot.slane %v2447, 5
        %v2450 = vor.u32 %v2446, %v2449
        %v2451 = vrot.slane %v2450, 4
        %v2453 = vshll.u32 %v2165, 16
        %v2455 = vrot.slane %v2453, 5
        %v2456 = vsel %vm279, %v2451, %v2455
        %v2457 = vshrl.u32 %v2165, 16
        %v2459 = vrot.slane %v2457, 4
        %v2460 = vor.u32 %v2459, %v2455
        %v2461 = vrot.slane %v2460, 4
        %v2463 = vshll.u32 %v2166, 16
        %v2465 = vrot.slane %v2463, 5
        %v2466 = vsel %vm279, %v2461, %v2465
        %v2468 = vshrl.u32 %v2167, 16
        %v2470 = vrot.slane %v2468, 4
        %v2471 = vshll.u32 %v2167, 16
        %v2473 = vrot.slane %v2471, 5
        %v2474 = vor.u32 %v2470, %v2473
        %v2475 = vrot.slane %v2474, 4
        %v2477 = vshll.u32 %v2168, 16
        %v2479 = vrot.slane %v2477, 5
        %v2480 = vsel %vm279, %v2475, %v2479
        %v2481 = vshrl.u32 %v2168, 16
        %v2483 = vrot.slane %v2481, 4
        %v2484 = vor.u32 %v2483, %v2479
        %v2485 = vrot.slane %v2484, 4
        %v2487 = vshll.u32 %v2169, 16
        %v2489 = vrot.slane %v2487, 5
        %v2490 = vsel %vm279, %v2485, %v2489
        %v2492 = vshrl.u32 %v2170, 16
        %v2494 = vrot.slane %v2492, 4
        %v2495 = vshll.u32 %v2170, 16
        %v2497 = vrot.slane %v2495, 5
        %v2498 = vor.u32 %v2494, %v2497
        %v2499 = vrot.slane %v2498, 4
        %v2501 = vshll.u32 %v2171, 16
        %v2503 = vrot.slane %v2501, 5
        %v2504 = vsel %vm279, %v2499, %v2503
        %v2505 = vshrl.u32 %v2171, 16
        %v2507 = vrot.slane %v2505, 4
        %v2508 = vor.u32 %v2507, %v2503
        %v2509 = vrot.slane %v2508, 4
        %v2511 = vshll.u32 %v2172, 16
        %v2513 = vrot.slane %v2511, 5
        %v2514 = vsel %vm279, %v2509, %v2513
        %v2516 = vshrl.u32 %v2173, 16
        %v2518 = vrot.slane %v2516, 4
        %v2519 = vshll.u32 %v2173, 16
        %v2521 = vrot.slane %v2519, 5
        %v2522 = vor.u32 %v2518, %v2521
        %v2523 = vrot.slane %v2522, 4
        %v2525 = vshll.u32 %v2174, 16
        %v2527 = vrot.slane %v2525, 5
        %v2528 = vsel %vm279, %v2523, %v2527
        %v2529 = vshrl.u32 %v2174, 16
        %v2531 = vrot.slane %v2529, 4
        %v2532 = vor.u32 %v2531, %v2527
        %v2533 = vrot.slane %v2532, 4
        %v2535 = vshll.u32 %v2175, 16
        %v2537 = vrot.slane %v2535, 5
        %v2538 = vsel %vm279, %v2533, %v2537
        %v2540 = vshrl.u32 %v2176, 16
        %v2542 = vrot.slane %v2540, 4
        %v2543 = vshll.u32 %v2176, 16
        %v2545 = vrot.slane %v2543, 5
        %v2546 = vor.u32 %v2542, %v2545
        %v2547 = vrot.slane %v2546, 4
        %v2549 = vshll.u32 %v2177, 16
        %v2551 = vrot.slane %v2549, 5
        %v2552 = vsel %vm279, %v2547, %v2551
        %v2553 = vshrl.u32 %v2177, 16
        %v2555 = vrot.slane %v2553, 4
        %v2556 = vor.u32 %v2555, %v2551
        %v2557 = vrot.slane %v2556, 4
        %v2559 = vshll.u32 %v2178, 16
        %v2561 = vrot.slane %v2559, 5
        %v2562 = vsel %vm279, %v2557, %v2561
        %s2563 = scalar_lea.vmem [#allocation3], 256
        %v2564 = vld [vmem:[%s2563] sm:$0xf]
        %v2565 = vld [vmem:[%s2563 + $0x4] sm:$0xf]
        %v2566 = vld [vmem:[%s2563 + $0x8] sm:$0xf]
        %v2567 = vld [vmem:[%s2563 + $0xc] sm:$0xf]
        %v2568 = vld [vmem:[%s2563 + $0x10] sm:$0xf]
        %v2569 = vld [vmem:[%s2563 + $0x14] sm:$0xf]
        %v2570 = vld [vmem:[%s2563 + $0x18] sm:$0xf]
        %v2571 = vld [vmem:[%s2563 + $0x1c] sm:$0xf]
        %v2572 = vld [vmem:[%s2563 + $0x20] sm:$0xf]
        %v2573 = vld [vmem:[%s2563 + $0x24] sm:$0xf]
        %v2574 = vld [vmem:[%s2563 + $0x28] sm:$0xf]
        %v2575 = vld [vmem:[%s2563 + $0x2c] sm:$0xf]
        %v2576 = vld [vmem:[%s2563 + $0x30] sm:$0xf]
        %v2577 = vld [vmem:[%s2563 + $0x34] sm:$0xf]
        %v2578 = vld [vmem:[%s2563 + $0x38] sm:$0xf]
        %v2579 = vld [vmem:[%s2563 + $0x3c] sm:$0xf]
        %v2580 = vunpack.c.l.b16 %v2192
        %v2581 = vunpack.c.l.b16 %v2202
        %v2582 = vunpack.c.l.b16 %v2216
        %v2583 = vunpack.c.l.b16 %v2226
        %v2584 = vunpack.c.l.b16 %v2240
        %v2585 = vunpack.c.l.b16 %v2250
        %v2586 = vunpack.c.l.b16 %v2264
        %v2587 = vunpack.c.l.b16 %v2274
        %v2588 = vunpack.c.l.b16 %v2288
        %v2589 = vunpack.c.l.b16 %v2298
        %v2590 = vunpack.c.l.b16 %v2312
        %v2591 = vunpack.c.l.b16 %v2322
        %v2592 = vunpack.c.l.b16 %v2336
        %v2593 = vunpack.c.l.b16 %v2346
        %v2594 = vunpack.c.l.b16 %v2360
        %v2595 = vunpack.c.l.b16 %v2370
        %v2596 = vunpack.c.l.b16 %v2384
        %v2597 = vunpack.c.l.b16 %v2394
        %v2598 = vunpack.c.l.b16 %v2408
        %v2599 = vunpack.c.l.b16 %v2418
        %v2600 = vunpack.c.l.b16 %v2432
        %v2601 = vunpack.c.l.b16 %v2442
        %v2602 = vunpack.c.l.b16 %v2456
        %v2603 = vunpack.c.l.b16 %v2466
        %v2604 = vunpack.c.l.b16 %v2480
        %v2605 = vunpack.c.l.b16 %v2490
        %v2606 = vunpack.c.l.b16 %v2504
        %v2607 = vunpack.c.l.b16 %v2514
        %v2608 = vunpack.c.l.b16 %v2528
        %v2609 = vunpack.c.l.b16 %v2538
        %v2610 = vunpack.c.l.b16 %v2552
        %v2611 = vunpack.c.l.b16 %v2562
        %v2612 = vpack.c.b16 %v2581, %v2580
        %v2613 = vpack.c.b16 %v2583, %v2582
        %v2614 = vpack.c.b16 %v2585, %v2584
        %v2615 = vpack.c.b16 %v2587, %v2586
        %v2616 = vpack.c.b16 %v2589, %v2588
        %v2617 = vpack.c.b16 %v2591, %v2590
        %v2618 = vpack.c.b16 %v2593, %v2592
        %v2619 = vpack.c.b16 %v2595, %v2594
        %v2620 = vpack.c.b16 %v2597, %v2596
        %v2621 = vpack.c.b16 %v2599, %v2598
        %v2622 = vpack.c.b16 %v2601, %v2600
        %v2623 = vpack.c.b16 %v2603, %v2602
        %v2624 = vpack.c.b16 %v2605, %v2604
        %v2625 = vpack.c.b16 %v2607, %v2606
        %v2626 = vpack.c.b16 %v2609, %v2608
        %v2627 = vpack.c.b16 %v2611, %v2610
        %v2660 = vunpack.c.l.b16 %v2564
        %v2661 = vunpack.c.l.b16 %v2565
        %v2662 = vunpack.c.l.b16 %v2566
        %v2663 = vunpack.c.l.b16 %v2567
        %v2664 = vunpack.c.l.b16 %v2568
        %v2665 = vunpack.c.l.b16 %v2569
        %v2666 = vunpack.c.l.b16 %v2570
        %v2667 = vunpack.c.l.b16 %v2571
        %v2668 = vunpack.c.l.b16 %v2572
        %v2669 = vunpack.c.l.b16 %v2573
        %v2670 = vunpack.c.l.b16 %v2574
        %v2671 = vunpack.c.l.b16 %v2575
        %v2672 = vunpack.c.l.b16 %v2576
        %v2673 = vunpack.c.l.b16 %v2577
        %v2674 = vunpack.c.l.b16 %v2578
        %v2675 = vunpack.c.l.b16 %v2579
        %v2676 = vpack.c.b16 %v2661, %v2660
        %v2677 = vpack.c.b16 %v2663, %v2662
        %v2678 = vpack.c.b16 %v2665, %v2664
        %v2679 = vpack.c.b16 %v2667, %v2666
        %v2680 = vpack.c.b16 %v2669, %v2668
        %v2681 = vpack.c.b16 %v2671, %v2670
        %v2682 = vpack.c.b16 %v2673, %v2672
        %v2683 = vpack.c.b16 %v2675, %v2674
        %2692 = vmatprep.subr.bf16.mxu0 0
        %2693 = vmatpush1.bf16.msra.mxu0 %v2683
        %2694 = vmatprep.subr.bf16.mxu0 0
        %2695 = vmatpush1.bf16.msra.mxu0 %v2682
        %2696 = vmatprep.subr.bf16.mxu0 0
        %2697 = vmatpush1.bf16.msra.mxu0 %v2681
        %2698 = vmatprep.subr.bf16.mxu0 0
        %2699 = vmatpush1.bf16.msra.mxu0 %v2680
        %2700 = vmatprep.subr.bf16.mxu0 0
        %2701 = vmatpush1.bf16.msra.mxu0 %v2679
        %2702 = vmatprep.subr.bf16.mxu0 0
        %2703 = vmatpush1.bf16.msra.mxu0 %v2678
        %2704 = vmatprep.subr.bf16.mxu0 0
        %2705 = vmatpush1.bf16.msra.mxu0 %v2677
        %2706 = vmatprep.subr.bf16.mxu0 0
        %2707 = vmatpush1.bf16.msra.mxu0 %v2676
        %2708 = vmatprep.subr.bf16.mxu0 0
        %2709 = vmatpush2.bf16.msra.mxu0 0
        %2710 = vmatprep.subr.bf16.mxu0 0
        %2711 = vmatpush2.bf16.msra.mxu0 0
        %2712 = vmatprep.subr.bf16.mxu0 0
        %2713 = vmatpush2.bf16.msra.mxu0 0
        %2714 = vmatprep.subr.bf16.mxu0 0
        %2715 = vmatpush2.bf16.msra.mxu0 0
        %2716 = vmatprep.subr.bf16.mxu0 0
        %2717 = vmatpush2.bf16.msra.mxu0 0
        %2718 = vmatprep.subr.bf16.mxu0 0
        %2719 = vmatpush2.bf16.msra.mxu0 0
        %2720 = vmatprep.subr.bf16.mxu0 0
        %2721 = vmatpush2.bf16.msra.mxu0 0
        %2722 = vmatprep.subr.bf16.mxu0 0
        %2723 = vmatpush2.bf16.msra.mxu0 0
        %2724 = vmatprep.mubr.bf16.mxu0 0
        %2725 = vmatmul.mubr.bf16.gmra.mxu0 %v2612
        %v2726 = vpop.f32.mrf.mxu0
        %v2727 = vadd.f32 0.0, %v2726
        %v2728 = vpop.f32.mrf.mxu0
        %v2729 = vpop.f32.mrf.mxu0
        %v2730 = vadd.f32 0.0, %v2729
        %v2731 = vpop.f32.mrf.mxu0
        %2732 = vmatprep.mubr.bf16.mxu0 0
        %2733 = vmatmul.mubr.bf16.gmra.mxu0 %v2613
        %v2734 = vpop.f32.mrf.mxu0
        %v2735 = vadd.f32 0.0, %v2734
        %v2736 = vpop.f32.mrf.mxu0
        %v2737 = vpop.f32.mrf.mxu0
        %v2738 = vadd.f32 0.0, %v2737
        %v2739 = vpop.f32.mrf.mxu0
        %2740 = vmatprep.mubr.bf16.mxu0 0
        %2741 = vmatmul.mubr.bf16.gmra.mxu0 %v2614
        %v2742 = vpop.f32.mrf.mxu0
        %v2743 = vadd.f32 0.0, %v2742
        %v2744 = vpop.f32.mrf.mxu0
        %v2745 = vpop.f32.mrf.mxu0
        %v2746 = vadd.f32 0.0, %v2745
        %v2747 = vpop.f32.mrf.mxu0
        %2748 = vmatprep.mubr.bf16.mxu0 0
        %2749 = vmatmul.mubr.bf16.gmra.mxu0 %v2615
        %v2750 = vpop.f32.mrf.mxu0
        %v2751 = vadd.f32 0.0, %v2750
        %v2752 = vpop.f32.mrf.mxu0
        %v2753 = vpop.f32.mrf.mxu0
        %v2754 = vadd.f32 0.0, %v2753
        %v2755 = vpop.f32.mrf.mxu0
        %2756 = vmatprep.mubr.bf16.mxu0 0
        %2757 = vmatmul.mubr.bf16.gmra.mxu0 %v2616
        %v2758 = vpop.f32.mrf.mxu0
        %v2759 = vadd.f32 0.0, %v2758
        %v2760 = vpop.f32.mrf.mxu0
        %v2761 = vpop.f32.mrf.mxu0
        %v2762 = vadd.f32 0.0, %v2761
        %v2763 = vpop.f32.mrf.mxu0
        %2764 = vmatprep.mubr.bf16.mxu0 0
        %2765 = vmatmul.mubr.bf16.gmra.mxu0 %v2617
        %v2766 = vpop.f32.mrf.mxu0
        %v2767 = vadd.f32 0.0, %v2766
        %v2768 = vpop.f32.mrf.mxu0
        %v2769 = vpop.f32.mrf.mxu0
        %v2770 = vadd.f32 0.0, %v2769
        %v2771 = vpop.f32.mrf.mxu0
        %2772 = vmatprep.mubr.bf16.mxu0 0
        %2773 = vmatmul.mubr.bf16.gmra.mxu0 %v2618
        %v2774 = vpop.f32.mrf.mxu0
        %v2775 = vadd.f32 0.0, %v2774
        %v2776 = vpop.f32.mrf.mxu0
        %v2777 = vpop.f32.mrf.mxu0
        %v2778 = vadd.f32 0.0, %v2777
        %v2779 = vpop.f32.mrf.mxu0
        %2780 = vmatprep.mubr.bf16.mxu0 0
        %2781 = vmatmul.mubr.bf16.gmra.mxu0 %v2619
        %v2782 = vpop.f32.mrf.mxu0
        %v2783 = vadd.f32 0.0, %v2782
        %v2784 = vpop.f32.mrf.mxu0
        %v2785 = vpop.f32.mrf.mxu0
        %v2786 = vadd.f32 0.0, %v2785
        %v2787 = vpop.f32.mrf.mxu0
        %2788 = vmatprep.mubr.bf16.mxu0 0
        %2789 = vmatmul.mubr.bf16.gmra.mxu0 %v2620
        %v2790 = vpop.f32.mrf.mxu0
        %v2791 = vadd.f32 0.0, %v2790
        %v2792 = vpop.f32.mrf.mxu0
        %v2793 = vpop.f32.mrf.mxu0
        %v2794 = vadd.f32 0.0, %v2793
        %v2795 = vpop.f32.mrf.mxu0
        %2796 = vmatprep.mubr.bf16.mxu0 0
        %2797 = vmatmul.mubr.bf16.gmra.mxu0 %v2621
        %v2798 = vpop.f32.mrf.mxu0
        %v2799 = vadd.f32 0.0, %v2798
        %v2800 = vpop.f32.mrf.mxu0
        %v2801 = vpop.f32.mrf.mxu0
        %v2802 = vadd.f32 0.0, %v2801
        %v2803 = vpop.f32.mrf.mxu0
        %2804 = vmatprep.mubr.bf16.mxu0 0
        %2805 = vmatmul.mubr.bf16.gmra.mxu0 %v2622
        %v2806 = vpop.f32.mrf.mxu0
        %v2807 = vadd.f32 0.0, %v2806
        %v2808 = vpop.f32.mrf.mxu0
        %v2809 = vpop.f32.mrf.mxu0
        %v2810 = vadd.f32 0.0, %v2809
        %v2811 = vpop.f32.mrf.mxu0
        %2812 = vmatprep.mubr.bf16.mxu0 0
        %2813 = vmatmul.mubr.bf16.gmra.mxu0 %v2623
        %v2814 = vpop.f32.mrf.mxu0
        %v2815 = vadd.f32 0.0, %v2814
        %v2816 = vpop.f32.mrf.mxu0
        %v2817 = vpop.f32.mrf.mxu0
        %v2818 = vadd.f32 0.0, %v2817
        %v2819 = vpop.f32.mrf.mxu0
        %2820 = vmatprep.mubr.bf16.mxu0 0
        %2821 = vmatmul.mubr.bf16.gmra.mxu0 %v2624
        %v2822 = vpop.f32.mrf.mxu0
        %v2823 = vadd.f32 0.0, %v2822
        %v2824 = vpop.f32.mrf.mxu0
        %v2825 = vpop.f32.mrf.mxu0
        %v2826 = vadd.f32 0.0, %v2825
        %v2827 = vpop.f32.mrf.mxu0
        %2828 = vmatprep.mubr.bf16.mxu0 0
        %2829 = vmatmul.mubr.bf16.gmra.mxu0 %v2625
        %v2830 = vpop.f32.mrf.mxu0
        %v2831 = vadd.f32 0.0, %v2830
        %v2832 = vpop.f32.mrf.mxu0
        %v2833 = vpop.f32.mrf.mxu0
        %v2834 = vadd.f32 0.0, %v2833
        %v2835 = vpop.f32.mrf.mxu0
        %2836 = vmatprep.mubr.bf16.mxu0 0
        %2837 = vmatmul.mubr.bf16.gmra.mxu0 %v2626
        %v2838 = vpop.f32.mrf.mxu0
        %v2839 = vadd.f32 0.0, %v2838
        %v2840 = vpop.f32.mrf.mxu0
        %v2841 = vpop.f32.mrf.mxu0
        %v2842 = vadd.f32 0.0, %v2841
        %v2843 = vpop.f32.mrf.mxu0
        %2844 = vmatprep.mubr.bf16.mxu0 0
        %2845 = vmatmul.mubr.bf16.gmra.mxu0 %v2627
        %v2846 = vpop.f32.mrf.mxu0
        %v2847 = vadd.f32 0.0, %v2846
        %v2848 = vpop.f32.mrf.mxu0
        %v2849 = vpop.f32.mrf.mxu0
        %v2850 = vadd.f32 0.0, %v2849
        %v2851 = vpop.f32.mrf.mxu0
        %2852 = vdwg.mxu0
        %v2853 = vadd.f32 %v2099, %v2727
        %v2854 = vadd.f32 %v2100, %v2730
        %v2855 = vadd.f32 %v2101, %v2735
        %v2856 = vadd.f32 %v2102, %v2738
        %v2857 = vadd.f32 %v2103, %v2743
        %v2858 = vadd.f32 %v2104, %v2746
        %v2859 = vadd.f32 %v2105, %v2751
        %v2860 = vadd.f32 %v2106, %v2754
        %v2861 = vadd.f32 %v2107, %v2759
        %v2862 = vadd.f32 %v2108, %v2762
        %v2863 = vadd.f32 %v2109, %v2767
        %v2864 = vadd.f32 %v2110, %v2770
        %v2865 = vadd.f32 %v2111, %v2775
        %v2866 = vadd.f32 %v2112, %v2778
        %v2867 = vadd.f32 %v2113, %v2783
        %v2868 = vadd.f32 %v2114, %v2786
        %v2869 = vadd.f32 %v2115, %v2791
        %v2870 = vadd.f32 %v2116, %v2794
        %v2871 = vadd.f32 %v2117, %v2799
        %v2872 = vadd.f32 %v2118, %v2802
        %v2873 = vadd.f32 %v2119, %v2807
        %v2874 = vadd.f32 %v2120, %v2810
        %v2875 = vadd.f32 %v2121, %v2815
        %v2876 = vadd.f32 %v2122, %v2818
        %v2877 = vadd.f32 %v2123, %v2823
        %v2878 = vadd.f32 %v2124, %v2826
        %v2879 = vadd.f32 %v2125, %v2831
        %v2880 = vadd.f32 %v2126, %v2834
        %v2881 = vadd.f32 %v2127, %v2839
        %v2882 = vadd.f32 %v2128, %v2842
        %v2883 = vadd.f32 %v2129, %v2847
        %v2884 = vadd.f32 %v2130, %v2850
        %v2885 = vld [vmem:[%s1744] sm:$0xe]
        %v2886 = vld [vmem:[%s1744 + $0xc] sm:$0xe]
        %v2887 = vld [vmem:[%s1744 + $0x18] sm:$0xe]
        %v2888 = vld [vmem:[%s1744 + $0x24] sm:$0xe]
        %v2889 = vld [vmem:[%s1744 + $0x30] sm:$0xe]
        %v2890 = vld [vmem:[%s1744 + $0x3c] sm:$0xe]
        %v2891 = vld [vmem:[%s1744 + $0x48] sm:$0xe]
        %v2892 = vld [vmem:[%s1744 + $0x54] sm:$0xe]
        %v2893 = vld [vmem:[%s1744 + $0x60] sm:$0xe]
        %v2894 = vld [vmem:[%s1744 + $0x6c] sm:$0xe]
        %v2895 = vld [vmem:[%s1744 + $0x78] sm:$0xe]
        %v2896 = vld [vmem:[%s1744 + $0x84] sm:$0xe]
        %v2897 = vld [vmem:[%s1744 + $0x90] sm:$0xe]
        %v2898 = vld [vmem:[%s1744 + $0x9c] sm:$0xe]
        %v2899 = vld [vmem:[%s1744 + $0xa8] sm:$0xe]
        %v2900 = vld [vmem:[%s1744 + $0xb4] sm:$0xe]
        %v2949 = vrot.slane %v2885, 5
        %v2950 = vrot.slane %v2949, 4
        %v2951 = vrot.slane %v2132, 5
        %v2952 = vsel %vm1309, %v2950, %v2951
        %v2953 = vrot.slane %v2951, 4
        %v2954 = vrot.slane %v2133, 5
        %v2955 = vsel %vm1309, %v2953, %v2954
        %v2956 = vrot.slane %v2886, 5
        %v2957 = vrot.slane %v2956, 4
        %v2958 = vrot.slane %v2135, 5
        %v2959 = vsel %vm1309, %v2957, %v2958
        %v2960 = vrot.slane %v2958, 4
        %v2961 = vrot.slane %v2136, 5
        %v2962 = vsel %vm1309, %v2960, %v2961
        %v2963 = vrot.slane %v2887, 5
        %v2964 = vrot.slane %v2963, 4
        %v2965 = vrot.slane %v2138, 5
        %v2966 = vsel %vm1309, %v2964, %v2965
        %v2967 = vrot.slane %v2965, 4
        %v2968 = vrot.slane %v2139, 5
        %v2969 = vsel %vm1309, %v2967, %v2968
        %v2970 = vrot.slane %v2888, 5
        %v2971 = vrot.slane %v2970, 4
        %v2972 = vrot.slane %v2141, 5
        %v2973 = vsel %vm1309, %v2971, %v2972
        %v2974 = vrot.slane %v2972, 4
        %v2975 = vrot.slane %v2142, 5
        %v2976 = vsel %vm1309, %v2974, %v2975
        %v2977 = vrot.slane %v2889, 5
        %v2978 = vrot.slane %v2977, 4
        %v2979 = vrot.slane %v2144, 5
        %v2980 = vsel %vm1309, %v2978, %v2979
        %v2981 = vrot.slane %v2979, 4
        %v2982 = vrot.slane %v2145, 5
        %v2983 = vsel %vm1309, %v2981, %v2982
        %v2984 = vrot.slane %v2890, 5
        %v2985 = vrot.slane %v2984, 4
        %v2986 = vrot.slane %v2147, 5
        %v2987 = vsel %vm1309, %v2985, %v2986
        %v2988 = vrot.slane %v2986, 4
        %v2989 = vrot.slane %v2148, 5
        %v2990 = vsel %vm1309, %v2988, %v2989
        %v2991 = vrot.slane %v2891, 5
        %v2992 = vrot.slane %v2991, 4
        %v2993 = vrot.slane %v2150, 5
        %v2994 = vsel %vm1309, %v2992, %v2993
        %v2995 = vrot.slane %v2993, 4
        %v2996 = vrot.slane %v2151, 5
        %v2997 = vsel %vm1309, %v2995, %v2996
        %v2998 = vrot.slane %v2892, 5
        %v2999 = vrot.slane %v2998, 4
        %v3000 = vrot.slane %v2153, 5
        %v3001 = vsel %vm1309, %v2999, %v3000
        %v3002 = vrot.slane %v3000, 4
        %v3003 = vrot.slane %v2154, 5
        %v3004 = vsel %vm1309, %v3002, %v3003
        %v3005 = vrot.slane %v2893, 5
        %v3006 = vrot.slane %v3005, 4
        %v3007 = vrot.slane %v2156, 5
        %v3008 = vsel %vm1309, %v3006, %v3007
        %v3009 = vrot.slane %v3007, 4
        %v3010 = vrot.slane %v2157, 5
        %v3011 = vsel %vm1309, %v3009, %v3010
        %v3012 = vrot.slane %v2894, 5
        %v3013 = vrot.slane %v3012, 4
        %v3014 = vrot.slane %v2159, 5
        %v3015 = vsel %vm1309, %v3013, %v3014
        %v3016 = vrot.slane %v3014, 4
        %v3017 = vrot.slane %v2160, 5
        %v3018 = vsel %vm1309, %v3016, %v3017
        %v3019 = vrot.slane %v2895, 5
        %v3020 = vrot.slane %v3019, 4
        %v3021 = vrot.slane %v2162, 5
        %v3022 = vsel %vm1309, %v3020, %v3021
        %v3023 = vrot.slane %v3021, 4
        %v3024 = vrot.slane %v2163, 5
        %v3025 = vsel %vm1309, %v3023, %v3024
        %v3026 = vrot.slane %v2896, 5
        %v3027 = vrot.slane %v3026, 4
        %v3028 = vrot.slane %v2165, 5
        %v3029 = vsel %vm1309, %v3027, %v3028
        %v3030 = vrot.slane %v3028, 4
        %v3031 = vrot.slane %v2166, 5
        %v3032 = vsel %vm1309, %v3030, %v3031
        %v3033 = vrot.slane %v2897, 5
        %v3034 = vrot.slane %v3033, 4
        %v3035 = vrot.slane %v2168, 5
        %v3036 = vsel %vm1309, %v3034, %v3035
        %v3037 = vrot.slane %v3035, 4
        %v3038 = vrot.slane %v2169, 5
        %v3039 = vsel %vm1309, %v3037, %v3038
        %v3040 = vrot.slane %v2898, 5
        %v3041 = vrot.slane %v3040, 4
        %v3042 = vrot.slane %v2171, 5
        %v3043 = vsel %vm1309, %v3041, %v3042
        %v3044 = vrot.slane %v3042, 4
        %v3045 = vrot.slane %v2172, 5
        %v3046 = vsel %vm1309, %v3044, %v3045
        %v3047 = vrot.slane %v2899, 5
        %v3048 = vrot.slane %v3047, 4
        %v3049 = vrot.slane %v2174, 5
        %v3050 = vsel %vm1309, %v3048, %v3049
        %v3051 = vrot.slane %v3049, 4
        %v3052 = vrot.slane %v2175, 5
        %v3053 = vsel %vm1309, %v3051, %v3052
        %v3054 = vrot.slane %v2900, 5
        %v3055 = vrot.slane %v3054, 4
        %v3056 = vrot.slane %v2177, 5
        %v3057 = vsel %vm1309, %v3055, %v3056
        %v3058 = vrot.slane %v3056, 4
        %v3059 = vrot.slane %v2178, 5
        %v3060 = vsel %vm1309, %v3058, %v3059
        %s3061 = scalar_lea.vmem [#allocation3], 320
        %v3062 = vld [vmem:[%s3061] sm:$0xf]
        %v3063 = vld [vmem:[%s3061 + $0x4] sm:$0xf]
        %v3064 = vld [vmem:[%s3061 + $0x8] sm:$0xf]
        %v3065 = vld [vmem:[%s3061 + $0xc] sm:$0xf]
        %v3066 = vld [vmem:[%s3061 + $0x10] sm:$0xf]
        %v3067 = vld [vmem:[%s3061 + $0x14] sm:$0xf]
        %v3068 = vld [vmem:[%s3061 + $0x18] sm:$0xf]
        %v3069 = vld [vmem:[%s3061 + $0x1c] sm:$0xf]
        %v3070 = vld [vmem:[%s3061 + $0x20] sm:$0xf]
        %v3071 = vld [vmem:[%s3061 + $0x24] sm:$0xf]
        %v3072 = vld [vmem:[%s3061 + $0x28] sm:$0xf]
        %v3073 = vld [vmem:[%s3061 + $0x2c] sm:$0xf]
        %v3074 = vld [vmem:[%s3061 + $0x30] sm:$0xf]
        %v3075 = vld [vmem:[%s3061 + $0x34] sm:$0xf]
        %v3076 = vld [vmem:[%s3061 + $0x38] sm:$0xf]
        %v3077 = vld [vmem:[%s3061 + $0x3c] sm:$0xf]
        %v3078 = vunpack.c.l.b16 %v2952
        %v3079 = vunpack.c.l.b16 %v2955
        %v3080 = vunpack.c.l.b16 %v2959
        %v3081 = vunpack.c.l.b16 %v2962
        %v3082 = vunpack.c.l.b16 %v2966
        %v3083 = vunpack.c.l.b16 %v2969
        %v3084 = vunpack.c.l.b16 %v2973
        %v3085 = vunpack.c.l.b16 %v2976
        %v3086 = vunpack.c.l.b16 %v2980
        %v3087 = vunpack.c.l.b16 %v2983
        %v3088 = vunpack.c.l.b16 %v2987
        %v3089 = vunpack.c.l.b16 %v2990
        %v3090 = vunpack.c.l.b16 %v2994
        %v3091 = vunpack.c.l.b16 %v2997
        %v3092 = vunpack.c.l.b16 %v3001
        %v3093 = vunpack.c.l.b16 %v3004
        %v3094 = vunpack.c.l.b16 %v3008
        %v3095 = vunpack.c.l.b16 %v3011
        %v3096 = vunpack.c.l.b16 %v3015
        %v3097 = vunpack.c.l.b16 %v3018
        %v3098 = vunpack.c.l.b16 %v3022
        %v3099 = vunpack.c.l.b16 %v3025
        %v3100 = vunpack.c.l.b16 %v3029
        %v3101 = vunpack.c.l.b16 %v3032
        %v3102 = vunpack.c.l.b16 %v3036
        %v3103 = vunpack.c.l.b16 %v3039
        %v3104 = vunpack.c.l.b16 %v3043
        %v3105 = vunpack.c.l.b16 %v3046
        %v3106 = vunpack.c.l.b16 %v3050
        %v3107 = vunpack.c.l.b16 %v3053
        %v3108 = vunpack.c.l.b16 %v3057
        %v3109 = vunpack.c.l.b16 %v3060
        %v3110 = vpack.c.b16 %v3079, %v3078
        %v3111 = vpack.c.b16 %v3081, %v3080
        %v3112 = vpack.c.b16 %v3083, %v3082
        %v3113 = vpack.c.b16 %v3085, %v3084
        %v3114 = vpack.c.b16 %v3087, %v3086
        %v3115 = vpack.c.b16 %v3089, %v3088
        %v3116 = vpack.c.b16 %v3091, %v3090
        %v3117 = vpack.c.b16 %v3093, %v3092
        %v3118 = vpack.c.b16 %v3095, %v3094
        %v3119 = vpack.c.b16 %v3097, %v3096
        %v3120 = vpack.c.b16 %v3099, %v3098
        %v3121 = vpack.c.b16 %v3101, %v3100
        %v3122 = vpack.c.b16 %v3103, %v3102
        %v3123 = vpack.c.b16 %v3105, %v3104
        %v3124 = vpack.c.b16 %v3107, %v3106
        %v3125 = vpack.c.b16 %v3109, %v3108
        %v3158 = vunpack.c.l.b16 %v3062
        %v3159 = vunpack.c.l.b16 %v3063
        %v3160 = vunpack.c.l.b16 %v3064
        %v3161 = vunpack.c.l.b16 %v3065
        %v3162 = vunpack.c.l.b16 %v3066
        %v3163 = vunpack.c.l.b16 %v3067
        %v3164 = vunpack.c.l.b16 %v3068
        %v3165 = vunpack.c.l.b16 %v3069
        %v3166 = vunpack.c.l.b16 %v3070
        %v3167 = vunpack.c.l.b16 %v3071
        %v3168 = vunpack.c.l.b16 %v3072
        %v3169 = vunpack.c.l.b16 %v3073
        %v3170 = vunpack.c.l.b16 %v3074
        %v3171 = vunpack.c.l.b16 %v3075
        %v3172 = vunpack.c.l.b16 %v3076
        %v3173 = vunpack.c.l.b16 %v3077
        %v3174 = vpack.c.b16 %v3159, %v3158
        %v3175 = vpack.c.b16 %v3161, %v3160
        %v3176 = vpack.c.b16 %v3163, %v3162
        %v3177 = vpack.c.b16 %v3165, %v3164
        %v3178 = vpack.c.b16 %v3167, %v3166
        %v3179 = vpack.c.b16 %v3169, %v3168
        %v3180 = vpack.c.b16 %v3171, %v3170
        %v3181 = vpack.c.b16 %v3173, %v3172
        %3190 = vmatprep.subr.bf16.mxu0 0
        %3191 = vmatpush1.bf16.msra.mxu0 %v3181
        %3192 = vmatprep.subr.bf16.mxu0 0
        %3193 = vmatpush1.bf16.msra.mxu0 %v3180
        %3194 = vmatprep.subr.bf16.mxu0 0
        %3195 = vmatpush1.bf16.msra.mxu0 %v3179
        %3196 = vmatprep.subr.bf16.mxu0 0
        %3197 = vmatpush1.bf16.msra.mxu0 %v3178
        %3198 = vmatprep.subr.bf16.mxu0 0
        %3199 = vmatpush1.bf16.msra.mxu0 %v3177
        %3200 = vmatprep.subr.bf16.mxu0 0
        %3201 = vmatpush1.bf16.msra.mxu0 %v3176
        %3202 = vmatprep.subr.bf16.mxu0 0
        %3203 = vmatpush1.bf16.msra.mxu0 %v3175
        %3204 = vmatprep.subr.bf16.mxu0 0
        %3205 = vmatpush1.bf16.msra.mxu0 %v3174
        %3206 = vmatprep.subr.bf16.mxu0 0
        %3207 = vmatpush2.bf16.msra.mxu0 0
        %3208 = vmatprep.subr.bf16.mxu0 0
        %3209 = vmatpush2.bf16.msra.mxu0 0
        %3210 = vmatprep.subr.bf16.mxu0 0
        %3211 = vmatpush2.bf16.msra.mxu0 0
        %3212 = vmatprep.subr.bf16.mxu0 0
        %3213 = vmatpush2.bf16.msra.mxu0 0
        %3214 = vmatprep.subr.bf16.mxu0 0
        %3215 = vmatpush2.bf16.msra.mxu0 0
        %3216 = vmatprep.subr.bf16.mxu0 0
        %3217 = vmatpush2.bf16.msra.mxu0 0
        %3218 = vmatprep.subr.bf16.mxu0 0
        %3219 = vmatpush2.bf16.msra.mxu0 0
        %3220 = vmatprep.subr.bf16.mxu0 0
        %3221 = vmatpush2.bf16.msra.mxu0 0
        %3222 = vmatprep.mubr.bf16.mxu0 0
        %3223 = vmatmul.mubr.bf16.gmra.mxu0 %v3110
        %v3224 = vpop.f32.mrf.mxu0
        %v3225 = vadd.f32 0.0, %v3224
        %v3226 = vpop.f32.mrf.mxu0
        %v3227 = vpop.f32.mrf.mxu0
        %v3228 = vadd.f32 0.0, %v3227
        %v3229 = vpop.f32.mrf.mxu0
        %3230 = vmatprep.mubr.bf16.mxu0 0
        %3231 = vmatmul.mubr.bf16.gmra.mxu0 %v3111
        %v3232 = vpop.f32.mrf.mxu0
        %v3233 = vadd.f32 0.0, %v3232
        %v3234 = vpop.f32.mrf.mxu0
        %v3235 = vpop.f32.mrf.mxu0
        %v3236 = vadd.f32 0.0, %v3235
        %v3237 = vpop.f32.mrf.mxu0
        %3238 = vmatprep.mubr.bf16.mxu0 0
        %3239 = vmatmul.mubr.bf16.gmra.mxu0 %v3112
        %v3240 = vpop.f32.mrf.mxu0
        %v3241 = vadd.f32 0.0, %v3240
        %v3242 = vpop.f32.mrf.mxu0
        %v3243 = vpop.f32.mrf.mxu0
        %v3244 = vadd.f32 0.0, %v3243
        %v3245 = vpop.f32.mrf.mxu0
        %3246 = vmatprep.mubr.bf16.mxu0 0
        %3247 = vmatmul.mubr.bf16.gmra.mxu0 %v3113
        %v3248 = vpop.f32.mrf.mxu0
        %v3249 = vadd.f32 0.0, %v3248
        %v3250 = vpop.f32.mrf.mxu0
        %v3251 = vpop.f32.mrf.mxu0
        %v3252 = vadd.f32 0.0, %v3251
        %v3253 = vpop.f32.mrf.mxu0
        %3254 = vmatprep.mubr.bf16.mxu0 0
        %3255 = vmatmul.mubr.bf16.gmra.mxu0 %v3114
        %v3256 = vpop.f32.mrf.mxu0
        %v3257 = vadd.f32 0.0, %v3256
        %v3258 = vpop.f32.mrf.mxu0
        %v3259 = vpop.f32.mrf.mxu0
        %v3260 = vadd.f32 0.0, %v3259
        %v3261 = vpop.f32.mrf.mxu0
        %3262 = vmatprep.mubr.bf16.mxu0 0
        %3263 = vmatmul.mubr.bf16.gmra.mxu0 %v3115
        %v3264 = vpop.f32.mrf.mxu0
        %v3265 = vadd.f32 0.0, %v3264
        %v3266 = vpop.f32.mrf.mxu0
        %v3267 = vpop.f32.mrf.mxu0
        %v3268 = vadd.f32 0.0, %v3267
        %v3269 = vpop.f32.mrf.mxu0
        %3270 = vmatprep.mubr.bf16.mxu0 0
        %3271 = vmatmul.mubr.bf16.gmra.mxu0 %v3116
        %v3272 = vpop.f32.mrf.mxu0
        %v3273 = vadd.f32 0.0, %v3272
        %v3274 = vpop.f32.mrf.mxu0
        %v3275 = vpop.f32.mrf.mxu0
        %v3276 = vadd.f32 0.0, %v3275
        %v3277 = vpop.f32.mrf.mxu0
        %3278 = vmatprep.mubr.bf16.mxu0 0
        %3279 = vmatmul.mubr.bf16.gmra.mxu0 %v3117
        %v3280 = vpop.f32.mrf.mxu0
        %v3281 = vadd.f32 0.0, %v3280
        %v3282 = vpop.f32.mrf.mxu0
        %v3283 = vpop.f32.mrf.mxu0
        %v3284 = vadd.f32 0.0, %v3283
        %v3285 = vpop.f32.mrf.mxu0
        %3286 = vmatprep.mubr.bf16.mxu0 0
        %3287 = vmatmul.mubr.bf16.gmra.mxu0 %v3118
        %v3288 = vpop.f32.mrf.mxu0
        %v3289 = vadd.f32 0.0, %v3288
        %v3290 = vpop.f32.mrf.mxu0
        %v3291 = vpop.f32.mrf.mxu0
        %v3292 = vadd.f32 0.0, %v3291
        %v3293 = vpop.f32.mrf.mxu0
        %3294 = vmatprep.mubr.bf16.mxu0 0
        %3295 = vmatmul.mubr.bf16.gmra.mxu0 %v3119
        %v3296 = vpop.f32.mrf.mxu0
        %v3297 = vadd.f32 0.0, %v3296
        %v3298 = vpop.f32.mrf.mxu0
        %v3299 = vpop.f32.mrf.mxu0
        %v3300 = vadd.f32 0.0, %v3299
        %v3301 = vpop.f32.mrf.mxu0
        %3302 = vmatprep.mubr.bf16.mxu0 0
        %3303 = vmatmul.mubr.bf16.gmra.mxu0 %v3120
        %v3304 = vpop.f32.mrf.mxu0
        %v3305 = vadd.f32 0.0, %v3304
        %v3306 = vpop.f32.mrf.mxu0
        %v3307 = vpop.f32.mrf.mxu0
        %v3308 = vadd.f32 0.0, %v3307
        %v3309 = vpop.f32.mrf.mxu0
        %3310 = vmatprep.mubr.bf16.mxu0 0
        %3311 = vmatmul.mubr.bf16.gmra.mxu0 %v3121
        %v3312 = vpop.f32.mrf.mxu0
        %v3313 = vadd.f32 0.0, %v3312
        %v3314 = vpop.f32.mrf.mxu0
        %v3315 = vpop.f32.mrf.mxu0
        %v3316 = vadd.f32 0.0, %v3315
        %v3317 = vpop.f32.mrf.mxu0
        %3318 = vmatprep.mubr.bf16.mxu0 0
        %3319 = vmatmul.mubr.bf16.gmra.mxu0 %v3122
        %v3320 = vpop.f32.mrf.mxu0
        %v3321 = vadd.f32 0.0, %v3320
        %v3322 = vpop.f32.mrf.mxu0
        %v3323 = vpop.f32.mrf.mxu0
        %v3324 = vadd.f32 0.0, %v3323
        %v3325 = vpop.f32.mrf.mxu0
        %3326 = vmatprep.mubr.bf16.mxu0 0
        %3327 = vmatmul.mubr.bf16.gmra.mxu0 %v3123
        %v3328 = vpop.f32.mrf.mxu0
        %v3329 = vadd.f32 0.0, %v3328
        %v3330 = vpop.f32.mrf.mxu0
        %v3331 = vpop.f32.mrf.mxu0
        %v3332 = vadd.f32 0.0, %v3331
        %v3333 = vpop.f32.mrf.mxu0
        %3334 = vmatprep.mubr.bf16.mxu0 0
        %3335 = vmatmul.mubr.bf16.gmra.mxu0 %v3124
        %v3336 = vpop.f32.mrf.mxu0
        %v3337 = vadd.f32 0.0, %v3336
        %v3338 = vpop.f32.mrf.mxu0
        %v3339 = vpop.f32.mrf.mxu0
        %v3340 = vadd.f32 0.0, %v3339
        %v3341 = vpop.f32.mrf.mxu0
        %3342 = vmatprep.mubr.bf16.mxu0 0
        %3343 = vmatmul.mubr.bf16.gmra.mxu0 %v3125
        %v3344 = vpop.f32.mrf.mxu0
        %v3345 = vadd.f32 0.0, %v3344
        %v3346 = vpop.f32.mrf.mxu0
        %v3347 = vpop.f32.mrf.mxu0
        %v3348 = vadd.f32 0.0, %v3347
        %v3349 = vpop.f32.mrf.mxu0
        %3350 = vdwg.mxu0
        %v3351 = vadd.f32 %v2853, %v3225
        %v3352 = vadd.f32 %v2854, %v3228
        %v3353 = vadd.f32 %v2855, %v3233
        %v3354 = vadd.f32 %v2856, %v3236
        %v3355 = vadd.f32 %v2857, %v3241
        %v3356 = vadd.f32 %v2858, %v3244
        %v3357 = vadd.f32 %v2859, %v3249
        %v3358 = vadd.f32 %v2860, %v3252
        %v3359 = vadd.f32 %v2861, %v3257
        %v3360 = vadd.f32 %v2862, %v3260
        %v3361 = vadd.f32 %v2863, %v3265
        %v3362 = vadd.f32 %v2864, %v3268
        %v3363 = vadd.f32 %v2865, %v3273
        %v3364 = vadd.f32 %v2866, %v3276
        %v3365 = vadd.f32 %v2867, %v3281
        %v3366 = vadd.f32 %v2868, %v3284
        %v3367 = vadd.f32 %v2869, %v3289
        %v3368 = vadd.f32 %v2870, %v3292
        %v3369 = vadd.f32 %v2871, %v3297
        %v3370 = vadd.f32 %v2872, %v3300
        %v3371 = vadd.f32 %v2873, %v3305
        %v3372 = vadd.f32 %v2874, %v3308
        %v3373 = vadd.f32 %v2875, %v3313
        %v3374 = vadd.f32 %v2876, %v3316
        %v3375 = vadd.f32 %v2877, %v3321
        %v3376 = vadd.f32 %v2878, %v3324
        %v3377 = vadd.f32 %v2879, %v3329
        %v3378 = vadd.f32 %v2880, %v3332
        %v3379 = vadd.f32 %v2881, %v3337
        %v3380 = vadd.f32 %v2882, %v3340
        %v3381 = vadd.f32 %v2883, %v3345
        %v3382 = vadd.f32 %v2884, %v3348
        %s3383 = scalar_lea.vmem %s209, 24
        %v3384 = vld [vmem:[%s3383] sm:$0xf]
        %v3385 = vld [vmem:[%s3383 + $0x4] sm:$0xf]
        %v3386 = vld [vmem:[%s3383 + $0xc] sm:$0xf]
        %v3387 = vld [vmem:[%s3383 + $0x10] sm:$0xf]
        %v3388 = vld [vmem:[%s3383 + $0x18] sm:$0xf]
        %v3389 = vld [vmem:[%s3383 + $0x1c] sm:$0xf]
        %v3390 = vld [vmem:[%s3383 + $0x24] sm:$0xf]
        %v3391 = vld [vmem:[%s3383 + $0x28] sm:$0xf]
        %v3392 = vld [vmem:[%s3383 + $0x30] sm:$0xf]
        %v3393 = vld [vmem:[%s3383 + $0x34] sm:$0xf]
        %v3394 = vld [vmem:[%s3383 + $0x3c] sm:$0xf]
        %v3395 = vld [vmem:[%s3383 + $0x40] sm:$0xf]
        %v3396 = vld [vmem:[%s3383 + $0x48] sm:$0xf]
        %v3397 = vld [vmem:[%s3383 + $0x4c] sm:$0xf]
        %v3398 = vld [vmem:[%s3383 + $0x54] sm:$0xf]
        %v3399 = vld [vmem:[%s3383 + $0x58] sm:$0xf]
        %v3400 = vld [vmem:[%s3383 + $0x60] sm:$0xf]
        %v3401 = vld [vmem:[%s3383 + $0x64] sm:$0xf]
        %v3402 = vld [vmem:[%s3383 + $0x6c] sm:$0xf]
        %v3403 = vld [vmem:[%s3383 + $0x70] sm:$0xf]
        %v3404 = vld [vmem:[%s3383 + $0x78] sm:$0xf]
        %v3405 = vld [vmem:[%s3383 + $0x7c] sm:$0xf]
        %v3406 = vld [vmem:[%s3383 + $0x84] sm:$0xf]
        %v3407 = vld [vmem:[%s3383 + $0x88] sm:$0xf]
        %v3408 = vld [vmem:[%s3383 + $0x90] sm:$0xf]
        %v3409 = vld [vmem:[%s3383 + $0x94] sm:$0xf]
        %v3410 = vld [vmem:[%s3383 + $0x9c] sm:$0xf]
        %v3411 = vld [vmem:[%s3383 + $0xa0] sm:$0xf]
        %v3412 = vld [vmem:[%s3383 + $0xa8] sm:$0xf]
        %v3413 = vld [vmem:[%s3383 + $0xac] sm:$0xf]
        %v3414 = vld [vmem:[%s3383 + $0xb4] sm:$0xf]
        %v3415 = vld [vmem:[%s3383 + $0xb8] sm:$0xf]
        %s3416 = scalar_lea.vmem [#allocation3], 384
        %v3417 = vld [vmem:[%s3416] sm:$0xf]
        %v3418 = vld [vmem:[%s3416 + $0x4] sm:$0xf]
        %v3419 = vld [vmem:[%s3416 + $0x8] sm:$0xf]
        %v3420 = vld [vmem:[%s3416 + $0xc] sm:$0xf]
        %v3421 = vld [vmem:[%s3416 + $0x10] sm:$0xf]
        %v3422 = vld [vmem:[%s3416 + $0x14] sm:$0xf]
        %v3423 = vld [vmem:[%s3416 + $0x18] sm:$0xf]
        %v3424 = vld [vmem:[%s3416 + $0x1c] sm:$0xf]
        %v3425 = vld [vmem:[%s3416 + $0x20] sm:$0xf]
        %v3426 = vld [vmem:[%s3416 + $0x24] sm:$0xf]
        %v3427 = vld [vmem:[%s3416 + $0x28] sm:$0xf]
        %v3428 = vld [vmem:[%s3416 + $0x2c] sm:$0xf]
        %v3429 = vld [vmem:[%s3416 + $0x30] sm:$0xf]
        %v3430 = vld [vmem:[%s3416 + $0x34] sm:$0xf]
        %v3431 = vld [vmem:[%s3416 + $0x38] sm:$0xf]
        %v3432 = vld [vmem:[%s3416 + $0x3c] sm:$0xf]
        %v3465 = vunpack.c.l.b16 %v3384
        %v3466 = vunpack.c.l.b16 %v3385
        %v3467 = vunpack.c.l.b16 %v3386
        %v3468 = vunpack.c.l.b16 %v3387
        %v3469 = vunpack.c.l.b16 %v3388
        %v3470 = vunpack.c.l.b16 %v3389
        %v3471 = vunpack.c.l.b16 %v3390
        %v3472 = vunpack.c.l.b16 %v3391
        %v3473 = vunpack.c.l.b16 %v3392
        %v3474 = vunpack.c.l.b16 %v3393
        %v3475 = vunpack.c.l.b16 %v3394
        %v3476 = vunpack.c.l.b16 %v3395
        %v3477 = vunpack.c.l.b16 %v3396
        %v3478 = vunpack.c.l.b16 %v3397
        %v3479 = vunpack.c.l.b16 %v3398
        %v3480 = vunpack.c.l.b16 %v3399
        %v3481 = vunpack.c.l.b16 %v3400
        %v3482 = vunpack.c.l.b16 %v3401
        %v3483 = vunpack.c.l.b16 %v3402
        %v3484 = vunpack.c.l.b16 %v3403
        %v3485 = vunpack.c.l.b16 %v3404
        %v3486 = vunpack.c.l.b16 %v3405
        %v3487 = vunpack.c.l.b16 %v3406
        %v3488 = vunpack.c.l.b16 %v3407
        %v3489 = vunpack.c.l.b16 %v3408
        %v3490 = vunpack.c.l.b16 %v3409
        %v3491 = vunpack.c.l.b16 %v3410
        %v3492 = vunpack.c.l.b16 %v3411
        %v3493 = vunpack.c.l.b16 %v3412
        %v3494 = vunpack.c.l.b16 %v3413
        %v3495 = vunpack.c.l.b16 %v3414
        %v3496 = vunpack.c.l.b16 %v3415
        %v3497 = vpack.c.b16 %v3466, %v3465
        %v3498 = vpack.c.b16 %v3468, %v3467
        %v3499 = vpack.c.b16 %v3470, %v3469
        %v3500 = vpack.c.b16 %v3472, %v3471
        %v3501 = vpack.c.b16 %v3474, %v3473
        %v3502 = vpack.c.b16 %v3476, %v3475
        %v3503 = vpack.c.b16 %v3478, %v3477
        %v3504 = vpack.c.b16 %v3480, %v3479
        %v3505 = vpack.c.b16 %v3482, %v3481
        %v3506 = vpack.c.b16 %v3484, %v3483
        %v3507 = vpack.c.b16 %v3486, %v3485
        %v3508 = vpack.c.b16 %v3488, %v3487
        %v3509 = vpack.c.b16 %v3490, %v3489
        %v3510 = vpack.c.b16 %v3492, %v3491
        %v3511 = vpack.c.b16 %v3494, %v3493
        %v3512 = vpack.c.b16 %v3496, %v3495
        %v3545 = vunpack.c.l.b16 %v3417
        %v3546 = vunpack.c.l.b16 %v3418
        %v3547 = vunpack.c.l.b16 %v3419
        %v3548 = vunpack.c.l.b16 %v3420
        %v3549 = vunpack.c.l.b16 %v3421
        %v3550 = vunpack.c.l.b16 %v3422
        %v3551 = vunpack.c.l.b16 %v3423
        %v3552 = vunpack.c.l.b16 %v3424
        %v3553 = vunpack.c.l.b16 %v3425
        %v3554 = vunpack.c.l.b16 %v3426
        %v3555 = vunpack.c.l.b16 %v3427
        %v3556 = vunpack.c.l.b16 %v3428
        %v3557 = vunpack.c.l.b16 %v3429
        %v3558 = vunpack.c.l.b16 %v3430
        %v3559 = vunpack.c.l.b16 %v3431
        %v3560 = vunpack.c.l.b16 %v3432
        %v3561 = vpack.c.b16 %v3546, %v3545
        %v3562 = vpack.c.b16 %v3548, %v3547
        %v3563 = vpack.c.b16 %v3550, %v3549
        %v3564 = vpack.c.b16 %v3552, %v3551
        %v3565 = vpack.c.b16 %v3554, %v3553
        %v3566 = vpack.c.b16 %v3556, %v3555
        %v3567 = vpack.c.b16 %v3558, %v3557
        %v3568 = vpack.c.b16 %v3560, %v3559
        %3577 = vmatprep.subr.bf16.mxu0 0
        %3578 = vmatpush1.bf16.msra.mxu0 %v3568
        %3579 = vmatprep.subr.bf16.mxu0 0
        %3580 = vmatpush1.bf16.msra.mxu0 %v3567
        %3581 = vmatprep.subr.bf16.mxu0 0
        %3582 = vmatpush1.bf16.msra.mxu0 %v3566
        %3583 = vmatprep.subr.bf16.mxu0 0
        %3584 = vmatpush1.bf16.msra.mxu0 %v3565
        %3585 = vmatprep.subr.bf16.mxu0 0
        %3586 = vmatpush1.bf16.msra.mxu0 %v3564
        %3587 = vmatprep.subr.bf16.mxu0 0
        %3588 = vmatpush1.bf16.msra.mxu0 %v3563
        %3589 = vmatprep.subr.bf16.mxu0 0
        %3590 = vmatpush1.bf16.msra.mxu0 %v3562
        %3591 = vmatprep.subr.bf16.mxu0 0
        %3592 = vmatpush1.bf16.msra.mxu0 %v3561
        %3593 = vmatprep.subr.bf16.mxu0 0
        %3594 = vmatpush2.bf16.msra.mxu0 0
        %3595 = vmatprep.subr.bf16.mxu0 0
        %3596 = vmatpush2.bf16.msra.mxu0 0
        %3597 = vmatprep.subr.bf16.mxu0 0
        %3598 = vmatpush2.bf16.msra.mxu0 0
        %3599 = vmatprep.subr.bf16.mxu0 0
        %3600 = vmatpush2.bf16.msra.mxu0 0
        %3601 = vmatprep.subr.bf16.mxu0 0
        %3602 = vmatpush2.bf16.msra.mxu0 0
        %3603 = vmatprep.subr.bf16.mxu0 0
        %3604 = vmatpush2.bf16.msra.mxu0 0
        %3605 = vmatprep.subr.bf16.mxu0 0
        %3606 = vmatpush2.bf16.msra.mxu0 0
        %3607 = vmatprep.subr.bf16.mxu0 0
        %3608 = vmatpush2.bf16.msra.mxu0 0
        %3609 = vmatprep.mubr.bf16.mxu0 0
        %3610 = vmatmul.mubr.bf16.gmra.mxu0 %v3497
        %v3611 = vpop.f32.mrf.mxu0
        %v3612 = vadd.f32 0.0, %v3611
        %v3613 = vpop.f32.mrf.mxu0
        %v3614 = vpop.f32.mrf.mxu0
        %v3615 = vadd.f32 0.0, %v3614
        %v3616 = vpop.f32.mrf.mxu0
        %3617 = vmatprep.mubr.bf16.mxu0 0
        %3618 = vmatmul.mubr.bf16.gmra.mxu0 %v3498
        %v3619 = vpop.f32.mrf.mxu0
        %v3620 = vadd.f32 0.0, %v3619
        %v3621 = vpop.f32.mrf.mxu0
        %v3622 = vpop.f32.mrf.mxu0
        %v3623 = vadd.f32 0.0, %v3622
        %v3624 = vpop.f32.mrf.mxu0
        %3625 = vmatprep.mubr.bf16.mxu0 0
        %3626 = vmatmul.mubr.bf16.gmra.mxu0 %v3499
        %v3627 = vpop.f32.mrf.mxu0
        %v3628 = vadd.f32 0.0, %v3627
        %v3629 = vpop.f32.mrf.mxu0
        %v3630 = vpop.f32.mrf.mxu0
        %v3631 = vadd.f32 0.0, %v3630
        %v3632 = vpop.f32.mrf.mxu0
        %3633 = vmatprep.mubr.bf16.mxu0 0
        %3634 = vmatmul.mubr.bf16.gmra.mxu0 %v3500
        %v3635 = vpop.f32.mrf.mxu0
        %v3636 = vadd.f32 0.0, %v3635
        %v3637 = vpop.f32.mrf.mxu0
        %v3638 = vpop.f32.mrf.mxu0
        %v3639 = vadd.f32 0.0, %v3638
        %v3640 = vpop.f32.mrf.mxu0
        %3641 = vmatprep.mubr.bf16.mxu0 0
        %3642 = vmatmul.mubr.bf16.gmra.mxu0 %v3501
        %v3643 = vpop.f32.mrf.mxu0
        %v3644 = vadd.f32 0.0, %v3643
        %v3645 = vpop.f32.mrf.mxu0
        %v3646 = vpop.f32.mrf.mxu0
        %v3647 = vadd.f32 0.0, %v3646
        %v3648 = vpop.f32.mrf.mxu0
        %3649 = vmatprep.mubr.bf16.mxu0 0
        %3650 = vmatmul.mubr.bf16.gmra.mxu0 %v3502
        %v3651 = vpop.f32.mrf.mxu0
        %v3652 = vadd.f32 0.0, %v3651
        %v3653 = vpop.f32.mrf.mxu0
        %v3654 = vpop.f32.mrf.mxu0
        %v3655 = vadd.f32 0.0, %v3654
        %v3656 = vpop.f32.mrf.mxu0
        %3657 = vmatprep.mubr.bf16.mxu0 0
        %3658 = vmatmul.mubr.bf16.gmra.mxu0 %v3503
        %v3659 = vpop.f32.mrf.mxu0
        %v3660 = vadd.f32 0.0, %v3659
        %v3661 = vpop.f32.mrf.mxu0
        %v3662 = vpop.f32.mrf.mxu0
        %v3663 = vadd.f32 0.0, %v3662
        %v3664 = vpop.f32.mrf.mxu0
        %3665 = vmatprep.mubr.bf16.mxu0 0
        %3666 = vmatmul.mubr.bf16.gmra.mxu0 %v3504
        %v3667 = vpop.f32.mrf.mxu0
        %v3668 = vadd.f32 0.0, %v3667
        %v3669 = vpop.f32.mrf.mxu0
        %v3670 = vpop.f32.mrf.mxu0
        %v3671 = vadd.f32 0.0, %v3670
        %v3672 = vpop.f32.mrf.mxu0
        %3673 = vmatprep.mubr.bf16.mxu0 0
        %3674 = vmatmul.mubr.bf16.gmra.mxu0 %v3505
        %v3675 = vpop.f32.mrf.mxu0
        %v3676 = vadd.f32 0.0, %v3675
        %v3677 = vpop.f32.mrf.mxu0
        %v3678 = vpop.f32.mrf.mxu0
        %v3679 = vadd.f32 0.0, %v3678
        %v3680 = vpop.f32.mrf.mxu0
        %3681 = vmatprep.mubr.bf16.mxu0 0
        %3682 = vmatmul.mubr.bf16.gmra.mxu0 %v3506
        %v3683 = vpop.f32.mrf.mxu0
        %v3684 = vadd.f32 0.0, %v3683
        %v3685 = vpop.f32.mrf.mxu0
        %v3686 = vpop.f32.mrf.mxu0
        %v3687 = vadd.f32 0.0, %v3686
        %v3688 = vpop.f32.mrf.mxu0
        %3689 = vmatprep.mubr.bf16.mxu0 0
        %3690 = vmatmul.mubr.bf16.gmra.mxu0 %v3507
        %v3691 = vpop.f32.mrf.mxu0
        %v3692 = vadd.f32 0.0, %v3691
        %v3693 = vpop.f32.mrf.mxu0
        %v3694 = vpop.f32.mrf.mxu0
        %v3695 = vadd.f32 0.0, %v3694
        %v3696 = vpop.f32.mrf.mxu0
        %3697 = vmatprep.mubr.bf16.mxu0 0
        %3698 = vmatmul.mubr.bf16.gmra.mxu0 %v3508
        %v3699 = vpop.f32.mrf.mxu0
        %v3700 = vadd.f32 0.0, %v3699
        %v3701 = vpop.f32.mrf.mxu0
        %v3702 = vpop.f32.mrf.mxu0
        %v3703 = vadd.f32 0.0, %v3702
        %v3704 = vpop.f32.mrf.mxu0
        %3705 = vmatprep.mubr.bf16.mxu0 0
        %3706 = vmatmul.mubr.bf16.gmra.mxu0 %v3509
        %v3707 = vpop.f32.mrf.mxu0
        %v3708 = vadd.f32 0.0, %v3707
        %v3709 = vpop.f32.mrf.mxu0
        %v3710 = vpop.f32.mrf.mxu0
        %v3711 = vadd.f32 0.0, %v3710
        %v3712 = vpop.f32.mrf.mxu0
        %3713 = vmatprep.mubr.bf16.mxu0 0
        %3714 = vmatmul.mubr.bf16.gmra.mxu0 %v3510
        %v3715 = vpop.f32.mrf.mxu0
        %v3716 = vadd.f32 0.0, %v3715
        %v3717 = vpop.f32.mrf.mxu0
        %v3718 = vpop.f32.mrf.mxu0
        %v3719 = vadd.f32 0.0, %v3718
        %v3720 = vpop.f32.mrf.mxu0
        %3721 = vmatprep.mubr.bf16.mxu0 0
        %3722 = vmatmul.mubr.bf16.gmra.mxu0 %v3511
        %v3723 = vpop.f32.mrf.mxu0
        %v3724 = vadd.f32 0.0, %v3723
        %v3725 = vpop.f32.mrf.mxu0
        %v3726 = vpop.f32.mrf.mxu0
        %v3727 = vadd.f32 0.0, %v3726
        %v3728 = vpop.f32.mrf.mxu0
        %3729 = vmatprep.mubr.bf16.mxu0 0
        %3730 = vmatmul.mubr.bf16.gmra.mxu0 %v3512
        %v3731 = vpop.f32.mrf.mxu0
        %v3732 = vadd.f32 0.0, %v3731
        %v3733 = vpop.f32.mrf.mxu0
        %v3734 = vpop.f32.mrf.mxu0
        %v3735 = vadd.f32 0.0, %v3734
        %v3736 = vpop.f32.mrf.mxu0
        %3737 = vdwg.mxu0
        %v3738 = vadd.f32 %v3351, %v3612
        %v3739 = vadd.f32 %v3352, %v3615
        %v3740 = vadd.f32 %v3353, %v3620
        %v3741 = vadd.f32 %v3354, %v3623
        %v3742 = vadd.f32 %v3355, %v3628
        %v3743 = vadd.f32 %v3356, %v3631
        %v3744 = vadd.f32 %v3357, %v3636
        %v3745 = vadd.f32 %v3358, %v3639
        %v3746 = vadd.f32 %v3359, %v3644
        %v3747 = vadd.f32 %v3360, %v3647
        %v3748 = vadd.f32 %v3361, %v3652
        %v3749 = vadd.f32 %v3362, %v3655
        %v3750 = vadd.f32 %v3363, %v3660
        %v3751 = vadd.f32 %v3364, %v3663
        %v3752 = vadd.f32 %v3365, %v3668
        %v3753 = vadd.f32 %v3366, %v3671
        %v3754 = vadd.f32 %v3367, %v3676
        %v3755 = vadd.f32 %v3368, %v3679
        %v3756 = vadd.f32 %v3369, %v3684
        %v3757 = vadd.f32 %v3370, %v3687
        %v3758 = vadd.f32 %v3371, %v3692
        %v3759 = vadd.f32 %v3372, %v3695
        %v3760 = vadd.f32 %v3373, %v3700
        %v3761 = vadd.f32 %v3374, %v3703
        %v3762 = vadd.f32 %v3375, %v3708
        %v3763 = vadd.f32 %v3376, %v3711
        %v3764 = vadd.f32 %v3377, %v3716
        %v3765 = vadd.f32 %v3378, %v3719
        %v3766 = vadd.f32 %v3379, %v3724
        %v3767 = vadd.f32 %v3380, %v3727
        %v3768 = vadd.f32 %v3381, %v3732
        %v3769 = vadd.f32 %v3382, %v3735
        %v3770 = vld [vmem:[%s3383] sm:$0xf]
        %v3771 = vld [vmem:[%s3383 + $0x4] sm:$0xf]
        %v3772 = vld [vmem:[%s3383 + $0x8] sm:$0x1]
        %v3773 = vld [vmem:[%s3383 + $0xc] sm:$0xf]
        %v3774 = vld [vmem:[%s3383 + $0x10] sm:$0xf]
        %v3775 = vld [vmem:[%s3383 + $0x14] sm:$0x1]
        %v3776 = vld [vmem:[%s3383 + $0x18] sm:$0xf]
        %v3777 = vld [vmem:[%s3383 + $0x1c] sm:$0xf]
        %v3778 = vld [vmem:[%s3383 + $0x20] sm:$0x1]
        %v3779 = vld [vmem:[%s3383 + $0x24] sm:$0xf]
        %v3780 = vld [vmem:[%s3383 + $0x28] sm:$0xf]
        %v3781 = vld [vmem:[%s3383 + $0x2c] sm:$0x1]
        %v3782 = vld [vmem:[%s3383 + $0x30] sm:$0xf]
        %v3783 = vld [vmem:[%s3383 + $0x34] sm:$0xf]
        %v3784 = vld [vmem:[%s3383 + $0x38] sm:$0x1]
        %v3785 = vld [vmem:[%s3383 + $0x3c] sm:$0xf]
        %v3786 = vld [vmem:[%s3383 + $0x40] sm:$0xf]
        %v3787 = vld [vmem:[%s3383 + $0x44] sm:$0x1]
        %v3788 = vld [vmem:[%s3383 + $0x48] sm:$0xf]
        %v3789 = vld [vmem:[%s3383 + $0x4c] sm:$0xf]
        %v3790 = vld [vmem:[%s3383 + $0x50] sm:$0x1]
        %v3791 = vld [vmem:[%s3383 + $0x54] sm:$0xf]
        %v3792 = vld [vmem:[%s3383 + $0x58] sm:$0xf]
        %v3793 = vld [vmem:[%s3383 + $0x5c] sm:$0x1]
        %v3794 = vld [vmem:[%s3383 + $0x60] sm:$0xf]
        %v3795 = vld [vmem:[%s3383 + $0x64] sm:$0xf]
        %v3796 = vld [vmem:[%s3383 + $0x68] sm:$0x1]
        %v3797 = vld [vmem:[%s3383 + $0x6c] sm:$0xf]
        %v3798 = vld [vmem:[%s3383 + $0x70] sm:$0xf]
        %v3799 = vld [vmem:[%s3383 + $0x74] sm:$0x1]
        %v3800 = vld [vmem:[%s3383 + $0x78] sm:$0xf]
        %v3801 = vld [vmem:[%s3383 + $0x7c] sm:$0xf]
        %v3802 = vld [vmem:[%s3383 + $0x80] sm:$0x1]
        %v3803 = vld [vmem:[%s3383 + $0x84] sm:$0xf]
        %v3804 = vld [vmem:[%s3383 + $0x88] sm:$0xf]
        %v3805 = vld [vmem:[%s3383 + $0x8c] sm:$0x1]
        %v3806 = vld [vmem:[%s3383 + $0x90] sm:$0xf]
        %v3807 = vld [vmem:[%s3383 + $0x94] sm:$0xf]
        %v3808 = vld [vmem:[%s3383 + $0x98] sm:$0x1]
        %v3809 = vld [vmem:[%s3383 + $0x9c] sm:$0xf]
        %v3810 = vld [vmem:[%s3383 + $0xa0] sm:$0xf]
        %v3811 = vld [vmem:[%s3383 + $0xa4] sm:$0x1]
        %v3812 = vld [vmem:[%s3383 + $0xa8] sm:$0xf]
        %v3813 = vld [vmem:[%s3383 + $0xac] sm:$0xf]
        %v3814 = vld [vmem:[%s3383 + $0xb0] sm:$0x1]
        %v3815 = vld [vmem:[%s3383 + $0xb4] sm:$0xf]
        %v3816 = vld [vmem:[%s3383 + $0xb8] sm:$0xf]
        %v3817 = vld [vmem:[%s3383 + $0xbc] sm:$0x1]
        %v3819 = vshrl.u32 %v3770, 16
        %v3821 = vrot.slane %v3819, 4
        %v3822 = vshll.u32 %v3770, 16
        %v3824 = vrot.slane %v3822, 5
        %v3825 = vor.u32 %v3821, %v3824
        %v3826 = vrot.slane %v3825, 4
        %v3828 = vshll.u32 %v3771, 16
        %v3830 = vrot.slane %v3828, 5
        %v3831 = vsel %vm279, %v3826, %v3830
        %v3832 = vshrl.u32 %v3771, 16
        %v3834 = vrot.slane %v3832, 4
        %v3835 = vor.u32 %v3834, %v3830
        %v3836 = vrot.slane %v3835, 4
        %v3838 = vshll.u32 %v3772, 16
        %v3840 = vrot.slane %v3838, 5
        %v3841 = vsel %vm279, %v3836, %v3840
        %v3843 = vshrl.u32 %v3773, 16
        %v3845 = vrot.slane %v3843, 4
        %v3846 = vshll.u32 %v3773, 16
        %v3848 = vrot.slane %v3846, 5
        %v3849 = vor.u32 %v3845, %v3848
        %v3850 = vrot.slane %v3849, 4
        %v3852 = vshll.u32 %v3774, 16
        %v3854 = vrot.slane %v3852, 5
        %v3855 = vsel %vm279, %v3850, %v3854
        %v3856 = vshrl.u32 %v3774, 16
        %v3858 = vrot.slane %v3856, 4
        %v3859 = vor.u32 %v3858, %v3854
        %v3860 = vrot.slane %v3859, 4
        %v3862 = vshll.u32 %v3775, 16
        %v3864 = vrot.slane %v3862, 5
        %v3865 = vsel %vm279, %v3860, %v3864
        %v3867 = vshrl.u32 %v3776, 16
        %v3869 = vrot.slane %v3867, 4
        %v3870 = vshll.u32 %v3776, 16
        %v3872 = vrot.slane %v3870, 5
        %v3873 = vor.u32 %v3869, %v3872
        %v3874 = vrot.slane %v3873, 4
        %v3876 = vshll.u32 %v3777, 16
        %v3878 = vrot.slane %v3876, 5
        %v3879 = vsel %vm279, %v3874, %v3878
        %v3880 = vshrl.u32 %v3777, 16
        %v3882 = vrot.slane %v3880, 4
        %v3883 = vor.u32 %v3882, %v3878
        %v3884 = vrot.slane %v3883, 4
        %v3886 = vshll.u32 %v3778, 16
        %v3888 = vrot.slane %v3886, 5
        %v3889 = vsel %vm279, %v3884, %v3888
        %v3891 = vshrl.u32 %v3779, 16
        %v3893 = vrot.slane %v3891, 4
        %v3894 = vshll.u32 %v3779, 16
        %v3896 = vrot.slane %v3894, 5
        %v3897 = vor.u32 %v3893, %v3896
        %v3898 = vrot.slane %v3897, 4
        %v3900 = vshll.u32 %v3780, 16
        %v3902 = vrot.slane %v3900, 5
        %v3903 = vsel %vm279, %v3898, %v3902
        %v3904 = vshrl.u32 %v3780, 16
        %v3906 = vrot.slane %v3904, 4
        %v3907 = vor.u32 %v3906, %v3902
        %v3908 = vrot.slane %v3907, 4
        %v3910 = vshll.u32 %v3781, 16
        %v3912 = vrot.slane %v3910, 5
        %v3913 = vsel %vm279, %v3908, %v3912
        %v3915 = vshrl.u32 %v3782, 16
        %v3917 = vrot.slane %v3915, 4
        %v3918 = vshll.u32 %v3782, 16
        %v3920 = vrot.slane %v3918, 5
        %v3921 = vor.u32 %v3917, %v3920
        %v3922 = vrot.slane %v3921, 4
        %v3924 = vshll.u32 %v3783, 16
        %v3926 = vrot.slane %v3924, 5
        %v3927 = vsel %vm279, %v3922, %v3926
        %v3928 = vshrl.u32 %v3783, 16
        %v3930 = vrot.slane %v3928, 4
        %v3931 = vor.u32 %v3930, %v3926
        %v3932 = vrot.slane %v3931, 4
        %v3934 = vshll.u32 %v3784, 16
        %v3936 = vrot.slane %v3934, 5
        %v3937 = vsel %vm279, %v3932, %v3936
        %v3939 = vshrl.u32 %v3785, 16
        %v3941 = vrot.slane %v3939, 4
        %v3942 = vshll.u32 %v3785, 16
        %v3944 = vrot.slane %v3942, 5
        %v3945 = vor.u32 %v3941, %v3944
        %v3946 = vrot.slane %v3945, 4
        %v3948 = vshll.u32 %v3786, 16
        %v3950 = vrot.slane %v3948, 5
        %v3951 = vsel %vm279, %v3946, %v3950
        %v3952 = vshrl.u32 %v3786, 16
        %v3954 = vrot.slane %v3952, 4
        %v3955 = vor.u32 %v3954, %v3950
        %v3956 = vrot.slane %v3955, 4
        %v3958 = vshll.u32 %v3787, 16
        %v3960 = vrot.slane %v3958, 5
        %v3961 = vsel %vm279, %v3956, %v3960
        %v3963 = vshrl.u32 %v3788, 16
        %v3965 = vrot.slane %v3963, 4
        %v3966 = vshll.u32 %v3788, 16
        %v3968 = vrot.slane %v3966, 5
        %v3969 = vor.u32 %v3965, %v3968
        %v3970 = vrot.slane %v3969, 4
        %v3972 = vshll.u32 %v3789, 16
        %v3974 = vrot.slane %v3972, 5
        %v3975 = vsel %vm279, %v3970, %v3974
        %v3976 = vshrl.u32 %v3789, 16
        %v3978 = vrot.slane %v3976, 4
        %v3979 = vor.u32 %v3978, %v3974
        %v3980 = vrot.slane %v3979, 4
        %v3982 = vshll.u32 %v3790, 16
        %v3984 = vrot.slane %v3982, 5
        %v3985 = vsel %vm279, %v3980, %v3984
        %v3987 = vshrl.u32 %v3791, 16
        %v3989 = vrot.slane %v3987, 4
        %v3990 = vshll.u32 %v3791, 16
        %v3992 = vrot.slane %v3990, 5
        %v3993 = vor.u32 %v3989, %v3992
        %v3994 = vrot.slane %v3993, 4
        %v3996 = vshll.u32 %v3792, 16
        %v3998 = vrot.slane %v3996, 5
        %v3999 = vsel %vm279, %v3994, %v3998
        %v4000 = vshrl.u32 %v3792, 16
        %v4002 = vrot.slane %v4000, 4
        %v4003 = vor.u32 %v4002, %v3998
        %v4004 = vrot.slane %v4003, 4
        %v4006 = vshll.u32 %v3793, 16
        %v4008 = vrot.slane %v4006, 5
        %v4009 = vsel %vm279, %v4004, %v4008
        %v4011 = vshrl.u32 %v3794, 16
        %v4013 = vrot.slane %v4011, 4
        %v4014 = vshll.u32 %v3794, 16
        %v4016 = vrot.slane %v4014, 5
        %v4017 = vor.u32 %v4013, %v4016
        %v4018 = vrot.slane %v4017, 4
        %v4020 = vshll.u32 %v3795, 16
        %v4022 = vrot.slane %v4020, 5
        %v4023 = vsel %vm279, %v4018, %v4022
        %v4024 = vshrl.u32 %v3795, 16
        %v4026 = vrot.slane %v4024, 4
        %v4027 = vor.u32 %v4026, %v4022
        %v4028 = vrot.slane %v4027, 4
        %v4030 = vshll.u32 %v3796, 16
        %v4032 = vrot.slane %v4030, 5
        %v4033 = vsel %vm279, %v4028, %v4032
        %v4035 = vshrl.u32 %v3797, 16
        %v4037 = vrot.slane %v4035, 4
        %v4038 = vshll.u32 %v3797, 16
        %v4040 = vrot.slane %v4038, 5
        %v4041 = vor.u32 %v4037, %v4040
        %v4042 = vrot.slane %v4041, 4
        %v4044 = vshll.u32 %v3798, 16
        %v4046 = vrot.slane %v4044, 5
        %v4047 = vsel %vm279, %v4042, %v4046
        %v4048 = vshrl.u32 %v3798, 16
        %v4050 = vrot.slane %v4048, 4
        %v4051 = vor.u32 %v4050, %v4046
        %v4052 = vrot.slane %v4051, 4
        %v4054 = vshll.u32 %v3799, 16
        %v4056 = vrot.slane %v4054, 5
        %v4057 = vsel %vm279, %v4052, %v4056
        %v4059 = vshrl.u32 %v3800, 16
        %v4061 = vrot.slane %v4059, 4
        %v4062 = vshll.u32 %v3800, 16
        %v4064 = vrot.slane %v4062, 5
        %v4065 = vor.u32 %v4061, %v4064
        %v4066 = vrot.slane %v4065, 4
        %v4068 = vshll.u32 %v3801, 16
        %v4070 = vrot.slane %v4068, 5
        %v4071 = vsel %vm279, %v4066, %v4070
        %v4072 = vshrl.u32 %v3801, 16
        %v4074 = vrot.slane %v4072, 4
        %v4075 = vor.u32 %v4074, %v4070
        %v4076 = vrot.slane %v4075, 4
        %v4078 = vshll.u32 %v3802, 16
        %v4080 = vrot.slane %v4078, 5
        %v4081 = vsel %vm279, %v4076, %v4080
        %v4083 = vshrl.u32 %v3803, 16
        %v4085 = vrot.slane %v4083, 4
        %v4086 = vshll.u32 %v3803, 16
        %v4088 = vrot.slane %v4086, 5
        %v4089 = vor.u32 %v4085, %v4088
        %v4090 = vrot.slane %v4089, 4
        %v4092 = vshll.u32 %v3804, 16
        %v4094 = vrot.slane %v4092, 5
        %v4095 = vsel %vm279, %v4090, %v4094
        %v4096 = vshrl.u32 %v3804, 16
        %v4098 = vrot.slane %v4096, 4
        %v4099 = vor.u32 %v4098, %v4094
        %v4100 = vrot.slane %v4099, 4
        %v4102 = vshll.u32 %v3805, 16
        %v4104 = vrot.slane %v4102, 5
        %v4105 = vsel %vm279, %v4100, %v4104
        %v4107 = vshrl.u32 %v3806, 16
        %v4109 = vrot.slane %v4107, 4
        %v4110 = vshll.u32 %v3806, 16
        %v4112 = vrot.slane %v4110, 5
        %v4113 = vor.u32 %v4109, %v4112
        %v4114 = vrot.slane %v4113, 4
        %v4116 = vshll.u32 %v3807, 16
        %v4118 = vrot.slane %v4116, 5
        %v4119 = vsel %vm279, %v4114, %v4118
        %v4120 = vshrl.u32 %v3807, 16
        %v4122 = vrot.slane %v4120, 4
        %v4123 = vor.u32 %v4122, %v4118
        %v4124 = vrot.slane %v4123, 4
        %v4126 = vshll.u32 %v3808, 16
        %v4128 = vrot.slane %v4126, 5
        %v4129 = vsel %vm279, %v4124, %v4128
        %v4131 = vshrl.u32 %v3809, 16
        %v4133 = vrot.slane %v4131, 4
        %v4134 = vshll.u32 %v3809, 16
        %v4136 = vrot.slane %v4134, 5
        %v4137 = vor.u32 %v4133, %v4136
        %v4138 = vrot.slane %v4137, 4
        %v4140 = vshll.u32 %v3810, 16
        %v4142 = vrot.slane %v4140, 5
        %v4143 = vsel %vm279, %v4138, %v4142
        %v4144 = vshrl.u32 %v3810, 16
        %v4146 = vrot.slane %v4144, 4
        %v4147 = vor.u32 %v4146, %v4142
        %v4148 = vrot.slane %v4147, 4
        %v4150 = vshll.u32 %v3811, 16
        %v4152 = vrot.slane %v4150, 5
        %v4153 = vsel %vm279, %v4148, %v4152
        %v4155 = vshrl.u32 %v3812, 16
        %v4157 = vrot.slane %v4155, 4
        %v4158 = vshll.u32 %v3812, 16
        %v4160 = vrot.slane %v4158, 5
        %v4161 = vor.u32 %v4157, %v4160
        %v4162 = vrot.slane %v4161, 4
        %v4164 = vshll.u32 %v3813, 16
        %v4166 = vrot.slane %v4164, 5
        %v4167 = vsel %vm279, %v4162, %v4166
        %v4168 = vshrl.u32 %v3813, 16
        %v4170 = vrot.slane %v4168, 4
        %v4171 = vor.u32 %v4170, %v4166
        %v4172 = vrot.slane %v4171, 4
        %v4174 = vshll.u32 %v3814, 16
        %v4176 = vrot.slane %v4174, 5
        %v4177 = vsel %vm279, %v4172, %v4176
        %v4179 = vshrl.u32 %v3815, 16
        %v4181 = vrot.slane %v4179, 4
        %v4182 = vshll.u32 %v3815, 16
        %v4184 = vrot.slane %v4182, 5
        %v4185 = vor.u32 %v4181, %v4184
        %v4186 = vrot.slane %v4185, 4
        %v4188 = vshll.u32 %v3816, 16
        %v4190 = vrot.slane %v4188, 5
        %v4191 = vsel %vm279, %v4186, %v4190
        %v4192 = vshrl.u32 %v3816, 16
        %v4194 = vrot.slane %v4192, 4
        %v4195 = vor.u32 %v4194, %v4190
        %v4196 = vrot.slane %v4195, 4
        %v4198 = vshll.u32 %v3817, 16
        %v4200 = vrot.slane %v4198, 5
        %v4201 = vsel %vm279, %v4196, %v4200
        %s4202 = scalar_lea.vmem [#allocation3], 448
        %v4203 = vld [vmem:[%s4202] sm:$0xf]
        %v4204 = vld [vmem:[%s4202 + $0x4] sm:$0xf]
        %v4205 = vld [vmem:[%s4202 + $0x8] sm:$0xf]
        %v4206 = vld [vmem:[%s4202 + $0xc] sm:$0xf]
        %v4207 = vld [vmem:[%s4202 + $0x10] sm:$0xf]
        %v4208 = vld [vmem:[%s4202 + $0x14] sm:$0xf]
        %v4209 = vld [vmem:[%s4202 + $0x18] sm:$0xf]
        %v4210 = vld [vmem:[%s4202 + $0x1c] sm:$0xf]
        %v4211 = vld [vmem:[%s4202 + $0x20] sm:$0xf]
        %v4212 = vld [vmem:[%s4202 + $0x24] sm:$0xf]
        %v4213 = vld [vmem:[%s4202 + $0x28] sm:$0xf]
        %v4214 = vld [vmem:[%s4202 + $0x2c] sm:$0xf]
        %v4215 = vld [vmem:[%s4202 + $0x30] sm:$0xf]
        %v4216 = vld [vmem:[%s4202 + $0x34] sm:$0xf]
        %v4217 = vld [vmem:[%s4202 + $0x38] sm:$0xf]
        %v4218 = vld [vmem:[%s4202 + $0x3c] sm:$0xf]
        %v4219 = vunpack.c.l.b16 %v3831
        %v4220 = vunpack.c.l.b16 %v3841
        %v4221 = vunpack.c.l.b16 %v3855
        %v4222 = vunpack.c.l.b16 %v3865
        %v4223 = vunpack.c.l.b16 %v3879
        %v4224 = vunpack.c.l.b16 %v3889
        %v4225 = vunpack.c.l.b16 %v3903
        %v4226 = vunpack.c.l.b16 %v3913
        %v4227 = vunpack.c.l.b16 %v3927
        %v4228 = vunpack.c.l.b16 %v3937
        %v4229 = vunpack.c.l.b16 %v3951
        %v4230 = vunpack.c.l.b16 %v3961
        %v4231 = vunpack.c.l.b16 %v3975
        %v4232 = vunpack.c.l.b16 %v3985
        %v4233 = vunpack.c.l.b16 %v3999
        %v4234 = vunpack.c.l.b16 %v4009
        %v4235 = vunpack.c.l.b16 %v4023
        %v4236 = vunpack.c.l.b16 %v4033
        %v4237 = vunpack.c.l.b16 %v4047
        %v4238 = vunpack.c.l.b16 %v4057
        %v4239 = vunpack.c.l.b16 %v4071
        %v4240 = vunpack.c.l.b16 %v4081
        %v4241 = vunpack.c.l.b16 %v4095
        %v4242 = vunpack.c.l.b16 %v4105
        %v4243 = vunpack.c.l.b16 %v4119
        %v4244 = vunpack.c.l.b16 %v4129
        %v4245 = vunpack.c.l.b16 %v4143
        %v4246 = vunpack.c.l.b16 %v4153
        %v4247 = vunpack.c.l.b16 %v4167
        %v4248 = vunpack.c.l.b16 %v4177
        %v4249 = vunpack.c.l.b16 %v4191
        %v4250 = vunpack.c.l.b16 %v4201
        %v4251 = vpack.c.b16 %v4220, %v4219
        %v4252 = vpack.c.b16 %v4222, %v4221
        %v4253 = vpack.c.b16 %v4224, %v4223
        %v4254 = vpack.c.b16 %v4226, %v4225
        %v4255 = vpack.c.b16 %v4228, %v4227
        %v4256 = vpack.c.b16 %v4230, %v4229
        %v4257 = vpack.c.b16 %v4232, %v4231
        %v4258 = vpack.c.b16 %v4234, %v4233
        %v4259 = vpack.c.b16 %v4236, %v4235
        %v4260 = vpack.c.b16 %v4238, %v4237
        %v4261 = vpack.c.b16 %v4240, %v4239
        %v4262 = vpack.c.b16 %v4242, %v4241
        %v4263 = vpack.c.b16 %v4244, %v4243
        %v4264 = vpack.c.b16 %v4246, %v4245
        %v4265 = vpack.c.b16 %v4248, %v4247
        %v4266 = vpack.c.b16 %v4250, %v4249
        %v4299 = vunpack.c.l.b16 %v4203
        %v4300 = vunpack.c.l.b16 %v4204
        %v4301 = vunpack.c.l.b16 %v4205
        %v4302 = vunpack.c.l.b16 %v4206
        %v4303 = vunpack.c.l.b16 %v4207
        %v4304 = vunpack.c.l.b16 %v4208
        %v4305 = vunpack.c.l.b16 %v4209
        %v4306 = vunpack.c.l.b16 %v4210
        %v4307 = vunpack.c.l.b16 %v4211
        %v4308 = vunpack.c.l.b16 %v4212
        %v4309 = vunpack.c.l.b16 %v4213
        %v4310 = vunpack.c.l.b16 %v4214
        %v4311 = vunpack.c.l.b16 %v4215
        %v4312 = vunpack.c.l.b16 %v4216
        %v4313 = vunpack.c.l.b16 %v4217
        %v4314 = vunpack.c.l.b16 %v4218
        %v4315 = vpack.c.b16 %v4300, %v4299
        %v4316 = vpack.c.b16 %v4302, %v4301
        %v4317 = vpack.c.b16 %v4304, %v4303
        %v4318 = vpack.c.b16 %v4306, %v4305
        %v4319 = vpack.c.b16 %v4308, %v4307
        %v4320 = vpack.c.b16 %v4310, %v4309
        %v4321 = vpack.c.b16 %v4312, %v4311
        %v4322 = vpack.c.b16 %v4314, %v4313
        %4331 = vmatprep.subr.bf16.mxu0 0
        %4332 = vmatpush1.bf16.msra.mxu0 %v4322
        %4333 = vmatprep.subr.bf16.mxu0 0
        %4334 = vmatpush1.bf16.msra.mxu0 %v4321
        %4335 = vmatprep.subr.bf16.mxu0 0
        %4336 = vmatpush1.bf16.msra.mxu0 %v4320
        %4337 = vmatprep.subr.bf16.mxu0 0
        %4338 = vmatpush1.bf16.msra.mxu0 %v4319
        %4339 = vmatprep.subr.bf16.mxu0 0
        %4340 = vmatpush1.bf16.msra.mxu0 %v4318
        %4341 = vmatprep.subr.bf16.mxu0 0
        %4342 = vmatpush1.bf16.msra.mxu0 %v4317
        %4343 = vmatprep.subr.bf16.mxu0 0
        %4344 = vmatpush1.bf16.msra.mxu0 %v4316
        %4345 = vmatprep.subr.bf16.mxu0 0
        %4346 = vmatpush1.bf16.msra.mxu0 %v4315
        %4347 = vmatprep.subr.bf16.mxu0 0
        %4348 = vmatpush2.bf16.msra.mxu0 0
        %4349 = vmatprep.subr.bf16.mxu0 0
        %4350 = vmatpush2.bf16.msra.mxu0 0
        %4351 = vmatprep.subr.bf16.mxu0 0
        %4352 = vmatpush2.bf16.msra.mxu0 0
        %4353 = vmatprep.subr.bf16.mxu0 0
        %4354 = vmatpush2.bf16.msra.mxu0 0
        %4355 = vmatprep.subr.bf16.mxu0 0
        %4356 = vmatpush2.bf16.msra.mxu0 0
        %4357 = vmatprep.subr.bf16.mxu0 0
        %4358 = vmatpush2.bf16.msra.mxu0 0
        %4359 = vmatprep.subr.bf16.mxu0 0
        %4360 = vmatpush2.bf16.msra.mxu0 0
        %4361 = vmatprep.subr.bf16.mxu0 0
        %4362 = vmatpush2.bf16.msra.mxu0 0
        %4363 = vmatprep.mubr.bf16.mxu0 0
        %4364 = vmatmul.mubr.bf16.gmra.mxu0 %v4251
        %v4365 = vpop.f32.mrf.mxu0
        %v4366 = vadd.f32 0.0, %v4365
        %v4367 = vpop.f32.mrf.mxu0
        %v4368 = vpop.f32.mrf.mxu0
        %v4369 = vadd.f32 0.0, %v4368
        %v4370 = vpop.f32.mrf.mxu0
        %4371 = vmatprep.mubr.bf16.mxu0 0
        %4372 = vmatmul.mubr.bf16.gmra.mxu0 %v4252
        %v4373 = vpop.f32.mrf.mxu0
        %v4374 = vadd.f32 0.0, %v4373
        %v4375 = vpop.f32.mrf.mxu0
        %v4376 = vpop.f32.mrf.mxu0
        %v4377 = vadd.f32 0.0, %v4376
        %v4378 = vpop.f32.mrf.mxu0
        %4379 = vmatprep.mubr.bf16.mxu0 0
        %4380 = vmatmul.mubr.bf16.gmra.mxu0 %v4253
        %v4381 = vpop.f32.mrf.mxu0
        %v4382 = vadd.f32 0.0, %v4381
        %v4383 = vpop.f32.mrf.mxu0
        %v4384 = vpop.f32.mrf.mxu0
        %v4385 = vadd.f32 0.0, %v4384
        %v4386 = vpop.f32.mrf.mxu0
        %4387 = vmatprep.mubr.bf16.mxu0 0
        %4388 = vmatmul.mubr.bf16.gmra.mxu0 %v4254
        %v4389 = vpop.f32.mrf.mxu0
        %v4390 = vadd.f32 0.0, %v4389
        %v4391 = vpop.f32.mrf.mxu0
        %v4392 = vpop.f32.mrf.mxu0
        %v4393 = vadd.f32 0.0, %v4392
        %v4394 = vpop.f32.mrf.mxu0
        %4395 = vmatprep.mubr.bf16.mxu0 0
        %4396 = vmatmul.mubr.bf16.gmra.mxu0 %v4255
        %v4397 = vpop.f32.mrf.mxu0
        %v4398 = vadd.f32 0.0, %v4397
        %v4399 = vpop.f32.mrf.mxu0
        %v4400 = vpop.f32.mrf.mxu0
        %v4401 = vadd.f32 0.0, %v4400
        %v4402 = vpop.f32.mrf.mxu0
        %4403 = vmatprep.mubr.bf16.mxu0 0
        %4404 = vmatmul.mubr.bf16.gmra.mxu0 %v4256
        %v4405 = vpop.f32.mrf.mxu0
        %v4406 = vadd.f32 0.0, %v4405
        %v4407 = vpop.f32.mrf.mxu0
        %v4408 = vpop.f32.mrf.mxu0
        %v4409 = vadd.f32 0.0, %v4408
        %v4410 = vpop.f32.mrf.mxu0
        %4411 = vmatprep.mubr.bf16.mxu0 0
        %4412 = vmatmul.mubr.bf16.gmra.mxu0 %v4257
        %v4413 = vpop.f32.mrf.mxu0
        %v4414 = vadd.f32 0.0, %v4413
        %v4415 = vpop.f32.mrf.mxu0
        %v4416 = vpop.f32.mrf.mxu0
        %v4417 = vadd.f32 0.0, %v4416
        %v4418 = vpop.f32.mrf.mxu0
        %4419 = vmatprep.mubr.bf16.mxu0 0
        %4420 = vmatmul.mubr.bf16.gmra.mxu0 %v4258
        %v4421 = vpop.f32.mrf.mxu0
        %v4422 = vadd.f32 0.0, %v4421
        %v4423 = vpop.f32.mrf.mxu0
        %v4424 = vpop.f32.mrf.mxu0
        %v4425 = vadd.f32 0.0, %v4424
        %v4426 = vpop.f32.mrf.mxu0
        %4427 = vmatprep.mubr.bf16.mxu0 0
        %4428 = vmatmul.mubr.bf16.gmra.mxu0 %v4259
        %v4429 = vpop.f32.mrf.mxu0
        %v4430 = vadd.f32 0.0, %v4429
        %v4431 = vpop.f32.mrf.mxu0
        %v4432 = vpop.f32.mrf.mxu0
        %v4433 = vadd.f32 0.0, %v4432
        %v4434 = vpop.f32.mrf.mxu0
        %4435 = vmatprep.mubr.bf16.mxu0 0
        %4436 = vmatmul.mubr.bf16.gmra.mxu0 %v4260
        %v4437 = vpop.f32.mrf.mxu0
        %v4438 = vadd.f32 0.0, %v4437
        %v4439 = vpop.f32.mrf.mxu0
        %v4440 = vpop.f32.mrf.mxu0
        %v4441 = vadd.f32 0.0, %v4440
        %v4442 = vpop.f32.mrf.mxu0
        %4443 = vmatprep.mubr.bf16.mxu0 0
        %4444 = vmatmul.mubr.bf16.gmra.mxu0 %v4261
        %v4445 = vpop.f32.mrf.mxu0
        %v4446 = vadd.f32 0.0, %v4445
        %v4447 = vpop.f32.mrf.mxu0
        %v4448 = vpop.f32.mrf.mxu0
        %v4449 = vadd.f32 0.0, %v4448
        %v4450 = vpop.f32.mrf.mxu0
        %4451 = vmatprep.mubr.bf16.mxu0 0
        %4452 = vmatmul.mubr.bf16.gmra.mxu0 %v4262
        %v4453 = vpop.f32.mrf.mxu0
        %v4454 = vadd.f32 0.0, %v4453
        %v4455 = vpop.f32.mrf.mxu0
        %v4456 = vpop.f32.mrf.mxu0
        %v4457 = vadd.f32 0.0, %v4456
        %v4458 = vpop.f32.mrf.mxu0
        %4459 = vmatprep.mubr.bf16.mxu0 0
        %4460 = vmatmul.mubr.bf16.gmra.mxu0 %v4263
        %v4461 = vpop.f32.mrf.mxu0
        %v4462 = vadd.f32 0.0, %v4461
        %v4463 = vpop.f32.mrf.mxu0
        %v4464 = vpop.f32.mrf.mxu0
        %v4465 = vadd.f32 0.0, %v4464
        %v4466 = vpop.f32.mrf.mxu0
        %4467 = vmatprep.mubr.bf16.mxu0 0
        %4468 = vmatmul.mubr.bf16.gmra.mxu0 %v4264
        %v4469 = vpop.f32.mrf.mxu0
        %v4470 = vadd.f32 0.0, %v4469
        %v4471 = vpop.f32.mrf.mxu0
        %v4472 = vpop.f32.mrf.mxu0
        %v4473 = vadd.f32 0.0, %v4472
        %v4474 = vpop.f32.mrf.mxu0
        %4475 = vmatprep.mubr.bf16.mxu0 0
        %4476 = vmatmul.mubr.bf16.gmra.mxu0 %v4265
        %v4477 = vpop.f32.mrf.mxu0
        %v4478 = vadd.f32 0.0, %v4477
        %v4479 = vpop.f32.mrf.mxu0
        %v4480 = vpop.f32.mrf.mxu0
        %v4481 = vadd.f32 0.0, %v4480
        %v4482 = vpop.f32.mrf.mxu0
        %4483 = vmatprep.mubr.bf16.mxu0 0
        %4484 = vmatmul.mubr.bf16.gmra.mxu0 %v4266
        %v4485 = vpop.f32.mrf.mxu0
        %v4486 = vadd.f32 0.0, %v4485
        %v4487 = vpop.f32.mrf.mxu0
        %v4488 = vpop.f32.mrf.mxu0
        %v4489 = vadd.f32 0.0, %v4488
        %v4490 = vpop.f32.mrf.mxu0
        %4491 = vdwg.mxu0
        %v4492 = vadd.f32 %v3738, %v4366
        %v4493 = vadd.f32 %v3739, %v4369
        %v4494 = vadd.f32 %v3740, %v4374
        %v4495 = vadd.f32 %v3741, %v4377
        %v4496 = vadd.f32 %v3742, %v4382
        %v4497 = vadd.f32 %v3743, %v4385
        %v4498 = vadd.f32 %v3744, %v4390
        %v4499 = vadd.f32 %v3745, %v4393
        %v4500 = vadd.f32 %v3746, %v4398
        %v4501 = vadd.f32 %v3747, %v4401
        %v4502 = vadd.f32 %v3748, %v4406
        %v4503 = vadd.f32 %v3749, %v4409
        %v4504 = vadd.f32 %v3750, %v4414
        %v4505 = vadd.f32 %v3751, %v4417
        %v4506 = vadd.f32 %v3752, %v4422
        %v4507 = vadd.f32 %v3753, %v4425
        %v4508 = vadd.f32 %v3754, %v4430
        %v4509 = vadd.f32 %v3755, %v4433
        %v4510 = vadd.f32 %v3756, %v4438
        %v4511 = vadd.f32 %v3757, %v4441
        %v4512 = vadd.f32 %v3758, %v4446
        %v4513 = vadd.f32 %v3759, %v4449
        %v4514 = vadd.f32 %v3760, %v4454
        %v4515 = vadd.f32 %v3761, %v4457
        %v4516 = vadd.f32 %v3762, %v4462
        %v4517 = vadd.f32 %v3763, %v4465
        %v4518 = vadd.f32 %v3764, %v4470
        %v4519 = vadd.f32 %v3765, %v4473
        %v4520 = vadd.f32 %v3766, %v4478
        %v4521 = vadd.f32 %v3767, %v4481
        %v4522 = vadd.f32 %v3768, %v4486
        %v4523 = vadd.f32 %v3769, %v4489
        %v4524 = vld [vmem:[%s3383] sm:$0xe]
        %v4525 = vld [vmem:[%s3383 + $0xc] sm:$0xe]
        %v4526 = vld [vmem:[%s3383 + $0x18] sm:$0xe]
        %v4527 = vld [vmem:[%s3383 + $0x24] sm:$0xe]
        %v4528 = vld [vmem:[%s3383 + $0x30] sm:$0xe]
        %v4529 = vld [vmem:[%s3383 + $0x3c] sm:$0xe]
        %v4530 = vld [vmem:[%s3383 + $0x48] sm:$0xe]
        %v4531 = vld [vmem:[%s3383 + $0x54] sm:$0xe]
        %v4532 = vld [vmem:[%s3383 + $0x60] sm:$0xe]
        %v4533 = vld [vmem:[%s3383 + $0x6c] sm:$0xe]
        %v4534 = vld [vmem:[%s3383 + $0x78] sm:$0xe]
        %v4535 = vld [vmem:[%s3383 + $0x84] sm:$0xe]
        %v4536 = vld [vmem:[%s3383 + $0x90] sm:$0xe]
        %v4537 = vld [vmem:[%s3383 + $0x9c] sm:$0xe]
        %v4538 = vld [vmem:[%s3383 + $0xa8] sm:$0xe]
        %v4539 = vld [vmem:[%s3383 + $0xb4] sm:$0xe]
        %v4588 = vrot.slane %v4524, 5
        %v4589 = vrot.slane %v4588, 4
        %v4590 = vrot.slane %v3771, 5
        %v4591 = vsel %vm1309, %v4589, %v4590
        %v4592 = vrot.slane %v4590, 4
        %v4593 = vrot.slane %v3772, 5
        %v4594 = vsel %vm1309, %v4592, %v4593
        %v4595 = vrot.slane %v4525, 5
        %v4596 = vrot.slane %v4595, 4
        %v4597 = vrot.slane %v3774, 5
        %v4598 = vsel %vm1309, %v4596, %v4597
        %v4599 = vrot.slane %v4597, 4
        %v4600 = vrot.slane %v3775, 5
        %v4601 = vsel %vm1309, %v4599, %v4600
        %v4602 = vrot.slane %v4526, 5
        %v4603 = vrot.slane %v4602, 4
        %v4604 = vrot.slane %v3777, 5
        %v4605 = vsel %vm1309, %v4603, %v4604
        %v4606 = vrot.slane %v4604, 4
        %v4607 = vrot.slane %v3778, 5
        %v4608 = vsel %vm1309, %v4606, %v4607
        %v4609 = vrot.slane %v4527, 5
        %v4610 = vrot.slane %v4609, 4
        %v4611 = vrot.slane %v3780, 5
        %v4612 = vsel %vm1309, %v4610, %v4611
        %v4613 = vrot.slane %v4611, 4
        %v4614 = vrot.slane %v3781, 5
        %v4615 = vsel %vm1309, %v4613, %v4614
        %v4616 = vrot.slane %v4528, 5
        %v4617 = vrot.slane %v4616, 4
        %v4618 = vrot.slane %v3783, 5
        %v4619 = vsel %vm1309, %v4617, %v4618
        %v4620 = vrot.slane %v4618, 4
        %v4621 = vrot.slane %v3784, 5
        %v4622 = vsel %vm1309, %v4620, %v4621
        %v4623 = vrot.slane %v4529, 5
        %v4624 = vrot.slane %v4623, 4
        %v4625 = vrot.slane %v3786, 5
        %v4626 = vsel %vm1309, %v4624, %v4625
        %v4627 = vrot.slane %v4625, 4
        %v4628 = vrot.slane %v3787, 5
        %v4629 = vsel %vm1309, %v4627, %v4628
        %v4630 = vrot.slane %v4530, 5
        %v4631 = vrot.slane %v4630, 4
        %v4632 = vrot.slane %v3789, 5
        %v4633 = vsel %vm1309, %v4631, %v4632
        %v4634 = vrot.slane %v4632, 4
        %v4635 = vrot.slane %v3790, 5
        %v4636 = vsel %vm1309, %v4634, %v4635
        %v4637 = vrot.slane %v4531, 5
        %v4638 = vrot.slane %v4637, 4
        %v4639 = vrot.slane %v3792, 5
        %v4640 = vsel %vm1309, %v4638, %v4639
        %v4641 = vrot.slane %v4639, 4
        %v4642 = vrot.slane %v3793, 5
        %v4643 = vsel %vm1309, %v4641, %v4642
        %v4644 = vrot.slane %v4532, 5
        %v4645 = vrot.slane %v4644, 4
        %v4646 = vrot.slane %v3795, 5
        %v4647 = vsel %vm1309, %v4645, %v4646
        %v4648 = vrot.slane %v4646, 4
        %v4649 = vrot.slane %v3796, 5
        %v4650 = vsel %vm1309, %v4648, %v4649
        %v4651 = vrot.slane %v4533, 5
        %v4652 = vrot.slane %v4651, 4
        %v4653 = vrot.slane %v3798, 5
        %v4654 = vsel %vm1309, %v4652, %v4653
        %v4655 = vrot.slane %v4653, 4
        %v4656 = vrot.slane %v3799, 5
        %v4657 = vsel %vm1309, %v4655, %v4656
        %v4658 = vrot.slane %v4534, 5
        %v4659 = vrot.slane %v4658, 4
        %v4660 = vrot.slane %v3801, 5
        %v4661 = vsel %vm1309, %v4659, %v4660
        %v4662 = vrot.slane %v4660, 4
        %v4663 = vrot.slane %v3802, 5
        %v4664 = vsel %vm1309, %v4662, %v4663
        %v4665 = vrot.slane %v4535, 5
        %v4666 = vrot.slane %v4665, 4
        %v4667 = vrot.slane %v3804, 5
        %v4668 = vsel %vm1309, %v4666, %v4667
        %v4669 = vrot.slane %v4667, 4
        %v4670 = vrot.slane %v3805, 5
        %v4671 = vsel %vm1309, %v4669, %v4670
        %v4672 = vrot.slane %v4536, 5
        %v4673 = vrot.slane %v4672, 4
        %v4674 = vrot.slane %v3807, 5
        %v4675 = vsel %vm1309, %v4673, %v4674
        %v4676 = vrot.slane %v4674, 4
        %v4677 = vrot.slane %v3808, 5
        %v4678 = vsel %vm1309, %v4676, %v4677
        %v4679 = vrot.slane %v4537, 5
        %v4680 = vrot.slane %v4679, 4
        %v4681 = vrot.slane %v3810, 5
        %v4682 = vsel %vm1309, %v4680, %v4681
        %v4683 = vrot.slane %v4681, 4
        %v4684 = vrot.slane %v3811, 5
        %v4685 = vsel %vm1309, %v4683, %v4684
        %v4686 = vrot.slane %v4538, 5
        %v4687 = vrot.slane %v4686, 4
        %v4688 = vrot.slane %v3813, 5
        %v4689 = vsel %vm1309, %v4687, %v4688
        %v4690 = vrot.slane %v4688, 4
        %v4691 = vrot.slane %v3814, 5
        %v4692 = vsel %vm1309, %v4690, %v4691
        %v4693 = vrot.slane %v4539, 5
        %v4694 = vrot.slane %v4693, 4
        %v4695 = vrot.slane %v3816, 5
        %v4696 = vsel %vm1309, %v4694, %v4695
        %v4697 = vrot.slane %v4695, 4
        %v4698 = vrot.slane %v3817, 5
        %v4699 = vsel %vm1309, %v4697, %v4698
        %s4700 = scalar_lea.vmem [#allocation3], 512
        %v4701 = vld [vmem:[%s4700] sm:$0xf]
        %v4702 = vld [vmem:[%s4700 + $0x4] sm:$0xf]
        %v4703 = vld [vmem:[%s4700 + $0x8] sm:$0xf]
        %v4704 = vld [vmem:[%s4700 + $0xc] sm:$0xf]
        %v4705 = vld [vmem:[%s4700 + $0x10] sm:$0xf]
        %v4706 = vld [vmem:[%s4700 + $0x14] sm:$0xf]
        %v4707 = vld [vmem:[%s4700 + $0x18] sm:$0xf]
        %v4708 = vld [vmem:[%s4700 + $0x1c] sm:$0xf]
        %v4709 = vld [vmem:[%s4700 + $0x20] sm:$0xf]
        %v4710 = vld [vmem:[%s4700 + $0x24] sm:$0xf]
        %v4711 = vld [vmem:[%s4700 + $0x28] sm:$0xf]
        %v4712 = vld [vmem:[%s4700 + $0x2c] sm:$0xf]
        %v4713 = vld [vmem:[%s4700 + $0x30] sm:$0xf]
        %v4714 = vld [vmem:[%s4700 + $0x34] sm:$0xf]
        %v4715 = vld [vmem:[%s4700 + $0x38] sm:$0xf]
        %v4716 = vld [vmem:[%s4700 + $0x3c] sm:$0xf]
        %v4717 = vunpack.c.l.b16 %v4591
        %v4718 = vunpack.c.l.b16 %v4594
        %v4719 = vunpack.c.l.b16 %v4598
        %v4720 = vunpack.c.l.b16 %v4601
        %v4721 = vunpack.c.l.b16 %v4605
        %v4722 = vunpack.c.l.b16 %v4608
        %v4723 = vunpack.c.l.b16 %v4612
        %v4724 = vunpack.c.l.b16 %v4615
        %v4725 = vunpack.c.l.b16 %v4619
        %v4726 = vunpack.c.l.b16 %v4622
        %v4727 = vunpack.c.l.b16 %v4626
        %v4728 = vunpack.c.l.b16 %v4629
        %v4729 = vunpack.c.l.b16 %v4633
        %v4730 = vunpack.c.l.b16 %v4636
        %v4731 = vunpack.c.l.b16 %v4640
        %v4732 = vunpack.c.l.b16 %v4643
        %v4733 = vunpack.c.l.b16 %v4647
        %v4734 = vunpack.c.l.b16 %v4650
        %v4735 = vunpack.c.l.b16 %v4654
        %v4736 = vunpack.c.l.b16 %v4657
        %v4737 = vunpack.c.l.b16 %v4661
        %v4738 = vunpack.c.l.b16 %v4664
        %v4739 = vunpack.c.l.b16 %v4668
        %v4740 = vunpack.c.l.b16 %v4671
        %v4741 = vunpack.c.l.b16 %v4675
        %v4742 = vunpack.c.l.b16 %v4678
        %v4743 = vunpack.c.l.b16 %v4682
        %v4744 = vunpack.c.l.b16 %v4685
        %v4745 = vunpack.c.l.b16 %v4689
        %v4746 = vunpack.c.l.b16 %v4692
        %v4747 = vunpack.c.l.b16 %v4696
        %v4748 = vunpack.c.l.b16 %v4699
        %v4749 = vpack.c.b16 %v4718, %v4717
        %v4750 = vpack.c.b16 %v4720, %v4719
        %v4751 = vpack.c.b16 %v4722, %v4721
        %v4752 = vpack.c.b16 %v4724, %v4723
        %v4753 = vpack.c.b16 %v4726, %v4725
        %v4754 = vpack.c.b16 %v4728, %v4727
        %v4755 = vpack.c.b16 %v4730, %v4729
        %v4756 = vpack.c.b16 %v4732, %v4731
        %v4757 = vpack.c.b16 %v4734, %v4733
        %v4758 = vpack.c.b16 %v4736, %v4735
        %v4759 = vpack.c.b16 %v4738, %v4737
        %v4760 = vpack.c.b16 %v4740, %v4739
        %v4761 = vpack.c.b16 %v4742, %v4741
        %v4762 = vpack.c.b16 %v4744, %v4743
        %v4763 = vpack.c.b16 %v4746, %v4745
        %v4764 = vpack.c.b16 %v4748, %v4747
        %v4797 = vunpack.c.l.b16 %v4701
        %v4798 = vunpack.c.l.b16 %v4702
        %v4799 = vunpack.c.l.b16 %v4703
        %v4800 = vunpack.c.l.b16 %v4704
        %v4801 = vunpack.c.l.b16 %v4705
        %v4802 = vunpack.c.l.b16 %v4706
        %v4803 = vunpack.c.l.b16 %v4707
        %v4804 = vunpack.c.l.b16 %v4708
        %v4805 = vunpack.c.l.b16 %v4709
        %v4806 = vunpack.c.l.b16 %v4710
        %v4807 = vunpack.c.l.b16 %v4711
        %v4808 = vunpack.c.l.b16 %v4712
        %v4809 = vunpack.c.l.b16 %v4713
        %v4810 = vunpack.c.l.b16 %v4714
        %v4811 = vunpack.c.l.b16 %v4715
        %v4812 = vunpack.c.l.b16 %v4716
        %v4813 = vpack.c.b16 %v4798, %v4797
        %v4814 = vpack.c.b16 %v4800, %v4799
        %v4815 = vpack.c.b16 %v4802, %v4801
        %v4816 = vpack.c.b16 %v4804, %v4803
        %v4817 = vpack.c.b16 %v4806, %v4805
        %v4818 = vpack.c.b16 %v4808, %v4807
        %v4819 = vpack.c.b16 %v4810, %v4809
        %v4820 = vpack.c.b16 %v4812, %v4811
        %4829 = vmatprep.subr.bf16.mxu0 0
        %4830 = vmatpush1.bf16.msra.mxu0 %v4820
        %4831 = vmatprep.subr.bf16.mxu0 0
        %4832 = vmatpush1.bf16.msra.mxu0 %v4819
        %4833 = vmatprep.subr.bf16.mxu0 0
        %4834 = vmatpush1.bf16.msra.mxu0 %v4818
        %4835 = vmatprep.subr.bf16.mxu0 0
        %4836 = vmatpush1.bf16.msra.mxu0 %v4817
        %4837 = vmatprep.subr.bf16.mxu0 0
        %4838 = vmatpush1.bf16.msra.mxu0 %v4816
        %4839 = vmatprep.subr.bf16.mxu0 0
        %4840 = vmatpush1.bf16.msra.mxu0 %v4815
        %4841 = vmatprep.subr.bf16.mxu0 0
        %4842 = vmatpush1.bf16.msra.mxu0 %v4814
        %4843 = vmatprep.subr.bf16.mxu0 0
        %4844 = vmatpush1.bf16.msra.mxu0 %v4813
        %4845 = vmatprep.subr.bf16.mxu0 0
        %4846 = vmatpush2.bf16.msra.mxu0 0
        %4847 = vmatprep.subr.bf16.mxu0 0
        %4848 = vmatpush2.bf16.msra.mxu0 0
        %4849 = vmatprep.subr.bf16.mxu0 0
        %4850 = vmatpush2.bf16.msra.mxu0 0
        %4851 = vmatprep.subr.bf16.mxu0 0
        %4852 = vmatpush2.bf16.msra.mxu0 0
        %4853 = vmatprep.subr.bf16.mxu0 0
        %4854 = vmatpush2.bf16.msra.mxu0 0
        %4855 = vmatprep.subr.bf16.mxu0 0
        %4856 = vmatpush2.bf16.msra.mxu0 0
        %4857 = vmatprep.subr.bf16.mxu0 0
        %4858 = vmatpush2.bf16.msra.mxu0 0
        %4859 = vmatprep.subr.bf16.mxu0 0
        %4860 = vmatpush2.bf16.msra.mxu0 0
        %4861 = vmatprep.mubr.bf16.mxu0 0
        %4862 = vmatmul.mubr.bf16.gmra.mxu0 %v4749
        %v4863 = vpop.f32.mrf.mxu0
        %v4864 = vadd.f32 0.0, %v4863
        %v4865 = vpop.f32.mrf.mxu0
        %v4866 = vpop.f32.mrf.mxu0
        %v4867 = vadd.f32 0.0, %v4866
        %v4868 = vpop.f32.mrf.mxu0
        %4869 = vmatprep.mubr.bf16.mxu0 0
        %4870 = vmatmul.mubr.bf16.gmra.mxu0 %v4750
        %v4871 = vpop.f32.mrf.mxu0
        %v4872 = vadd.f32 0.0, %v4871
        %v4873 = vpop.f32.mrf.mxu0
        %v4874 = vpop.f32.mrf.mxu0
        %v4875 = vadd.f32 0.0, %v4874
        %v4876 = vpop.f32.mrf.mxu0
        %4877 = vmatprep.mubr.bf16.mxu0 0
        %4878 = vmatmul.mubr.bf16.gmra.mxu0 %v4751
        %v4879 = vpop.f32.mrf.mxu0
        %v4880 = vadd.f32 0.0, %v4879
        %v4881 = vpop.f32.mrf.mxu0
        %v4882 = vpop.f32.mrf.mxu0
        %v4883 = vadd.f32 0.0, %v4882
        %v4884 = vpop.f32.mrf.mxu0
        %4885 = vmatprep.mubr.bf16.mxu0 0
        %4886 = vmatmul.mubr.bf16.gmra.mxu0 %v4752
        %v4887 = vpop.f32.mrf.mxu0
        %v4888 = vadd.f32 0.0, %v4887
        %v4889 = vpop.f32.mrf.mxu0
        %v4890 = vpop.f32.mrf.mxu0
        %v4891 = vadd.f32 0.0, %v4890
        %v4892 = vpop.f32.mrf.mxu0
        %4893 = vmatprep.mubr.bf16.mxu0 0
        %4894 = vmatmul.mubr.bf16.gmra.mxu0 %v4753
        %v4895 = vpop.f32.mrf.mxu0
        %v4896 = vadd.f32 0.0, %v4895
        %v4897 = vpop.f32.mrf.mxu0
        %v4898 = vpop.f32.mrf.mxu0
        %v4899 = vadd.f32 0.0, %v4898
        %v4900 = vpop.f32.mrf.mxu0
        %4901 = vmatprep.mubr.bf16.mxu0 0
        %4902 = vmatmul.mubr.bf16.gmra.mxu0 %v4754
        %v4903 = vpop.f32.mrf.mxu0
        %v4904 = vadd.f32 0.0, %v4903
        %v4905 = vpop.f32.mrf.mxu0
        %v4906 = vpop.f32.mrf.mxu0
        %v4907 = vadd.f32 0.0, %v4906
        %v4908 = vpop.f32.mrf.mxu0
        %4909 = vmatprep.mubr.bf16.mxu0 0
        %4910 = vmatmul.mubr.bf16.gmra.mxu0 %v4755
        %v4911 = vpop.f32.mrf.mxu0
        %v4912 = vadd.f32 0.0, %v4911
        %v4913 = vpop.f32.mrf.mxu0
        %v4914 = vpop.f32.mrf.mxu0
        %v4915 = vadd.f32 0.0, %v4914
        %v4916 = vpop.f32.mrf.mxu0
        %4917 = vmatprep.mubr.bf16.mxu0 0
        %4918 = vmatmul.mubr.bf16.gmra.mxu0 %v4756
        %v4919 = vpop.f32.mrf.mxu0
        %v4920 = vadd.f32 0.0, %v4919
        %v4921 = vpop.f32.mrf.mxu0
        %v4922 = vpop.f32.mrf.mxu0
        %v4923 = vadd.f32 0.0, %v4922
        %v4924 = vpop.f32.mrf.mxu0
        %4925 = vmatprep.mubr.bf16.mxu0 0
        %4926 = vmatmul.mubr.bf16.gmra.mxu0 %v4757
        %v4927 = vpop.f32.mrf.mxu0
        %v4928 = vadd.f32 0.0, %v4927
        %v4929 = vpop.f32.mrf.mxu0
        %v4930 = vpop.f32.mrf.mxu0
        %v4931 = vadd.f32 0.0, %v4930
        %v4932 = vpop.f32.mrf.mxu0
        %4933 = vmatprep.mubr.bf16.mxu0 0
        %4934 = vmatmul.mubr.bf16.gmra.mxu0 %v4758
        %v4935 = vpop.f32.mrf.mxu0
        %v4936 = vadd.f32 0.0, %v4935
        %v4937 = vpop.f32.mrf.mxu0
        %v4938 = vpop.f32.mrf.mxu0
        %v4939 = vadd.f32 0.0, %v4938
        %v4940 = vpop.f32.mrf.mxu0
        %4941 = vmatprep.mubr.bf16.mxu0 0
        %4942 = vmatmul.mubr.bf16.gmra.mxu0 %v4759
        %v4943 = vpop.f32.mrf.mxu0
        %v4944 = vadd.f32 0.0, %v4943
        %v4945 = vpop.f32.mrf.mxu0
        %v4946 = vpop.f32.mrf.mxu0
        %v4947 = vadd.f32 0.0, %v4946
        %v4948 = vpop.f32.mrf.mxu0
        %4949 = vmatprep.mubr.bf16.mxu0 0
        %4950 = vmatmul.mubr.bf16.gmra.mxu0 %v4760
        %v4951 = vpop.f32.mrf.mxu0
        %v4952 = vadd.f32 0.0, %v4951
        %v4953 = vpop.f32.mrf.mxu0
        %v4954 = vpop.f32.mrf.mxu0
        %v4955 = vadd.f32 0.0, %v4954
        %v4956 = vpop.f32.mrf.mxu0
        %4957 = vmatprep.mubr.bf16.mxu0 0
        %4958 = vmatmul.mubr.bf16.gmra.mxu0 %v4761
        %v4959 = vpop.f32.mrf.mxu0
        %v4960 = vadd.f32 0.0, %v4959
        %v4961 = vpop.f32.mrf.mxu0
        %v4962 = vpop.f32.mrf.mxu0
        %v4963 = vadd.f32 0.0, %v4962
        %v4964 = vpop.f32.mrf.mxu0
        %4965 = vmatprep.mubr.bf16.mxu0 0
        %4966 = vmatmul.mubr.bf16.gmra.mxu0 %v4762
        %v4967 = vpop.f32.mrf.mxu0
        %v4968 = vadd.f32 0.0, %v4967
        %v4969 = vpop.f32.mrf.mxu0
        %v4970 = vpop.f32.mrf.mxu0
        %v4971 = vadd.f32 0.0, %v4970
        %v4972 = vpop.f32.mrf.mxu0
        %4973 = vmatprep.mubr.bf16.mxu0 0
        %4974 = vmatmul.mubr.bf16.gmra.mxu0 %v4763
        %v4975 = vpop.f32.mrf.mxu0
        %v4976 = vadd.f32 0.0, %v4975
        %v4977 = vpop.f32.mrf.mxu0
        %v4978 = vpop.f32.mrf.mxu0
        %v4979 = vadd.f32 0.0, %v4978
        %v4980 = vpop.f32.mrf.mxu0
        %4981 = vmatprep.mubr.bf16.mxu0 0
        %4982 = vmatmul.mubr.bf16.gmra.mxu0 %v4764
        %v4983 = vpop.f32.mrf.mxu0
        %v4984 = vadd.f32 0.0, %v4983
        %v4985 = vpop.f32.mrf.mxu0
        %v4986 = vpop.f32.mrf.mxu0
        %v4987 = vadd.f32 0.0, %v4986
        %v4988 = vpop.f32.mrf.mxu0
        %4989 = vdwg.mxu0
        %v4990 = vadd.f32 %v4492, %v4864
        %v4991 = vadd.f32 %v4493, %v4867
        %v4992 = vadd.f32 %v4494, %v4872
        %v4993 = vadd.f32 %v4495, %v4875
        %v4994 = vadd.f32 %v4496, %v4880
        %v4995 = vadd.f32 %v4497, %v4883
        %v4996 = vadd.f32 %v4498, %v4888
        %v4997 = vadd.f32 %v4499, %v4891
        %v4998 = vadd.f32 %v4500, %v4896
        %v4999 = vadd.f32 %v4501, %v4899
        %v5000 = vadd.f32 %v4502, %v4904
        %v5001 = vadd.f32 %v4503, %v4907
        %v5002 = vadd.f32 %v4504, %v4912
        %v5003 = vadd.f32 %v4505, %v4915
        %v5004 = vadd.f32 %v4506, %v4920
        %v5005 = vadd.f32 %v4507, %v4923
        %v5006 = vadd.f32 %v4508, %v4928
        %v5007 = vadd.f32 %v4509, %v4931
        %v5008 = vadd.f32 %v4510, %v4936
        %v5009 = vadd.f32 %v4511, %v4939
        %v5010 = vadd.f32 %v4512, %v4944
        %v5011 = vadd.f32 %v4513, %v4947
        %v5012 = vadd.f32 %v4514, %v4952
        %v5013 = vadd.f32 %v4515, %v4955
        %v5014 = vadd.f32 %v4516, %v4960
        %v5015 = vadd.f32 %v4517, %v4963
        %v5016 = vadd.f32 %v4518, %v4968
        %v5017 = vadd.f32 %v4519, %v4971
        %v5018 = vadd.f32 %v4520, %v4976
        %v5019 = vadd.f32 %v4521, %v4979
        %v5020 = vadd.f32 %v4522, %v4984
        %v5021 = vadd.f32 %v4523, %v4987
        %v5022 = vlaneseq
        %v5023 = vshrl.u32 %v5022, 7
        %v5024 = vsub.s32 0, %v5023
        %v5025 = vrot.slane %v211, %v5024
        %v5026 = vmul.f32 %v4990, %v5025
        %v5027 = vmul.f32 %v4991, %v5025
        %v5028 = vmul.f32 %v4992, %v5025
        %v5029 = vmul.f32 %v4993, %v5025
        %v5030 = vmul.f32 %v4994, %v5025
        %v5031 = vmul.f32 %v4995, %v5025
        %v5032 = vmul.f32 %v4996, %v5025
        %v5033 = vmul.f32 %v4997, %v5025
        %v5034 = vmul.f32 %v4998, %v5025
        %v5035 = vmul.f32 %v4999, %v5025
        %v5036 = vmul.f32 %v5000, %v5025
        %v5037 = vmul.f32 %v5001, %v5025
        %v5038 = vmul.f32 %v5002, %v5025
        %v5039 = vmul.f32 %v5003, %v5025
        %v5040 = vmul.f32 %v5004, %v5025
        %v5041 = vmul.f32 %v5005, %v5025
        %v5042 = vmul.f32 %v5006, %v5025
        %v5043 = vmul.f32 %v5007, %v5025
        %v5044 = vmul.f32 %v5008, %v5025
        %v5045 = vmul.f32 %v5009, %v5025
        %v5046 = vmul.f32 %v5010, %v5025
        %v5047 = vmul.f32 %v5011, %v5025
        %v5048 = vmul.f32 %v5012, %v5025
        %v5049 = vmul.f32 %v5013, %v5025
        %v5050 = vmul.f32 %v5014, %v5025
        %v5051 = vmul.f32 %v5015, %v5025
        %v5052 = vmul.f32 %v5016, %v5025
        %v5053 = vmul.f32 %v5017, %v5025
        %v5054 = vmul.f32 %v5018, %v5025
        %v5055 = vmul.f32 %v5019, %v5025
        %v5056 = vmul.f32 %v5020, %v5025
        %v5057 = vmul.f32 %v5021, %v5025
        %v5058 = vlaneseq
        %v5059 = vshrl.u32 %v5058, 7
        %v5060 = vsub.s32 0, %v5059
        %v5061 = vrot.slane %v212, %v5060
        %v5062 = vadd.f32 %v5026, %v5061
        %v5063 = vadd.f32 %v5027, %v5061
        %v5064 = vadd.f32 %v5028, %v5061
        %v5065 = vadd.f32 %v5029, %v5061
        %v5066 = vadd.f32 %v5030, %v5061
        %v5067 = vadd.f32 %v5031, %v5061
        %v5068 = vadd.f32 %v5032, %v5061
        %v5069 = vadd.f32 %v5033, %v5061
        %v5070 = vadd.f32 %v5034, %v5061
        %v5071 = vadd.f32 %v5035, %v5061
        %v5072 = vadd.f32 %v5036, %v5061
        %v5073 = vadd.f32 %v5037, %v5061
        %v5074 = vadd.f32 %v5038, %v5061
        %v5075 = vadd.f32 %v5039, %v5061
        %v5076 = vadd.f32 %v5040, %v5061
        %v5077 = vadd.f32 %v5041, %v5061
        %v5078 = vadd.f32 %v5042, %v5061
        %v5079 = vadd.f32 %v5043, %v5061
        %v5080 = vadd.f32 %v5044, %v5061
        %v5081 = vadd.f32 %v5045, %v5061
        %v5082 = vadd.f32 %v5046, %v5061
        %v5083 = vadd.f32 %v5047, %v5061
        %v5084 = vadd.f32 %v5048, %v5061
        %v5085 = vadd.f32 %v5049, %v5061
        %v5086 = vadd.f32 %v5050, %v5061
        %v5087 = vadd.f32 %v5051, %v5061
        %v5088 = vadd.f32 %v5052, %v5061
        %v5089 = vadd.f32 %v5053, %v5061
        %v5090 = vadd.f32 %v5054, %v5061
        %v5091 = vadd.f32 %v5055, %v5061
        %v5092 = vadd.f32 %v5056, %v5061
        %v5093 = vadd.f32 %v5057, %v5061
        %v5094 = vmax.f32 %v5062, 0.0
        %v5095 = vmax.f32 %v5063, 0.0
        %v5096 = vmax.f32 %v5064, 0.0
        %v5097 = vmax.f32 %v5065, 0.0
        %v5098 = vmax.f32 %v5066, 0.0
        %v5099 = vmax.f32 %v5067, 0.0
        %v5100 = vmax.f32 %v5068, 0.0
        %v5101 = vmax.f32 %v5069, 0.0
        %v5102 = vmax.f32 %v5070, 0.0
        %v5103 = vmax.f32 %v5071, 0.0
        %v5104 = vmax.f32 %v5072, 0.0
        %v5105 = vmax.f32 %v5073, 0.0
        %v5106 = vmax.f32 %v5074, 0.0
        %v5107 = vmax.f32 %v5075, 0.0
        %v5108 = vmax.f32 %v5076, 0.0
        %v5109 = vmax.f32 %v5077, 0.0
        %v5110 = vmax.f32 %v5078, 0.0
        %v5111 = vmax.f32 %v5079, 0.0
        %v5112 = vmax.f32 %v5080, 0.0
        %v5113 = vmax.f32 %v5081, 0.0
        %v5114 = vmax.f32 %v5082, 0.0
        %v5115 = vmax.f32 %v5083, 0.0
        %v5116 = vmax.f32 %v5084, 0.0
        %v5117 = vmax.f32 %v5085, 0.0
        %v5118 = vmax.f32 %v5086, 0.0
        %v5119 = vmax.f32 %v5087, 0.0
        %v5120 = vmax.f32 %v5088, 0.0
        %v5121 = vmax.f32 %v5089, 0.0
        %v5122 = vmax.f32 %v5090, 0.0
        %v5123 = vmax.f32 %v5091, 0.0
        %v5124 = vmax.f32 %v5092, 0.0
        %v5125 = vmax.f32 %v5093, 0.0
        %v5158 = vcombine.high %v5094, %v5094
        %v5160 = vunpack.c.l.s4 1983009808
        %v5161 = vunpack.c.0.s8 %v5160
        %v5162 = vlaneseq
        %v5163 = vshrl.u32 %v5162, 7
        %v5164 = vsub.s32 %v5161, %v5163
        %v5165 = vrot.slane %v5094, %v5164
        %v5167 = vunpack.c.l.s4 1983009808
        %v5168 = vunpack.c.0.s8 %v5167
        %v5169 = vlaneseq
        %v5170 = vshrl.u32 %v5169, 7
        %v5171 = vsub.s32 %v5168, %v5170
        %v5172 = vrot.slane %v5158, %v5171
        %v5173 = vcombine.high %v5165, %v5165
        %v5174 = vcombine.high %v5172, %v5172
        %v5175 = vcombine.high %v5095, %v5095
        %v5177 = vunpack.c.l.s4 1983009808
        %v5178 = vunpack.c.0.s8 %v5177
        %v5179 = vlaneseq
        %v5180 = vshrl.u32 %v5179, 7
        %v5181 = vsub.s32 %v5178, %v5180
        %v5182 = vrot.slane %v5095, %v5181
        %v5184 = vunpack.c.l.s4 1983009808
        %v5185 = vunpack.c.0.s8 %v5184
        %v5186 = vlaneseq
        %v5187 = vshrl.u32 %v5186, 7
        %v5188 = vsub.s32 %v5185, %v5187
        %v5189 = vrot.slane %v5175, %v5188
        %v5190 = vcombine.high %v5182, %v5182
        %v5191 = vcombine.high %v5189, %v5189
        %v5192 = vcombine.high %v5096, %v5096
        %v5194 = vunpack.c.l.s4 1983009808
        %v5195 = vunpack.c.0.s8 %v5194
        %v5196 = vlaneseq
        %v5197 = vshrl.u32 %v5196, 7
        %v5198 = vsub.s32 %v5195, %v5197
        %v5199 = vrot.slane %v5096, %v5198
        %v5201 = vunpack.c.l.s4 1983009808
        %v5202 = vunpack.c.0.s8 %v5201
        %v5203 = vlaneseq
        %v5204 = vshrl.u32 %v5203, 7
        %v5205 = vsub.s32 %v5202, %v5204
        %v5206 = vrot.slane %v5192, %v5205
        %v5207 = vcombine.high %v5199, %v5199
        %v5208 = vcombine.high %v5206, %v5206
        %v5209 = vcombine.high %v5097, %v5097
        %v5211 = vunpack.c.l.s4 1983009808
        %v5212 = vunpack.c.0.s8 %v5211
        %v5213 = vlaneseq
        %v5214 = vshrl.u32 %v5213, 7
        %v5215 = vsub.s32 %v5212, %v5214
        %v5216 = vrot.slane %v5097, %v5215
        %v5218 = vunpack.c.l.s4 1983009808
        %v5219 = vunpack.c.0.s8 %v5218
        %v5220 = vlaneseq
        %v5221 = vshrl.u32 %v5220, 7
        %v5222 = vsub.s32 %v5219, %v5221
        %v5223 = vrot.slane %v5209, %v5222
        %v5224 = vcombine.high %v5216, %v5216
        %v5225 = vcombine.high %v5223, %v5223
        %v5226 = vcombine.high %v5098, %v5098
        %v5228 = vunpack.c.l.s4 1983009808
        %v5229 = vunpack.c.0.s8 %v5228
        %v5230 = vlaneseq
        %v5231 = vshrl.u32 %v5230, 7
        %v5232 = vsub.s32 %v5229, %v5231
        %v5233 = vrot.slane %v5098, %v5232
        %v5235 = vunpack.c.l.s4 1983009808
        %v5236 = vunpack.c.0.s8 %v5235
        %v5237 = vlaneseq
        %v5238 = vshrl.u32 %v5237, 7
        %v5239 = vsub.s32 %v5236, %v5238
        %v5240 = vrot.slane %v5226, %v5239
        %v5241 = vcombine.high %v5233, %v5233
        %v5242 = vcombine.high %v5240, %v5240
        %v5243 = vcombine.high %v5099, %v5099
        %v5245 = vunpack.c.l.s4 1983009808
        %v5246 = vunpack.c.0.s8 %v5245
        %v5247 = vlaneseq
        %v5248 = vshrl.u32 %v5247, 7
        %v5249 = vsub.s32 %v5246, %v5248
        %v5250 = vrot.slane %v5099, %v5249
        %v5252 = vunpack.c.l.s4 1983009808
        %v5253 = vunpack.c.0.s8 %v5252
        %v5254 = vlaneseq
        %v5255 = vshrl.u32 %v5254, 7
        %v5256 = vsub.s32 %v5253, %v5255
        %v5257 = vrot.slane %v5243, %v5256
        %v5258 = vcombine.high %v5250, %v5250
        %v5259 = vcombine.high %v5257, %v5257
        %v5260 = vcombine.high %v5100, %v5100
        %v5262 = vunpack.c.l.s4 1983009808
        %v5263 = vunpack.c.0.s8 %v5262
        %v5264 = vlaneseq
        %v5265 = vshrl.u32 %v5264, 7
        %v5266 = vsub.s32 %v5263, %v5265
        %v5267 = vrot.slane %v5100, %v5266
        %v5269 = vunpack.c.l.s4 1983009808
        %v5270 = vunpack.c.0.s8 %v5269
        %v5271 = vlaneseq
        %v5272 = vshrl.u32 %v5271, 7
        %v5273 = vsub.s32 %v5270, %v5272
        %v5274 = vrot.slane %v5260, %v5273
        %v5275 = vcombine.high %v5267, %v5267
        %v5276 = vcombine.high %v5274, %v5274
        %v5277 = vcombine.high %v5101, %v5101
        %v5279 = vunpack.c.l.s4 1983009808
        %v5280 = vunpack.c.0.s8 %v5279
        %v5281 = vlaneseq
        %v5282 = vshrl.u32 %v5281, 7
        %v5283 = vsub.s32 %v5280, %v5282
        %v5284 = vrot.slane %v5101, %v5283
        %v5286 = vunpack.c.l.s4 1983009808
        %v5287 = vunpack.c.0.s8 %v5286
        %v5288 = vlaneseq
        %v5289 = vshrl.u32 %v5288, 7
        %v5290 = vsub.s32 %v5287, %v5289
        %v5291 = vrot.slane %v5277, %v5290
        %v5292 = vcombine.high %v5284, %v5284
        %v5293 = vcombine.high %v5291, %v5291
        %v5294 = vcombine.high %v5102, %v5102
        %v5296 = vunpack.c.l.s4 1983009808
        %v5297 = vunpack.c.0.s8 %v5296
        %v5298 = vlaneseq
        %v5299 = vshrl.u32 %v5298, 7
        %v5300 = vsub.s32 %v5297, %v5299
        %v5301 = vrot.slane %v5102, %v5300
        %v5303 = vunpack.c.l.s4 1983009808
        %v5304 = vunpack.c.0.s8 %v5303
        %v5305 = vlaneseq
        %v5306 = vshrl.u32 %v5305, 7
        %v5307 = vsub.s32 %v5304, %v5306
        %v5308 = vrot.slane %v5294, %v5307
        %v5309 = vcombine.high %v5301, %v5301
        %v5310 = vcombine.high %v5308, %v5308
        %v5311 = vcombine.high %v5103, %v5103
        %v5313 = vunpack.c.l.s4 1983009808
        %v5314 = vunpack.c.0.s8 %v5313
        %v5315 = vlaneseq
        %v5316 = vshrl.u32 %v5315, 7
        %v5317 = vsub.s32 %v5314, %v5316
        %v5318 = vrot.slane %v5103, %v5317
        %v5320 = vunpack.c.l.s4 1983009808
        %v5321 = vunpack.c.0.s8 %v5320
        %v5322 = vlaneseq
        %v5323 = vshrl.u32 %v5322, 7
        %v5324 = vsub.s32 %v5321, %v5323
        %v5325 = vrot.slane %v5311, %v5324
        %v5326 = vcombine.high %v5318, %v5318
        %v5327 = vcombine.high %v5325, %v5325
        %v5328 = vcombine.high %v5104, %v5104
        %v5330 = vunpack.c.l.s4 1983009808
        %v5331 = vunpack.c.0.s8 %v5330
        %v5332 = vlaneseq
        %v5333 = vshrl.u32 %v5332, 7
        %v5334 = vsub.s32 %v5331, %v5333
        %v5335 = vrot.slane %v5104, %v5334
        %v5337 = vunpack.c.l.s4 1983009808
        %v5338 = vunpack.c.0.s8 %v5337
        %v5339 = vlaneseq
        %v5340 = vshrl.u32 %v5339, 7
        %v5341 = vsub.s32 %v5338, %v5340
        %v5342 = vrot.slane %v5328, %v5341
        %v5343 = vcombine.high %v5335, %v5335
        %v5344 = vcombine.high %v5342, %v5342
        %v5345 = vcombine.high %v5105, %v5105
        %v5347 = vunpack.c.l.s4 1983009808
        %v5348 = vunpack.c.0.s8 %v5347
        %v5349 = vlaneseq
        %v5350 = vshrl.u32 %v5349, 7
        %v5351 = vsub.s32 %v5348, %v5350
        %v5352 = vrot.slane %v5105, %v5351
        %v5354 = vunpack.c.l.s4 1983009808
        %v5355 = vunpack.c.0.s8 %v5354
        %v5356 = vlaneseq
        %v5357 = vshrl.u32 %v5356, 7
        %v5358 = vsub.s32 %v5355, %v5357
        %v5359 = vrot.slane %v5345, %v5358
        %v5360 = vcombine.high %v5352, %v5352
        %v5361 = vcombine.high %v5359, %v5359
        %v5362 = vcombine.high %v5106, %v5106
        %v5364 = vunpack.c.l.s4 1983009808
        %v5365 = vunpack.c.0.s8 %v5364
        %v5366 = vlaneseq
        %v5367 = vshrl.u32 %v5366, 7
        %v5368 = vsub.s32 %v5365, %v5367
        %v5369 = vrot.slane %v5106, %v5368
        %v5371 = vunpack.c.l.s4 1983009808
        %v5372 = vunpack.c.0.s8 %v5371
        %v5373 = vlaneseq
        %v5374 = vshrl.u32 %v5373, 7
        %v5375 = vsub.s32 %v5372, %v5374
        %v5376 = vrot.slane %v5362, %v5375
        %v5377 = vcombine.high %v5369, %v5369
        %v5378 = vcombine.high %v5376, %v5376
        %v5379 = vcombine.high %v5107, %v5107
        %v5381 = vunpack.c.l.s4 1983009808
        %v5382 = vunpack.c.0.s8 %v5381
        %v5383 = vlaneseq
        %v5384 = vshrl.u32 %v5383, 7
        %v5385 = vsub.s32 %v5382, %v5384
        %v5386 = vrot.slane %v5107, %v5385
        %v5388 = vunpack.c.l.s4 1983009808
        %v5389 = vunpack.c.0.s8 %v5388
        %v5390 = vlaneseq
        %v5391 = vshrl.u32 %v5390, 7
        %v5392 = vsub.s32 %v5389, %v5391
        %v5393 = vrot.slane %v5379, %v5392
        %v5394 = vcombine.high %v5386, %v5386
        %v5395 = vcombine.high %v5393, %v5393
        %v5396 = vcombine.high %v5108, %v5108
        %v5398 = vunpack.c.l.s4 1983009808
        %v5399 = vunpack.c.0.s8 %v5398
        %v5400 = vlaneseq
        %v5401 = vshrl.u32 %v5400, 7
        %v5402 = vsub.s32 %v5399, %v5401
        %v5403 = vrot.slane %v5108, %v5402
        %v5405 = vunpack.c.l.s4 1983009808
        %v5406 = vunpack.c.0.s8 %v5405
        %v5407 = vlaneseq
        %v5408 = vshrl.u32 %v5407, 7
        %v5409 = vsub.s32 %v5406, %v5408
        %v5410 = vrot.slane %v5396, %v5409
        %v5411 = vcombine.high %v5403, %v5403
        %v5412 = vcombine.high %v5410, %v5410
        %v5413 = vcombine.high %v5109, %v5109
        %v5415 = vunpack.c.l.s4 1983009808
        %v5416 = vunpack.c.0.s8 %v5415
        %v5417 = vlaneseq
        %v5418 = vshrl.u32 %v5417, 7
        %v5419 = vsub.s32 %v5416, %v5418
        %v5420 = vrot.slane %v5109, %v5419
        %v5422 = vunpack.c.l.s4 1983009808
        %v5423 = vunpack.c.0.s8 %v5422
        %v5424 = vlaneseq
        %v5425 = vshrl.u32 %v5424, 7
        %v5426 = vsub.s32 %v5423, %v5425
        %v5427 = vrot.slane %v5413, %v5426
        %v5428 = vcombine.high %v5420, %v5420
        %v5429 = vcombine.high %v5427, %v5427
        %v5430 = vcombine.high %v5110, %v5110
        %v5432 = vunpack.c.l.s4 1983009808
        %v5433 = vunpack.c.0.s8 %v5432
        %v5434 = vlaneseq
        %v5435 = vshrl.u32 %v5434, 7
        %v5436 = vsub.s32 %v5433, %v5435
        %v5437 = vrot.slane %v5110, %v5436
        %v5439 = vunpack.c.l.s4 1983009808
        %v5440 = vunpack.c.0.s8 %v5439
        %v5441 = vlaneseq
        %v5442 = vshrl.u32 %v5441, 7
        %v5443 = vsub.s32 %v5440, %v5442
        %v5444 = vrot.slane %v5430, %v5443
        %v5445 = vcombine.high %v5437, %v5437
        %v5446 = vcombine.high %v5444, %v5444
        %v5447 = vcombine.high %v5111, %v5111
        %v5449 = vunpack.c.l.s4 1983009808
        %v5450 = vunpack.c.0.s8 %v5449
        %v5451 = vlaneseq
        %v5452 = vshrl.u32 %v5451, 7
        %v5453 = vsub.s32 %v5450, %v5452
        %v5454 = vrot.slane %v5111, %v5453
        %v5456 = vunpack.c.l.s4 1983009808
        %v5457 = vunpack.c.0.s8 %v5456
        %v5458 = vlaneseq
        %v5459 = vshrl.u32 %v5458, 7
        %v5460 = vsub.s32 %v5457, %v5459
        %v5461 = vrot.slane %v5447, %v5460
        %v5462 = vcombine.high %v5454, %v5454
        %v5463 = vcombine.high %v5461, %v5461
        %v5464 = vcombine.high %v5112, %v5112
        %v5466 = vunpack.c.l.s4 1983009808
        %v5467 = vunpack.c.0.s8 %v5466
        %v5468 = vlaneseq
        %v5469 = vshrl.u32 %v5468, 7
        %v5470 = vsub.s32 %v5467, %v5469
        %v5471 = vrot.slane %v5112, %v5470
        %v5473 = vunpack.c.l.s4 1983009808
        %v5474 = vunpack.c.0.s8 %v5473
        %v5475 = vlaneseq
        %v5476 = vshrl.u32 %v5475, 7
        %v5477 = vsub.s32 %v5474, %v5476
        %v5478 = vrot.slane %v5464, %v5477
        %v5479 = vcombine.high %v5471, %v5471
        %v5480 = vcombine.high %v5478, %v5478
        %v5481 = vcombine.high %v5113, %v5113
        %v5483 = vunpack.c.l.s4 1983009808
        %v5484 = vunpack.c.0.s8 %v5483
        %v5485 = vlaneseq
        %v5486 = vshrl.u32 %v5485, 7
        %v5487 = vsub.s32 %v5484, %v5486
        %v5488 = vrot.slane %v5113, %v5487
        %v5490 = vunpack.c.l.s4 1983009808
        %v5491 = vunpack.c.0.s8 %v5490
        %v5492 = vlaneseq
        %v5493 = vshrl.u32 %v5492, 7
        %v5494 = vsub.s32 %v5491, %v5493
        %v5495 = vrot.slane %v5481, %v5494
        %v5496 = vcombine.high %v5488, %v5488
        %v5497 = vcombine.high %v5495, %v5495
        %v5498 = vcombine.high %v5114, %v5114
        %v5500 = vunpack.c.l.s4 1983009808
        %v5501 = vunpack.c.0.s8 %v5500
        %v5502 = vlaneseq
        %v5503 = vshrl.u32 %v5502, 7
        %v5504 = vsub.s32 %v5501, %v5503
        %v5505 = vrot.slane %v5114, %v5504
        %v5507 = vunpack.c.l.s4 1983009808
        %v5508 = vunpack.c.0.s8 %v5507
        %v5509 = vlaneseq
        %v5510 = vshrl.u32 %v5509, 7
        %v5511 = vsub.s32 %v5508, %v5510
        %v5512 = vrot.slane %v5498, %v5511
        %v5513 = vcombine.high %v5505, %v5505
        %v5514 = vcombine.high %v5512, %v5512
        %v5515 = vcombine.high %v5115, %v5115
        %v5517 = vunpack.c.l.s4 1983009808
        %v5518 = vunpack.c.0.s8 %v5517
        %v5519 = vlaneseq
        %v5520 = vshrl.u32 %v5519, 7
        %v5521 = vsub.s32 %v5518, %v5520
        %v5522 = vrot.slane %v5115, %v5521
        %v5524 = vunpack.c.l.s4 1983009808
        %v5525 = vunpack.c.0.s8 %v5524
        %v5526 = vlaneseq
        %v5527 = vshrl.u32 %v5526, 7
        %v5528 = vsub.s32 %v5525, %v5527
        %v5529 = vrot.slane %v5515, %v5528
        %v5530 = vcombine.high %v5522, %v5522
        %v5531 = vcombine.high %v5529, %v5529
        %v5532 = vcombine.high %v5116, %v5116
        %v5534 = vunpack.c.l.s4 1983009808
        %v5535 = vunpack.c.0.s8 %v5534
        %v5536 = vlaneseq
        %v5537 = vshrl.u32 %v5536, 7
        %v5538 = vsub.s32 %v5535, %v5537
        %v5539 = vrot.slane %v5116, %v5538
        %v5541 = vunpack.c.l.s4 1983009808
        %v5542 = vunpack.c.0.s8 %v5541
        %v5543 = vlaneseq
        %v5544 = vshrl.u32 %v5543, 7
        %v5545 = vsub.s32 %v5542, %v5544
        %v5546 = vrot.slane %v5532, %v5545
        %v5547 = vcombine.high %v5539, %v5539
        %v5548 = vcombine.high %v5546, %v5546
        %v5549 = vcombine.high %v5117, %v5117
        %v5551 = vunpack.c.l.s4 1983009808
        %v5552 = vunpack.c.0.s8 %v5551
        %v5553 = vlaneseq
        %v5554 = vshrl.u32 %v5553, 7
        %v5555 = vsub.s32 %v5552, %v5554
        %v5556 = vrot.slane %v5117, %v5555
        %v5558 = vunpack.c.l.s4 1983009808
        %v5559 = vunpack.c.0.s8 %v5558
        %v5560 = vlaneseq
        %v5561 = vshrl.u32 %v5560, 7
        %v5562 = vsub.s32 %v5559, %v5561
        %v5563 = vrot.slane %v5549, %v5562
        %v5564 = vcombine.high %v5556, %v5556
        %v5565 = vcombine.high %v5563, %v5563
        %v5566 = vcombine.high %v5118, %v5118
        %v5568 = vunpack.c.l.s4 1983009808
        %v5569 = vunpack.c.0.s8 %v5568
        %v5570 = vlaneseq
        %v5571 = vshrl.u32 %v5570, 7
        %v5572 = vsub.s32 %v5569, %v5571
        %v5573 = vrot.slane %v5118, %v5572
        %v5575 = vunpack.c.l.s4 1983009808
        %v5576 = vunpack.c.0.s8 %v5575
        %v5577 = vlaneseq
        %v5578 = vshrl.u32 %v5577, 7
        %v5579 = vsub.s32 %v5576, %v5578
        %v5580 = vrot.slane %v5566, %v5579
        %v5581 = vcombine.high %v5573, %v5573
        %v5582 = vcombine.high %v5580, %v5580
        %v5583 = vcombine.high %v5119, %v5119
        %v5585 = vunpack.c.l.s4 1983009808
        %v5586 = vunpack.c.0.s8 %v5585
        %v5587 = vlaneseq
        %v5588 = vshrl.u32 %v5587, 7
        %v5589 = vsub.s32 %v5586, %v5588
        %v5590 = vrot.slane %v5119, %v5589
        %v5592 = vunpack.c.l.s4 1983009808
        %v5593 = vunpack.c.0.s8 %v5592
        %v5594 = vlaneseq
        %v5595 = vshrl.u32 %v5594, 7
        %v5596 = vsub.s32 %v5593, %v5595
        %v5597 = vrot.slane %v5583, %v5596
        %v5598 = vcombine.high %v5590, %v5590
        %v5599 = vcombine.high %v5597, %v5597
        %v5600 = vcombine.high %v5120, %v5120
        %v5602 = vunpack.c.l.s4 1983009808
        %v5603 = vunpack.c.0.s8 %v5602
        %v5604 = vlaneseq
        %v5605 = vshrl.u32 %v5604, 7
        %v5606 = vsub.s32 %v5603, %v5605
        %v5607 = vrot.slane %v5120, %v5606
        %v5609 = vunpack.c.l.s4 1983009808
        %v5610 = vunpack.c.0.s8 %v5609
        %v5611 = vlaneseq
        %v5612 = vshrl.u32 %v5611, 7
        %v5613 = vsub.s32 %v5610, %v5612
        %v5614 = vrot.slane %v5600, %v5613
        %v5615 = vcombine.high %v5607, %v5607
        %v5616 = vcombine.high %v5614, %v5614
        %v5617 = vcombine.high %v5121, %v5121
        %v5619 = vunpack.c.l.s4 1983009808
        %v5620 = vunpack.c.0.s8 %v5619
        %v5621 = vlaneseq
        %v5622 = vshrl.u32 %v5621, 7
        %v5623 = vsub.s32 %v5620, %v5622
        %v5624 = vrot.slane %v5121, %v5623
        %v5626 = vunpack.c.l.s4 1983009808
        %v5627 = vunpack.c.0.s8 %v5626
        %v5628 = vlaneseq
        %v5629 = vshrl.u32 %v5628, 7
        %v5630 = vsub.s32 %v5627, %v5629
        %v5631 = vrot.slane %v5617, %v5630
        %v5632 = vcombine.high %v5624, %v5624
        %v5633 = vcombine.high %v5631, %v5631
        %v5634 = vcombine.high %v5122, %v5122
        %v5636 = vunpack.c.l.s4 1983009808
        %v5637 = vunpack.c.0.s8 %v5636
        %v5638 = vlaneseq
        %v5639 = vshrl.u32 %v5638, 7
        %v5640 = vsub.s32 %v5637, %v5639
        %v5641 = vrot.slane %v5122, %v5640
        %v5643 = vunpack.c.l.s4 1983009808
        %v5644 = vunpack.c.0.s8 %v5643
        %v5645 = vlaneseq
        %v5646 = vshrl.u32 %v5645, 7
        %v5647 = vsub.s32 %v5644, %v5646
        %v5648 = vrot.slane %v5634, %v5647
        %v5649 = vcombine.high %v5641, %v5641
        %v5650 = vcombine.high %v5648, %v5648
        %v5651 = vcombine.high %v5123, %v5123
        %v5653 = vunpack.c.l.s4 1983009808
        %v5654 = vunpack.c.0.s8 %v5653
        %v5655 = vlaneseq
        %v5656 = vshrl.u32 %v5655, 7
        %v5657 = vsub.s32 %v5654, %v5656
        %v5658 = vrot.slane %v5123, %v5657
        %v5660 = vunpack.c.l.s4 1983009808
        %v5661 = vunpack.c.0.s8 %v5660
        %v5662 = vlaneseq
        %v5663 = vshrl.u32 %v5662, 7
        %v5664 = vsub.s32 %v5661, %v5663
        %v5665 = vrot.slane %v5651, %v5664
        %v5666 = vcombine.high %v5658, %v5658
        %v5667 = vcombine.high %v5665, %v5665
        %v5668 = vcombine.high %v5124, %v5124
        %v5670 = vunpack.c.l.s4 1983009808
        %v5671 = vunpack.c.0.s8 %v5670
        %v5672 = vlaneseq
        %v5673 = vshrl.u32 %v5672, 7
        %v5674 = vsub.s32 %v5671, %v5673
        %v5675 = vrot.slane %v5124, %v5674
        %v5677 = vunpack.c.l.s4 1983009808
        %v5678 = vunpack.c.0.s8 %v5677
        %v5679 = vlaneseq
        %v5680 = vshrl.u32 %v5679, 7
        %v5681 = vsub.s32 %v5678, %v5680
        %v5682 = vrot.slane %v5668, %v5681
        %v5683 = vcombine.high %v5675, %v5675
        %v5684 = vcombine.high %v5682, %v5682
        %v5685 = vcombine.high %v5125, %v5125
        %v5687 = vunpack.c.l.s4 1983009808
        %v5688 = vunpack.c.0.s8 %v5687
        %v5689 = vlaneseq
        %v5690 = vshrl.u32 %v5689, 7
        %v5691 = vsub.s32 %v5688, %v5690
        %v5692 = vrot.slane %v5125, %v5691
        %v5694 = vunpack.c.l.s4 1983009808
        %v5695 = vunpack.c.0.s8 %v5694
        %v5696 = vlaneseq
        %v5697 = vshrl.u32 %v5696, 7
        %v5698 = vsub.s32 %v5695, %v5697
        %v5699 = vrot.slane %v5685, %v5698
        %v5700 = vcombine.high %v5692, %v5692
        %v5701 = vcombine.high %v5699, %v5699
        %vm5830 = vcmask 1041408
        %v5831 = vsel %vm5830, %v5165, -inf
        %v5832 = vrot.slane %v5831, 4
        %v5833 = vmax.f32 %v5831, %v5832
        %v5834 = vrot.slane %v5833, 2
        %v5835 = vmax.f32 %v5833, %v5834
        %v5836 = vrot.slane %v5835, 1
        %v5837 = vmax.f32 %v5835, %v5836
        %v5838 = vsel %vm5830, %v5173, -inf
        %v5839 = vrot.slane %v5838, 4
        %v5840 = vmax.f32 %v5838, %v5839
        %v5841 = vrot.slane %v5840, 2
        %v5842 = vmax.f32 %v5840, %v5841
        %v5843 = vrot.slane %v5842, 1
        %v5844 = vmax.f32 %v5842, %v5843
        %v5845 = vsel %vm5830, %v5172, -inf
        %v5846 = vrot.slane %v5845, 4
        %v5847 = vmax.f32 %v5845, %v5846
        %v5848 = vrot.slane %v5847, 2
        %v5849 = vmax.f32 %v5847, %v5848
        %v5850 = vrot.slane %v5849, 1
        %v5851 = vmax.f32 %v5849, %v5850
        %v5852 = vsel %vm5830, %v5174, -inf
        %v5853 = vrot.slane %v5852, 4
        %v5854 = vmax.f32 %v5852, %v5853
        %v5855 = vrot.slane %v5854, 2
        %v5856 = vmax.f32 %v5854, %v5855
        %v5857 = vrot.slane %v5856, 1
        %v5858 = vmax.f32 %v5856, %v5857
        %v5859 = vsel %vm5830, %v5182, -inf
        %v5860 = vrot.slane %v5859, 4
        %v5861 = vmax.f32 %v5859, %v5860
        %v5862 = vrot.slane %v5861, 2
        %v5863 = vmax.f32 %v5861, %v5862
        %v5864 = vrot.slane %v5863, 1
        %v5865 = vmax.f32 %v5863, %v5864
        %v5866 = vsel %vm5830, %v5190, -inf
        %v5867 = vrot.slane %v5866, 4
        %v5868 = vmax.f32 %v5866, %v5867
        %v5869 = vrot.slane %v5868, 2
        %v5870 = vmax.f32 %v5868, %v5869
        %v5871 = vrot.slane %v5870, 1
        %v5872 = vmax.f32 %v5870, %v5871
        %v5873 = vsel %vm5830, %v5189, -inf
        %v5874 = vrot.slane %v5873, 4
        %v5875 = vmax.f32 %v5873, %v5874
        %v5876 = vrot.slane %v5875, 2
        %v5877 = vmax.f32 %v5875, %v5876
        %v5878 = vrot.slane %v5877, 1
        %v5879 = vmax.f32 %v5877, %v5878
        %v5880 = vsel %vm5830, %v5191, -inf
        %v5881 = vrot.slane %v5880, 4
        %v5882 = vmax.f32 %v5880, %v5881
        %v5883 = vrot.slane %v5882, 2
        %v5884 = vmax.f32 %v5882, %v5883
        %v5885 = vrot.slane %v5884, 1
        %v5886 = vmax.f32 %v5884, %v5885
        %v5887 = vsel %vm5830, %v5199, -inf
        %v5888 = vrot.slane %v5887, 4
        %v5889 = vmax.f32 %v5887, %v5888
        %v5890 = vrot.slane %v5889, 2
        %v5891 = vmax.f32 %v5889, %v5890
        %v5892 = vrot.slane %v5891, 1
        %v5893 = vmax.f32 %v5891, %v5892
        %v5894 = vsel %vm5830, %v5207, -inf
        %v5895 = vrot.slane %v5894, 4
        %v5896 = vmax.f32 %v5894, %v5895
        %v5897 = vrot.slane %v5896, 2
        %v5898 = vmax.f32 %v5896, %v5897
        %v5899 = vrot.slane %v5898, 1
        %v5900 = vmax.f32 %v5898, %v5899
        %v5901 = vsel %vm5830, %v5206, -inf
        %v5902 = vrot.slane %v5901, 4
        %v5903 = vmax.f32 %v5901, %v5902
        %v5904 = vrot.slane %v5903, 2
        %v5905 = vmax.f32 %v5903, %v5904
        %v5906 = vrot.slane %v5905, 1
        %v5907 = vmax.f32 %v5905, %v5906
        %v5908 = vsel %vm5830, %v5208, -inf
        %v5909 = vrot.slane %v5908, 4
        %v5910 = vmax.f32 %v5908, %v5909
        %v5911 = vrot.slane %v5910, 2
        %v5912 = vmax.f32 %v5910, %v5911
        %v5913 = vrot.slane %v5912, 1
        %v5914 = vmax.f32 %v5912, %v5913
        %v5915 = vsel %vm5830, %v5216, -inf
        %v5916 = vrot.slane %v5915, 4
        %v5917 = vmax.f32 %v5915, %v5916
        %v5918 = vrot.slane %v5917, 2
        %v5919 = vmax.f32 %v5917, %v5918
        %v5920 = vrot.slane %v5919, 1
        %v5921 = vmax.f32 %v5919, %v5920
        %v5922 = vsel %vm5830, %v5224, -inf
        %v5923 = vrot.slane %v5922, 4
        %v5924 = vmax.f32 %v5922, %v5923
        %v5925 = vrot.slane %v5924, 2
        %v5926 = vmax.f32 %v5924, %v5925
        %v5927 = vrot.slane %v5926, 1
        %v5928 = vmax.f32 %v5926, %v5927
        %v5929 = vsel %vm5830, %v5223, -inf
        %v5930 = vrot.slane %v5929, 4
        %v5931 = vmax.f32 %v5929, %v5930
        %v5932 = vrot.slane %v5931, 2
        %v5933 = vmax.f32 %v5931, %v5932
        %v5934 = vrot.slane %v5933, 1
        %v5935 = vmax.f32 %v5933, %v5934
        %v5936 = vsel %vm5830, %v5225, -inf
        %v5937 = vrot.slane %v5936, 4
        %v5938 = vmax.f32 %v5936, %v5937
        %v5939 = vrot.slane %v5938, 2
        %v5940 = vmax.f32 %v5938, %v5939
        %v5941 = vrot.slane %v5940, 1
        %v5942 = vmax.f32 %v5940, %v5941
        %v5943 = vsel %vm5830, %v5233, -inf
        %v5944 = vrot.slane %v5943, 4
        %v5945 = vmax.f32 %v5943, %v5944
        %v5946 = vrot.slane %v5945, 2
        %v5947 = vmax.f32 %v5945, %v5946
        %v5948 = vrot.slane %v5947, 1
        %v5949 = vmax.f32 %v5947, %v5948
        %v5950 = vsel %vm5830, %v5241, -inf
        %v5951 = vrot.slane %v5950, 4
        %v5952 = vmax.f32 %v5950, %v5951
        %v5953 = vrot.slane %v5952, 2
        %v5954 = vmax.f32 %v5952, %v5953
        %v5955 = vrot.slane %v5954, 1
        %v5956 = vmax.f32 %v5954, %v5955
        %v5957 = vsel %vm5830, %v5240, -inf
        %v5958 = vrot.slane %v5957, 4
        %v5959 = vmax.f32 %v5957, %v5958
        %v5960 = vrot.slane %v5959, 2
        %v5961 = vmax.f32 %v5959, %v5960
        %v5962 = vrot.slane %v5961, 1
        %v5963 = vmax.f32 %v5961, %v5962
        %v5964 = vsel %vm5830, %v5242, -inf
        %v5965 = vrot.slane %v5964, 4
        %v5966 = vmax.f32 %v5964, %v5965
        %v5967 = vrot.slane %v5966, 2
        %v5968 = vmax.f32 %v5966, %v5967
        %v5969 = vrot.slane %v5968, 1
        %v5970 = vmax.f32 %v5968, %v5969
        %v5971 = vsel %vm5830, %v5250, -inf
        %v5972 = vrot.slane %v5971, 4
        %v5973 = vmax.f32 %v5971, %v5972
        %v5974 = vrot.slane %v5973, 2
        %v5975 = vmax.f32 %v5973, %v5974
        %v5976 = vrot.slane %v5975, 1
        %v5977 = vmax.f32 %v5975, %v5976
        %v5978 = vsel %vm5830, %v5258, -inf
        %v5979 = vrot.slane %v5978, 4
        %v5980 = vmax.f32 %v5978, %v5979
        %v5981 = vrot.slane %v5980, 2
        %v5982 = vmax.f32 %v5980, %v5981
        %v5983 = vrot.slane %v5982, 1
        %v5984 = vmax.f32 %v5982, %v5983
        %v5985 = vsel %vm5830, %v5257, -inf
        %v5986 = vrot.slane %v5985, 4
        %v5987 = vmax.f32 %v5985, %v5986
        %v5988 = vrot.slane %v5987, 2
        %v5989 = vmax.f32 %v5987, %v5988
        %v5990 = vrot.slane %v5989, 1
        %v5991 = vmax.f32 %v5989, %v5990
        %v5992 = vsel %vm5830, %v5259, -inf
        %v5993 = vrot.slane %v5992, 4
        %v5994 = vmax.f32 %v5992, %v5993
        %v5995 = vrot.slane %v5994, 2
        %v5996 = vmax.f32 %v5994, %v5995
        %v5997 = vrot.slane %v5996, 1
        %v5998 = vmax.f32 %v5996, %v5997
        %v5999 = vsel %vm5830, %v5267, -inf
        %v6000 = vrot.slane %v5999, 4
        %v6001 = vmax.f32 %v5999, %v6000
        %v6002 = vrot.slane %v6001, 2
        %v6003 = vmax.f32 %v6001, %v6002
        %v6004 = vrot.slane %v6003, 1
        %v6005 = vmax.f32 %v6003, %v6004
        %v6006 = vsel %vm5830, %v5275, -inf
        %v6007 = vrot.slane %v6006, 4
        %v6008 = vmax.f32 %v6006, %v6007
        %v6009 = vrot.slane %v6008, 2
        %v6010 = vmax.f32 %v6008, %v6009
        %v6011 = vrot.slane %v6010, 1
        %v6012 = vmax.f32 %v6010, %v6011
        %v6013 = vsel %vm5830, %v5274, -inf
        %v6014 = vrot.slane %v6013, 4
        %v6015 = vmax.f32 %v6013, %v6014
        %v6016 = vrot.slane %v6015, 2
        %v6017 = vmax.f32 %v6015, %v6016
        %v6018 = vrot.slane %v6017, 1
        %v6019 = vmax.f32 %v6017, %v6018
        %v6020 = vsel %vm5830, %v5276, -inf
        %v6021 = vrot.slane %v6020, 4
        %v6022 = vmax.f32 %v6020, %v6021
        %v6023 = vrot.slane %v6022, 2
        %v6024 = vmax.f32 %v6022, %v6023
        %v6025 = vrot.slane %v6024, 1
        %v6026 = vmax.f32 %v6024, %v6025
        %v6027 = vsel %vm5830, %v5284, -inf
        %v6028 = vrot.slane %v6027, 4
        %v6029 = vmax.f32 %v6027, %v6028
        %v6030 = vrot.slane %v6029, 2
        %v6031 = vmax.f32 %v6029, %v6030
        %v6032 = vrot.slane %v6031, 1
        %v6033 = vmax.f32 %v6031, %v6032
        %v6034 = vsel %vm5830, %v5292, -inf
        %v6035 = vrot.slane %v6034, 4
        %v6036 = vmax.f32 %v6034, %v6035
        %v6037 = vrot.slane %v6036, 2
        %v6038 = vmax.f32 %v6036, %v6037
        %v6039 = vrot.slane %v6038, 1
        %v6040 = vmax.f32 %v6038, %v6039
        %v6041 = vsel %vm5830, %v5291, -inf
        %v6042 = vrot.slane %v6041, 4
        %v6043 = vmax.f32 %v6041, %v6042
        %v6044 = vrot.slane %v6043, 2
        %v6045 = vmax.f32 %v6043, %v6044
        %v6046 = vrot.slane %v6045, 1
        %v6047 = vmax.f32 %v6045, %v6046
        %v6048 = vsel %vm5830, %v5293, -inf
        %v6049 = vrot.slane %v6048, 4
        %v6050 = vmax.f32 %v6048, %v6049
        %v6051 = vrot.slane %v6050, 2
        %v6052 = vmax.f32 %v6050, %v6051
        %v6053 = vrot.slane %v6052, 1
        %v6054 = vmax.f32 %v6052, %v6053
        %v6055 = vsel %vm5830, %v5301, -inf
        %v6056 = vrot.slane %v6055, 4
        %v6057 = vmax.f32 %v6055, %v6056
        %v6058 = vrot.slane %v6057, 2
        %v6059 = vmax.f32 %v6057, %v6058
        %v6060 = vrot.slane %v6059, 1
        %v6061 = vmax.f32 %v6059, %v6060
        %v6062 = vsel %vm5830, %v5309, -inf
        %v6063 = vrot.slane %v6062, 4
        %v6064 = vmax.f32 %v6062, %v6063
        %v6065 = vrot.slane %v6064, 2
        %v6066 = vmax.f32 %v6064, %v6065
        %v6067 = vrot.slane %v6066, 1
        %v6068 = vmax.f32 %v6066, %v6067
        %v6069 = vsel %vm5830, %v5308, -inf
        %v6070 = vrot.slane %v6069, 4
        %v6071 = vmax.f32 %v6069, %v6070
        %v6072 = vrot.slane %v6071, 2
        %v6073 = vmax.f32 %v6071, %v6072
        %v6074 = vrot.slane %v6073, 1
        %v6075 = vmax.f32 %v6073, %v6074
        %v6076 = vsel %vm5830, %v5310, -inf
        %v6077 = vrot.slane %v6076, 4
        %v6078 = vmax.f32 %v6076, %v6077
        %v6079 = vrot.slane %v6078, 2
        %v6080 = vmax.f32 %v6078, %v6079
        %v6081 = vrot.slane %v6080, 1
        %v6082 = vmax.f32 %v6080, %v6081
        %v6083 = vsel %vm5830, %v5318, -inf
        %v6084 = vrot.slane %v6083, 4
        %v6085 = vmax.f32 %v6083, %v6084
        %v6086 = vrot.slane %v6085, 2
        %v6087 = vmax.f32 %v6085, %v6086
        %v6088 = vrot.slane %v6087, 1
        %v6089 = vmax.f32 %v6087, %v6088
        %v6090 = vsel %vm5830, %v5326, -inf
        %v6091 = vrot.slane %v6090, 4
        %v6092 = vmax.f32 %v6090, %v6091
        %v6093 = vrot.slane %v6092, 2
        %v6094 = vmax.f32 %v6092, %v6093
        %v6095 = vrot.slane %v6094, 1
        %v6096 = vmax.f32 %v6094, %v6095
        %v6097 = vsel %vm5830, %v5325, -inf
        %v6098 = vrot.slane %v6097, 4
        %v6099 = vmax.f32 %v6097, %v6098
        %v6100 = vrot.slane %v6099, 2
        %v6101 = vmax.f32 %v6099, %v6100
        %v6102 = vrot.slane %v6101, 1
        %v6103 = vmax.f32 %v6101, %v6102
        %v6104 = vsel %vm5830, %v5327, -inf
        %v6105 = vrot.slane %v6104, 4
        %v6106 = vmax.f32 %v6104, %v6105
        %v6107 = vrot.slane %v6106, 2
        %v6108 = vmax.f32 %v6106, %v6107
        %v6109 = vrot.slane %v6108, 1
        %v6110 = vmax.f32 %v6108, %v6109
        %v6111 = vsel %vm5830, %v5335, -inf
        %v6112 = vrot.slane %v6111, 4
        %v6113 = vmax.f32 %v6111, %v6112
        %v6114 = vrot.slane %v6113, 2
        %v6115 = vmax.f32 %v6113, %v6114
        %v6116 = vrot.slane %v6115, 1
        %v6117 = vmax.f32 %v6115, %v6116
        %v6118 = vsel %vm5830, %v5343, -inf
        %v6119 = vrot.slane %v6118, 4
        %v6120 = vmax.f32 %v6118, %v6119
        %v6121 = vrot.slane %v6120, 2
        %v6122 = vmax.f32 %v6120, %v6121
        %v6123 = vrot.slane %v6122, 1
        %v6124 = vmax.f32 %v6122, %v6123
        %v6125 = vsel %vm5830, %v5342, -inf
        %v6126 = vrot.slane %v6125, 4
        %v6127 = vmax.f32 %v6125, %v6126
        %v6128 = vrot.slane %v6127, 2
        %v6129 = vmax.f32 %v6127, %v6128
        %v6130 = vrot.slane %v6129, 1
        %v6131 = vmax.f32 %v6129, %v6130
        %v6132 = vsel %vm5830, %v5344, -inf
        %v6133 = vrot.slane %v6132, 4
        %v6134 = vmax.f32 %v6132, %v6133
        %v6135 = vrot.slane %v6134, 2
        %v6136 = vmax.f32 %v6134, %v6135
        %v6137 = vrot.slane %v6136, 1
        %v6138 = vmax.f32 %v6136, %v6137
        %v6139 = vsel %vm5830, %v5352, -inf
        %v6140 = vrot.slane %v6139, 4
        %v6141 = vmax.f32 %v6139, %v6140
        %v6142 = vrot.slane %v6141, 2
        %v6143 = vmax.f32 %v6141, %v6142
        %v6144 = vrot.slane %v6143, 1
        %v6145 = vmax.f32 %v6143, %v6144
        %v6146 = vsel %vm5830, %v5360, -inf
        %v6147 = vrot.slane %v6146, 4
        %v6148 = vmax.f32 %v6146, %v6147
        %v6149 = vrot.slane %v6148, 2
        %v6150 = vmax.f32 %v6148, %v6149
        %v6151 = vrot.slane %v6150, 1
        %v6152 = vmax.f32 %v6150, %v6151
        %v6153 = vsel %vm5830, %v5359, -inf
        %v6154 = vrot.slane %v6153, 4
        %v6155 = vmax.f32 %v6153, %v6154
        %v6156 = vrot.slane %v6155, 2
        %v6157 = vmax.f32 %v6155, %v6156
        %v6158 = vrot.slane %v6157, 1
        %v6159 = vmax.f32 %v6157, %v6158
        %v6160 = vsel %vm5830, %v5361, -inf
        %v6161 = vrot.slane %v6160, 4
        %v6162 = vmax.f32 %v6160, %v6161
        %v6163 = vrot.slane %v6162, 2
        %v6164 = vmax.f32 %v6162, %v6163
        %v6165 = vrot.slane %v6164, 1
        %v6166 = vmax.f32 %v6164, %v6165
        %v6167 = vsel %vm5830, %v5369, -inf
        %v6168 = vrot.slane %v6167, 4
        %v6169 = vmax.f32 %v6167, %v6168
        %v6170 = vrot.slane %v6169, 2
        %v6171 = vmax.f32 %v6169, %v6170
        %v6172 = vrot.slane %v6171, 1
        %v6173 = vmax.f32 %v6171, %v6172
        %v6174 = vsel %vm5830, %v5377, -inf
        %v6175 = vrot.slane %v6174, 4
        %v6176 = vmax.f32 %v6174, %v6175
        %v6177 = vrot.slane %v6176, 2
        %v6178 = vmax.f32 %v6176, %v6177
        %v6179 = vrot.slane %v6178, 1
        %v6180 = vmax.f32 %v6178, %v6179
        %v6181 = vsel %vm5830, %v5376, -inf
        %v6182 = vrot.slane %v6181, 4
        %v6183 = vmax.f32 %v6181, %v6182
        %v6184 = vrot.slane %v6183, 2
        %v6185 = vmax.f32 %v6183, %v6184
        %v6186 = vrot.slane %v6185, 1
        %v6187 = vmax.f32 %v6185, %v6186
        %v6188 = vsel %vm5830, %v5378, -inf
        %v6189 = vrot.slane %v6188, 4
        %v6190 = vmax.f32 %v6188, %v6189
        %v6191 = vrot.slane %v6190, 2
        %v6192 = vmax.f32 %v6190, %v6191
        %v6193 = vrot.slane %v6192, 1
        %v6194 = vmax.f32 %v6192, %v6193
        %v6195 = vsel %vm5830, %v5386, -inf
        %v6196 = vrot.slane %v6195, 4
        %v6197 = vmax.f32 %v6195, %v6196
        %v6198 = vrot.slane %v6197, 2
        %v6199 = vmax.f32 %v6197, %v6198
        %v6200 = vrot.slane %v6199, 1
        %v6201 = vmax.f32 %v6199, %v6200
        %v6202 = vsel %vm5830, %v5394, -inf
        %v6203 = vrot.slane %v6202, 4
        %v6204 = vmax.f32 %v6202, %v6203
        %v6205 = vrot.slane %v6204, 2
        %v6206 = vmax.f32 %v6204, %v6205
        %v6207 = vrot.slane %v6206, 1
        %v6208 = vmax.f32 %v6206, %v6207
        %v6209 = vsel %vm5830, %v5393, -inf
        %v6210 = vrot.slane %v6209, 4
        %v6211 = vmax.f32 %v6209, %v6210
        %v6212 = vrot.slane %v6211, 2
        %v6213 = vmax.f32 %v6211, %v6212
        %v6214 = vrot.slane %v6213, 1
        %v6215 = vmax.f32 %v6213, %v6214
        %v6216 = vsel %vm5830, %v5395, -inf
        %v6217 = vrot.slane %v6216, 4
        %v6218 = vmax.f32 %v6216, %v6217
        %v6219 = vrot.slane %v6218, 2
        %v6220 = vmax.f32 %v6218, %v6219
        %v6221 = vrot.slane %v6220, 1
        %v6222 = vmax.f32 %v6220, %v6221
        %v6223 = vsel %vm5830, %v5403, -inf
        %v6224 = vrot.slane %v6223, 4
        %v6225 = vmax.f32 %v6223, %v6224
        %v6226 = vrot.slane %v6225, 2
        %v6227 = vmax.f32 %v6225, %v6226
        %v6228 = vrot.slane %v6227, 1
        %v6229 = vmax.f32 %v6227, %v6228
        %v6230 = vsel %vm5830, %v5411, -inf
        %v6231 = vrot.slane %v6230, 4
        %v6232 = vmax.f32 %v6230, %v6231
        %v6233 = vrot.slane %v6232, 2
        %v6234 = vmax.f32 %v6232, %v6233
        %v6235 = vrot.slane %v6234, 1
        %v6236 = vmax.f32 %v6234, %v6235
        %v6237 = vsel %vm5830, %v5410, -inf
        %v6238 = vrot.slane %v6237, 4
        %v6239 = vmax.f32 %v6237, %v6238
        %v6240 = vrot.slane %v6239, 2
        %v6241 = vmax.f32 %v6239, %v6240
        %v6242 = vrot.slane %v6241, 1
        %v6243 = vmax.f32 %v6241, %v6242
        %v6244 = vsel %vm5830, %v5412, -inf
        %v6245 = vrot.slane %v6244, 4
        %v6246 = vmax.f32 %v6244, %v6245
        %v6247 = vrot.slane %v6246, 2
        %v6248 = vmax.f32 %v6246, %v6247
        %v6249 = vrot.slane %v6248, 1
        %v6250 = vmax.f32 %v6248, %v6249
        %v6251 = vsel %vm5830, %v5420, -inf
        %v6252 = vrot.slane %v6251, 4
        %v6253 = vmax.f32 %v6251, %v6252
        %v6254 = vrot.slane %v6253, 2
        %v6255 = vmax.f32 %v6253, %v6254
        %v6256 = vrot.slane %v6255, 1
        %v6257 = vmax.f32 %v6255, %v6256
        %v6258 = vsel %vm5830, %v5428, -inf
        %v6259 = vrot.slane %v6258, 4
        %v6260 = vmax.f32 %v6258, %v6259
        %v6261 = vrot.slane %v6260, 2
        %v6262 = vmax.f32 %v6260, %v6261
        %v6263 = vrot.slane %v6262, 1
        %v6264 = vmax.f32 %v6262, %v6263
        %v6265 = vsel %vm5830, %v5427, -inf
        %v6266 = vrot.slane %v6265, 4
        %v6267 = vmax.f32 %v6265, %v6266
        %v6268 = vrot.slane %v6267, 2
        %v6269 = vmax.f32 %v6267, %v6268
        %v6270 = vrot.slane %v6269, 1
        %v6271 = vmax.f32 %v6269, %v6270
        %v6272 = vsel %vm5830, %v5429, -inf
        %v6273 = vrot.slane %v6272, 4
        %v6274 = vmax.f32 %v6272, %v6273
        %v6275 = vrot.slane %v6274, 2
        %v6276 = vmax.f32 %v6274, %v6275
        %v6277 = vrot.slane %v6276, 1
        %v6278 = vmax.f32 %v6276, %v6277
        %v6279 = vsel %vm5830, %v5437, -inf
        %v6280 = vrot.slane %v6279, 4
        %v6281 = vmax.f32 %v6279, %v6280
        %v6282 = vrot.slane %v6281, 2
        %v6283 = vmax.f32 %v6281, %v6282
        %v6284 = vrot.slane %v6283, 1
        %v6285 = vmax.f32 %v6283, %v6284
        %v6286 = vsel %vm5830, %v5445, -inf
        %v6287 = vrot.slane %v6286, 4
        %v6288 = vmax.f32 %v6286, %v6287
        %v6289 = vrot.slane %v6288, 2
        %v6290 = vmax.f32 %v6288, %v6289
        %v6291 = vrot.slane %v6290, 1
        %v6292 = vmax.f32 %v6290, %v6291
        %v6293 = vsel %vm5830, %v5444, -inf
        %v6294 = vrot.slane %v6293, 4
        %v6295 = vmax.f32 %v6293, %v6294
        %v6296 = vrot.slane %v6295, 2
        %v6297 = vmax.f32 %v6295, %v6296
        %v6298 = vrot.slane %v6297, 1
        %v6299 = vmax.f32 %v6297, %v6298
        %v6300 = vsel %vm5830, %v5446, -inf
        %v6301 = vrot.slane %v6300, 4
        %v6302 = vmax.f32 %v6300, %v6301
        %v6303 = vrot.slane %v6302, 2
        %v6304 = vmax.f32 %v6302, %v6303
        %v6305 = vrot.slane %v6304, 1
        %v6306 = vmax.f32 %v6304, %v6305
        %v6307 = vsel %vm5830, %v5454, -inf
        %v6308 = vrot.slane %v6307, 4
        %v6309 = vmax.f32 %v6307, %v6308
        %v6310 = vrot.slane %v6309, 2
        %v6311 = vmax.f32 %v6309, %v6310
        %v6312 = vrot.slane %v6311, 1
        %v6313 = vmax.f32 %v6311, %v6312
        %v6314 = vsel %vm5830, %v5462, -inf
        %v6315 = vrot.slane %v6314, 4
        %v6316 = vmax.f32 %v6314, %v6315
        %v6317 = vrot.slane %v6316, 2
        %v6318 = vmax.f32 %v6316, %v6317
        %v6319 = vrot.slane %v6318, 1
        %v6320 = vmax.f32 %v6318, %v6319
        %v6321 = vsel %vm5830, %v5461, -inf
        %v6322 = vrot.slane %v6321, 4
        %v6323 = vmax.f32 %v6321, %v6322
        %v6324 = vrot.slane %v6323, 2
        %v6325 = vmax.f32 %v6323, %v6324
        %v6326 = vrot.slane %v6325, 1
        %v6327 = vmax.f32 %v6325, %v6326
        %v6328 = vsel %vm5830, %v5463, -inf
        %v6329 = vrot.slane %v6328, 4
        %v6330 = vmax.f32 %v6328, %v6329
        %v6331 = vrot.slane %v6330, 2
        %v6332 = vmax.f32 %v6330, %v6331
        %v6333 = vrot.slane %v6332, 1
        %v6334 = vmax.f32 %v6332, %v6333
        %v6335 = vsel %vm5830, %v5471, -inf
        %v6336 = vrot.slane %v6335, 4
        %v6337 = vmax.f32 %v6335, %v6336
        %v6338 = vrot.slane %v6337, 2
        %v6339 = vmax.f32 %v6337, %v6338
        %v6340 = vrot.slane %v6339, 1
        %v6341 = vmax.f32 %v6339, %v6340
        %v6342 = vsel %vm5830, %v5479, -inf
        %v6343 = vrot.slane %v6342, 4
        %v6344 = vmax.f32 %v6342, %v6343
        %v6345 = vrot.slane %v6344, 2
        %v6346 = vmax.f32 %v6344, %v6345
        %v6347 = vrot.slane %v6346, 1
        %v6348 = vmax.f32 %v6346, %v6347
        %v6349 = vsel %vm5830, %v5478, -inf
        %v6350 = vrot.slane %v6349, 4
        %v6351 = vmax.f32 %v6349, %v6350
        %v6352 = vrot.slane %v6351, 2
        %v6353 = vmax.f32 %v6351, %v6352
        %v6354 = vrot.slane %v6353, 1
        %v6355 = vmax.f32 %v6353, %v6354
        %v6356 = vsel %vm5830, %v5480, -inf
        %v6357 = vrot.slane %v6356, 4
        %v6358 = vmax.f32 %v6356, %v6357
        %v6359 = vrot.slane %v6358, 2
        %v6360 = vmax.f32 %v6358, %v6359
        %v6361 = vrot.slane %v6360, 1
        %v6362 = vmax.f32 %v6360, %v6361
        %v6363 = vsel %vm5830, %v5488, -inf
        %v6364 = vrot.slane %v6363, 4
        %v6365 = vmax.f32 %v6363, %v6364
        %v6366 = vrot.slane %v6365, 2
        %v6367 = vmax.f32 %v6365, %v6366
        %v6368 = vrot.slane %v6367, 1
        %v6369 = vmax.f32 %v6367, %v6368
        %v6370 = vsel %vm5830, %v5496, -inf
        %v6371 = vrot.slane %v6370, 4
        %v6372 = vmax.f32 %v6370, %v6371
        %v6373 = vrot.slane %v6372, 2
        %v6374 = vmax.f32 %v6372, %v6373
        %v6375 = vrot.slane %v6374, 1
        %v6376 = vmax.f32 %v6374, %v6375
        %v6377 = vsel %vm5830, %v5495, -inf
        %v6378 = vrot.slane %v6377, 4
        %v6379 = vmax.f32 %v6377, %v6378
        %v6380 = vrot.slane %v6379, 2
        %v6381 = vmax.f32 %v6379, %v6380
        %v6382 = vrot.slane %v6381, 1
        %v6383 = vmax.f32 %v6381, %v6382
        %v6384 = vsel %vm5830, %v5497, -inf
        %v6385 = vrot.slane %v6384, 4
        %v6386 = vmax.f32 %v6384, %v6385
        %v6387 = vrot.slane %v6386, 2
        %v6388 = vmax.f32 %v6386, %v6387
        %v6389 = vrot.slane %v6388, 1
        %v6390 = vmax.f32 %v6388, %v6389
        %v6391 = vsel %vm5830, %v5505, -inf
        %v6392 = vrot.slane %v6391, 4
        %v6393 = vmax.f32 %v6391, %v6392
        %v6394 = vrot.slane %v6393, 2
        %v6395 = vmax.f32 %v6393, %v6394
        %v6396 = vrot.slane %v6395, 1
        %v6397 = vmax.f32 %v6395, %v6396
        %v6398 = vsel %vm5830, %v5513, -inf
        %v6399 = vrot.slane %v6398, 4
        %v6400 = vmax.f32 %v6398, %v6399
        %v6401 = vrot.slane %v6400, 2
        %v6402 = vmax.f32 %v6400, %v6401
        %v6403 = vrot.slane %v6402, 1
        %v6404 = vmax.f32 %v6402, %v6403
        %v6405 = vsel %vm5830, %v5512, -inf
        %v6406 = vrot.slane %v6405, 4
        %v6407 = vmax.f32 %v6405, %v6406
        %v6408 = vrot.slane %v6407, 2
        %v6409 = vmax.f32 %v6407, %v6408
        %v6410 = vrot.slane %v6409, 1
        %v6411 = vmax.f32 %v6409, %v6410
        %v6412 = vsel %vm5830, %v5514, -inf
        %v6413 = vrot.slane %v6412, 4
        %v6414 = vmax.f32 %v6412, %v6413
        %v6415 = vrot.slane %v6414, 2
        %v6416 = vmax.f32 %v6414, %v6415
        %v6417 = vrot.slane %v6416, 1
        %v6418 = vmax.f32 %v6416, %v6417
        %v6419 = vsel %vm5830, %v5522, -inf
        %v6420 = vrot.slane %v6419, 4
        %v6421 = vmax.f32 %v6419, %v6420
        %v6422 = vrot.slane %v6421, 2
        %v6423 = vmax.f32 %v6421, %v6422
        %v6424 = vrot.slane %v6423, 1
        %v6425 = vmax.f32 %v6423, %v6424
        %v6426 = vsel %vm5830, %v5530, -inf
        %v6427 = vrot.slane %v6426, 4
        %v6428 = vmax.f32 %v6426, %v6427
        %v6429 = vrot.slane %v6428, 2
        %v6430 = vmax.f32 %v6428, %v6429
        %v6431 = vrot.slane %v6430, 1
        %v6432 = vmax.f32 %v6430, %v6431
        %v6433 = vsel %vm5830, %v5529, -inf
        %v6434 = vrot.slane %v6433, 4
        %v6435 = vmax.f32 %v6433, %v6434
        %v6436 = vrot.slane %v6435, 2
        %v6437 = vmax.f32 %v6435, %v6436
        %v6438 = vrot.slane %v6437, 1
        %v6439 = vmax.f32 %v6437, %v6438
        %v6440 = vsel %vm5830, %v5531, -inf
        %v6441 = vrot.slane %v6440, 4
        %v6442 = vmax.f32 %v6440, %v6441
        %v6443 = vrot.slane %v6442, 2
        %v6444 = vmax.f32 %v6442, %v6443
        %v6445 = vrot.slane %v6444, 1
        %v6446 = vmax.f32 %v6444, %v6445
        %v6447 = vsel %vm5830, %v5539, -inf
        %v6448 = vrot.slane %v6447, 4
        %v6449 = vmax.f32 %v6447, %v6448
        %v6450 = vrot.slane %v6449, 2
        %v6451 = vmax.f32 %v6449, %v6450
        %v6452 = vrot.slane %v6451, 1
        %v6453 = vmax.f32 %v6451, %v6452
        %v6454 = vsel %vm5830, %v5547, -inf
        %v6455 = vrot.slane %v6454, 4
        %v6456 = vmax.f32 %v6454, %v6455
        %v6457 = vrot.slane %v6456, 2
        %v6458 = vmax.f32 %v6456, %v6457
        %v6459 = vrot.slane %v6458, 1
        %v6460 = vmax.f32 %v6458, %v6459
        %v6461 = vsel %vm5830, %v5546, -inf
        %v6462 = vrot.slane %v6461, 4
        %v6463 = vmax.f32 %v6461, %v6462
        %v6464 = vrot.slane %v6463, 2
        %v6465 = vmax.f32 %v6463, %v6464
        %v6466 = vrot.slane %v6465, 1
        %v6467 = vmax.f32 %v6465, %v6466
        %v6468 = vsel %vm5830, %v5548, -inf
        %v6469 = vrot.slane %v6468, 4
        %v6470 = vmax.f32 %v6468, %v6469
        %v6471 = vrot.slane %v6470, 2
        %v6472 = vmax.f32 %v6470, %v6471
        %v6473 = vrot.slane %v6472, 1
        %v6474 = vmax.f32 %v6472, %v6473
        %v6475 = vsel %vm5830, %v5556, -inf
        %v6476 = vrot.slane %v6475, 4
        %v6477 = vmax.f32 %v6475, %v6476
        %v6478 = vrot.slane %v6477, 2
        %v6479 = vmax.f32 %v6477, %v6478
        %v6480 = vrot.slane %v6479, 1
        %v6481 = vmax.f32 %v6479, %v6480
        %v6482 = vsel %vm5830, %v5564, -inf
        %v6483 = vrot.slane %v6482, 4
        %v6484 = vmax.f32 %v6482, %v6483
        %v6485 = vrot.slane %v6484, 2
        %v6486 = vmax.f32 %v6484, %v6485
        %v6487 = vrot.slane %v6486, 1
        %v6488 = vmax.f32 %v6486, %v6487
        %v6489 = vsel %vm5830, %v5563, -inf
        %v6490 = vrot.slane %v6489, 4
        %v6491 = vmax.f32 %v6489, %v6490
        %v6492 = vrot.slane %v6491, 2
        %v6493 = vmax.f32 %v6491, %v6492
        %v6494 = vrot.slane %v6493, 1
        %v6495 = vmax.f32 %v6493, %v6494
        %v6496 = vsel %vm5830, %v5565, -inf
        %v6497 = vrot.slane %v6496, 4
        %v6498 = vmax.f32 %v6496, %v6497
        %v6499 = vrot.slane %v6498, 2
        %v6500 = vmax.f32 %v6498, %v6499
        %v6501 = vrot.slane %v6500, 1
        %v6502 = vmax.f32 %v6500, %v6501
        %v6503 = vsel %vm5830, %v5573, -inf
        %v6504 = vrot.slane %v6503, 4
        %v6505 = vmax.f32 %v6503, %v6504
        %v6506 = vrot.slane %v6505, 2
        %v6507 = vmax.f32 %v6505, %v6506
        %v6508 = vrot.slane %v6507, 1
        %v6509 = vmax.f32 %v6507, %v6508
        %v6510 = vsel %vm5830, %v5581, -inf
        %v6511 = vrot.slane %v6510, 4
        %v6512 = vmax.f32 %v6510, %v6511
        %v6513 = vrot.slane %v6512, 2
        %v6514 = vmax.f32 %v6512, %v6513
        %v6515 = vrot.slane %v6514, 1
        %v6516 = vmax.f32 %v6514, %v6515
        %v6517 = vsel %vm5830, %v5580, -inf
        %v6518 = vrot.slane %v6517, 4
        %v6519 = vmax.f32 %v6517, %v6518
        %v6520 = vrot.slane %v6519, 2
        %v6521 = vmax.f32 %v6519, %v6520
        %v6522 = vrot.slane %v6521, 1
        %v6523 = vmax.f32 %v6521, %v6522
        %v6524 = vsel %vm5830, %v5582, -inf
        %v6525 = vrot.slane %v6524, 4
        %v6526 = vmax.f32 %v6524, %v6525
        %v6527 = vrot.slane %v6526, 2
        %v6528 = vmax.f32 %v6526, %v6527
        %v6529 = vrot.slane %v6528, 1
        %v6530 = vmax.f32 %v6528, %v6529
        %v6531 = vsel %vm5830, %v5590, -inf
        %v6532 = vrot.slane %v6531, 4
        %v6533 = vmax.f32 %v6531, %v6532
        %v6534 = vrot.slane %v6533, 2
        %v6535 = vmax.f32 %v6533, %v6534
        %v6536 = vrot.slane %v6535, 1
        %v6537 = vmax.f32 %v6535, %v6536
        %v6538 = vsel %vm5830, %v5598, -inf
        %v6539 = vrot.slane %v6538, 4
        %v6540 = vmax.f32 %v6538, %v6539
        %v6541 = vrot.slane %v6540, 2
        %v6542 = vmax.f32 %v6540, %v6541
        %v6543 = vrot.slane %v6542, 1
        %v6544 = vmax.f32 %v6542, %v6543
        %v6545 = vsel %vm5830, %v5597, -inf
        %v6546 = vrot.slane %v6545, 4
        %v6547 = vmax.f32 %v6545, %v6546
        %v6548 = vrot.slane %v6547, 2
        %v6549 = vmax.f32 %v6547, %v6548
        %v6550 = vrot.slane %v6549, 1
        %v6551 = vmax.f32 %v6549, %v6550
        %v6552 = vsel %vm5830, %v5599, -inf
        %v6553 = vrot.slane %v6552, 4
        %v6554 = vmax.f32 %v6552, %v6553
        %v6555 = vrot.slane %v6554, 2
        %v6556 = vmax.f32 %v6554, %v6555
        %v6557 = vrot.slane %v6556, 1
        %v6558 = vmax.f32 %v6556, %v6557
        %v6559 = vsel %vm5830, %v5607, -inf
        %v6560 = vrot.slane %v6559, 4
        %v6561 = vmax.f32 %v6559, %v6560
        %v6562 = vrot.slane %v6561, 2
        %v6563 = vmax.f32 %v6561, %v6562
        %v6564 = vrot.slane %v6563, 1
        %v6565 = vmax.f32 %v6563, %v6564
        %v6566 = vsel %vm5830, %v5615, -inf
        %v6567 = vrot.slane %v6566, 4
        %v6568 = vmax.f32 %v6566, %v6567
        %v6569 = vrot.slane %v6568, 2
        %v6570 = vmax.f32 %v6568, %v6569
        %v6571 = vrot.slane %v6570, 1
        %v6572 = vmax.f32 %v6570, %v6571
        %v6573 = vsel %vm5830, %v5614, -inf
        %v6574 = vrot.slane %v6573, 4
        %v6575 = vmax.f32 %v6573, %v6574
        %v6576 = vrot.slane %v6575, 2
        %v6577 = vmax.f32 %v6575, %v6576
        %v6578 = vrot.slane %v6577, 1
        %v6579 = vmax.f32 %v6577, %v6578
        %v6580 = vsel %vm5830, %v5616, -inf
        %v6581 = vrot.slane %v6580, 4
        %v6582 = vmax.f32 %v6580, %v6581
        %v6583 = vrot.slane %v6582, 2
        %v6584 = vmax.f32 %v6582, %v6583
        %v6585 = vrot.slane %v6584, 1
        %v6586 = vmax.f32 %v6584, %v6585
        %v6587 = vsel %vm5830, %v5624, -inf
        %v6588 = vrot.slane %v6587, 4
        %v6589 = vmax.f32 %v6587, %v6588
        %v6590 = vrot.slane %v6589, 2
        %v6591 = vmax.f32 %v6589, %v6590
        %v6592 = vrot.slane %v6591, 1
        %v6593 = vmax.f32 %v6591, %v6592
        %v6594 = vsel %vm5830, %v5632, -inf
        %v6595 = vrot.slane %v6594, 4
        %v6596 = vmax.f32 %v6594, %v6595
        %v6597 = vrot.slane %v6596, 2
        %v6598 = vmax.f32 %v6596, %v6597
        %v6599 = vrot.slane %v6598, 1
        %v6600 = vmax.f32 %v6598, %v6599
        %v6601 = vsel %vm5830, %v5631, -inf
        %v6602 = vrot.slane %v6601, 4
        %v6603 = vmax.f32 %v6601, %v6602
        %v6604 = vrot.slane %v6603, 2
        %v6605 = vmax.f32 %v6603, %v6604
        %v6606 = vrot.slane %v6605, 1
        %v6607 = vmax.f32 %v6605, %v6606
        %v6608 = vsel %vm5830, %v5633, -inf
        %v6609 = vrot.slane %v6608, 4
        %v6610 = vmax.f32 %v6608, %v6609
        %v6611 = vrot.slane %v6610, 2
        %v6612 = vmax.f32 %v6610, %v6611
        %v6613 = vrot.slane %v6612, 1
        %v6614 = vmax.f32 %v6612, %v6613
        %v6615 = vsel %vm5830, %v5641, -inf
        %v6616 = vrot.slane %v6615, 4
        %v6617 = vmax.f32 %v6615, %v6616
        %v6618 = vrot.slane %v6617, 2
        %v6619 = vmax.f32 %v6617, %v6618
        %v6620 = vrot.slane %v6619, 1
        %v6621 = vmax.f32 %v6619, %v6620
        %v6622 = vsel %vm5830, %v5649, -inf
        %v6623 = vrot.slane %v6622, 4
        %v6624 = vmax.f32 %v6622, %v6623
        %v6625 = vrot.slane %v6624, 2
        %v6626 = vmax.f32 %v6624, %v6625
        %v6627 = vrot.slane %v6626, 1
        %v6628 = vmax.f32 %v6626, %v6627
        %v6629 = vsel %vm5830, %v5648, -inf
        %v6630 = vrot.slane %v6629, 4
        %v6631 = vmax.f32 %v6629, %v6630
        %v6632 = vrot.slane %v6631, 2
        %v6633 = vmax.f32 %v6631, %v6632
        %v6634 = vrot.slane %v6633, 1
        %v6635 = vmax.f32 %v6633, %v6634
        %v6636 = vsel %vm5830, %v5650, -inf
        %v6637 = vrot.slane %v6636, 4
        %v6638 = vmax.f32 %v6636, %v6637
        %v6639 = vrot.slane %v6638, 2
        %v6640 = vmax.f32 %v6638, %v6639
        %v6641 = vrot.slane %v6640, 1
        %v6642 = vmax.f32 %v6640, %v6641
        %v6643 = vsel %vm5830, %v5658, -inf
        %v6644 = vrot.slane %v6643, 4
        %v6645 = vmax.f32 %v6643, %v6644
        %v6646 = vrot.slane %v6645, 2
        %v6647 = vmax.f32 %v6645, %v6646
        %v6648 = vrot.slane %v6647, 1
        %v6649 = vmax.f32 %v6647, %v6648
        %v6650 = vsel %vm5830, %v5666, -inf
        %v6651 = vrot.slane %v6650, 4
        %v6652 = vmax.f32 %v6650, %v6651
        %v6653 = vrot.slane %v6652, 2
        %v6654 = vmax.f32 %v6652, %v6653
        %v6655 = vrot.slane %v6654, 1
        %v6656 = vmax.f32 %v6654, %v6655
        %v6657 = vsel %vm5830, %v5665, -inf
        %v6658 = vrot.slane %v6657, 4
        %v6659 = vmax.f32 %v6657, %v6658
        %v6660 = vrot.slane %v6659, 2
        %v6661 = vmax.f32 %v6659, %v6660
        %v6662 = vrot.slane %v6661, 1
        %v6663 = vmax.f32 %v6661, %v6662
        %v6664 = vsel %vm5830, %v5667, -inf
        %v6665 = vrot.slane %v6664, 4
        %v6666 = vmax.f32 %v6664, %v6665
        %v6667 = vrot.slane %v6666, 2
        %v6668 = vmax.f32 %v6666, %v6667
        %v6669 = vrot.slane %v6668, 1
        %v6670 = vmax.f32 %v6668, %v6669
        %v6671 = vsel %vm5830, %v5675, -inf
        %v6672 = vrot.slane %v6671, 4
        %v6673 = vmax.f32 %v6671, %v6672
        %v6674 = vrot.slane %v6673, 2
        %v6675 = vmax.f32 %v6673, %v6674
        %v6676 = vrot.slane %v6675, 1
        %v6677 = vmax.f32 %v6675, %v6676
        %v6678 = vsel %vm5830, %v5683, -inf
        %v6679 = vrot.slane %v6678, 4
        %v6680 = vmax.f32 %v6678, %v6679
        %v6681 = vrot.slane %v6680, 2
        %v6682 = vmax.f32 %v6680, %v6681
        %v6683 = vrot.slane %v6682, 1
        %v6684 = vmax.f32 %v6682, %v6683
        %v6685 = vsel %vm5830, %v5682, -inf
        %v6686 = vrot.slane %v6685, 4
        %v6687 = vmax.f32 %v6685, %v6686
        %v6688 = vrot.slane %v6687, 2
        %v6689 = vmax.f32 %v6687, %v6688
        %v6690 = vrot.slane %v6689, 1
        %v6691 = vmax.f32 %v6689, %v6690
        %v6692 = vsel %vm5830, %v5684, -inf
        %v6693 = vrot.slane %v6692, 4
        %v6694 = vmax.f32 %v6692, %v6693
        %v6695 = vrot.slane %v6694, 2
        %v6696 = vmax.f32 %v6694, %v6695
        %v6697 = vrot.slane %v6696, 1
        %v6698 = vmax.f32 %v6696, %v6697
        %v6699 = vsel %vm5830, %v5692, -inf
        %v6700 = vrot.slane %v6699, 4
        %v6701 = vmax.f32 %v6699, %v6700
        %v6702 = vrot.slane %v6701, 2
        %v6703 = vmax.f32 %v6701, %v6702
        %v6704 = vrot.slane %v6703, 1
        %v6705 = vmax.f32 %v6703, %v6704
        %v6706 = vsel %vm5830, %v5700, -inf
        %v6707 = vrot.slane %v6706, 4
        %v6708 = vmax.f32 %v6706, %v6707
        %v6709 = vrot.slane %v6708, 2
        %v6710 = vmax.f32 %v6708, %v6709
        %v6711 = vrot.slane %v6710, 1
        %v6712 = vmax.f32 %v6710, %v6711
        %v6713 = vsel %vm5830, %v5699, -inf
        %v6714 = vrot.slane %v6713, 4
        %v6715 = vmax.f32 %v6713, %v6714
        %v6716 = vrot.slane %v6715, 2
        %v6717 = vmax.f32 %v6715, %v6716
        %v6718 = vrot.slane %v6717, 1
        %v6719 = vmax.f32 %v6717, %v6718
        %v6720 = vsel %vm5830, %v5701, -inf
        %v6721 = vrot.slane %v6720, 4
        %v6722 = vmax.f32 %v6720, %v6721
        %v6723 = vrot.slane %v6722, 2
        %v6724 = vmax.f32 %v6722, %v6723
        %v6725 = vrot.slane %v6724, 1
        %v6726 = vmax.f32 %v6724, %v6725
        %v6727 = vmax.f32 %v5837, %v5893
        %v6728 = vmax.f32 %v5844, %v5900
        %v6729 = vmax.f32 %v5851, %v5907
        %v6730 = vmax.f32 %v5858, %v5914
        %v6731 = vmax.f32 %v5865, %v5921
        %v6732 = vmax.f32 %v5872, %v5928
        %v6733 = vmax.f32 %v5879, %v5935
        %v6734 = vmax.f32 %v5886, %v5942
        %v6735 = vmax.f32 %v5949, %v6005
        %v6736 = vmax.f32 %v5956, %v6012
        %v6737 = vmax.f32 %v5963, %v6019
        %v6738 = vmax.f32 %v5970, %v6026
        %v6739 = vmax.f32 %v5977, %v6033
        %v6740 = vmax.f32 %v5984, %v6040
        %v6741 = vmax.f32 %v5991, %v6047
        %v6742 = vmax.f32 %v5998, %v6054
        %v6743 = vmax.f32 %v6061, %v6117
        %v6744 = vmax.f32 %v6068, %v6124
        %v6745 = vmax.f32 %v6075, %v6131
        %v6746 = vmax.f32 %v6082, %v6138
        %v6747 = vmax.f32 %v6089, %v6145
        %v6748 = vmax.f32 %v6096, %v6152
        %v6749 = vmax.f32 %v6103, %v6159
        %v6750 = vmax.f32 %v6110, %v6166
        %v6751 = vmax.f32 %v6173, %v6229
        %v6752 = vmax.f32 %v6180, %v6236
        %v6753 = vmax.f32 %v6187, %v6243
        %v6754 = vmax.f32 %v6194, %v6250
        %v6755 = vmax.f32 %v6201, %v6257
        %v6756 = vmax.f32 %v6208, %v6264
        %v6757 = vmax.f32 %v6215, %v6271
        %v6758 = vmax.f32 %v6222, %v6278
        %v6759 = vmax.f32 %v6285, %v6341
        %v6760 = vmax.f32 %v6292, %v6348
        %v6761 = vmax.f32 %v6299, %v6355
        %v6762 = vmax.f32 %v6306, %v6362
        %v6763 = vmax.f32 %v6313, %v6369
        %v6764 = vmax.f32 %v6320, %v6376
        %v6765 = vmax.f32 %v6327, %v6383
        %v6766 = vmax.f32 %v6334, %v6390
        %v6767 = vmax.f32 %v6397, %v6453
        %v6768 = vmax.f32 %v6404, %v6460
        %v6769 = vmax.f32 %v6411, %v6467
        %v6770 = vmax.f32 %v6418, %v6474
        %v6771 = vmax.f32 %v6425, %v6481
        %v6772 = vmax.f32 %v6432, %v6488
        %v6773 = vmax.f32 %v6439, %v6495
        %v6774 = vmax.f32 %v6446, %v6502
        %v6775 = vmax.f32 %v6509, %v6565
        %v6776 = vmax.f32 %v6516, %v6572
        %v6777 = vmax.f32 %v6523, %v6579
        %v6778 = vmax.f32 %v6530, %v6586
        %v6779 = vmax.f32 %v6537, %v6593
        %v6780 = vmax.f32 %v6544, %v6600
        %v6781 = vmax.f32 %v6551, %v6607
        %v6782 = vmax.f32 %v6558, %v6614
        %v6783 = vmax.f32 %v6621, %v6677
        %v6784 = vmax.f32 %v6628, %v6684
        %v6785 = vmax.f32 %v6635, %v6691
        %v6786 = vmax.f32 %v6642, %v6698
        %v6787 = vmax.f32 %v6649, %v6705
        %v6788 = vmax.f32 %v6656, %v6712
        %v6789 = vmax.f32 %v6663, %v6719
        %v6790 = vmax.f32 %v6670, %v6726
        %6791 = vst [vmem:[#allocation2] sm:$0xf] 0
        %6792 = vst [vmem:[#allocation2 + $0x4] sm:$0x1] 0
        %6793 = vst [vmem:[#allocation2 + $0x8] sm:$0xf] 0
        %6794 = vst [vmem:[#allocation2 + $0xc] sm:$0x1] 0
        %6795 = vst [vmem:[#allocation2 + $0x10] sm:$0xf] 0
        %6796 = vst [vmem:[#allocation2 + $0x14] sm:$0x1] 0
        %6797 = vst [vmem:[#allocation2 + $0x18] sm:$0xf] 0
        %6798 = vst [vmem:[#allocation2 + $0x1c] sm:$0x1] 0
        %6799 = vst [vmem:[#allocation2 + $0x20] sm:$0xf] 0
        %6800 = vst [vmem:[#allocation2 + $0x24] sm:$0x1] 0
        %6801 = vst [vmem:[#allocation2 + $0x28] sm:$0xf] 0
        %6802 = vst [vmem:[#allocation2 + $0x2c] sm:$0x1] 0
        %6803 = vst [vmem:[#allocation2 + $0x30] sm:$0xf] 0
        %6804 = vst [vmem:[#allocation2 + $0x34] sm:$0x1] 0
        %6805 = vst [vmem:[#allocation2 + $0x38] sm:$0xf] 0
        %6806 = vst [vmem:[#allocation2 + $0x3c] sm:$0x1] 0
        %6807 = vst [vmem:[#allocation2 + $0x40] sm:$0xf] 0
        %6808 = vst [vmem:[#allocation2 + $0x44] sm:$0x1] 0
        %6809 = vst [vmem:[#allocation2 + $0x48] sm:$0xf] 0
        %6810 = vst [vmem:[#allocation2 + $0x4c] sm:$0x1] 0
        %v6811 = vpack.c.bf16 %v6727, %v6727
        %v6812 = vpack.c.bf16 %v6728, %v6728
        %v6813 = vpack.c.bf16 %v6729, %v6729
        %v6814 = vpack.c.bf16 %v6730, %v6730
        %v6815 = vpack.c.bf16 %v6731, %v6731
        %v6816 = vpack.c.bf16 %v6732, %v6732
        %v6817 = vpack.c.bf16 %v6733, %v6733
        %v6818 = vpack.c.bf16 %v6734, %v6734
        %v6819 = vpack.c.bf16 %v6735, %v6735
        %v6820 = vpack.c.bf16 %v6736, %v6736
        %v6821 = vpack.c.bf16 %v6737, %v6737
        %v6822 = vpack.c.bf16 %v6738, %v6738
        %v6823 = vpack.c.bf16 %v6739, %v6739
        %v6824 = vpack.c.bf16 %v6740, %v6740
        %v6825 = vpack.c.bf16 %v6741, %v6741
        %v6826 = vpack.c.bf16 %v6742, %v6742
        %v6827 = vpack.c.bf16 %v6743, %v6743
        %v6828 = vpack.c.bf16 %v6744, %v6744
        %v6829 = vpack.c.bf16 %v6745, %v6745
        %v6830 = vpack.c.bf16 %v6746, %v6746
        %v6831 = vpack.c.bf16 %v6747, %v6747
        %v6832 = vpack.c.bf16 %v6748, %v6748
        %v6833 = vpack.c.bf16 %v6749, %v6749
        %v6834 = vpack.c.bf16 %v6750, %v6750
        %v6835 = vpack.c.bf16 %v6751, %v6751
        %v6836 = vpack.c.bf16 %v6752, %v6752
        %v6837 = vpack.c.bf16 %v6753, %v6753
        %v6838 = vpack.c.bf16 %v6754, %v6754
        %v6839 = vpack.c.bf16 %v6755, %v6755
        %v6840 = vpack.c.bf16 %v6756, %v6756
        %v6841 = vpack.c.bf16 %v6757, %v6757
        %v6842 = vpack.c.bf16 %v6758, %v6758
        %v6843 = vpack.c.bf16 %v6759, %v6759
        %v6844 = vpack.c.bf16 %v6760, %v6760
        %v6845 = vpack.c.bf16 %v6761, %v6761
        %v6846 = vpack.c.bf16 %v6762, %v6762
        %v6847 = vpack.c.bf16 %v6763, %v6763
        %v6848 = vpack.c.bf16 %v6764, %v6764
        %v6849 = vpack.c.bf16 %v6765, %v6765
        %v6850 = vpack.c.bf16 %v6766, %v6766
        %v6851 = vpack.c.bf16 %v6767, %v6767
        %v6852 = vpack.c.bf16 %v6768, %v6768
        %v6853 = vpack.c.bf16 %v6769, %v6769
        %v6854 = vpack.c.bf16 %v6770, %v6770
        %v6855 = vpack.c.bf16 %v6771, %v6771
        %v6856 = vpack.c.bf16 %v6772, %v6772
        %v6857 = vpack.c.bf16 %v6773, %v6773
        %v6858 = vpack.c.bf16 %v6774, %v6774
        %v6859 = vpack.c.bf16 %v6775, %v6775
        %v6860 = vpack.c.bf16 %v6776, %v6776
        %v6861 = vpack.c.bf16 %v6777, %v6777
        %v6862 = vpack.c.bf16 %v6778, %v6778
        %v6863 = vpack.c.bf16 %v6779, %v6779
        %v6864 = vpack.c.bf16 %v6780, %v6780
        %v6865 = vpack.c.bf16 %v6781, %v6781
        %v6866 = vpack.c.bf16 %v6782, %v6782
        %v6867 = vpack.c.bf16 %v6783, %v6783
        %v6868 = vpack.c.bf16 %v6784, %v6784
        %v6869 = vpack.c.bf16 %v6785, %v6785
        %v6870 = vpack.c.bf16 %v6786, %v6786
        %v6871 = vpack.c.bf16 %v6787, %v6787
        %v6872 = vpack.c.bf16 %v6788, %v6788
        %v6873 = vpack.c.bf16 %v6789, %v6789
        %v6874 = vpack.c.bf16 %v6790, %v6790
        %v6939 = vunpack.c.l.b16 %v6811
        %v6940 = vunpack.c.l.b16 %v6812
        %v6941 = vunpack.c.l.b16 %v6813
        %v6942 = vunpack.c.l.b16 %v6814
        %v6943 = vunpack.c.l.b16 %v6815
        %v6944 = vunpack.c.l.b16 %v6816
        %v6945 = vunpack.c.l.b16 %v6817
        %v6946 = vunpack.c.l.b16 %v6818
        %v6947 = vunpack.c.l.b16 %v6819
        %v6948 = vunpack.c.l.b16 %v6820
        %v6949 = vunpack.c.l.b16 %v6821
        %v6950 = vunpack.c.l.b16 %v6822
        %v6951 = vunpack.c.l.b16 %v6823
        %v6952 = vunpack.c.l.b16 %v6824
        %v6953 = vunpack.c.l.b16 %v6825
        %v6954 = vunpack.c.l.b16 %v6826
        %v6955 = vunpack.c.l.b16 %v6827
        %v6956 = vunpack.c.l.b16 %v6828
        %v6957 = vunpack.c.l.b16 %v6829
        %v6958 = vunpack.c.l.b16 %v6830
        %v6959 = vunpack.c.l.b16 %v6831
        %v6960 = vunpack.c.l.b16 %v6832
        %v6961 = vunpack.c.l.b16 %v6833
        %v6962 = vunpack.c.l.b16 %v6834
        %v6963 = vunpack.c.l.b16 %v6835
        %v6964 = vunpack.c.l.b16 %v6836
        %v6965 = vunpack.c.l.b16 %v6837
        %v6966 = vunpack.c.l.b16 %v6838
        %v6967 = vunpack.c.l.b16 %v6839
        %v6968 = vunpack.c.l.b16 %v6840
        %v6969 = vunpack.c.l.b16 %v6841
        %v6970 = vunpack.c.l.b16 %v6842
        %v6971 = vunpack.c.l.b16 %v6843
        %v6972 = vunpack.c.l.b16 %v6844
        %v6973 = vunpack.c.l.b16 %v6845
        %v6974 = vunpack.c.l.b16 %v6846
        %v6975 = vunpack.c.l.b16 %v6847
        %v6976 = vunpack.c.l.b16 %v6848
        %v6977 = vunpack.c.l.b16 %v6849
        %v6978 = vunpack.c.l.b16 %v6850
        %v6979 = vunpack.c.l.b16 %v6851
        %v6980 = vunpack.c.l.b16 %v6852
        %v6981 = vunpack.c.l.b16 %v6853
        %v6982 = vunpack.c.l.b16 %v6854
        %v6983 = vunpack.c.l.b16 %v6855
        %v6984 = vunpack.c.l.b16 %v6856
        %v6985 = vunpack.c.l.b16 %v6857
        %v6986 = vunpack.c.l.b16 %v6858
        %v6987 = vunpack.c.l.b16 %v6859
        %v6988 = vunpack.c.l.b16 %v6860
        %v6989 = vunpack.c.l.b16 %v6861
        %v6990 = vunpack.c.l.b16 %v6862
        %v6991 = vunpack.c.l.b16 %v6863
        %v6992 = vunpack.c.l.b16 %v6864
        %v6993 = vunpack.c.l.b16 %v6865
        %v6994 = vunpack.c.l.b16 %v6866
        %v6995 = vunpack.c.l.b16 %v6867
        %v6996 = vunpack.c.l.b16 %v6868
        %v6997 = vunpack.c.l.b16 %v6869
        %v6998 = vunpack.c.l.b16 %v6870
        %v6999 = vunpack.c.l.b16 %v6871
        %v7000 = vunpack.c.l.b16 %v6872
        %v7001 = vunpack.c.l.b16 %v6873
        %v7002 = vunpack.c.l.b16 %v6874
        %v7003 = vpack.c.b16 %v6939, %v6939
        %v7004 = vpack.c.b16 %v6940, %v6940
        %v7005 = vpack.c.b16 %v6941, %v6941
        %v7006 = vpack.c.b16 %v6942, %v6942
        %v7007 = vpack.c.b16 %v6943, %v6943
        %v7008 = vpack.c.b16 %v6944, %v6944
        %v7009 = vpack.c.b16 %v6945, %v6945
        %v7010 = vpack.c.b16 %v6946, %v6946
        %v7011 = vpack.c.b16 %v6947, %v6947
        %v7012 = vpack.c.b16 %v6948, %v6948
        %v7013 = vpack.c.b16 %v6949, %v6949
        %v7014 = vpack.c.b16 %v6950, %v6950
        %v7015 = vpack.c.b16 %v6951, %v6951
        %v7016 = vpack.c.b16 %v6952, %v6952
        %v7017 = vpack.c.b16 %v6953, %v6953
        %v7018 = vpack.c.b16 %v6954, %v6954
        %v7019 = vpack.c.b16 %v6955, %v6955
        %v7020 = vpack.c.b16 %v6956, %v6956
        %v7021 = vpack.c.b16 %v6957, %v6957
        %v7022 = vpack.c.b16 %v6958, %v6958
        %v7023 = vpack.c.b16 %v6959, %v6959
        %v7024 = vpack.c.b16 %v6960, %v6960
        %v7025 = vpack.c.b16 %v6961, %v6961
        %v7026 = vpack.c.b16 %v6962, %v6962
        %v7027 = vpack.c.b16 %v6963, %v6963
        %v7028 = vpack.c.b16 %v6964, %v6964
        %v7029 = vpack.c.b16 %v6965, %v6965
        %v7030 = vpack.c.b16 %v6966, %v6966
        %v7031 = vpack.c.b16 %v6967, %v6967
        %v7032 = vpack.c.b16 %v6968, %v6968
        %v7033 = vpack.c.b16 %v6969, %v6969
        %v7034 = vpack.c.b16 %v6970, %v6970
        %v7035 = vpack.c.b16 %v6971, %v6971
        %v7036 = vpack.c.b16 %v6972, %v6972
        %v7037 = vpack.c.b16 %v6973, %v6973
        %v7038 = vpack.c.b16 %v6974, %v6974
        %v7039 = vpack.c.b16 %v6975, %v6975
        %v7040 = vpack.c.b16 %v6976, %v6976
        %v7041 = vpack.c.b16 %v6977, %v6977
        %v7042 = vpack.c.b16 %v6978, %v6978
        %v7043 = vpack.c.b16 %v6979, %v6979
        %v7044 = vpack.c.b16 %v6980, %v6980
        %v7045 = vpack.c.b16 %v6981, %v6981
        %v7046 = vpack.c.b16 %v6982, %v6982
        %v7047 = vpack.c.b16 %v6983, %v6983
        %v7048 = vpack.c.b16 %v6984, %v6984
        %v7049 = vpack.c.b16 %v6985, %v6985
        %v7050 = vpack.c.b16 %v6986, %v6986
        %v7051 = vpack.c.b16 %v6987, %v6987
        %v7052 = vpack.c.b16 %v6988, %v6988
        %v7053 = vpack.c.b16 %v6989, %v6989
        %v7054 = vpack.c.b16 %v6990, %v6990
        %v7055 = vpack.c.b16 %v6991, %v6991
        %v7056 = vpack.c.b16 %v6992, %v6992
        %v7057 = vpack.c.b16 %v6993, %v6993
        %v7058 = vpack.c.b16 %v6994, %v6994
        %v7059 = vpack.c.b16 %v6995, %v6995
        %v7060 = vpack.c.b16 %v6996, %v6996
        %v7061 = vpack.c.b16 %v6997, %v6997
        %v7062 = vpack.c.b16 %v6998, %v6998
        %v7063 = vpack.c.b16 %v6999, %v6999
        %v7064 = vpack.c.b16 %v7000, %v7000
        %v7065 = vpack.c.b16 %v7001, %v7001
        %v7066 = vpack.c.b16 %v7002, %v7002
        %v7067 = vunpack.c.l.b16 %v7003
        %v7068 = vunpack.c.l.b16 %v7004
        %v7069 = vunpack.c.l.b16 %v7005
        %v7070 = vunpack.c.l.b16 %v7006
        %v7071 = vunpack.c.l.b16 %v7007
        %v7072 = vunpack.c.l.b16 %v7008
        %v7073 = vunpack.c.l.b16 %v7009
        %v7074 = vunpack.c.l.b16 %v7010
        %v7075 = vunpack.c.l.b16 %v7011
        %v7076 = vunpack.c.l.b16 %v7012
        %v7077 = vunpack.c.l.b16 %v7013
        %v7078 = vunpack.c.l.b16 %v7014
        %v7079 = vunpack.c.l.b16 %v7015
        %v7080 = vunpack.c.l.b16 %v7016
        %v7081 = vunpack.c.l.b16 %v7017
        %v7082 = vunpack.c.l.b16 %v7018
        %v7083 = vunpack.c.l.b16 %v7019
        %v7084 = vunpack.c.l.b16 %v7020
        %v7085 = vunpack.c.l.b16 %v7021
        %v7086 = vunpack.c.l.b16 %v7022
        %v7087 = vunpack.c.l.b16 %v7023
        %v7088 = vunpack.c.l.b16 %v7024
        %v7089 = vunpack.c.l.b16 %v7025
        %v7090 = vunpack.c.l.b16 %v7026
        %v7091 = vunpack.c.l.b16 %v7027
        %v7092 = vunpack.c.l.b16 %v7028
        %v7093 = vunpack.c.l.b16 %v7029
        %v7094 = vunpack.c.l.b16 %v7030
        %v7095 = vunpack.c.l.b16 %v7031
        %v7096 = vunpack.c.l.b16 %v7032
        %v7097 = vunpack.c.l.b16 %v7033
        %v7098 = vunpack.c.l.b16 %v7034
        %v7099 = vunpack.c.l.b16 %v7035
        %v7100 = vunpack.c.l.b16 %v7036
        %v7101 = vunpack.c.l.b16 %v7037
        %v7102 = vunpack.c.l.b16 %v7038
        %v7103 = vunpack.c.l.b16 %v7039
        %v7104 = vunpack.c.l.b16 %v7040
        %v7105 = vunpack.c.l.b16 %v7041
        %v7106 = vunpack.c.l.b16 %v7042
        %v7107 = vunpack.c.l.b16 %v7043
        %v7108 = vunpack.c.l.b16 %v7044
        %v7109 = vunpack.c.l.b16 %v7045
        %v7110 = vunpack.c.l.b16 %v7046
        %v7111 = vunpack.c.l.b16 %v7047
        %v7112 = vunpack.c.l.b16 %v7048
        %v7113 = vunpack.c.l.b16 %v7049
        %v7114 = vunpack.c.l.b16 %v7050
        %v7115 = vunpack.c.l.b16 %v7051
        %v7116 = vunpack.c.l.b16 %v7052
        %v7117 = vunpack.c.l.b16 %v7053
        %v7118 = vunpack.c.l.b16 %v7054
        %v7119 = vunpack.c.l.b16 %v7055
        %v7120 = vunpack.c.l.b16 %v7056
        %v7121 = vunpack.c.l.b16 %v7057
        %v7122 = vunpack.c.l.b16 %v7058
        %v7123 = vunpack.c.l.b16 %v7059
        %v7124 = vunpack.c.l.b16 %v7060
        %v7125 = vunpack.c.l.b16 %v7061
        %v7126 = vunpack.c.l.b16 %v7062
        %v7127 = vunpack.c.l.b16 %v7063
        %v7128 = vunpack.c.l.b16 %v7064
        %v7129 = vunpack.c.l.b16 %v7065
        %v7130 = vunpack.c.l.b16 %v7066
        %vm7131 = vcmask 1042434
        %v7132 = vsel %vm7131, %v7068, %v7067
        %vm7133 = vcmask 1043459
        %v7134 = vsel %vm7133, %v7069, %v7132
        %vm7135 = vcmask 1044484
        %v7136 = vsel %vm7135, %v7070, %v7134
        %vm7137 = vcmask 1045509
        %v7138 = vsel %vm7137, %v7071, %v7136
        %vm7139 = vcmask 1046534
        %v7140 = vsel %vm7139, %v7072, %v7138
        %vm7141 = vcmask 1047559
        %v7142 = vsel %vm7141, %v7073, %v7140
        %v7143 = vsel %vm7131, %v7076, %v7075
        %v7144 = vsel %vm7133, %v7077, %v7143
        %v7145 = vsel %vm7135, %v7078, %v7144
        %v7146 = vsel %vm7137, %v7079, %v7145
        %v7147 = vsel %vm7139, %v7080, %v7146
        %v7148 = vsel %vm7141, %v7081, %v7147
        %v7149 = vsel %vm7131, %v7084, %v7083
        %v7150 = vsel %vm7133, %v7085, %v7149
        %v7151 = vsel %vm7135, %v7086, %v7150
        %v7152 = vsel %vm7137, %v7087, %v7151
        %v7153 = vsel %vm7139, %v7088, %v7152
        %v7154 = vsel %vm7141, %v7089, %v7153
        %v7155 = vsel %vm7131, %v7092, %v7091
        %v7156 = vsel %vm7133, %v7093, %v7155
        %v7157 = vsel %vm7135, %v7094, %v7156
        %v7158 = vsel %vm7137, %v7095, %v7157
        %v7159 = vsel %vm7139, %v7096, %v7158
        %v7160 = vsel %vm7141, %v7097, %v7159
        %v7161 = vsel %vm7131, %v7100, %v7099
        %v7162 = vsel %vm7133, %v7101, %v7161
        %v7163 = vsel %vm7135, %v7102, %v7162
        %v7164 = vsel %vm7137, %v7103, %v7163
        %v7165 = vsel %vm7139, %v7104, %v7164
        %v7166 = vsel %vm7141, %v7105, %v7165
        %v7167 = vsel %vm7131, %v7108, %v7107
        %v7168 = vsel %vm7133, %v7109, %v7167
        %v7169 = vsel %vm7135, %v7110, %v7168
        %v7170 = vsel %vm7137, %v7111, %v7169
        %v7171 = vsel %vm7139, %v7112, %v7170
        %v7172 = vsel %vm7141, %v7113, %v7171
        %v7173 = vsel %vm7131, %v7116, %v7115
        %v7174 = vsel %vm7133, %v7117, %v7173
        %v7175 = vsel %vm7135, %v7118, %v7174
        %v7176 = vsel %vm7137, %v7119, %v7175
        %v7177 = vsel %vm7139, %v7120, %v7176
        %v7178 = vsel %vm7141, %v7121, %v7177
        %v7179 = vsel %vm7131, %v7124, %v7123
        %v7180 = vsel %vm7133, %v7125, %v7179
        %v7181 = vsel %vm7135, %v7126, %v7180
        %v7182 = vsel %vm7137, %v7127, %v7181
        %v7183 = vsel %vm7139, %v7128, %v7182
        %v7184 = vsel %vm7141, %v7129, %v7183
        %v7185 = vpack.c.b16 %v7142, %v7142
        %v7186 = vpack.c.b16 %v7074, %v7074
        %v7187 = vpack.c.b16 %v7148, %v7148
        %v7188 = vpack.c.b16 %v7082, %v7082
        %v7189 = vpack.c.b16 %v7154, %v7154
        %v7190 = vpack.c.b16 %v7090, %v7090
        %v7191 = vpack.c.b16 %v7160, %v7160
        %v7192 = vpack.c.b16 %v7098, %v7098
        %v7193 = vpack.c.b16 %v7166, %v7166
        %v7194 = vpack.c.b16 %v7106, %v7106
        %v7195 = vpack.c.b16 %v7172, %v7172
        %v7196 = vpack.c.b16 %v7114, %v7114
        %v7197 = vpack.c.b16 %v7178, %v7178
        %v7198 = vpack.c.b16 %v7122, %v7122
        %v7199 = vpack.c.b16 %v7184, %v7184
        %v7200 = vpack.c.b16 %v7130, %v7130
        %s7217 = scalar_lea.vmem [#allocation2], 8
        %vm7218 = vcmask 1043456
        %vm7219 = vsmask.f32 7938
        %vm7220 = vmand %vm7218, %vm7219
        %v7221 = vld [vmem:[%s7217] sm:$0xf]
        %v7222 = vsel %vm7220, %v7185, %v7221
        %7223 = vst [vmem:[%s7217] sm:$0xf] %v7222
        %vm7224 = vcmask 1040384
        %vm7225 = vsmask.f32 256
        %vm7226 = vmand %vm7224, %vm7225
        %v7227 = vld [vmem:[%s7217 + $0x4] sm:$0x1]
        %v7228 = vsel %vm7226, %v7186, %v7227
        %7229 = vst [vmem:[%s7217 + $0x4] sm:$0x1] %v7228
        %v7230 = vld [vmem:[%s7217 + $0x8] sm:$0xf]
        %v7231 = vsel %vm7220, %v7187, %v7230
        %7232 = vst [vmem:[%s7217 + $0x8] sm:$0xf] %v7231
        %v7233 = vld [vmem:[%s7217 + $0xc] sm:$0x1]
        %v7234 = vsel %vm7226, %v7188, %v7233
        %7235 = vst [vmem:[%s7217 + $0xc] sm:$0x1] %v7234
        %v7236 = vld [vmem:[%s7217 + $0x10] sm:$0xf]
        %v7237 = vsel %vm7220, %v7189, %v7236
        %7238 = vst [vmem:[%s7217 + $0x10] sm:$0xf] %v7237
        %v7239 = vld [vmem:[%s7217 + $0x14] sm:$0x1]
        %v7240 = vsel %vm7226, %v7190, %v7239
        %7241 = vst [vmem:[%s7217 + $0x14] sm:$0x1] %v7240
        %v7242 = vld [vmem:[%s7217 + $0x18] sm:$0xf]
        %v7243 = vsel %vm7220, %v7191, %v7242
        %7244 = vst [vmem:[%s7217 + $0x18] sm:$0xf] %v7243
        %v7245 = vld [vmem:[%s7217 + $0x1c] sm:$0x1]
        %v7246 = vsel %vm7226, %v7192, %v7245
        %7247 = vst [vmem:[%s7217 + $0x1c] sm:$0x1] %v7246
        %v7248 = vld [vmem:[%s7217 + $0x20] sm:$0xf]
        %v7249 = vsel %vm7220, %v7193, %v7248
        %7250 = vst [vmem:[%s7217 + $0x20] sm:$0xf] %v7249
        %v7251 = vld [vmem:[%s7217 + $0x24] sm:$0x1]
        %v7252 = vsel %vm7226, %v7194, %v7251
        %7253 = vst [vmem:[%s7217 + $0x24] sm:$0x1] %v7252
        %v7254 = vld [vmem:[%s7217 + $0x28] sm:$0xf]
        %v7255 = vsel %vm7220, %v7195, %v7254
        %7256 = vst [vmem:[%s7217 + $0x28] sm:$0xf] %v7255
        %v7257 = vld [vmem:[%s7217 + $0x2c] sm:$0x1]
        %v7258 = vsel %vm7226, %v7196, %v7257
        %7259 = vst [vmem:[%s7217 + $0x2c] sm:$0x1] %v7258
        %v7260 = vld [vmem:[%s7217 + $0x30] sm:$0xf]
        %v7261 = vsel %vm7220, %v7197, %v7260
        %7262 = vst [vmem:[%s7217 + $0x30] sm:$0xf] %v7261
        %v7263 = vld [vmem:[%s7217 + $0x34] sm:$0x1]
        %v7264 = vsel %vm7226, %v7198, %v7263
        %7265 = vst [vmem:[%s7217 + $0x34] sm:$0x1] %v7264
        %v7266 = vld [vmem:[%s7217 + $0x38] sm:$0xf]
        %v7267 = vsel %vm7220, %v7199, %v7266
        %7268 = vst [vmem:[%s7217 + $0x38] sm:$0xf] %v7267
        %v7269 = vld [vmem:[%s7217 + $0x3c] sm:$0x1]
        %v7270 = vsel %vm7226, %v7200, %v7269
        %7271 = vst [vmem:[%s7217 + $0x3c] sm:$0x1] %v7270
        %v7272 = vld [vmem:[%s2 + $0x2] sm:$0x1]
        %v7273 = vld [vmem:[%s2 + $0x3] sm:$0x1]
        %v7274 = vld [vmem:[#allocation2] sm:$0xf]
        %v7275 = vld [vmem:[#allocation2 + $0x8] sm:$0xf]
        %v7276 = vld [vmem:[#allocation2 + $0x10] sm:$0xf]
        %v7277 = vld [vmem:[#allocation2 + $0x18] sm:$0xf]
        %v7278 = vld [vmem:[#allocation2 + $0x20] sm:$0xf]
        %v7279 = vld [vmem:[#allocation2 + $0x28] sm:$0xf]
        %v7280 = vld [vmem:[#allocation2 + $0x30] sm:$0xf]
        %v7281 = vld [vmem:[#allocation2 + $0x38] sm:$0xf]
        %s7282 = scalar_lea.vmem [#allocation3], 576
        %v7283 = vld [vmem:[%s7282] sm:$0xf]
        %v7284 = vld [vmem:[%s7282 + $0x4] sm:$0xf]
        %v7285 = vld [vmem:[%s7282 + $0x8] sm:$0xf]
        %v7286 = vld [vmem:[%s7282 + $0xc] sm:$0xf]
        %v7287 = vld [vmem:[%s7282 + $0x10] sm:$0xf]
        %v7288 = vld [vmem:[%s7282 + $0x14] sm:$0xf]
        %v7289 = vld [vmem:[%s7282 + $0x18] sm:$0xf]
        %v7290 = vld [vmem:[%s7282 + $0x1c] sm:$0xf]
        %v7291 = vld [vmem:[%s7282 + $0x20] sm:$0xf]
        %v7292 = vld [vmem:[%s7282 + $0x24] sm:$0xf]
        %v7293 = vld [vmem:[%s7282 + $0x28] sm:$0xf]
        %v7294 = vld [vmem:[%s7282 + $0x2c] sm:$0xf]
        %v7295 = vld [vmem:[%s7282 + $0x30] sm:$0xf]
        %v7296 = vld [vmem:[%s7282 + $0x34] sm:$0xf]
        %v7297 = vld [vmem:[%s7282 + $0x38] sm:$0xf]
        %v7298 = vld [vmem:[%s7282 + $0x3c] sm:$0xf]
        %v7299 = vld [vmem:[#allocation2 + $0x4] sm:$0x1]
        %v7300 = vld [vmem:[#allocation2 + $0xc] sm:$0x1]
        %v7301 = vld [vmem:[#allocation2 + $0x14] sm:$0x1]
        %v7302 = vld [vmem:[#allocation2 + $0x1c] sm:$0x1]
        %v7303 = vld [vmem:[#allocation2 + $0x24] sm:$0x1]
        %v7304 = vld [vmem:[#allocation2 + $0x2c] sm:$0x1]
        %v7305 = vld [vmem:[#allocation2 + $0x34] sm:$0x1]
        %v7306 = vld [vmem:[#allocation2 + $0x3c] sm:$0x1]
        %v7308 = vshrl.u32 %v7274, 16
        %v7310 = vrot.slane %v7308, 4
        %v7311 = vshll.u32 %v7274, 16
        %v7313 = vrot.slane %v7311, 5
        %v7314 = vor.u32 %v7310, %v7313
        %v7315 = vrot.slane %v7314, 4
        %v7317 = vshll.u32 %v7299, 16
        %v7319 = vrot.slane %v7317, 5
        %v7320 = vsel %vm279, %v7315, %v7319
        %v7322 = vshrl.u32 %v7275, 16
        %v7324 = vrot.slane %v7322, 4
        %v7325 = vshll.u32 %v7275, 16
        %v7327 = vrot.slane %v7325, 5
        %v7328 = vor.u32 %v7324, %v7327
        %v7329 = vrot.slane %v7328, 4
        %v7331 = vshll.u32 %v7300, 16
        %v7333 = vrot.slane %v7331, 5
        %v7334 = vsel %vm279, %v7329, %v7333
        %v7336 = vshrl.u32 %v7276, 16
        %v7338 = vrot.slane %v7336, 4
        %v7339 = vshll.u32 %v7276, 16
        %v7341 = vrot.slane %v7339, 5
        %v7342 = vor.u32 %v7338, %v7341
        %v7343 = vrot.slane %v7342, 4
        %v7345 = vshll.u32 %v7301, 16
        %v7347 = vrot.slane %v7345, 5
        %v7348 = vsel %vm279, %v7343, %v7347
        %v7350 = vshrl.u32 %v7277, 16
        %v7352 = vrot.slane %v7350, 4
        %v7353 = vshll.u32 %v7277, 16
        %v7355 = vrot.slane %v7353, 5
        %v7356 = vor.u32 %v7352, %v7355
        %v7357 = vrot.slane %v7356, 4
        %v7359 = vshll.u32 %v7302, 16
        %v7361 = vrot.slane %v7359, 5
        %v7362 = vsel %vm279, %v7357, %v7361
        %v7364 = vshrl.u32 %v7278, 16
        %v7366 = vrot.slane %v7364, 4
        %v7367 = vshll.u32 %v7278, 16
        %v7369 = vrot.slane %v7367, 5
        %v7370 = vor.u32 %v7366, %v7369
        %v7371 = vrot.slane %v7370, 4
        %v7373 = vshll.u32 %v7303, 16
        %v7375 = vrot.slane %v7373, 5
        %v7376 = vsel %vm279, %v7371, %v7375
        %v7378 = vshrl.u32 %v7279, 16
        %v7380 = vrot.slane %v7378, 4
        %v7381 = vshll.u32 %v7279, 16
        %v7383 = vrot.slane %v7381, 5
        %v7384 = vor.u32 %v7380, %v7383
        %v7385 = vrot.slane %v7384, 4
        %v7387 = vshll.u32 %v7304, 16
        %v7389 = vrot.slane %v7387, 5
        %v7390 = vsel %vm279, %v7385, %v7389
        %v7392 = vshrl.u32 %v7280, 16
        %v7394 = vrot.slane %v7392, 4
        %v7395 = vshll.u32 %v7280, 16
        %v7397 = vrot.slane %v7395, 5
        %v7398 = vor.u32 %v7394, %v7397
        %v7399 = vrot.slane %v7398, 4
        %v7401 = vshll.u32 %v7305, 16
        %v7403 = vrot.slane %v7401, 5
        %v7404 = vsel %vm279, %v7399, %v7403
        %v7406 = vshrl.u32 %v7281, 16
        %v7408 = vrot.slane %v7406, 4
        %v7409 = vshll.u32 %v7281, 16
        %v7411 = vrot.slane %v7409, 5
        %v7412 = vor.u32 %v7408, %v7411
        %v7413 = vrot.slane %v7412, 4
        %v7415 = vshll.u32 %v7306, 16
        %v7417 = vrot.slane %v7415, 5
        %v7418 = vsel %vm279, %v7413, %v7417
        %s7419 = scalar_lea.vmem [#allocation3], 640
        %v7420 = vld [vmem:[%s7419] sm:$0xf]
        %v7421 = vld [vmem:[%s7419 + $0x4] sm:$0xf]
        %v7422 = vld [vmem:[%s7419 + $0x8] sm:$0xf]
        %v7423 = vld [vmem:[%s7419 + $0xc] sm:$0xf]
        %v7424 = vld [vmem:[%s7419 + $0x10] sm:$0xf]
        %v7425 = vld [vmem:[%s7419 + $0x14] sm:$0xf]
        %v7426 = vld [vmem:[%s7419 + $0x18] sm:$0xf]
        %v7427 = vld [vmem:[%s7419 + $0x1c] sm:$0xf]
        %v7428 = vld [vmem:[%s7419 + $0x20] sm:$0xf]
        %v7429 = vld [vmem:[%s7419 + $0x24] sm:$0xf]
        %v7430 = vld [vmem:[%s7419 + $0x28] sm:$0xf]
        %v7431 = vld [vmem:[%s7419 + $0x2c] sm:$0xf]
        %v7432 = vld [vmem:[%s7419 + $0x30] sm:$0xf]
        %v7433 = vld [vmem:[%s7419 + $0x34] sm:$0xf]
        %v7434 = vld [vmem:[%s7419 + $0x38] sm:$0xf]
        %v7435 = vld [vmem:[%s7419 + $0x3c] sm:$0xf]
        %v7436 = vunpack.c.l.b16 %v7320
        %v7437 = vunpack.c.l.b16 %v7334
        %v7438 = vunpack.c.l.b16 %v7348
        %v7439 = vunpack.c.l.b16 %v7362
        %v7440 = vunpack.c.l.b16 %v7376
        %v7441 = vunpack.c.l.b16 %v7390
        %v7442 = vunpack.c.l.b16 %v7404
        %v7443 = vunpack.c.l.b16 %v7418
        %v7444 = vpack.c.b16 %v7437, %v7436
        %v7445 = vpack.c.b16 %v7439, %v7438
        %v7446 = vpack.c.b16 %v7441, %v7440
        %v7447 = vpack.c.b16 %v7443, %v7442
        %v7468 = vunpack.c.l.b16 %v7420
        %v7469 = vunpack.c.l.b16 %v7421
        %v7470 = vunpack.c.l.b16 %v7422
        %v7471 = vunpack.c.l.b16 %v7423
        %v7472 = vunpack.c.l.b16 %v7424
        %v7473 = vunpack.c.l.b16 %v7425
        %v7474 = vunpack.c.l.b16 %v7426
        %v7475 = vunpack.c.l.b16 %v7427
        %v7476 = vunpack.c.l.b16 %v7428
        %v7477 = vunpack.c.l.b16 %v7429
        %v7478 = vunpack.c.l.b16 %v7430
        %v7479 = vunpack.c.l.b16 %v7431
        %v7480 = vunpack.c.l.b16 %v7432
        %v7481 = vunpack.c.l.b16 %v7433
        %v7482 = vunpack.c.l.b16 %v7434
        %v7483 = vunpack.c.l.b16 %v7435
        %v7484 = vpack.c.b16 %v7469, %v7468
        %v7485 = vpack.c.b16 %v7471, %v7470
        %v7486 = vpack.c.b16 %v7473, %v7472
        %v7487 = vpack.c.b16 %v7475, %v7474
        %v7488 = vpack.c.b16 %v7477, %v7476
        %v7489 = vpack.c.b16 %v7479, %v7478
        %v7490 = vpack.c.b16 %v7481, %v7480
        %v7491 = vpack.c.b16 %v7483, %v7482
        %7500 = vmatprep.subr.bf16.mxu0 0
        %7501 = vmatpush1.bf16.msra.mxu0 %v7491
        %7502 = vmatprep.subr.bf16.mxu0 0
        %7503 = vmatpush1.bf16.msra.mxu0 %v7490
        %7504 = vmatprep.subr.bf16.mxu0 0
        %7505 = vmatpush1.bf16.msra.mxu0 %v7489
        %7506 = vmatprep.subr.bf16.mxu0 0
        %7507 = vmatpush1.bf16.msra.mxu0 %v7488
        %7508 = vmatprep.subr.bf16.mxu0 0
        %7509 = vmatpush1.bf16.msra.mxu0 %v7487
        %7510 = vmatprep.subr.bf16.mxu0 0
        %7511 = vmatpush1.bf16.msra.mxu0 %v7486
        %7512 = vmatprep.subr.bf16.mxu0 0
        %7513 = vmatpush1.bf16.msra.mxu0 %v7485
        %7514 = vmatprep.subr.bf16.mxu0 0
        %7515 = vmatpush1.bf16.msra.mxu0 %v7484
        %7516 = vmatprep.subr.bf16.mxu0 0
        %7517 = vmatpush2.bf16.msra.mxu0 0
        %7518 = vmatprep.subr.bf16.mxu0 0
        %7519 = vmatpush2.bf16.msra.mxu0 0
        %7520 = vmatprep.subr.bf16.mxu0 0
        %7521 = vmatpush2.bf16.msra.mxu0 0
        %7522 = vmatprep.subr.bf16.mxu0 0
        %7523 = vmatpush2.bf16.msra.mxu0 0
        %7524 = vmatprep.subr.bf16.mxu0 0
        %7525 = vmatpush2.bf16.msra.mxu0 0
        %7526 = vmatprep.subr.bf16.mxu0 0
        %7527 = vmatpush2.bf16.msra.mxu0 0
        %7528 = vmatprep.subr.bf16.mxu0 0
        %7529 = vmatpush2.bf16.msra.mxu0 0
        %7530 = vmatprep.subr.bf16.mxu0 0
        %7531 = vmatpush2.bf16.msra.mxu0 0
        %7532 = vmatprep.mubr.bf16.mxu0 0
        %7533 = vmatmul.mubr.bf16.gmra.mxu0 %v7444
        %v7534 = vpop.f32.mrf.mxu0
        %v7535 = vadd.f32 0.0, %v7534
        %v7536 = vpop.f32.mrf.mxu0
        %v7537 = vpop.f32.mrf.mxu0
        %v7538 = vadd.f32 0.0, %v7537
        %v7539 = vpop.f32.mrf.mxu0
        %7540 = vmatprep.mubr.bf16.mxu0 0
        %7541 = vmatmul.mubr.bf16.gmra.mxu0 %v7445
        %v7542 = vpop.f32.mrf.mxu0
        %v7543 = vadd.f32 0.0, %v7542
        %v7544 = vpop.f32.mrf.mxu0
        %v7545 = vpop.f32.mrf.mxu0
        %v7546 = vadd.f32 0.0, %v7545
        %v7547 = vpop.f32.mrf.mxu0
        %7548 = vmatprep.mubr.bf16.mxu0 0
        %7549 = vmatmul.mubr.bf16.gmra.mxu0 %v7446
        %v7550 = vpop.f32.mrf.mxu0
        %v7551 = vadd.f32 0.0, %v7550
        %v7552 = vpop.f32.mrf.mxu0
        %v7553 = vpop.f32.mrf.mxu0
        %v7554 = vadd.f32 0.0, %v7553
        %v7555 = vpop.f32.mrf.mxu0
        %7556 = vmatprep.mubr.bf16.mxu0 0
        %7557 = vmatmul.mubr.bf16.gmra.mxu0 %v7447
        %v7558 = vpop.f32.mrf.mxu0
        %v7559 = vadd.f32 0.0, %v7558
        %v7560 = vpop.f32.mrf.mxu0
        %v7561 = vpop.f32.mrf.mxu0
        %v7562 = vadd.f32 0.0, %v7561
        %v7563 = vpop.f32.mrf.mxu0
        %7564 = vdwg.mxu0
        %v7573 = vunpack.c.l.b16 %v7274
        %v7574 = vunpack.c.l.b16 %v7275
        %v7575 = vunpack.c.l.b16 %v7276
        %v7576 = vunpack.c.l.b16 %v7277
        %v7577 = vunpack.c.l.b16 %v7278
        %v7578 = vunpack.c.l.b16 %v7279
        %v7579 = vunpack.c.l.b16 %v7280
        %v7580 = vunpack.c.l.b16 %v7281
        %v7581 = vpack.c.b16 %v7574, %v7573
        %v7582 = vpack.c.b16 %v7576, %v7575
        %v7583 = vpack.c.b16 %v7578, %v7577
        %v7584 = vpack.c.b16 %v7580, %v7579
        %v7605 = vunpack.c.l.b16 %v7283
        %v7606 = vunpack.c.l.b16 %v7284
        %v7607 = vunpack.c.l.b16 %v7285
        %v7608 = vunpack.c.l.b16 %v7286
        %v7609 = vunpack.c.l.b16 %v7287
        %v7610 = vunpack.c.l.b16 %v7288
        %v7611 = vunpack.c.l.b16 %v7289
        %v7612 = vunpack.c.l.b16 %v7290
        %v7613 = vunpack.c.l.b16 %v7291
        %v7614 = vunpack.c.l.b16 %v7292
        %v7615 = vunpack.c.l.b16 %v7293
        %v7616 = vunpack.c.l.b16 %v7294
        %v7617 = vunpack.c.l.b16 %v7295
        %v7618 = vunpack.c.l.b16 %v7296
        %v7619 = vunpack.c.l.b16 %v7297
        %v7620 = vunpack.c.l.b16 %v7298
        %v7621 = vpack.c.b16 %v7606, %v7605
        %v7622 = vpack.c.b16 %v7608, %v7607
        %v7623 = vpack.c.b16 %v7610, %v7609
        %v7624 = vpack.c.b16 %v7612, %v7611
        %v7625 = vpack.c.b16 %v7614, %v7613
        %v7626 = vpack.c.b16 %v7616, %v7615
        %v7627 = vpack.c.b16 %v7618, %v7617
        %v7628 = vpack.c.b16 %v7620, %v7619
        %7637 = vmatprep.subr.bf16.mxu0 0
        %7638 = vmatpush1.bf16.msra.mxu0 %v7628
        %7639 = vmatprep.subr.bf16.mxu0 0
        %7640 = vmatpush1.bf16.msra.mxu0 %v7627
        %7641 = vmatprep.subr.bf16.mxu0 0
        %7642 = vmatpush1.bf16.msra.mxu0 %v7626
        %7643 = vmatprep.subr.bf16.mxu0 0
        %7644 = vmatpush1.bf16.msra.mxu0 %v7625
        %7645 = vmatprep.subr.bf16.mxu0 0
        %7646 = vmatpush1.bf16.msra.mxu0 %v7624
        %7647 = vmatprep.subr.bf16.mxu0 0
        %7648 = vmatpush1.bf16.msra.mxu0 %v7623
        %7649 = vmatprep.subr.bf16.mxu0 0
        %7650 = vmatpush1.bf16.msra.mxu0 %v7622
        %7651 = vmatprep.subr.bf16.mxu0 0
        %7652 = vmatpush1.bf16.msra.mxu0 %v7621
        %7653 = vmatprep.subr.bf16.mxu0 0
        %7654 = vmatpush2.bf16.msra.mxu0 0
        %7655 = vmatprep.subr.bf16.mxu0 0
        %7656 = vmatpush2.bf16.msra.mxu0 0
        %7657 = vmatprep.subr.bf16.mxu0 0
        %7658 = vmatpush2.bf16.msra.mxu0 0
        %7659 = vmatprep.subr.bf16.mxu0 0
        %7660 = vmatpush2.bf16.msra.mxu0 0
        %7661 = vmatprep.subr.bf16.mxu0 0
        %7662 = vmatpush2.bf16.msra.mxu0 0
        %7663 = vmatprep.subr.bf16.mxu0 0
        %7664 = vmatpush2.bf16.msra.mxu0 0
        %7665 = vmatprep.subr.bf16.mxu0 0
        %7666 = vmatpush2.bf16.msra.mxu0 0
        %7667 = vmatprep.subr.bf16.mxu0 0
        %7668 = vmatpush2.bf16.msra.mxu0 0
        %7669 = vmatprep.mubr.bf16.mxu0 0
        %7670 = vmatmul.mubr.bf16.gmra.mxu0 %v7581
        %v7671 = vpop.f32.mrf.mxu0
        %v7672 = vadd.f32 %v7535, %v7671
        %v7673 = vpop.f32.mrf.mxu0
        %v7674 = vpop.f32.mrf.mxu0
        %v7675 = vadd.f32 %v7538, %v7674
        %v7676 = vpop.f32.mrf.mxu0
        %7677 = vmatprep.mubr.bf16.mxu0 0
        %7678 = vmatmul.mubr.bf16.gmra.mxu0 %v7582
        %v7679 = vpop.f32.mrf.mxu0
        %v7680 = vadd.f32 %v7543, %v7679
        %v7681 = vpop.f32.mrf.mxu0
        %v7682 = vpop.f32.mrf.mxu0
        %v7683 = vadd.f32 %v7546, %v7682
        %v7684 = vpop.f32.mrf.mxu0
        %7685 = vmatprep.mubr.bf16.mxu0 0
        %7686 = vmatmul.mubr.bf16.gmra.mxu0 %v7583
        %v7687 = vpop.f32.mrf.mxu0
        %v7688 = vadd.f32 %v7551, %v7687
        %v7689 = vpop.f32.mrf.mxu0
        %v7690 = vpop.f32.mrf.mxu0
        %v7691 = vadd.f32 %v7554, %v7690
        %v7692 = vpop.f32.mrf.mxu0
        %7693 = vmatprep.mubr.bf16.mxu0 0
        %7694 = vmatmul.mubr.bf16.gmra.mxu0 %v7584
        %v7695 = vpop.f32.mrf.mxu0
        %v7696 = vadd.f32 %v7559, %v7695
        %v7697 = vpop.f32.mrf.mxu0
        %v7698 = vpop.f32.mrf.mxu0
        %v7699 = vadd.f32 %v7562, %v7698
        %v7700 = vpop.f32.mrf.mxu0
        %7701 = vdwg.mxu0
        %v7702 = vld [vmem:[#allocation2] sm:$0xe]
        %v7703 = vld [vmem:[#allocation2 + $0x8] sm:$0xe]
        %v7704 = vld [vmem:[#allocation2 + $0x10] sm:$0xe]
        %v7705 = vld [vmem:[#allocation2 + $0x18] sm:$0xe]
        %v7706 = vld [vmem:[#allocation2 + $0x20] sm:$0xe]
        %v7707 = vld [vmem:[#allocation2 + $0x28] sm:$0xe]
        %v7708 = vld [vmem:[#allocation2 + $0x30] sm:$0xe]
        %v7709 = vld [vmem:[#allocation2 + $0x38] sm:$0xe]
        %v7726 = vrot.slane %v7702, 5
        %v7727 = vrot.slane %v7726, 4
        %v7728 = vrot.slane %v7299, 5
        %v7729 = vsel %vm1309, %v7727, %v7728
        %v7730 = vrot.slane %v7703, 5
        %v7731 = vrot.slane %v7730, 4
        %v7732 = vrot.slane %v7300, 5
        %v7733 = vsel %vm1309, %v7731, %v7732
        %v7734 = vrot.slane %v7704, 5
        %v7735 = vrot.slane %v7734, 4
        %v7736 = vrot.slane %v7301, 5
        %v7737 = vsel %vm1309, %v7735, %v7736
        %v7738 = vrot.slane %v7705, 5
        %v7739 = vrot.slane %v7738, 4
        %v7740 = vrot.slane %v7302, 5
        %v7741 = vsel %vm1309, %v7739, %v7740
        %v7742 = vrot.slane %v7706, 5
        %v7743 = vrot.slane %v7742, 4
        %v7744 = vrot.slane %v7303, 5
        %v7745 = vsel %vm1309, %v7743, %v7744
        %v7746 = vrot.slane %v7707, 5
        %v7747 = vrot.slane %v7746, 4
        %v7748 = vrot.slane %v7304, 5
        %v7749 = vsel %vm1309, %v7747, %v7748
        %v7750 = vrot.slane %v7708, 5
        %v7751 = vrot.slane %v7750, 4
        %v7752 = vrot.slane %v7305, 5
        %v7753 = vsel %vm1309, %v7751, %v7752
        %v7754 = vrot.slane %v7709, 5
        %v7755 = vrot.slane %v7754, 4
        %v7756 = vrot.slane %v7306, 5
        %v7757 = vsel %vm1309, %v7755, %v7756
        %s7758 = scalar_lea.vmem [#allocation3], 704
        %v7759 = vld [vmem:[%s7758] sm:$0xf]
        %v7760 = vld [vmem:[%s7758 + $0x4] sm:$0xf]
        %v7761 = vld [vmem:[%s7758 + $0x8] sm:$0xf]
        %v7762 = vld [vmem:[%s7758 + $0xc] sm:$0xf]
        %v7763 = vld [vmem:[%s7758 + $0x10] sm:$0xf]
        %v7764 = vld [vmem:[%s7758 + $0x14] sm:$0xf]
        %v7765 = vld [vmem:[%s7758 + $0x18] sm:$0xf]
        %v7766 = vld [vmem:[%s7758 + $0x1c] sm:$0xf]
        %v7767 = vld [vmem:[%s7758 + $0x20] sm:$0xf]
        %v7768 = vld [vmem:[%s7758 + $0x24] sm:$0xf]
        %v7769 = vld [vmem:[%s7758 + $0x28] sm:$0xf]
        %v7770 = vld [vmem:[%s7758 + $0x2c] sm:$0xf]
        %v7771 = vld [vmem:[%s7758 + $0x30] sm:$0xf]
        %v7772 = vld [vmem:[%s7758 + $0x34] sm:$0xf]
        %v7773 = vld [vmem:[%s7758 + $0x38] sm:$0xf]
        %v7774 = vld [vmem:[%s7758 + $0x3c] sm:$0xf]
        %v7775 = vunpack.c.l.b16 %v7729
        %v7776 = vunpack.c.l.b16 %v7733
        %v7777 = vunpack.c.l.b16 %v7737
        %v7778 = vunpack.c.l.b16 %v7741
        %v7779 = vunpack.c.l.b16 %v7745
        %v7780 = vunpack.c.l.b16 %v7749
        %v7781 = vunpack.c.l.b16 %v7753
        %v7782 = vunpack.c.l.b16 %v7757
        %v7783 = vpack.c.b16 %v7776, %v7775
        %v7784 = vpack.c.b16 %v7778, %v7777
        %v7785 = vpack.c.b16 %v7780, %v7779
        %v7786 = vpack.c.b16 %v7782, %v7781
        %v7807 = vunpack.c.l.b16 %v7759
        %v7808 = vunpack.c.l.b16 %v7760
        %v7809 = vunpack.c.l.b16 %v7761
        %v7810 = vunpack.c.l.b16 %v7762
        %v7811 = vunpack.c.l.b16 %v7763
        %v7812 = vunpack.c.l.b16 %v7764
        %v7813 = vunpack.c.l.b16 %v7765
        %v7814 = vunpack.c.l.b16 %v7766
        %v7815 = vunpack.c.l.b16 %v7767
        %v7816 = vunpack.c.l.b16 %v7768
        %v7817 = vunpack.c.l.b16 %v7769
        %v7818 = vunpack.c.l.b16 %v7770
        %v7819 = vunpack.c.l.b16 %v7771
        %v7820 = vunpack.c.l.b16 %v7772
        %v7821 = vunpack.c.l.b16 %v7773
        %v7822 = vunpack.c.l.b16 %v7774
        %v7823 = vpack.c.b16 %v7808, %v7807
        %v7824 = vpack.c.b16 %v7810, %v7809
        %v7825 = vpack.c.b16 %v7812, %v7811
        %v7826 = vpack.c.b16 %v7814, %v7813
        %v7827 = vpack.c.b16 %v7816, %v7815
        %v7828 = vpack.c.b16 %v7818, %v7817
        %v7829 = vpack.c.b16 %v7820, %v7819
        %v7830 = vpack.c.b16 %v7822, %v7821
        %7839 = vmatprep.subr.bf16.mxu0 0
        %7840 = vmatpush1.bf16.msra.mxu0 %v7830
        %7841 = vmatprep.subr.bf16.mxu0 0
        %7842 = vmatpush1.bf16.msra.mxu0 %v7829
        %7843 = vmatprep.subr.bf16.mxu0 0
        %7844 = vmatpush1.bf16.msra.mxu0 %v7828
        %7845 = vmatprep.subr.bf16.mxu0 0
        %7846 = vmatpush1.bf16.msra.mxu0 %v7827
        %7847 = vmatprep.subr.bf16.mxu0 0
        %7848 = vmatpush1.bf16.msra.mxu0 %v7826
        %7849 = vmatprep.subr.bf16.mxu0 0
        %7850 = vmatpush1.bf16.msra.mxu0 %v7825
        %7851 = vmatprep.subr.bf16.mxu0 0
        %7852 = vmatpush1.bf16.msra.mxu0 %v7824
        %7853 = vmatprep.subr.bf16.mxu0 0
        %7854 = vmatpush1.bf16.msra.mxu0 %v7823
        %7855 = vmatprep.subr.bf16.mxu0 0
        %7856 = vmatpush2.bf16.msra.mxu0 0
        %7857 = vmatprep.subr.bf16.mxu0 0
        %7858 = vmatpush2.bf16.msra.mxu0 0
        %7859 = vmatprep.subr.bf16.mxu0 0
        %7860 = vmatpush2.bf16.msra.mxu0 0
        %7861 = vmatprep.subr.bf16.mxu0 0
        %7862 = vmatpush2.bf16.msra.mxu0 0
        %7863 = vmatprep.subr.bf16.mxu0 0
        %7864 = vmatpush2.bf16.msra.mxu0 0
        %7865 = vmatprep.subr.bf16.mxu0 0
        %7866 = vmatpush2.bf16.msra.mxu0 0
        %7867 = vmatprep.subr.bf16.mxu0 0
        %7868 = vmatpush2.bf16.msra.mxu0 0
        %7869 = vmatprep.subr.bf16.mxu0 0
        %7870 = vmatpush2.bf16.msra.mxu0 0
        %7871 = vmatprep.mubr.bf16.mxu0 0
        %7872 = vmatmul.mubr.bf16.gmra.mxu0 %v7783
        %v7873 = vpop.f32.mrf.mxu0
        %v7874 = vadd.f32 0.0, %v7873
        %v7875 = vpop.f32.mrf.mxu0
        %v7876 = vpop.f32.mrf.mxu0
        %v7877 = vadd.f32 0.0, %v7876
        %v7878 = vpop.f32.mrf.mxu0
        %7879 = vmatprep.mubr.bf16.mxu0 0
        %7880 = vmatmul.mubr.bf16.gmra.mxu0 %v7784
        %v7881 = vpop.f32.mrf.mxu0
        %v7882 = vadd.f32 0.0, %v7881
        %v7883 = vpop.f32.mrf.mxu0
        %v7884 = vpop.f32.mrf.mxu0
        %v7885 = vadd.f32 0.0, %v7884
        %v7886 = vpop.f32.mrf.mxu0
        %7887 = vmatprep.mubr.bf16.mxu0 0
        %7888 = vmatmul.mubr.bf16.gmra.mxu0 %v7785
        %v7889 = vpop.f32.mrf.mxu0
        %v7890 = vadd.f32 0.0, %v7889
        %v7891 = vpop.f32.mrf.mxu0
        %v7892 = vpop.f32.mrf.mxu0
        %v7893 = vadd.f32 0.0, %v7892
        %v7894 = vpop.f32.mrf.mxu0
        %7895 = vmatprep.mubr.bf16.mxu0 0
        %7896 = vmatmul.mubr.bf16.gmra.mxu0 %v7786
        %v7897 = vpop.f32.mrf.mxu0
        %v7898 = vadd.f32 0.0, %v7897
        %v7899 = vpop.f32.mrf.mxu0
        %v7900 = vpop.f32.mrf.mxu0
        %v7901 = vadd.f32 0.0, %v7900
        %v7902 = vpop.f32.mrf.mxu0
        %7903 = vdwg.mxu0
        %v7904 = vadd.f32 %v7672, %v7874
        %v7905 = vadd.f32 %v7675, %v7877
        %v7906 = vadd.f32 %v7680, %v7882
        %v7907 = vadd.f32 %v7683, %v7885
        %v7908 = vadd.f32 %v7688, %v7890
        %v7909 = vadd.f32 %v7691, %v7893
        %v7910 = vadd.f32 %v7696, %v7898
        %v7911 = vadd.f32 %v7699, %v7901
        %v7912 = vld [vmem:[%s7217] sm:$0xf]
        %v7913 = vld [vmem:[%s7217 + $0x8] sm:$0xf]
        %v7914 = vld [vmem:[%s7217 + $0x10] sm:$0xf]
        %v7915 = vld [vmem:[%s7217 + $0x18] sm:$0xf]
        %v7916 = vld [vmem:[%s7217 + $0x20] sm:$0xf]
        %v7917 = vld [vmem:[%s7217 + $0x28] sm:$0xf]
        %v7918 = vld [vmem:[%s7217 + $0x30] sm:$0xf]
        %v7919 = vld [vmem:[%s7217 + $0x38] sm:$0xf]
        %s7920 = scalar_lea.vmem [#allocation3], 768
        %v7921 = vld [vmem:[%s7920] sm:$0xf]
        %v7922 = vld [vmem:[%s7920 + $0x4] sm:$0xf]
        %v7923 = vld [vmem:[%s7920 + $0x8] sm:$0xf]
        %v7924 = vld [vmem:[%s7920 + $0xc] sm:$0xf]
        %v7925 = vld [vmem:[%s7920 + $0x10] sm:$0xf]
        %v7926 = vld [vmem:[%s7920 + $0x14] sm:$0xf]
        %v7927 = vld [vmem:[%s7920 + $0x18] sm:$0xf]
        %v7928 = vld [vmem:[%s7920 + $0x1c] sm:$0xf]
        %v7929 = vld [vmem:[%s7920 + $0x20] sm:$0xf]
        %v7930 = vld [vmem:[%s7920 + $0x24] sm:$0xf]
        %v7931 = vld [vmem:[%s7920 + $0x28] sm:$0xf]
        %v7932 = vld [vmem:[%s7920 + $0x2c] sm:$0xf]
        %v7933 = vld [vmem:[%s7920 + $0x30] sm:$0xf]
        %v7934 = vld [vmem:[%s7920 + $0x34] sm:$0xf]
        %v7935 = vld [vmem:[%s7920 + $0x38] sm:$0xf]
        %v7936 = vld [vmem:[%s7920 + $0x3c] sm:$0xf]
        %v7945 = vunpack.c.l.b16 %v7912
        %v7946 = vunpack.c.l.b16 %v7913
        %v7947 = vunpack.c.l.b16 %v7914
        %v7948 = vunpack.c.l.b16 %v7915
        %v7949 = vunpack.c.l.b16 %v7916
        %v7950 = vunpack.c.l.b16 %v7917
        %v7951 = vunpack.c.l.b16 %v7918
        %v7952 = vunpack.c.l.b16 %v7919
        %v7953 = vpack.c.b16 %v7946, %v7945
        %v7954 = vpack.c.b16 %v7948, %v7947
        %v7955 = vpack.c.b16 %v7950, %v7949
        %v7956 = vpack.c.b16 %v7952, %v7951
        %v7977 = vunpack.c.l.b16 %v7921
        %v7978 = vunpack.c.l.b16 %v7922
        %v7979 = vunpack.c.l.b16 %v7923
        %v7980 = vunpack.c.l.b16 %v7924
        %v7981 = vunpack.c.l.b16 %v7925
        %v7982 = vunpack.c.l.b16 %v7926
        %v7983 = vunpack.c.l.b16 %v7927
        %v7984 = vunpack.c.l.b16 %v7928
        %v7985 = vunpack.c.l.b16 %v7929
        %v7986 = vunpack.c.l.b16 %v7930
        %v7987 = vunpack.c.l.b16 %v7931
        %v7988 = vunpack.c.l.b16 %v7932
        %v7989 = vunpack.c.l.b16 %v7933
        %v7990 = vunpack.c.l.b16 %v7934
        %v7991 = vunpack.c.l.b16 %v7935
        %v7992 = vunpack.c.l.b16 %v7936
        %v7993 = vpack.c.b16 %v7978, %v7977
        %v7994 = vpack.c.b16 %v7980, %v7979
        %v7995 = vpack.c.b16 %v7982, %v7981
        %v7996 = vpack.c.b16 %v7984, %v7983
        %v7997 = vpack.c.b16 %v7986, %v7985
        %v7998 = vpack.c.b16 %v7988, %v7987
        %v7999 = vpack.c.b16 %v7990, %v7989
        %v8000 = vpack.c.b16 %v7992, %v7991
        %8009 = vmatprep.subr.bf16.mxu0 0
        %8010 = vmatpush1.bf16.msra.mxu0 %v8000
        %8011 = vmatprep.subr.bf16.mxu0 0
        %8012 = vmatpush1.bf16.msra.mxu0 %v7999
        %8013 = vmatprep.subr.bf16.mxu0 0
        %8014 = vmatpush1.bf16.msra.mxu0 %v7998
        %8015 = vmatprep.subr.bf16.mxu0 0
        %8016 = vmatpush1.bf16.msra.mxu0 %v7997
        %8017 = vmatprep.subr.bf16.mxu0 0
        %8018 = vmatpush1.bf16.msra.mxu0 %v7996
        %8019 = vmatprep.subr.bf16.mxu0 0
        %8020 = vmatpush1.bf16.msra.mxu0 %v7995
        %8021 = vmatprep.subr.bf16.mxu0 0
        %8022 = vmatpush1.bf16.msra.mxu0 %v7994
        %8023 = vmatprep.subr.bf16.mxu0 0
        %8024 = vmatpush1.bf16.msra.mxu0 %v7993
        %8025 = vmatprep.subr.bf16.mxu0 0
        %8026 = vmatpush2.bf16.msra.mxu0 0
        %8027 = vmatprep.subr.bf16.mxu0 0
        %8028 = vmatpush2.bf16.msra.mxu0 0
        %8029 = vmatprep.subr.bf16.mxu0 0
        %8030 = vmatpush2.bf16.msra.mxu0 0
        %8031 = vmatprep.subr.bf16.mxu0 0
        %8032 = vmatpush2.bf16.msra.mxu0 0
        %8033 = vmatprep.subr.bf16.mxu0 0
        %8034 = vmatpush2.bf16.msra.mxu0 0
        %8035 = vmatprep.subr.bf16.mxu0 0
        %8036 = vmatpush2.bf16.msra.mxu0 0
        %8037 = vmatprep.subr.bf16.mxu0 0
        %8038 = vmatpush2.bf16.msra.mxu0 0
        %8039 = vmatprep.subr.bf16.mxu0 0
        %8040 = vmatpush2.bf16.msra.mxu0 0
        %8041 = vmatprep.mubr.bf16.mxu0 0
        %8042 = vmatmul.mubr.bf16.gmra.mxu0 %v7953
        %v8043 = vpop.f32.mrf.mxu0
        %v8044 = vadd.f32 0.0, %v8043
        %v8045 = vpop.f32.mrf.mxu0
        %v8046 = vpop.f32.mrf.mxu0
        %v8047 = vadd.f32 0.0, %v8046
        %v8048 = vpop.f32.mrf.mxu0
        %8049 = vmatprep.mubr.bf16.mxu0 0
        %8050 = vmatmul.mubr.bf16.gmra.mxu0 %v7954
        %v8051 = vpop.f32.mrf.mxu0
        %v8052 = vadd.f32 0.0, %v8051
        %v8053 = vpop.f32.mrf.mxu0
        %v8054 = vpop.f32.mrf.mxu0
        %v8055 = vadd.f32 0.0, %v8054
        %v8056 = vpop.f32.mrf.mxu0
        %8057 = vmatprep.mubr.bf16.mxu0 0
        %8058 = vmatmul.mubr.bf16.gmra.mxu0 %v7955
        %v8059 = vpop.f32.mrf.mxu0
        %v8060 = vadd.f32 0.0, %v8059
        %v8061 = vpop.f32.mrf.mxu0
        %v8062 = vpop.f32.mrf.mxu0
        %v8063 = vadd.f32 0.0, %v8062
        %v8064 = vpop.f32.mrf.mxu0
        %8065 = vmatprep.mubr.bf16.mxu0 0
        %8066 = vmatmul.mubr.bf16.gmra.mxu0 %v7956
        %v8067 = vpop.f32.mrf.mxu0
        %v8068 = vadd.f32 0.0, %v8067
        %v8069 = vpop.f32.mrf.mxu0
        %v8070 = vpop.f32.mrf.mxu0
        %v8071 = vadd.f32 0.0, %v8070
        %v8072 = vpop.f32.mrf.mxu0
        %8073 = vdwg.mxu0
        %v8074 = vadd.f32 %v7904, %v8044
        %v8075 = vadd.f32 %v7905, %v8047
        %v8076 = vadd.f32 %v7906, %v8052
        %v8077 = vadd.f32 %v7907, %v8055
        %v8078 = vadd.f32 %v7908, %v8060
        %v8079 = vadd.f32 %v7909, %v8063
        %v8080 = vadd.f32 %v7910, %v8068
        %v8081 = vadd.f32 %v7911, %v8071
        %v8082 = vld [vmem:[%s7217] sm:$0xf]
        %v8083 = vld [vmem:[%s7217 + $0x4] sm:$0x1]
        %v8084 = vld [vmem:[%s7217 + $0x8] sm:$0xf]
        %v8085 = vld [vmem:[%s7217 + $0xc] sm:$0x1]
        %v8086 = vld [vmem:[%s7217 + $0x10] sm:$0xf]
        %v8087 = vld [vmem:[%s7217 + $0x14] sm:$0x1]
        %v8088 = vld [vmem:[%s7217 + $0x18] sm:$0xf]
        %v8089 = vld [vmem:[%s7217 + $0x1c] sm:$0x1]
        %v8090 = vld [vmem:[%s7217 + $0x20] sm:$0xf]
        %v8091 = vld [vmem:[%s7217 + $0x24] sm:$0x1]
        %v8092 = vld [vmem:[%s7217 + $0x28] sm:$0xf]
        %v8093 = vld [vmem:[%s7217 + $0x2c] sm:$0x1]
        %v8094 = vld [vmem:[%s7217 + $0x30] sm:$0xf]
        %v8095 = vld [vmem:[%s7217 + $0x34] sm:$0x1]
        %v8096 = vld [vmem:[%s7217 + $0x38] sm:$0xf]
        %v8097 = vld [vmem:[%s7217 + $0x3c] sm:$0x1]
        %v8099 = vshrl.u32 %v8082, 16
        %v8101 = vrot.slane %v8099, 4
        %v8102 = vshll.u32 %v8082, 16
        %v8104 = vrot.slane %v8102, 5
        %v8105 = vor.u32 %v8101, %v8104
        %v8106 = vrot.slane %v8105, 4
        %v8108 = vshll.u32 %v8083, 16
        %v8110 = vrot.slane %v8108, 5
        %v8111 = vsel %vm279, %v8106, %v8110
        %v8113 = vshrl.u32 %v8084, 16
        %v8115 = vrot.slane %v8113, 4
        %v8116 = vshll.u32 %v8084, 16
        %v8118 = vrot.slane %v8116, 5
        %v8119 = vor.u32 %v8115, %v8118
        %v8120 = vrot.slane %v8119, 4
        %v8122 = vshll.u32 %v8085, 16
        %v8124 = vrot.slane %v8122, 5
        %v8125 = vsel %vm279, %v8120, %v8124
        %v8127 = vshrl.u32 %v8086, 16
        %v8129 = vrot.slane %v8127, 4
        %v8130 = vshll.u32 %v8086, 16
        %v8132 = vrot.slane %v8130, 5
        %v8133 = vor.u32 %v8129, %v8132
        %v8134 = vrot.slane %v8133, 4
        %v8136 = vshll.u32 %v8087, 16
        %v8138 = vrot.slane %v8136, 5
        %v8139 = vsel %vm279, %v8134, %v8138
        %v8141 = vshrl.u32 %v8088, 16
        %v8143 = vrot.slane %v8141, 4
        %v8144 = vshll.u32 %v8088, 16
        %v8146 = vrot.slane %v8144, 5
        %v8147 = vor.u32 %v8143, %v8146
        %v8148 = vrot.slane %v8147, 4
        %v8150 = vshll.u32 %v8089, 16
        %v8152 = vrot.slane %v8150, 5
        %v8153 = vsel %vm279, %v8148, %v8152
        %v8155 = vshrl.u32 %v8090, 16
        %v8157 = vrot.slane %v8155, 4
        %v8158 = vshll.u32 %v8090, 16
        %v8160 = vrot.slane %v8158, 5
        %v8161 = vor.u32 %v8157, %v8160
        %v8162 = vrot.slane %v8161, 4
        %v8164 = vshll.u32 %v8091, 16
        %v8166 = vrot.slane %v8164, 5
        %v8167 = vsel %vm279, %v8162, %v8166
        %v8169 = vshrl.u32 %v8092, 16
        %v8171 = vrot.slane %v8169, 4
        %v8172 = vshll.u32 %v8092, 16
        %v8174 = vrot.slane %v8172, 5
        %v8175 = vor.u32 %v8171, %v8174
        %v8176 = vrot.slane %v8175, 4
        %v8178 = vshll.u32 %v8093, 16
        %v8180 = vrot.slane %v8178, 5
        %v8181 = vsel %vm279, %v8176, %v8180
        %v8183 = vshrl.u32 %v8094, 16
        %v8185 = vrot.slane %v8183, 4
        %v8186 = vshll.u32 %v8094, 16
        %v8188 = vrot.slane %v8186, 5
        %v8189 = vor.u32 %v8185, %v8188
        %v8190 = vrot.slane %v8189, 4
        %v8192 = vshll.u32 %v8095, 16
        %v8194 = vrot.slane %v8192, 5
        %v8195 = vsel %vm279, %v8190, %v8194
        %v8197 = vshrl.u32 %v8096, 16
        %v8199 = vrot.slane %v8197, 4
        %v8200 = vshll.u32 %v8096, 16
        %v8202 = vrot.slane %v8200, 5
        %v8203 = vor.u32 %v8199, %v8202
        %v8204 = vrot.slane %v8203, 4
        %v8206 = vshll.u32 %v8097, 16
        %v8208 = vrot.slane %v8206, 5
        %v8209 = vsel %vm279, %v8204, %v8208
        %s8210 = scalar_lea.vmem [#allocation3], 832
        %v8211 = vld [vmem:[%s8210] sm:$0xf]
        %v8212 = vld [vmem:[%s8210 + $0x4] sm:$0xf]
        %v8213 = vld [vmem:[%s8210 + $0x8] sm:$0xf]
        %v8214 = vld [vmem:[%s8210 + $0xc] sm:$0xf]
        %v8215 = vld [vmem:[%s8210 + $0x10] sm:$0xf]
        %v8216 = vld [vmem:[%s8210 + $0x14] sm:$0xf]
        %v8217 = vld [vmem:[%s8210 + $0x18] sm:$0xf]
        %v8218 = vld [vmem:[%s8210 + $0x1c] sm:$0xf]
        %v8219 = vld [vmem:[%s8210 + $0x20] sm:$0xf]
        %v8220 = vld [vmem:[%s8210 + $0x24] sm:$0xf]
        %v8221 = vld [vmem:[%s8210 + $0x28] sm:$0xf]
        %v8222 = vld [vmem:[%s8210 + $0x2c] sm:$0xf]
        %v8223 = vld [vmem:[%s8210 + $0x30] sm:$0xf]
        %v8224 = vld [vmem:[%s8210 + $0x34] sm:$0xf]
        %v8225 = vld [vmem:[%s8210 + $0x38] sm:$0xf]
        %v8226 = vld [vmem:[%s8210 + $0x3c] sm:$0xf]
        %v8227 = vunpack.c.l.b16 %v8111
        %v8228 = vunpack.c.l.b16 %v8125
        %v8229 = vunpack.c.l.b16 %v8139
        %v8230 = vunpack.c.l.b16 %v8153
        %v8231 = vunpack.c.l.b16 %v8167
        %v8232 = vunpack.c.l.b16 %v8181
        %v8233 = vunpack.c.l.b16 %v8195
        %v8234 = vunpack.c.l.b16 %v8209
        %v8235 = vpack.c.b16 %v8228, %v8227
        %v8236 = vpack.c.b16 %v8230, %v8229
        %v8237 = vpack.c.b16 %v8232, %v8231
        %v8238 = vpack.c.b16 %v8234, %v8233
        %v8259 = vunpack.c.l.b16 %v8211
        %v8260 = vunpack.c.l.b16 %v8212
        %v8261 = vunpack.c.l.b16 %v8213
        %v8262 = vunpack.c.l.b16 %v8214
        %v8263 = vunpack.c.l.b16 %v8215
        %v8264 = vunpack.c.l.b16 %v8216
        %v8265 = vunpack.c.l.b16 %v8217
        %v8266 = vunpack.c.l.b16 %v8218
        %v8267 = vunpack.c.l.b16 %v8219
        %v8268 = vunpack.c.l.b16 %v8220
        %v8269 = vunpack.c.l.b16 %v8221
        %v8270 = vunpack.c.l.b16 %v8222
        %v8271 = vunpack.c.l.b16 %v8223
        %v8272 = vunpack.c.l.b16 %v8224
        %v8273 = vunpack.c.l.b16 %v8225
        %v8274 = vunpack.c.l.b16 %v8226
        %v8275 = vpack.c.b16 %v8260, %v8259
        %v8276 = vpack.c.b16 %v8262, %v8261
        %v8277 = vpack.c.b16 %v8264, %v8263
        %v8278 = vpack.c.b16 %v8266, %v8265
        %v8279 = vpack.c.b16 %v8268, %v8267
        %v8280 = vpack.c.b16 %v8270, %v8269
        %v8281 = vpack.c.b16 %v8272, %v8271
        %v8282 = vpack.c.b16 %v8274, %v8273
        %8291 = vmatprep.subr.bf16.mxu0 0
        %8292 = vmatpush1.bf16.msra.mxu0 %v8282
        %8293 = vmatprep.subr.bf16.mxu0 0
        %8294 = vmatpush1.bf16.msra.mxu0 %v8281
        %8295 = vmatprep.subr.bf16.mxu0 0
        %8296 = vmatpush1.bf16.msra.mxu0 %v8280
        %8297 = vmatprep.subr.bf16.mxu0 0
        %8298 = vmatpush1.bf16.msra.mxu0 %v8279
        %8299 = vmatprep.subr.bf16.mxu0 0
        %8300 = vmatpush1.bf16.msra.mxu0 %v8278
        %8301 = vmatprep.subr.bf16.mxu0 0
        %8302 = vmatpush1.bf16.msra.mxu0 %v8277
        %8303 = vmatprep.subr.bf16.mxu0 0
        %8304 = vmatpush1.bf16.msra.mxu0 %v8276
        %8305 = vmatprep.subr.bf16.mxu0 0
        %8306 = vmatpush1.bf16.msra.mxu0 %v8275
        %8307 = vmatprep.subr.bf16.mxu0 0
        %8308 = vmatpush2.bf16.msra.mxu0 0
        %8309 = vmatprep.subr.bf16.mxu0 0
        %8310 = vmatpush2.bf16.msra.mxu0 0
        %8311 = vmatprep.subr.bf16.mxu0 0
        %8312 = vmatpush2.bf16.msra.mxu0 0
        %8313 = vmatprep.subr.bf16.mxu0 0
        %8314 = vmatpush2.bf16.msra.mxu0 0
        %8315 = vmatprep.subr.bf16.mxu0 0
        %8316 = vmatpush2.bf16.msra.mxu0 0
        %8317 = vmatprep.subr.bf16.mxu0 0
        %8318 = vmatpush2.bf16.msra.mxu0 0
        %8319 = vmatprep.subr.bf16.mxu0 0
        %8320 = vmatpush2.bf16.msra.mxu0 0
        %8321 = vmatprep.subr.bf16.mxu0 0
        %8322 = vmatpush2.bf16.msra.mxu0 0
        %8323 = vmatprep.mubr.bf16.mxu0 0
        %8324 = vmatmul.mubr.bf16.gmra.mxu0 %v8235
        %v8325 = vpop.f32.mrf.mxu0
        %v8326 = vadd.f32 0.0, %v8325
        %v8327 = vpop.f32.mrf.mxu0
        %v8328 = vpop.f32.mrf.mxu0
        %v8329 = vadd.f32 0.0, %v8328
        %v8330 = vpop.f32.mrf.mxu0
        %8331 = vmatprep.mubr.bf16.mxu0 0
        %8332 = vmatmul.mubr.bf16.gmra.mxu0 %v8236
        %v8333 = vpop.f32.mrf.mxu0
        %v8334 = vadd.f32 0.0, %v8333
        %v8335 = vpop.f32.mrf.mxu0
        %v8336 = vpop.f32.mrf.mxu0
        %v8337 = vadd.f32 0.0, %v8336
        %v8338 = vpop.f32.mrf.mxu0
        %8339 = vmatprep.mubr.bf16.mxu0 0
        %8340 = vmatmul.mubr.bf16.gmra.mxu0 %v8237
        %v8341 = vpop.f32.mrf.mxu0
        %v8342 = vadd.f32 0.0, %v8341
        %v8343 = vpop.f32.mrf.mxu0
        %v8344 = vpop.f32.mrf.mxu0
        %v8345 = vadd.f32 0.0, %v8344
        %v8346 = vpop.f32.mrf.mxu0
        %8347 = vmatprep.mubr.bf16.mxu0 0
        %8348 = vmatmul.mubr.bf16.gmra.mxu0 %v8238
        %v8349 = vpop.f32.mrf.mxu0
        %v8350 = vadd.f32 0.0, %v8349
        %v8351 = vpop.f32.mrf.mxu0
        %v8352 = vpop.f32.mrf.mxu0
        %v8353 = vadd.f32 0.0, %v8352
        %v8354 = vpop.f32.mrf.mxu0
        %8355 = vdwg.mxu0
        %v8356 = vadd.f32 %v8074, %v8326
        %v8357 = vadd.f32 %v8075, %v8329
        %v8358 = vadd.f32 %v8076, %v8334
        %v8359 = vadd.f32 %v8077, %v8337
        %v8360 = vadd.f32 %v8078, %v8342
        %v8361 = vadd.f32 %v8079, %v8345
        %v8362 = vadd.f32 %v8080, %v8350
        %v8363 = vadd.f32 %v8081, %v8353
        %v8364 = vld [vmem:[%s7217] sm:$0xe]
        %v8365 = vld [vmem:[%s7217 + $0x8] sm:$0xe]
        %v8366 = vld [vmem:[%s7217 + $0x10] sm:$0xe]
        %v8367 = vld [vmem:[%s7217 + $0x18] sm:$0xe]
        %v8368 = vld [vmem:[%s7217 + $0x20] sm:$0xe]
        %v8369 = vld [vmem:[%s7217 + $0x28] sm:$0xe]
        %v8370 = vld [vmem:[%s7217 + $0x30] sm:$0xe]
        %v8371 = vld [vmem:[%s7217 + $0x38] sm:$0xe]
        %v8388 = vrot.slane %v8364, 5
        %v8389 = vrot.slane %v8388, 4
        %v8390 = vrot.slane %v8083, 5
        %v8391 = vsel %vm1309, %v8389, %v8390
        %v8392 = vrot.slane %v8365, 5
        %v8393 = vrot.slane %v8392, 4
        %v8394 = vrot.slane %v8085, 5
        %v8395 = vsel %vm1309, %v8393, %v8394
        %v8396 = vrot.slane %v8366, 5
        %v8397 = vrot.slane %v8396, 4
        %v8398 = vrot.slane %v8087, 5
        %v8399 = vsel %vm1309, %v8397, %v8398
        %v8400 = vrot.slane %v8367, 5
        %v8401 = vrot.slane %v8400, 4
        %v8402 = vrot.slane %v8089, 5
        %v8403 = vsel %vm1309, %v8401, %v8402
        %v8404 = vrot.slane %v8368, 5
        %v8405 = vrot.slane %v8404, 4
        %v8406 = vrot.slane %v8091, 5
        %v8407 = vsel %vm1309, %v8405, %v8406
        %v8408 = vrot.slane %v8369, 5
        %v8409 = vrot.slane %v8408, 4
        %v8410 = vrot.slane %v8093, 5
        %v8411 = vsel %vm1309, %v8409, %v8410
        %v8412 = vrot.slane %v8370, 5
        %v8413 = vrot.slane %v8412, 4
        %v8414 = vrot.slane %v8095, 5
        %v8415 = vsel %vm1309, %v8413, %v8414
        %v8416 = vrot.slane %v8371, 5
        %v8417 = vrot.slane %v8416, 4
        %v8418 = vrot.slane %v8097, 5
        %v8419 = vsel %vm1309, %v8417, %v8418
        %s8420 = scalar_lea.vmem [#allocation3], 896
        %v8421 = vld [vmem:[%s8420] sm:$0xf]
        %v8422 = vld [vmem:[%s8420 + $0x4] sm:$0xf]
        %v8423 = vld [vmem:[%s8420 + $0x8] sm:$0xf]
        %v8424 = vld [vmem:[%s8420 + $0xc] sm:$0xf]
        %v8425 = vld [vmem:[%s8420 + $0x10] sm:$0xf]
        %v8426 = vld [vmem:[%s8420 + $0x14] sm:$0xf]
        %v8427 = vld [vmem:[%s8420 + $0x18] sm:$0xf]
        %v8428 = vld [vmem:[%s8420 + $0x1c] sm:$0xf]
        %v8429 = vld [vmem:[%s8420 + $0x20] sm:$0xf]
        %v8430 = vld [vmem:[%s8420 + $0x24] sm:$0xf]
        %v8431 = vld [vmem:[%s8420 + $0x28] sm:$0xf]
        %v8432 = vld [vmem:[%s8420 + $0x2c] sm:$0xf]
        %v8433 = vld [vmem:[%s8420 + $0x30] sm:$0xf]
        %v8434 = vld [vmem:[%s8420 + $0x34] sm:$0xf]
        %v8435 = vld [vmem:[%s8420 + $0x38] sm:$0xf]
        %v8436 = vld [vmem:[%s8420 + $0x3c] sm:$0xf]
        %v8437 = vunpack.c.l.b16 %v8391
        %v8438 = vunpack.c.l.b16 %v8395
        %v8439 = vunpack.c.l.b16 %v8399
        %v8440 = vunpack.c.l.b16 %v8403
        %v8441 = vunpack.c.l.b16 %v8407
        %v8442 = vunpack.c.l.b16 %v8411
        %v8443 = vunpack.c.l.b16 %v8415
        %v8444 = vunpack.c.l.b16 %v8419
        %v8445 = vpack.c.b16 %v8438, %v8437
        %v8446 = vpack.c.b16 %v8440, %v8439
        %v8447 = vpack.c.b16 %v8442, %v8441
        %v8448 = vpack.c.b16 %v8444, %v8443
        %v8469 = vunpack.c.l.b16 %v8421
        %v8470 = vunpack.c.l.b16 %v8422
        %v8471 = vunpack.c.l.b16 %v8423
        %v8472 = vunpack.c.l.b16 %v8424
        %v8473 = vunpack.c.l.b16 %v8425
        %v8474 = vunpack.c.l.b16 %v8426
        %v8475 = vunpack.c.l.b16 %v8427
        %v8476 = vunpack.c.l.b16 %v8428
        %v8477 = vunpack.c.l.b16 %v8429
        %v8478 = vunpack.c.l.b16 %v8430
        %v8479 = vunpack.c.l.b16 %v8431
        %v8480 = vunpack.c.l.b16 %v8432
        %v8481 = vunpack.c.l.b16 %v8433
        %v8482 = vunpack.c.l.b16 %v8434
        %v8483 = vunpack.c.l.b16 %v8435
        %v8484 = vunpack.c.l.b16 %v8436
        %v8485 = vpack.c.b16 %v8470, %v8469
        %v8486 = vpack.c.b16 %v8472, %v8471
        %v8487 = vpack.c.b16 %v8474, %v8473
        %v8488 = vpack.c.b16 %v8476, %v8475
        %v8489 = vpack.c.b16 %v8478, %v8477
        %v8490 = vpack.c.b16 %v8480, %v8479
        %v8491 = vpack.c.b16 %v8482, %v8481
        %v8492 = vpack.c.b16 %v8484, %v8483
        %8501 = vmatprep.subr.bf16.mxu0 0
        %8502 = vmatpush1.bf16.msra.mxu0 %v8492
        %8503 = vmatprep.subr.bf16.mxu0 0
        %8504 = vmatpush1.bf16.msra.mxu0 %v8491
        %8505 = vmatprep.subr.bf16.mxu0 0
        %8506 = vmatpush1.bf16.msra.mxu0 %v8490
        %8507 = vmatprep.subr.bf16.mxu0 0
        %8508 = vmatpush1.bf16.msra.mxu0 %v8489
        %8509 = vmatprep.subr.bf16.mxu0 0
        %8510 = vmatpush1.bf16.msra.mxu0 %v8488
        %8511 = vmatprep.subr.bf16.mxu0 0
        %8512 = vmatpush1.bf16.msra.mxu0 %v8487
        %8513 = vmatprep.subr.bf16.mxu0 0
        %8514 = vmatpush1.bf16.msra.mxu0 %v8486
        %8515 = vmatprep.subr.bf16.mxu0 0
        %8516 = vmatpush1.bf16.msra.mxu0 %v8485
        %8517 = vmatprep.subr.bf16.mxu0 0
        %8518 = vmatpush2.bf16.msra.mxu0 0
        %8519 = vmatprep.subr.bf16.mxu0 0
        %8520 = vmatpush2.bf16.msra.mxu0 0
        %8521 = vmatprep.subr.bf16.mxu0 0
        %8522 = vmatpush2.bf16.msra.mxu0 0
        %8523 = vmatprep.subr.bf16.mxu0 0
        %8524 = vmatpush2.bf16.msra.mxu0 0
        %8525 = vmatprep.subr.bf16.mxu0 0
        %8526 = vmatpush2.bf16.msra.mxu0 0
        %8527 = vmatprep.subr.bf16.mxu0 0
        %8528 = vmatpush2.bf16.msra.mxu0 0
        %8529 = vmatprep.subr.bf16.mxu0 0
        %8530 = vmatpush2.bf16.msra.mxu0 0
        %8531 = vmatprep.subr.bf16.mxu0 0
        %8532 = vmatpush2.bf16.msra.mxu0 0
        %8533 = vmatprep.mubr.bf16.mxu0 0
        %8534 = vmatmul.mubr.bf16.gmra.mxu0 %v8445
        %v8535 = vpop.f32.mrf.mxu0
        %v8536 = vadd.f32 0.0, %v8535
        %v8537 = vpop.f32.mrf.mxu0
        %v8538 = vpop.f32.mrf.mxu0
        %v8539 = vadd.f32 0.0, %v8538
        %v8540 = vpop.f32.mrf.mxu0
        %8541 = vmatprep.mubr.bf16.mxu0 0
        %8542 = vmatmul.mubr.bf16.gmra.mxu0 %v8446
        %v8543 = vpop.f32.mrf.mxu0
        %v8544 = vadd.f32 0.0, %v8543
        %v8545 = vpop.f32.mrf.mxu0
        %v8546 = vpop.f32.mrf.mxu0
        %v8547 = vadd.f32 0.0, %v8546
        %v8548 = vpop.f32.mrf.mxu0
        %8549 = vmatprep.mubr.bf16.mxu0 0
        %8550 = vmatmul.mubr.bf16.gmra.mxu0 %v8447
        %v8551 = vpop.f32.mrf.mxu0
        %v8552 = vadd.f32 0.0, %v8551
        %v8553 = vpop.f32.mrf.mxu0
        %v8554 = vpop.f32.mrf.mxu0
        %v8555 = vadd.f32 0.0, %v8554
        %v8556 = vpop.f32.mrf.mxu0
        %8557 = vmatprep.mubr.bf16.mxu0 0
        %8558 = vmatmul.mubr.bf16.gmra.mxu0 %v8448
        %v8559 = vpop.f32.mrf.mxu0
        %v8560 = vadd.f32 0.0, %v8559
        %v8561 = vpop.f32.mrf.mxu0
        %v8562 = vpop.f32.mrf.mxu0
        %v8563 = vadd.f32 0.0, %v8562
        %v8564 = vpop.f32.mrf.mxu0
        %8565 = vdwg.mxu0
        %v8566 = vadd.f32 %v8356, %v8536
        %v8567 = vadd.f32 %v8357, %v8539
        %v8568 = vadd.f32 %v8358, %v8544
        %v8569 = vadd.f32 %v8359, %v8547
        %v8570 = vadd.f32 %v8360, %v8552
        %v8571 = vadd.f32 %v8361, %v8555
        %v8572 = vadd.f32 %v8362, %v8560
        %v8573 = vadd.f32 %v8363, %v8563
        %s8574 = scalar_lea.vmem [#allocation2], 16
        %v8575 = vld [vmem:[%s8574] sm:$0xf]
        %v8576 = vld [vmem:[%s8574 + $0x8] sm:$0xf]
        %v8577 = vld [vmem:[%s8574 + $0x10] sm:$0xf]
        %v8578 = vld [vmem:[%s8574 + $0x18] sm:$0xf]
        %v8579 = vld [vmem:[%s8574 + $0x20] sm:$0xf]
        %v8580 = vld [vmem:[%s8574 + $0x28] sm:$0xf]
        %v8581 = vld [vmem:[%s8574 + $0x30] sm:$0xf]
        %v8582 = vld [vmem:[%s8574 + $0x38] sm:$0xf]
        %s8583 = scalar_lea.vmem [#allocation3], 960
        %v8584 = vld [vmem:[%s8583] sm:$0xf]
        %v8585 = vld [vmem:[%s8583 + $0x4] sm:$0xf]
        %v8586 = vld [vmem:[%s8583 + $0x8] sm:$0xf]
        %v8587 = vld [vmem:[%s8583 + $0xc] sm:$0xf]
        %v8588 = vld [vmem:[%s8583 + $0x10] sm:$0xf]
        %v8589 = vld [vmem:[%s8583 + $0x14] sm:$0xf]
        %v8590 = vld [vmem:[%s8583 + $0x18] sm:$0xf]
        %v8591 = vld [vmem:[%s8583 + $0x1c] sm:$0xf]
        %v8592 = vld [vmem:[%s8583 + $0x20] sm:$0xf]
        %v8593 = vld [vmem:[%s8583 + $0x24] sm:$0xf]
        %v8594 = vld [vmem:[%s8583 + $0x28] sm:$0xf]
        %v8595 = vld [vmem:[%s8583 + $0x2c] sm:$0xf]
        %v8596 = vld [vmem:[%s8583 + $0x30] sm:$0xf]
        %v8597 = vld [vmem:[%s8583 + $0x34] sm:$0xf]
        %v8598 = vld [vmem:[%s8583 + $0x38] sm:$0xf]
        %v8599 = vld [vmem:[%s8583 + $0x3c] sm:$0xf]
        %v8608 = vunpack.c.l.b16 %v8575
        %v8609 = vunpack.c.l.b16 %v8576
        %v8610 = vunpack.c.l.b16 %v8577
        %v8611 = vunpack.c.l.b16 %v8578
        %v8612 = vunpack.c.l.b16 %v8579
        %v8613 = vunpack.c.l.b16 %v8580
        %v8614 = vunpack.c.l.b16 %v8581
        %v8615 = vunpack.c.l.b16 %v8582
        %v8616 = vpack.c.b16 %v8609, %v8608
        %v8617 = vpack.c.b16 %v8611, %v8610
        %v8618 = vpack.c.b16 %v8613, %v8612
        %v8619 = vpack.c.b16 %v8615, %v8614
        %v8640 = vunpack.c.l.b16 %v8584
        %v8641 = vunpack.c.l.b16 %v8585
        %v8642 = vunpack.c.l.b16 %v8586
        %v8643 = vunpack.c.l.b16 %v8587
        %v8644 = vunpack.c.l.b16 %v8588
        %v8645 = vunpack.c.l.b16 %v8589
        %v8646 = vunpack.c.l.b16 %v8590
        %v8647 = vunpack.c.l.b16 %v8591
        %v8648 = vunpack.c.l.b16 %v8592
        %v8649 = vunpack.c.l.b16 %v8593
        %v8650 = vunpack.c.l.b16 %v8594
        %v8651 = vunpack.c.l.b16 %v8595
        %v8652 = vunpack.c.l.b16 %v8596
        %v8653 = vunpack.c.l.b16 %v8597
        %v8654 = vunpack.c.l.b16 %v8598
        %v8655 = vunpack.c.l.b16 %v8599
        %v8656 = vpack.c.b16 %v8641, %v8640
        %v8657 = vpack.c.b16 %v8643, %v8642
        %v8658 = vpack.c.b16 %v8645, %v8644
        %v8659 = vpack.c.b16 %v8647, %v8646
        %v8660 = vpack.c.b16 %v8649, %v8648
        %v8661 = vpack.c.b16 %v8651, %v8650
        %v8662 = vpack.c.b16 %v8653, %v8652
        %v8663 = vpack.c.b16 %v8655, %v8654
        %8672 = vmatprep.subr.bf16.mxu0 0
        %8673 = vmatpush1.bf16.msra.mxu0 %v8663
        %8674 = vmatprep.subr.bf16.mxu0 0
        %8675 = vmatpush1.bf16.msra.mxu0 %v8662
        %8676 = vmatprep.subr.bf16.mxu0 0
        %8677 = vmatpush1.bf16.msra.mxu0 %v8661
        %8678 = vmatprep.subr.bf16.mxu0 0
        %8679 = vmatpush1.bf16.msra.mxu0 %v8660
        %8680 = vmatprep.subr.bf16.mxu0 0
        %8681 = vmatpush1.bf16.msra.mxu0 %v8659
        %8682 = vmatprep.subr.bf16.mxu0 0
        %8683 = vmatpush1.bf16.msra.mxu0 %v8658
        %8684 = vmatprep.subr.bf16.mxu0 0
        %8685 = vmatpush1.bf16.msra.mxu0 %v8657
        %8686 = vmatprep.subr.bf16.mxu0 0
        %8687 = vmatpush1.bf16.msra.mxu0 %v8656
        %8688 = vmatprep.subr.bf16.mxu0 0
        %8689 = vmatpush2.bf16.msra.mxu0 0
        %8690 = vmatprep.subr.bf16.mxu0 0
        %8691 = vmatpush2.bf16.msra.mxu0 0
        %8692 = vmatprep.subr.bf16.mxu0 0
        %8693 = vmatpush2.bf16.msra.mxu0 0
        %8694 = vmatprep.subr.bf16.mxu0 0
        %8695 = vmatpush2.bf16.msra.mxu0 0
        %8696 = vmatprep.subr.bf16.mxu0 0
        %8697 = vmatpush2.bf16.msra.mxu0 0
        %8698 = vmatprep.subr.bf16.mxu0 0
        %8699 = vmatpush2.bf16.msra.mxu0 0
        %8700 = vmatprep.subr.bf16.mxu0 0
        %8701 = vmatpush2.bf16.msra.mxu0 0
        %8702 = vmatprep.subr.bf16.mxu0 0
        %8703 = vmatpush2.bf16.msra.mxu0 0
        %8704 = vmatprep.mubr.bf16.mxu0 0
        %8705 = vmatmul.mubr.bf16.gmra.mxu0 %v8616
        %v8706 = vpop.f32.mrf.mxu0
        %v8707 = vadd.f32 0.0, %v8706
        %v8708 = vpop.f32.mrf.mxu0
        %v8709 = vpop.f32.mrf.mxu0
        %v8710 = vadd.f32 0.0, %v8709
        %v8711 = vpop.f32.mrf.mxu0
        %8712 = vmatprep.mubr.bf16.mxu0 0
        %8713 = vmatmul.mubr.bf16.gmra.mxu0 %v8617
        %v8714 = vpop.f32.mrf.mxu0
        %v8715 = vadd.f32 0.0, %v8714
        %v8716 = vpop.f32.mrf.mxu0
        %v8717 = vpop.f32.mrf.mxu0
        %v8718 = vadd.f32 0.0, %v8717
        %v8719 = vpop.f32.mrf.mxu0
        %8720 = vmatprep.mubr.bf16.mxu0 0
        %8721 = vmatmul.mubr.bf16.gmra.mxu0 %v8618
        %v8722 = vpop.f32.mrf.mxu0
        %v8723 = vadd.f32 0.0, %v8722
        %v8724 = vpop.f32.mrf.mxu0
        %v8725 = vpop.f32.mrf.mxu0
        %v8726 = vadd.f32 0.0, %v8725
        %v8727 = vpop.f32.mrf.mxu0
        %8728 = vmatprep.mubr.bf16.mxu0 0
        %8729 = vmatmul.mubr.bf16.gmra.mxu0 %v8619
        %v8730 = vpop.f32.mrf.mxu0
        %v8731 = vadd.f32 0.0, %v8730
        %v8732 = vpop.f32.mrf.mxu0
        %v8733 = vpop.f32.mrf.mxu0
        %v8734 = vadd.f32 0.0, %v8733
        %v8735 = vpop.f32.mrf.mxu0
        %8736 = vdwg.mxu0
        %v8737 = vadd.f32 %v8566, %v8707
        %v8738 = vadd.f32 %v8567, %v8710
        %v8739 = vadd.f32 %v8568, %v8715
        %v8740 = vadd.f32 %v8569, %v8718
        %v8741 = vadd.f32 %v8570, %v8723
        %v8742 = vadd.f32 %v8571, %v8726
        %v8743 = vadd.f32 %v8572, %v8731
        %v8744 = vadd.f32 %v8573, %v8734
        %v8745 = vld [vmem:[%s8574] sm:$0xf]
        %v8746 = vld [vmem:[%s8574 + $0x4] sm:$0x1]
        %v8747 = vld [vmem:[%s8574 + $0x8] sm:$0xf]
        %v8748 = vld [vmem:[%s8574 + $0xc] sm:$0x1]
        %v8749 = vld [vmem:[%s8574 + $0x10] sm:$0xf]
        %v8750 = vld [vmem:[%s8574 + $0x14] sm:$0x1]
        %v8751 = vld [vmem:[%s8574 + $0x18] sm:$0xf]
        %v8752 = vld [vmem:[%s8574 + $0x1c] sm:$0x1]
        %v8753 = vld [vmem:[%s8574 + $0x20] sm:$0xf]
        %v8754 = vld [vmem:[%s8574 + $0x24] sm:$0x1]
        %v8755 = vld [vmem:[%s8574 + $0x28] sm:$0xf]
        %v8756 = vld [vmem:[%s8574 + $0x2c] sm:$0x1]
        %v8757 = vld [vmem:[%s8574 + $0x30] sm:$0xf]
        %v8758 = vld [vmem:[%s8574 + $0x34] sm:$0x1]
        %v8759 = vld [vmem:[%s8574 + $0x38] sm:$0xf]
        %v8760 = vld [vmem:[%s8574 + $0x3c] sm:$0x1]
        %v8762 = vshrl.u32 %v8745, 16
        %v8764 = vrot.slane %v8762, 4
        %v8765 = vshll.u32 %v8745, 16
        %v8767 = vrot.slane %v8765, 5
        %v8768 = vor.u32 %v8764, %v8767
        %v8769 = vrot.slane %v8768, 4
        %v8771 = vshll.u32 %v8746, 16
        %v8773 = vrot.slane %v8771, 5
        %v8774 = vsel %vm279, %v8769, %v8773
        %v8776 = vshrl.u32 %v8747, 16
        %v8778 = vrot.slane %v8776, 4
        %v8779 = vshll.u32 %v8747, 16
        %v8781 = vrot.slane %v8779, 5
        %v8782 = vor.u32 %v8778, %v8781
        %v8783 = vrot.slane %v8782, 4
        %v8785 = vshll.u32 %v8748, 16
        %v8787 = vrot.slane %v8785, 5
        %v8788 = vsel %vm279, %v8783, %v8787
        %v8790 = vshrl.u32 %v8749, 16
        %v8792 = vrot.slane %v8790, 4
        %v8793 = vshll.u32 %v8749, 16
        %v8795 = vrot.slane %v8793, 5
        %v8796 = vor.u32 %v8792, %v8795
        %v8797 = vrot.slane %v8796, 4
        %v8799 = vshll.u32 %v8750, 16
        %v8801 = vrot.slane %v8799, 5
        %v8802 = vsel %vm279, %v8797, %v8801
        %v8804 = vshrl.u32 %v8751, 16
        %v8806 = vrot.slane %v8804, 4
        %v8807 = vshll.u32 %v8751, 16
        %v8809 = vrot.slane %v8807, 5
        %v8810 = vor.u32 %v8806, %v8809
        %v8811 = vrot.slane %v8810, 4
        %v8813 = vshll.u32 %v8752, 16
        %v8815 = vrot.slane %v8813, 5
        %v8816 = vsel %vm279, %v8811, %v8815
        %v8818 = vshrl.u32 %v8753, 16
        %v8820 = vrot.slane %v8818, 4
        %v8821 = vshll.u32 %v8753, 16
        %v8823 = vrot.slane %v8821, 5
        %v8824 = vor.u32 %v8820, %v8823
        %v8825 = vrot.slane %v8824, 4
        %v8827 = vshll.u32 %v8754, 16
        %v8829 = vrot.slane %v8827, 5
        %v8830 = vsel %vm279, %v8825, %v8829
        %v8832 = vshrl.u32 %v8755, 16
        %v8834 = vrot.slane %v8832, 4
        %v8835 = vshll.u32 %v8755, 16
        %v8837 = vrot.slane %v8835, 5
        %v8838 = vor.u32 %v8834, %v8837
        %v8839 = vrot.slane %v8838, 4
        %v8841 = vshll.u32 %v8756, 16
        %v8843 = vrot.slane %v8841, 5
        %v8844 = vsel %vm279, %v8839, %v8843
        %v8846 = vshrl.u32 %v8757, 16
        %v8848 = vrot.slane %v8846, 4
        %v8849 = vshll.u32 %v8757, 16
        %v8851 = vrot.slane %v8849, 5
        %v8852 = vor.u32 %v8848, %v8851
        %v8853 = vrot.slane %v8852, 4
        %v8855 = vshll.u32 %v8758, 16
        %v8857 = vrot.slane %v8855, 5
        %v8858 = vsel %vm279, %v8853, %v8857
        %v8860 = vshrl.u32 %v8759, 16
        %v8862 = vrot.slane %v8860, 4
        %v8863 = vshll.u32 %v8759, 16
        %v8865 = vrot.slane %v8863, 5
        %v8866 = vor.u32 %v8862, %v8865
        %v8867 = vrot.slane %v8866, 4
        %v8869 = vshll.u32 %v8760, 16
        %v8871 = vrot.slane %v8869, 5
        %v8872 = vsel %vm279, %v8867, %v8871
        %s8873 = scalar_lea.vmem [#allocation3], 1024
        %v8874 = vld [vmem:[%s8873] sm:$0xf]
        %v8875 = vld [vmem:[%s8873 + $0x4] sm:$0xf]
        %v8876 = vld [vmem:[%s8873 + $0x8] sm:$0xf]
        %v8877 = vld [vmem:[%s8873 + $0xc] sm:$0xf]
        %v8878 = vld [vmem:[%s8873 + $0x10] sm:$0xf]
        %v8879 = vld [vmem:[%s8873 + $0x14] sm:$0xf]
        %v8880 = vld [vmem:[%s8873 + $0x18] sm:$0xf]
        %v8881 = vld [vmem:[%s8873 + $0x1c] sm:$0xf]
        %v8882 = vld [vmem:[%s8873 + $0x20] sm:$0xf]
        %v8883 = vld [vmem:[%s8873 + $0x24] sm:$0xf]
        %v8884 = vld [vmem:[%s8873 + $0x28] sm:$0xf]
        %v8885 = vld [vmem:[%s8873 + $0x2c] sm:$0xf]
        %v8886 = vld [vmem:[%s8873 + $0x30] sm:$0xf]
        %v8887 = vld [vmem:[%s8873 + $0x34] sm:$0xf]
        %v8888 = vld [vmem:[%s8873 + $0x38] sm:$0xf]
        %v8889 = vld [vmem:[%s8873 + $0x3c] sm:$0xf]
        %v8890 = vunpack.c.l.b16 %v8774
        %v8891 = vunpack.c.l.b16 %v8788
        %v8892 = vunpack.c.l.b16 %v8802
        %v8893 = vunpack.c.l.b16 %v8816
        %v8894 = vunpack.c.l.b16 %v8830
        %v8895 = vunpack.c.l.b16 %v8844
        %v8896 = vunpack.c.l.b16 %v8858
        %v8897 = vunpack.c.l.b16 %v8872
        %v8898 = vpack.c.b16 %v8891, %v8890
        %v8899 = vpack.c.b16 %v8893, %v8892
        %v8900 = vpack.c.b16 %v8895, %v8894
        %v8901 = vpack.c.b16 %v8897, %v8896
        %v8922 = vunpack.c.l.b16 %v8874
        %v8923 = vunpack.c.l.b16 %v8875
        %v8924 = vunpack.c.l.b16 %v8876
        %v8925 = vunpack.c.l.b16 %v8877
        %v8926 = vunpack.c.l.b16 %v8878
        %v8927 = vunpack.c.l.b16 %v8879
        %v8928 = vunpack.c.l.b16 %v8880
        %v8929 = vunpack.c.l.b16 %v8881
        %v8930 = vunpack.c.l.b16 %v8882
        %v8931 = vunpack.c.l.b16 %v8883
        %v8932 = vunpack.c.l.b16 %v8884
        %v8933 = vunpack.c.l.b16 %v8885
        %v8934 = vunpack.c.l.b16 %v8886
        %v8935 = vunpack.c.l.b16 %v8887
        %v8936 = vunpack.c.l.b16 %v8888
        %v8937 = vunpack.c.l.b16 %v8889
        %v8938 = vpack.c.b16 %v8923, %v8922
        %v8939 = vpack.c.b16 %v8925, %v8924
        %v8940 = vpack.c.b16 %v8927, %v8926
        %v8941 = vpack.c.b16 %v8929, %v8928
        %v8942 = vpack.c.b16 %v8931, %v8930
        %v8943 = vpack.c.b16 %v8933, %v8932
        %v8944 = vpack.c.b16 %v8935, %v8934
        %v8945 = vpack.c.b16 %v8937, %v8936
        %8954 = vmatprep.subr.bf16.mxu0 0
        %8955 = vmatpush1.bf16.msra.mxu0 %v8945
        %8956 = vmatprep.subr.bf16.mxu0 0
        %8957 = vmatpush1.bf16.msra.mxu0 %v8944
        %8958 = vmatprep.subr.bf16.mxu0 0
        %8959 = vmatpush1.bf16.msra.mxu0 %v8943
        %8960 = vmatprep.subr.bf16.mxu0 0
        %8961 = vmatpush1.bf16.msra.mxu0 %v8942
        %8962 = vmatprep.subr.bf16.mxu0 0
        %8963 = vmatpush1.bf16.msra.mxu0 %v8941
        %8964 = vmatprep.subr.bf16.mxu0 0
        %8965 = vmatpush1.bf16.msra.mxu0 %v8940
        %8966 = vmatprep.subr.bf16.mxu0 0
        %8967 = vmatpush1.bf16.msra.mxu0 %v8939
        %8968 = vmatprep.subr.bf16.mxu0 0
        %8969 = vmatpush1.bf16.msra.mxu0 %v8938
        %8970 = vmatprep.subr.bf16.mxu0 0
        %8971 = vmatpush2.bf16.msra.mxu0 0
        %8972 = vmatprep.subr.bf16.mxu0 0
        %8973 = vmatpush2.bf16.msra.mxu0 0
        %8974 = vmatprep.subr.bf16.mxu0 0
        %8975 = vmatpush2.bf16.msra.mxu0 0
        %8976 = vmatprep.subr.bf16.mxu0 0
        %8977 = vmatpush2.bf16.msra.mxu0 0
        %8978 = vmatprep.subr.bf16.mxu0 0
        %8979 = vmatpush2.bf16.msra.mxu0 0
        %8980 = vmatprep.subr.bf16.mxu0 0
        %8981 = vmatpush2.bf16.msra.mxu0 0
        %8982 = vmatprep.subr.bf16.mxu0 0
        %8983 = vmatpush2.bf16.msra.mxu0 0
        %8984 = vmatprep.subr.bf16.mxu0 0
        %8985 = vmatpush2.bf16.msra.mxu0 0
        %8986 = vmatprep.mubr.bf16.mxu0 0
        %8987 = vmatmul.mubr.bf16.gmra.mxu0 %v8898
        %v8988 = vpop.f32.mrf.mxu0
        %v8989 = vadd.f32 0.0, %v8988
        %v8990 = vpop.f32.mrf.mxu0
        %v8991 = vpop.f32.mrf.mxu0
        %v8992 = vadd.f32 0.0, %v8991
        %v8993 = vpop.f32.mrf.mxu0
        %8994 = vmatprep.mubr.bf16.mxu0 0
        %8995 = vmatmul.mubr.bf16.gmra.mxu0 %v8899
        %v8996 = vpop.f32.mrf.mxu0
        %v8997 = vadd.f32 0.0, %v8996
        %v8998 = vpop.f32.mrf.mxu0
        %v8999 = vpop.f32.mrf.mxu0
        %v9000 = vadd.f32 0.0, %v8999
        %v9001 = vpop.f32.mrf.mxu0
        %9002 = vmatprep.mubr.bf16.mxu0 0
        %9003 = vmatmul.mubr.bf16.gmra.mxu0 %v8900
        %v9004 = vpop.f32.mrf.mxu0
        %v9005 = vadd.f32 0.0, %v9004
        %v9006 = vpop.f32.mrf.mxu0
        %v9007 = vpop.f32.mrf.mxu0
        %v9008 = vadd.f32 0.0, %v9007
        %v9009 = vpop.f32.mrf.mxu0
        %9010 = vmatprep.mubr.bf16.mxu0 0
        %9011 = vmatmul.mubr.bf16.gmra.mxu0 %v8901
        %v9012 = vpop.f32.mrf.mxu0
        %v9013 = vadd.f32 0.0, %v9012
        %v9014 = vpop.f32.mrf.mxu0
        %v9015 = vpop.f32.mrf.mxu0
        %v9016 = vadd.f32 0.0, %v9015
        %v9017 = vpop.f32.mrf.mxu0
        %9018 = vdwg.mxu0
        %v9019 = vadd.f32 %v8737, %v8989
        %v9020 = vadd.f32 %v8738, %v8992
        %v9021 = vadd.f32 %v8739, %v8997
        %v9022 = vadd.f32 %v8740, %v9000
        %v9023 = vadd.f32 %v8741, %v9005
        %v9024 = vadd.f32 %v8742, %v9008
        %v9025 = vadd.f32 %v8743, %v9013
        %v9026 = vadd.f32 %v8744, %v9016
        %v9027 = vld [vmem:[%s8574] sm:$0xe]
        %v9028 = vld [vmem:[%s8574 + $0x8] sm:$0xe]
        %v9029 = vld [vmem:[%s8574 + $0x10] sm:$0xe]
        %v9030 = vld [vmem:[%s8574 + $0x18] sm:$0xe]
        %v9031 = vld [vmem:[%s8574 + $0x20] sm:$0xe]
        %v9032 = vld [vmem:[%s8574 + $0x28] sm:$0xe]
        %v9033 = vld [vmem:[%s8574 + $0x30] sm:$0xe]
        %v9034 = vld [vmem:[%s8574 + $0x38] sm:$0xe]
        %v9051 = vrot.slane %v9027, 5
        %v9052 = vrot.slane %v9051, 4
        %v9053 = vrot.slane %v8746, 5
        %v9054 = vsel %vm1309, %v9052, %v9053
        %v9055 = vrot.slane %v9028, 5
        %v9056 = vrot.slane %v9055, 4
        %v9057 = vrot.slane %v8748, 5
        %v9058 = vsel %vm1309, %v9056, %v9057
        %v9059 = vrot.slane %v9029, 5
        %v9060 = vrot.slane %v9059, 4
        %v9061 = vrot.slane %v8750, 5
        %v9062 = vsel %vm1309, %v9060, %v9061
        %v9063 = vrot.slane %v9030, 5
        %v9064 = vrot.slane %v9063, 4
        %v9065 = vrot.slane %v8752, 5
        %v9066 = vsel %vm1309, %v9064, %v9065
        %v9067 = vrot.slane %v9031, 5
        %v9068 = vrot.slane %v9067, 4
        %v9069 = vrot.slane %v8754, 5
        %v9070 = vsel %vm1309, %v9068, %v9069
        %v9071 = vrot.slane %v9032, 5
        %v9072 = vrot.slane %v9071, 4
        %v9073 = vrot.slane %v8756, 5
        %v9074 = vsel %vm1309, %v9072, %v9073
        %v9075 = vrot.slane %v9033, 5
        %v9076 = vrot.slane %v9075, 4
        %v9077 = vrot.slane %v8758, 5
        %v9078 = vsel %vm1309, %v9076, %v9077
        %v9079 = vrot.slane %v9034, 5
        %v9080 = vrot.slane %v9079, 4
        %v9081 = vrot.slane %v8760, 5
        %v9082 = vsel %vm1309, %v9080, %v9081
        %s9083 = scalar_lea.vmem [#allocation3], 1088
        %v9084 = vld [vmem:[%s9083] sm:$0xf]
        %v9085 = vld [vmem:[%s9083 + $0x4] sm:$0xf]
        %v9086 = vld [vmem:[%s9083 + $0x8] sm:$0xf]
        %v9087 = vld [vmem:[%s9083 + $0xc] sm:$0xf]
        %v9088 = vld [vmem:[%s9083 + $0x10] sm:$0xf]
        %v9089 = vld [vmem:[%s9083 + $0x14] sm:$0xf]
        %v9090 = vld [vmem:[%s9083 + $0x18] sm:$0xf]
        %v9091 = vld [vmem:[%s9083 + $0x1c] sm:$0xf]
        %v9092 = vld [vmem:[%s9083 + $0x20] sm:$0xf]
        %v9093 = vld [vmem:[%s9083 + $0x24] sm:$0xf]
        %v9094 = vld [vmem:[%s9083 + $0x28] sm:$0xf]
        %v9095 = vld [vmem:[%s9083 + $0x2c] sm:$0xf]
        %v9096 = vld [vmem:[%s9083 + $0x30] sm:$0xf]
        %v9097 = vld [vmem:[%s9083 + $0x34] sm:$0xf]
        %v9098 = vld [vmem:[%s9083 + $0x38] sm:$0xf]
        %v9099 = vld [vmem:[%s9083 + $0x3c] sm:$0xf]
        %v9100 = vunpack.c.l.b16 %v9054
        %v9101 = vunpack.c.l.b16 %v9058
        %v9102 = vunpack.c.l.b16 %v9062
        %v9103 = vunpack.c.l.b16 %v9066
        %v9104 = vunpack.c.l.b16 %v9070
        %v9105 = vunpack.c.l.b16 %v9074
        %v9106 = vunpack.c.l.b16 %v9078
        %v9107 = vunpack.c.l.b16 %v9082
        %v9108 = vpack.c.b16 %v9101, %v9100
        %v9109 = vpack.c.b16 %v9103, %v9102
        %v9110 = vpack.c.b16 %v9105, %v9104
        %v9111 = vpack.c.b16 %v9107, %v9106
        %v9132 = vunpack.c.l.b16 %v9084
        %v9133 = vunpack.c.l.b16 %v9085
        %v9134 = vunpack.c.l.b16 %v9086
        %v9135 = vunpack.c.l.b16 %v9087
        %v9136 = vunpack.c.l.b16 %v9088
        %v9137 = vunpack.c.l.b16 %v9089
        %v9138 = vunpack.c.l.b16 %v9090
        %v9139 = vunpack.c.l.b16 %v9091
        %v9140 = vunpack.c.l.b16 %v9092
        %v9141 = vunpack.c.l.b16 %v9093
        %v9142 = vunpack.c.l.b16 %v9094
        %v9143 = vunpack.c.l.b16 %v9095
        %v9144 = vunpack.c.l.b16 %v9096
        %v9145 = vunpack.c.l.b16 %v9097
        %v9146 = vunpack.c.l.b16 %v9098
        %v9147 = vunpack.c.l.b16 %v9099
        %v9148 = vpack.c.b16 %v9133, %v9132
        %v9149 = vpack.c.b16 %v9135, %v9134
        %v9150 = vpack.c.b16 %v9137, %v9136
        %v9151 = vpack.c.b16 %v9139, %v9138
        %v9152 = vpack.c.b16 %v9141, %v9140
        %v9153 = vpack.c.b16 %v9143, %v9142
        %v9154 = vpack.c.b16 %v9145, %v9144
        %v9155 = vpack.c.b16 %v9147, %v9146
        %9164 = vmatprep.subr.bf16.mxu0 0
        %9165 = vmatpush1.bf16.msra.mxu0 %v9155
        %9166 = vmatprep.subr.bf16.mxu0 0
        %9167 = vmatpush1.bf16.msra.mxu0 %v9154
        %9168 = vmatprep.subr.bf16.mxu0 0
        %9169 = vmatpush1.bf16.msra.mxu0 %v9153
        %9170 = vmatprep.subr.bf16.mxu0 0
        %9171 = vmatpush1.bf16.msra.mxu0 %v9152
        %9172 = vmatprep.subr.bf16.mxu0 0
        %9173 = vmatpush1.bf16.msra.mxu0 %v9151
        %9174 = vmatprep.subr.bf16.mxu0 0
        %9175 = vmatpush1.bf16.msra.mxu0 %v9150
        %9176 = vmatprep.subr.bf16.mxu0 0
        %9177 = vmatpush1.bf16.msra.mxu0 %v9149
        %9178 = vmatprep.subr.bf16.mxu0 0
        %9179 = vmatpush1.bf16.msra.mxu0 %v9148
        %9180 = vmatprep.subr.bf16.mxu0 0
        %9181 = vmatpush2.bf16.msra.mxu0 0
        %9182 = vmatprep.subr.bf16.mxu0 0
        %9183 = vmatpush2.bf16.msra.mxu0 0
        %9184 = vmatprep.subr.bf16.mxu0 0
        %9185 = vmatpush2.bf16.msra.mxu0 0
        %9186 = vmatprep.subr.bf16.mxu0 0
        %9187 = vmatpush2.bf16.msra.mxu0 0
        %9188 = vmatprep.subr.bf16.mxu0 0
        %9189 = vmatpush2.bf16.msra.mxu0 0
        %9190 = vmatprep.subr.bf16.mxu0 0
        %9191 = vmatpush2.bf16.msra.mxu0 0
        %9192 = vmatprep.subr.bf16.mxu0 0
        %9193 = vmatpush2.bf16.msra.mxu0 0
        %9194 = vmatprep.subr.bf16.mxu0 0
        %9195 = vmatpush2.bf16.msra.mxu0 0
        %9196 = vmatprep.mubr.bf16.mxu0 0
        %9197 = vmatmul.mubr.bf16.gmra.mxu0 %v9108
        %v9198 = vpop.f32.mrf.mxu0
        %v9199 = vadd.f32 0.0, %v9198
        %v9200 = vpop.f32.mrf.mxu0
        %v9201 = vpop.f32.mrf.mxu0
        %v9202 = vadd.f32 0.0, %v9201
        %v9203 = vpop.f32.mrf.mxu0
        %9204 = vmatprep.mubr.bf16.mxu0 0
        %9205 = vmatmul.mubr.bf16.gmra.mxu0 %v9109
        %v9206 = vpop.f32.mrf.mxu0
        %v9207 = vadd.f32 0.0, %v9206
        %v9208 = vpop.f32.mrf.mxu0
        %v9209 = vpop.f32.mrf.mxu0
        %v9210 = vadd.f32 0.0, %v9209
        %v9211 = vpop.f32.mrf.mxu0
        %9212 = vmatprep.mubr.bf16.mxu0 0
        %9213 = vmatmul.mubr.bf16.gmra.mxu0 %v9110
        %v9214 = vpop.f32.mrf.mxu0
        %v9215 = vadd.f32 0.0, %v9214
        %v9216 = vpop.f32.mrf.mxu0
        %v9217 = vpop.f32.mrf.mxu0
        %v9218 = vadd.f32 0.0, %v9217
        %v9219 = vpop.f32.mrf.mxu0
        %9220 = vmatprep.mubr.bf16.mxu0 0
        %9221 = vmatmul.mubr.bf16.gmra.mxu0 %v9111
        %v9222 = vpop.f32.mrf.mxu0
        %v9223 = vadd.f32 0.0, %v9222
        %v9224 = vpop.f32.mrf.mxu0
        %v9225 = vpop.f32.mrf.mxu0
        %v9226 = vadd.f32 0.0, %v9225
        %v9227 = vpop.f32.mrf.mxu0
        %9228 = vdwg.mxu0
        %v9229 = vadd.f32 %v9019, %v9199
        %v9230 = vadd.f32 %v9020, %v9202
        %v9231 = vadd.f32 %v9021, %v9207
        %v9232 = vadd.f32 %v9022, %v9210
        %v9233 = vadd.f32 %v9023, %v9215
        %v9234 = vadd.f32 %v9024, %v9218
        %v9235 = vadd.f32 %v9025, %v9223
        %v9236 = vadd.f32 %v9026, %v9226
        %v9237 = vlaneseq
        %v9238 = vshrl.u32 %v9237, 7
        %v9239 = vsub.s32 0, %v9238
        %v9240 = vrot.slane %v7272, %v9239
        %v9241 = vmul.f32 %v9229, %v9240
        %v9242 = vmul.f32 %v9230, %v9240
        %v9243 = vmul.f32 %v9231, %v9240
        %v9244 = vmul.f32 %v9232, %v9240
        %v9245 = vmul.f32 %v9233, %v9240
        %v9246 = vmul.f32 %v9234, %v9240
        %v9247 = vmul.f32 %v9235, %v9240
        %v9248 = vmul.f32 %v9236, %v9240
        %v9249 = vlaneseq
        %v9250 = vshrl.u32 %v9249, 7
        %v9251 = vsub.s32 0, %v9250
        %v9252 = vrot.slane %v7273, %v9251
        %v9253 = vadd.f32 %v9241, %v9252
        %v9254 = vadd.f32 %v9242, %v9252
        %v9255 = vadd.f32 %v9243, %v9252
        %v9256 = vadd.f32 %v9244, %v9252
        %v9257 = vadd.f32 %v9245, %v9252
        %v9258 = vadd.f32 %v9246, %v9252
        %v9259 = vadd.f32 %v9247, %v9252
        %v9260 = vadd.f32 %v9248, %v9252
        %v9261 = vmax.f32 %v9253, 0.0
        %v9262 = vmax.f32 %v9254, 0.0
        %v9263 = vmax.f32 %v9255, 0.0
        %v9264 = vmax.f32 %v9256, 0.0
        %v9265 = vmax.f32 %v9257, 0.0
        %v9266 = vmax.f32 %v9258, 0.0
        %v9267 = vmax.f32 %v9259, 0.0
        %v9268 = vmax.f32 %v9260, 0.0
        %v9269 = vpack.c.bf16 %v9261, %v9261
        %v9270 = vpack.c.bf16 %v9262, %v9262
        %v9271 = vpack.c.bf16 %v9263, %v9263
        %v9272 = vpack.c.bf16 %v9264, %v9264
        %v9273 = vpack.c.bf16 %v9265, %v9265
        %v9274 = vpack.c.bf16 %v9266, %v9266
        %v9275 = vpack.c.bf16 %v9267, %v9267
        %v9276 = vpack.c.bf16 %v9268, %v9268
        %v9285 = vunpack.c.l.b16 %v9269
        %v9286 = vunpack.c.l.b16 %v9270
        %v9287 = vunpack.c.l.b16 %v9271
        %v9288 = vunpack.c.l.b16 %v9272
        %v9289 = vunpack.c.l.b16 %v9273
        %v9290 = vunpack.c.l.b16 %v9274
        %v9291 = vunpack.c.l.b16 %v9275
        %v9292 = vunpack.c.l.b16 %v9276
        %v9293 = vpack.c.b16 %v9285, %v9285
        %v9294 = vpack.c.b16 %v9286, %v9286
        %v9295 = vpack.c.b16 %v9287, %v9287
        %v9296 = vpack.c.b16 %v9288, %v9288
        %v9297 = vpack.c.b16 %v9289, %v9289
        %v9298 = vpack.c.b16 %v9290, %v9290
        %v9299 = vpack.c.b16 %v9291, %v9291
        %v9300 = vpack.c.b16 %v9292, %v9292
        %v9302 = vshrl.u32 %v9293, 16
        %v9304 = vrot.slane %v9302, 7
        %v9305 = vshll.u32 %v9293, 16
        %v9307 = vor.u32 %v9304, %v9305
        %v9308 = vrot.slane %v9304, 4
        %v9310 = vshrl.u32 %v9294, 16
        %v9312 = vrot.slane %v9310, 7
        %v9313 = vshll.u32 %v9294, 16
        %v9315 = vor.u32 %v9312, %v9313
        %v9316 = vrot.slane %v9312, 4
        %v9318 = vshrl.u32 %v9295, 16
        %v9320 = vrot.slane %v9318, 7
        %v9321 = vshll.u32 %v9295, 16
        %v9323 = vor.u32 %v9320, %v9321
        %v9324 = vrot.slane %v9320, 4
        %v9326 = vshrl.u32 %v9296, 16
        %v9328 = vrot.slane %v9326, 7
        %v9329 = vshll.u32 %v9296, 16
        %v9331 = vor.u32 %v9328, %v9329
        %v9332 = vrot.slane %v9328, 4
        %v9334 = vshrl.u32 %v9297, 16
        %v9336 = vrot.slane %v9334, 7
        %v9337 = vshll.u32 %v9297, 16
        %v9339 = vor.u32 %v9336, %v9337
        %v9340 = vrot.slane %v9336, 4
        %v9342 = vshrl.u32 %v9298, 16
        %v9344 = vrot.slane %v9342, 7
        %v9345 = vshll.u32 %v9298, 16
        %v9347 = vor.u32 %v9344, %v9345
        %v9348 = vrot.slane %v9344, 4
        %v9350 = vshrl.u32 %v9299, 16
        %v9352 = vrot.slane %v9350, 7
        %v9353 = vshll.u32 %v9299, 16
        %v9355 = vor.u32 %v9352, %v9353
        %v9356 = vrot.slane %v9352, 4
        %v9358 = vshrl.u32 %v9300, 16
        %v9360 = vrot.slane %v9358, 7
        %v9361 = vshll.u32 %v9300, 16
        %v9363 = vor.u32 %v9360, %v9361
        %v9364 = vrot.slane %v9360, 4
        %v9381 = vsel %vm7220, %v9307, %v8082
        %9382 = vst [vmem:[%s7217] sm:$0xf] %v9381
        %v9383 = vld [vmem:[%s7217 + $0x4] sm:$0x1]
        %v9384 = vsel %vm7226, %v9308, %v9383
        %9385 = vst [vmem:[%s7217 + $0x4] sm:$0x1] %v9384
        %v9386 = vld [vmem:[%s7217 + $0x8] sm:$0xf]
        %v9387 = vsel %vm7220, %v9315, %v9386
        %9388 = vst [vmem:[%s7217 + $0x8] sm:$0xf] %v9387
        %v9389 = vld [vmem:[%s7217 + $0xc] sm:$0x1]
        %v9390 = vsel %vm7226, %v9316, %v9389
        %9391 = vst [vmem:[%s7217 + $0xc] sm:$0x1] %v9390
        %v9392 = vld [vmem:[%s7217 + $0x10] sm:$0xf]
        %v9393 = vsel %vm7220, %v9323, %v9392
        %9394 = vst [vmem:[%s7217 + $0x10] sm:$0xf] %v9393
        %v9395 = vld [vmem:[%s7217 + $0x14] sm:$0x1]
        %v9396 = vsel %vm7226, %v9324, %v9395
        %9397 = vst [vmem:[%s7217 + $0x14] sm:$0x1] %v9396
        %v9398 = vld [vmem:[%s7217 + $0x18] sm:$0xf]
        %v9399 = vsel %vm7220, %v9331, %v9398
        %9400 = vst [vmem:[%s7217 + $0x18] sm:$0xf] %v9399
        %v9401 = vld [vmem:[%s7217 + $0x1c] sm:$0x1]
        %v9402 = vsel %vm7226, %v9332, %v9401
        %9403 = vst [vmem:[%s7217 + $0x1c] sm:$0x1] %v9402
        %v9404 = vld [vmem:[%s7217 + $0x20] sm:$0xf]
        %v9405 = vsel %vm7220, %v9339, %v9404
        %9406 = vst [vmem:[%s7217 + $0x20] sm:$0xf] %v9405
        %v9407 = vld [vmem:[%s7217 + $0x24] sm:$0x1]
        %v9408 = vsel %vm7226, %v9340, %v9407
        %9409 = vst [vmem:[%s7217 + $0x24] sm:$0x1] %v9408
        %v9410 = vld [vmem:[%s7217 + $0x28] sm:$0xf]
        %v9411 = vsel %vm7220, %v9347, %v9410
        %9412 = vst [vmem:[%s7217 + $0x28] sm:$0xf] %v9411
        %v9413 = vld [vmem:[%s7217 + $0x2c] sm:$0x1]
        %v9414 = vsel %vm7226, %v9348, %v9413
        %9415 = vst [vmem:[%s7217 + $0x2c] sm:$0x1] %v9414
        %v9416 = vld [vmem:[%s7217 + $0x30] sm:$0xf]
        %v9417 = vsel %vm7220, %v9355, %v9416
        %9418 = vst [vmem:[%s7217 + $0x30] sm:$0xf] %v9417
        %v9419 = vld [vmem:[%s7217 + $0x34] sm:$0x1]
        %v9420 = vsel %vm7226, %v9356, %v9419
        %9421 = vst [vmem:[%s7217 + $0x34] sm:$0x1] %v9420
        %v9422 = vld [vmem:[%s7217 + $0x38] sm:$0xf]
        %v9423 = vsel %vm7220, %v9363, %v9422
        %9424 = vst [vmem:[%s7217 + $0x38] sm:$0xf] %v9423
        %v9425 = vld [vmem:[%s7217 + $0x3c] sm:$0x1]
        %v9426 = vsel %vm7226, %v9364, %v9425
        %9427 = vst [vmem:[%s7217 + $0x3c] sm:$0x1] %v9426
        %v9428 = vld [vmem:[%s2 + $0x4] sm:$0x1]
        %v9429 = vld [vmem:[%s2 + $0x5] sm:$0x1]
        %v9430 = vld [vmem:[#allocation2] sm:$0xf]
        %v9431 = vld [vmem:[#allocation2 + $0x8] sm:$0xf]
        %v9432 = vld [vmem:[#allocation2 + $0x10] sm:$0xf]
        %v9433 = vld [vmem:[#allocation2 + $0x18] sm:$0xf]
        %v9434 = vld [vmem:[#allocation2 + $0x20] sm:$0xf]
        %v9435 = vld [vmem:[#allocation2 + $0x28] sm:$0xf]
        %v9436 = vld [vmem:[#allocation2 + $0x30] sm:$0xf]
        %v9437 = vld [vmem:[#allocation2 + $0x38] sm:$0xf]
        %s9438 = scalar_lea.vmem [#allocation3], 1152
        %v9439 = vld [vmem:[%s9438] sm:$0xf]
        %v9440 = vld [vmem:[%s9438 + $0x4] sm:$0xf]
        %v9441 = vld [vmem:[%s9438 + $0x8] sm:$0xf]
        %v9442 = vld [vmem:[%s9438 + $0xc] sm:$0xf]
        %v9443 = vld [vmem:[%s9438 + $0x10] sm:$0xf]
        %v9444 = vld [vmem:[%s9438 + $0x14] sm:$0xf]
        %v9445 = vld [vmem:[%s9438 + $0x18] sm:$0xf]
        %v9446 = vld [vmem:[%s9438 + $0x1c] sm:$0xf]
        %v9447 = vld [vmem:[%s9438 + $0x20] sm:$0xf]
        %v9448 = vld [vmem:[%s9438 + $0x24] sm:$0xf]
        %v9449 = vld [vmem:[%s9438 + $0x28] sm:$0xf]
        %v9450 = vld [vmem:[%s9438 + $0x2c] sm:$0xf]
        %v9451 = vld [vmem:[%s9438 + $0x30] sm:$0xf]
        %v9452 = vld [vmem:[%s9438 + $0x34] sm:$0xf]
        %v9453 = vld [vmem:[%s9438 + $0x38] sm:$0xf]
        %v9454 = vld [vmem:[%s9438 + $0x3c] sm:$0xf]
        %v9455 = vld [vmem:[#allocation2 + $0x4] sm:$0x1]
        %v9456 = vld [vmem:[#allocation2 + $0xc] sm:$0x1]
        %v9457 = vld [vmem:[#allocation2 + $0x14] sm:$0x1]
        %v9458 = vld [vmem:[#allocation2 + $0x1c] sm:$0x1]
        %v9459 = vld [vmem:[#allocation2 + $0x24] sm:$0x1]
        %v9460 = vld [vmem:[#allocation2 + $0x2c] sm:$0x1]
        %v9461 = vld [vmem:[#allocation2 + $0x34] sm:$0x1]
        %v9462 = vld [vmem:[#allocation2 + $0x3c] sm:$0x1]
        %v9464 = vshrl.u32 %v9430, 16
        %v9466 = vrot.slane %v9464, 4
        %v9467 = vshll.u32 %v9430, 16
        %v9469 = vrot.slane %v9467, 5
        %v9470 = vor.u32 %v9466, %v9469
        %v9471 = vrot.slane %v9470, 4
        %v9473 = vshll.u32 %v9455, 16
        %v9475 = vrot.slane %v9473, 5
        %v9476 = vsel %vm279, %v9471, %v9475
        %v9478 = vshrl.u32 %v9431, 16
        %v9480 = vrot.slane %v9478, 4
        %v9481 = vshll.u32 %v9431, 16
        %v9483 = vrot.slane %v9481, 5
        %v9484 = vor.u32 %v9480, %v9483
        %v9485 = vrot.slane %v9484, 4
        %v9487 = vshll.u32 %v9456, 16
        %v9489 = vrot.slane %v9487, 5
        %v9490 = vsel %vm279, %v9485, %v9489
        %v9492 = vshrl.u32 %v9432, 16
        %v9494 = vrot.slane %v9492, 4
        %v9495 = vshll.u32 %v9432, 16
        %v9497 = vrot.slane %v9495, 5
        %v9498 = vor.u32 %v9494, %v9497
        %v9499 = vrot.slane %v9498, 4
        %v9501 = vshll.u32 %v9457, 16
        %v9503 = vrot.slane %v9501, 5
        %v9504 = vsel %vm279, %v9499, %v9503
        %v9506 = vshrl.u32 %v9433, 16
        %v9508 = vrot.slane %v9506, 4
        %v9509 = vshll.u32 %v9433, 16
        %v9511 = vrot.slane %v9509, 5
        %v9512 = vor.u32 %v9508, %v9511
        %v9513 = vrot.slane %v9512, 4
        %v9515 = vshll.u32 %v9458, 16
        %v9517 = vrot.slane %v9515, 5
        %v9518 = vsel %vm279, %v9513, %v9517
        %v9520 = vshrl.u32 %v9434, 16
        %v9522 = vrot.slane %v9520, 4
        %v9523 = vshll.u32 %v9434, 16
        %v9525 = vrot.slane %v9523, 5
        %v9526 = vor.u32 %v9522, %v9525
        %v9527 = vrot.slane %v9526, 4
        %v9529 = vshll.u32 %v9459, 16
        %v9531 = vrot.slane %v9529, 5
        %v9532 = vsel %vm279, %v9527, %v9531
        %v9534 = vshrl.u32 %v9435, 16
        %v9536 = vrot.slane %v9534, 4
        %v9537 = vshll.u32 %v9435, 16
        %v9539 = vrot.slane %v9537, 5
        %v9540 = vor.u32 %v9536, %v9539
        %v9541 = vrot.slane %v9540, 4
        %v9543 = vshll.u32 %v9460, 16
        %v9545 = vrot.slane %v9543, 5
        %v9546 = vsel %vm279, %v9541, %v9545
        %v9548 = vshrl.u32 %v9436, 16
        %v9550 = vrot.slane %v9548, 4
        %v9551 = vshll.u32 %v9436, 16
        %v9553 = vrot.slane %v9551, 5
        %v9554 = vor.u32 %v9550, %v9553
        %v9555 = vrot.slane %v9554, 4
        %v9557 = vshll.u32 %v9461, 16
        %v9559 = vrot.slane %v9557, 5
        %v9560 = vsel %vm279, %v9555, %v9559
        %v9562 = vshrl.u32 %v9437, 16
        %v9564 = vrot.slane %v9562, 4
        %v9565 = vshll.u32 %v9437, 16
        %v9567 = vrot.slane %v9565, 5
        %v9568 = vor.u32 %v9564, %v9567
        %v9569 = vrot.slane %v9568, 4
        %v9571 = vshll.u32 %v9462, 16
        %v9573 = vrot.slane %v9571, 5
        %v9574 = vsel %vm279, %v9569, %v9573
        %s9575 = scalar_lea.vmem [#allocation3], 1216
        %v9576 = vld [vmem:[%s9575] sm:$0xf]
        %v9577 = vld [vmem:[%s9575 + $0x4] sm:$0xf]
        %v9578 = vld [vmem:[%s9575 + $0x8] sm:$0xf]
        %v9579 = vld [vmem:[%s9575 + $0xc] sm:$0xf]
        %v9580 = vld [vmem:[%s9575 + $0x10] sm:$0xf]
        %v9581 = vld [vmem:[%s9575 + $0x14] sm:$0xf]
        %v9582 = vld [vmem:[%s9575 + $0x18] sm:$0xf]
        %v9583 = vld [vmem:[%s9575 + $0x1c] sm:$0xf]
        %v9584 = vld [vmem:[%s9575 + $0x20] sm:$0xf]
        %v9585 = vld [vmem:[%s9575 + $0x24] sm:$0xf]
        %v9586 = vld [vmem:[%s9575 + $0x28] sm:$0xf]
        %v9587 = vld [vmem:[%s9575 + $0x2c] sm:$0xf]
        %v9588 = vld [vmem:[%s9575 + $0x30] sm:$0xf]
        %v9589 = vld [vmem:[%s9575 + $0x34] sm:$0xf]
        %v9590 = vld [vmem:[%s9575 + $0x38] sm:$0xf]
        %v9591 = vld [vmem:[%s9575 + $0x3c] sm:$0xf]
        %v9592 = vunpack.c.l.b16 %v9476
        %v9593 = vunpack.c.l.b16 %v9490
        %v9594 = vunpack.c.l.b16 %v9504
        %v9595 = vunpack.c.l.b16 %v9518
        %v9596 = vunpack.c.l.b16 %v9532
        %v9597 = vunpack.c.l.b16 %v9546
        %v9598 = vunpack.c.l.b16 %v9560
        %v9599 = vunpack.c.l.b16 %v9574
        %v9600 = vpack.c.b16 %v9593, %v9592
        %v9601 = vpack.c.b16 %v9595, %v9594
        %v9602 = vpack.c.b16 %v9597, %v9596
        %v9603 = vpack.c.b16 %v9599, %v9598
        %v9624 = vunpack.c.l.b16 %v9576
        %v9625 = vunpack.c.l.b16 %v9577
        %v9626 = vunpack.c.l.b16 %v9578
        %v9627 = vunpack.c.l.b16 %v9579
        %v9628 = vunpack.c.l.b16 %v9580
        %v9629 = vunpack.c.l.b16 %v9581
        %v9630 = vunpack.c.l.b16 %v9582
        %v9631 = vunpack.c.l.b16 %v9583
        %v9632 = vunpack.c.l.b16 %v9584
        %v9633 = vunpack.c.l.b16 %v9585
        %v9634 = vunpack.c.l.b16 %v9586
        %v9635 = vunpack.c.l.b16 %v9587
        %v9636 = vunpack.c.l.b16 %v9588
        %v9637 = vunpack.c.l.b16 %v9589
        %v9638 = vunpack.c.l.b16 %v9590
        %v9639 = vunpack.c.l.b16 %v9591
        %v9640 = vpack.c.b16 %v9625, %v9624
        %v9641 = vpack.c.b16 %v9627, %v9626
        %v9642 = vpack.c.b16 %v9629, %v9628
        %v9643 = vpack.c.b16 %v9631, %v9630
        %v9644 = vpack.c.b16 %v9633, %v9632
        %v9645 = vpack.c.b16 %v9635, %v9634
        %v9646 = vpack.c.b16 %v9637, %v9636
        %v9647 = vpack.c.b16 %v9639, %v9638
        %9656 = vmatprep.subr.bf16.mxu0 0
        %9657 = vmatpush1.bf16.msra.mxu0 %v9647
        %9658 = vmatprep.subr.bf16.mxu0 0
        %9659 = vmatpush1.bf16.msra.mxu0 %v9646
        %9660 = vmatprep.subr.bf16.mxu0 0
        %9661 = vmatpush1.bf16.msra.mxu0 %v9645
        %9662 = vmatprep.subr.bf16.mxu0 0
        %9663 = vmatpush1.bf16.msra.mxu0 %v9644
        %9664 = vmatprep.subr.bf16.mxu0 0
        %9665 = vmatpush1.bf16.msra.mxu0 %v9643
        %9666 = vmatprep.subr.bf16.mxu0 0
        %9667 = vmatpush1.bf16.msra.mxu0 %v9642
        %9668 = vmatprep.subr.bf16.mxu0 0
        %9669 = vmatpush1.bf16.msra.mxu0 %v9641
        %9670 = vmatprep.subr.bf16.mxu0 0
        %9671 = vmatpush1.bf16.msra.mxu0 %v9640
        %9672 = vmatprep.subr.bf16.mxu0 0
        %9673 = vmatpush2.bf16.msra.mxu0 0
        %9674 = vmatprep.subr.bf16.mxu0 0
        %9675 = vmatpush2.bf16.msra.mxu0 0
        %9676 = vmatprep.subr.bf16.mxu0 0
        %9677 = vmatpush2.bf16.msra.mxu0 0
        %9678 = vmatprep.subr.bf16.mxu0 0
        %9679 = vmatpush2.bf16.msra.mxu0 0
        %9680 = vmatprep.subr.bf16.mxu0 0
        %9681 = vmatpush2.bf16.msra.mxu0 0
        %9682 = vmatprep.subr.bf16.mxu0 0
        %9683 = vmatpush2.bf16.msra.mxu0 0
        %9684 = vmatprep.subr.bf16.mxu0 0
        %9685 = vmatpush2.bf16.msra.mxu0 0
        %9686 = vmatprep.subr.bf16.mxu0 0
        %9687 = vmatpush2.bf16.msra.mxu0 0
        %9688 = vmatprep.mubr.bf16.mxu0 0
        %9689 = vmatmul.mubr.bf16.gmra.mxu0 %v9600
        %v9690 = vpop.f32.mrf.mxu0
        %v9691 = vadd.f32 0.0, %v9690
        %v9692 = vpop.f32.mrf.mxu0
        %v9693 = vpop.f32.mrf.mxu0
        %v9694 = vadd.f32 0.0, %v9693
        %v9695 = vpop.f32.mrf.mxu0
        %9696 = vmatprep.mubr.bf16.mxu0 0
        %9697 = vmatmul.mubr.bf16.gmra.mxu0 %v9601
        %v9698 = vpop.f32.mrf.mxu0
        %v9699 = vadd.f32 0.0, %v9698
        %v9700 = vpop.f32.mrf.mxu0
        %v9701 = vpop.f32.mrf.mxu0
        %v9702 = vadd.f32 0.0, %v9701
        %v9703 = vpop.f32.mrf.mxu0
        %9704 = vmatprep.mubr.bf16.mxu0 0
        %9705 = vmatmul.mubr.bf16.gmra.mxu0 %v9602
        %v9706 = vpop.f32.mrf.mxu0
        %v9707 = vadd.f32 0.0, %v9706
        %v9708 = vpop.f32.mrf.mxu0
        %v9709 = vpop.f32.mrf.mxu0
        %v9710 = vadd.f32 0.0, %v9709
        %v9711 = vpop.f32.mrf.mxu0
        %9712 = vmatprep.mubr.bf16.mxu0 0
        %9713 = vmatmul.mubr.bf16.gmra.mxu0 %v9603
        %v9714 = vpop.f32.mrf.mxu0
        %v9715 = vadd.f32 0.0, %v9714
        %v9716 = vpop.f32.mrf.mxu0
        %v9717 = vpop.f32.mrf.mxu0
        %v9718 = vadd.f32 0.0, %v9717
        %v9719 = vpop.f32.mrf.mxu0
        %9720 = vdwg.mxu0
        %v9729 = vunpack.c.l.b16 %v9430
        %v9730 = vunpack.c.l.b16 %v9431
        %v9731 = vunpack.c.l.b16 %v9432
        %v9732 = vunpack.c.l.b16 %v9433
        %v9733 = vunpack.c.l.b16 %v9434
        %v9734 = vunpack.c.l.b16 %v9435
        %v9735 = vunpack.c.l.b16 %v9436
        %v9736 = vunpack.c.l.b16 %v9437
        %v9737 = vpack.c.b16 %v9730, %v9729
        %v9738 = vpack.c.b16 %v9732, %v9731
        %v9739 = vpack.c.b16 %v9734, %v9733
        %v9740 = vpack.c.b16 %v9736, %v9735
        %v9761 = vunpack.c.l.b16 %v9439
        %v9762 = vunpack.c.l.b16 %v9440
        %v9763 = vunpack.c.l.b16 %v9441
        %v9764 = vunpack.c.l.b16 %v9442
        %v9765 = vunpack.c.l.b16 %v9443
        %v9766 = vunpack.c.l.b16 %v9444
        %v9767 = vunpack.c.l.b16 %v9445
        %v9768 = vunpack.c.l.b16 %v9446
        %v9769 = vunpack.c.l.b16 %v9447
        %v9770 = vunpack.c.l.b16 %v9448
        %v9771 = vunpack.c.l.b16 %v9449
        %v9772 = vunpack.c.l.b16 %v9450
        %v9773 = vunpack.c.l.b16 %v9451
        %v9774 = vunpack.c.l.b16 %v9452
        %v9775 = vunpack.c.l.b16 %v9453
        %v9776 = vunpack.c.l.b16 %v9454
        %v9777 = vpack.c.b16 %v9762, %v9761
        %v9778 = vpack.c.b16 %v9764, %v9763
        %v9779 = vpack.c.b16 %v9766, %v9765
        %v9780 = vpack.c.b16 %v9768, %v9767
        %v9781 = vpack.c.b16 %v9770, %v9769
        %v9782 = vpack.c.b16 %v9772, %v9771
        %v9783 = vpack.c.b16 %v9774, %v9773
        %v9784 = vpack.c.b16 %v9776, %v9775
        %9793 = vmatprep.subr.bf16.mxu0 0
        %9794 = vmatpush1.bf16.msra.mxu0 %v9784
        %9795 = vmatprep.subr.bf16.mxu0 0
        %9796 = vmatpush1.bf16.msra.mxu0 %v9783
        %9797 = vmatprep.subr.bf16.mxu0 0
        %9798 = vmatpush1.bf16.msra.mxu0 %v9782
        %9799 = vmatprep.subr.bf16.mxu0 0
        %9800 = vmatpush1.bf16.msra.mxu0 %v9781
        %9801 = vmatprep.subr.bf16.mxu0 0
        %9802 = vmatpush1.bf16.msra.mxu0 %v9780
        %9803 = vmatprep.subr.bf16.mxu0 0
        %9804 = vmatpush1.bf16.msra.mxu0 %v9779
        %9805 = vmatprep.subr.bf16.mxu0 0
        %9806 = vmatpush1.bf16.msra.mxu0 %v9778
        %9807 = vmatprep.subr.bf16.mxu0 0
        %9808 = vmatpush1.bf16.msra.mxu0 %v9777
        %9809 = vmatprep.subr.bf16.mxu0 0
        %9810 = vmatpush2.bf16.msra.mxu0 0
        %9811 = vmatprep.subr.bf16.mxu0 0
        %9812 = vmatpush2.bf16.msra.mxu0 0
        %9813 = vmatprep.subr.bf16.mxu0 0
        %9814 = vmatpush2.bf16.msra.mxu0 0
        %9815 = vmatprep.subr.bf16.mxu0 0
        %9816 = vmatpush2.bf16.msra.mxu0 0
        %9817 = vmatprep.subr.bf16.mxu0 0
        %9818 = vmatpush2.bf16.msra.mxu0 0
        %9819 = vmatprep.subr.bf16.mxu0 0
        %9820 = vmatpush2.bf16.msra.mxu0 0
        %9821 = vmatprep.subr.bf16.mxu0 0
        %9822 = vmatpush2.bf16.msra.mxu0 0
        %9823 = vmatprep.subr.bf16.mxu0 0
        %9824 = vmatpush2.bf16.msra.mxu0 0
        %9825 = vmatprep.mubr.bf16.mxu0 0
        %9826 = vmatmul.mubr.bf16.gmra.mxu0 %v9737
        %v9827 = vpop.f32.mrf.mxu0
        %v9828 = vadd.f32 %v9691, %v9827
        %v9829 = vpop.f32.mrf.mxu0
        %v9830 = vpop.f32.mrf.mxu0
        %v9831 = vadd.f32 %v9694, %v9830
        %v9832 = vpop.f32.mrf.mxu0
        %9833 = vmatprep.mubr.bf16.mxu0 0
        %9834 = vmatmul.mubr.bf16.gmra.mxu0 %v9738
        %v9835 = vpop.f32.mrf.mxu0
        %v9836 = vadd.f32 %v9699, %v9835
        %v9837 = vpop.f32.mrf.mxu0
        %v9838 = vpop.f32.mrf.mxu0
        %v9839 = vadd.f32 %v9702, %v9838
        %v9840 = vpop.f32.mrf.mxu0
        %9841 = vmatprep.mubr.bf16.mxu0 0
        %9842 = vmatmul.mubr.bf16.gmra.mxu0 %v9739
        %v9843 = vpop.f32.mrf.mxu0
        %v9844 = vadd.f32 %v9707, %v9843
        %v9845 = vpop.f32.mrf.mxu0
        %v9846 = vpop.f32.mrf.mxu0
        %v9847 = vadd.f32 %v9710, %v9846
        %v9848 = vpop.f32.mrf.mxu0
        %9849 = vmatprep.mubr.bf16.mxu0 0
        %9850 = vmatmul.mubr.bf16.gmra.mxu0 %v9740
        %v9851 = vpop.f32.mrf.mxu0
        %v9852 = vadd.f32 %v9715, %v9851
        %v9853 = vpop.f32.mrf.mxu0
        %v9854 = vpop.f32.mrf.mxu0
        %v9855 = vadd.f32 %v9718, %v9854
        %v9856 = vpop.f32.mrf.mxu0
        %9857 = vdwg.mxu0
        %v9858 = vld [vmem:[#allocation2] sm:$0xe]
        %v9859 = vld [vmem:[#allocation2 + $0x8] sm:$0xe]
        %v9860 = vld [vmem:[#allocation2 + $0x10] sm:$0xe]
        %v9861 = vld [vmem:[#allocation2 + $0x18] sm:$0xe]
        %v9862 = vld [vmem:[#allocation2 + $0x20] sm:$0xe]
        %v9863 = vld [vmem:[#allocation2 + $0x28] sm:$0xe]
        %v9864 = vld [vmem:[#allocation2 + $0x30] sm:$0xe]
        %v9865 = vld [vmem:[#allocation2 + $0x38] sm:$0xe]
        %v9882 = vrot.slane %v9858, 5
        %v9883 = vrot.slane %v9882, 4
        %v9884 = vrot.slane %v9455, 5
        %v9885 = vsel %vm1309, %v9883, %v9884
        %v9886 = vrot.slane %v9859, 5
        %v9887 = vrot.slane %v9886, 4
        %v9888 = vrot.slane %v9456, 5
        %v9889 = vsel %vm1309, %v9887, %v9888
        %v9890 = vrot.slane %v9860, 5
        %v9891 = vrot.slane %v9890, 4
        %v9892 = vrot.slane %v9457, 5
        %v9893 = vsel %vm1309, %v9891, %v9892
        %v9894 = vrot.slane %v9861, 5
        %v9895 = vrot.slane %v9894, 4
        %v9896 = vrot.slane %v9458, 5
        %v9897 = vsel %vm1309, %v9895, %v9896
        %v9898 = vrot.slane %v9862, 5
        %v9899 = vrot.slane %v9898, 4
        %v9900 = vrot.slane %v9459, 5
        %v9901 = vsel %vm1309, %v9899, %v9900
        %v9902 = vrot.slane %v9863, 5
        %v9903 = vrot.slane %v9902, 4
        %v9904 = vrot.slane %v9460, 5
        %v9905 = vsel %vm1309, %v9903, %v9904
        %v9906 = vrot.slane %v9864, 5
        %v9907 = vrot.slane %v9906, 4
        %v9908 = vrot.slane %v9461, 5
        %v9909 = vsel %vm1309, %v9907, %v9908
        %v9910 = vrot.slane %v9865, 5
        %v9911 = vrot.slane %v9910, 4
        %v9912 = vrot.slane %v9462, 5
        %v9913 = vsel %vm1309, %v9911, %v9912
        %s9914 = scalar_lea.vmem [#allocation3], 1280
        %v9915 = vld [vmem:[%s9914] sm:$0xf]
        %v9916 = vld [vmem:[%s9914 + $0x4] sm:$0xf]
        %v9917 = vld [vmem:[%s9914 + $0x8] sm:$0xf]
        %v9918 = vld [vmem:[%s9914 + $0xc] sm:$0xf]
        %v9919 = vld [vmem:[%s9914 + $0x10] sm:$0xf]
        %v9920 = vld [vmem:[%s9914 + $0x14] sm:$0xf]
        %v9921 = vld [vmem:[%s9914 + $0x18] sm:$0xf]
        %v9922 = vld [vmem:[%s9914 + $0x1c] sm:$0xf]
        %v9923 = vld [vmem:[%s9914 + $0x20] sm:$0xf]
        %v9924 = vld [vmem:[%s9914 + $0x24] sm:$0xf]
        %v9925 = vld [vmem:[%s9914 + $0x28] sm:$0xf]
        %v9926 = vld [vmem:[%s9914 + $0x2c] sm:$0xf]
        %v9927 = vld [vmem:[%s9914 + $0x30] sm:$0xf]
        %v9928 = vld [vmem:[%s9914 + $0x34] sm:$0xf]
        %v9929 = vld [vmem:[%s9914 + $0x38] sm:$0xf]
        %v9930 = vld [vmem:[%s9914 + $0x3c] sm:$0xf]
        %v9931 = vunpack.c.l.b16 %v9885
        %v9932 = vunpack.c.l.b16 %v9889
        %v9933 = vunpack.c.l.b16 %v9893
        %v9934 = vunpack.c.l.b16 %v9897
        %v9935 = vunpack.c.l.b16 %v9901
        %v9936 = vunpack.c.l.b16 %v9905
        %v9937 = vunpack.c.l.b16 %v9909
        %v9938 = vunpack.c.l.b16 %v9913
        %v9939 = vpack.c.b16 %v9932, %v9931
        %v9940 = vpack.c.b16 %v9934, %v9933
        %v9941 = vpack.c.b16 %v9936, %v9935
        %v9942 = vpack.c.b16 %v9938, %v9937
        %v9963 = vunpack.c.l.b16 %v9915
        %v9964 = vunpack.c.l.b16 %v9916
        %v9965 = vunpack.c.l.b16 %v9917
        %v9966 = vunpack.c.l.b16 %v9918
        %v9967 = vunpack.c.l.b16 %v9919
        %v9968 = vunpack.c.l.b16 %v9920
        %v9969 = vunpack.c.l.b16 %v9921
        %v9970 = vunpack.c.l.b16 %v9922
        %v9971 = vunpack.c.l.b16 %v9923
        %v9972 = vunpack.c.l.b16 %v9924
        %v9973 = vunpack.c.l.b16 %v9925
        %v9974 = vunpack.c.l.b16 %v9926
        %v9975 = vunpack.c.l.b16 %v9927
        %v9976 = vunpack.c.l.b16 %v9928
        %v9977 = vunpack.c.l.b16 %v9929
        %v9978 = vunpack.c.l.b16 %v9930
        %v9979 = vpack.c.b16 %v9964, %v9963
        %v9980 = vpack.c.b16 %v9966, %v9965
        %v9981 = vpack.c.b16 %v9968, %v9967
        %v9982 = vpack.c.b16 %v9970, %v9969
        %v9983 = vpack.c.b16 %v9972, %v9971
        %v9984 = vpack.c.b16 %v9974, %v9973
        %v9985 = vpack.c.b16 %v9976, %v9975
        %v9986 = vpack.c.b16 %v9978, %v9977
        %9995 = vmatprep.subr.bf16.mxu0 0
        %9996 = vmatpush1.bf16.msra.mxu0 %v9986
        %9997 = vmatprep.subr.bf16.mxu0 0
        %9998 = vmatpush1.bf16.msra.mxu0 %v9985
        %9999 = vmatprep.subr.bf16.mxu0 0
        %10000 = vmatpush1.bf16.msra.mxu0 %v9984
        %10001 = vmatprep.subr.bf16.mxu0 0
        %10002 = vmatpush1.bf16.msra.mxu0 %v9983
        %10003 = vmatprep.subr.bf16.mxu0 0
        %10004 = vmatpush1.bf16.msra.mxu0 %v9982
        %10005 = vmatprep.subr.bf16.mxu0 0
        %10006 = vmatpush1.bf16.msra.mxu0 %v9981
        %10007 = vmatprep.subr.bf16.mxu0 0
        %10008 = vmatpush1.bf16.msra.mxu0 %v9980
        %10009 = vmatprep.subr.bf16.mxu0 0
        %10010 = vmatpush1.bf16.msra.mxu0 %v9979
        %10011 = vmatprep.subr.bf16.mxu0 0
        %10012 = vmatpush2.bf16.msra.mxu0 0
        %10013 = vmatprep.subr.bf16.mxu0 0
        %10014 = vmatpush2.bf16.msra.mxu0 0
        %10015 = vmatprep.subr.bf16.mxu0 0
        %10016 = vmatpush2.bf16.msra.mxu0 0
        %10017 = vmatprep.subr.bf16.mxu0 0
        %10018 = vmatpush2.bf16.msra.mxu0 0
        %10019 = vmatprep.subr.bf16.mxu0 0
        %10020 = vmatpush2.bf16.msra.mxu0 0
        %10021 = vmatprep.subr.bf16.mxu0 0
        %10022 = vmatpush2.bf16.msra.mxu0 0
        %10023 = vmatprep.subr.bf16.mxu0 0
        %10024 = vmatpush2.bf16.msra.mxu0 0
        %10025 = vmatprep.subr.bf16.mxu0 0
        %10026 = vmatpush2.bf16.msra.mxu0 0
        %10027 = vmatprep.mubr.bf16.mxu0 0
        %10028 = vmatmul.mubr.bf16.gmra.mxu0 %v9939
        %v10029 = vpop.f32.mrf.mxu0
        %v10030 = vadd.f32 0.0, %v10029
        %v10031 = vpop.f32.mrf.mxu0
        %v10032 = vpop.f32.mrf.mxu0
        %v10033 = vadd.f32 0.0, %v10032
        %v10034 = vpop.f32.mrf.mxu0
        %10035 = vmatprep.mubr.bf16.mxu0 0
        %10036 = vmatmul.mubr.bf16.gmra.mxu0 %v9940
        %v10037 = vpop.f32.mrf.mxu0
        %v10038 = vadd.f32 0.0, %v10037
        %v10039 = vpop.f32.mrf.mxu0
        %v10040 = vpop.f32.mrf.mxu0
        %v10041 = vadd.f32 0.0, %v10040
        %v10042 = vpop.f32.mrf.mxu0
        %10043 = vmatprep.mubr.bf16.mxu0 0
        %10044 = vmatmul.mubr.bf16.gmra.mxu0 %v9941
        %v10045 = vpop.f32.mrf.mxu0
        %v10046 = vadd.f32 0.0, %v10045
        %v10047 = vpop.f32.mrf.mxu0
        %v10048 = vpop.f32.mrf.mxu0
        %v10049 = vadd.f32 0.0, %v10048
        %v10050 = vpop.f32.mrf.mxu0
        %10051 = vmatprep.mubr.bf16.mxu0 0
        %10052 = vmatmul.mubr.bf16.gmra.mxu0 %v9942
        %v10053 = vpop.f32.mrf.mxu0
        %v10054 = vadd.f32 0.0, %v10053
        %v10055 = vpop.f32.mrf.mxu0
        %v10056 = vpop.f32.mrf.mxu0
        %v10057 = vadd.f32 0.0, %v10056
        %v10058 = vpop.f32.mrf.mxu0
        %10059 = vdwg.mxu0
        %v10060 = vadd.f32 %v9828, %v10030
        %v10061 = vadd.f32 %v9831, %v10033
        %v10062 = vadd.f32 %v9836, %v10038
        %v10063 = vadd.f32 %v9839, %v10041
        %v10064 = vadd.f32 %v9844, %v10046
        %v10065 = vadd.f32 %v9847, %v10049
        %v10066 = vadd.f32 %v9852, %v10054
        %v10067 = vadd.f32 %v9855, %v10057
        %v10068 = vld [vmem:[%s7217] sm:$0xf]
        %v10069 = vld [vmem:[%s7217 + $0x8] sm:$0xf]
        %v10070 = vld [vmem:[%s7217 + $0x10] sm:$0xf]
        %v10071 = vld [vmem:[%s7217 + $0x18] sm:$0xf]
        %v10072 = vld [vmem:[%s7217 + $0x20] sm:$0xf]
        %v10073 = vld [vmem:[%s7217 + $0x28] sm:$0xf]
        %v10074 = vld [vmem:[%s7217 + $0x30] sm:$0xf]
        %v10075 = vld [vmem:[%s7217 + $0x38] sm:$0xf]
        %s10076 = scalar_lea.vmem [#allocation3], 1344
        %v10077 = vld [vmem:[%s10076] sm:$0xf]
        %v10078 = vld [vmem:[%s10076 + $0x4] sm:$0xf]
        %v10079 = vld [vmem:[%s10076 + $0x8] sm:$0xf]
        %v10080 = vld [vmem:[%s10076 + $0xc] sm:$0xf]
        %v10081 = vld [vmem:[%s10076 + $0x10] sm:$0xf]
        %v10082 = vld [vmem:[%s10076 + $0x14] sm:$0xf]
        %v10083 = vld [vmem:[%s10076 + $0x18] sm:$0xf]
        %v10084 = vld [vmem:[%s10076 + $0x1c] sm:$0xf]
        %v10085 = vld [vmem:[%s10076 + $0x20] sm:$0xf]
        %v10086 = vld [vmem:[%s10076 + $0x24] sm:$0xf]
        %v10087 = vld [vmem:[%s10076 + $0x28] sm:$0xf]
        %v10088 = vld [vmem:[%s10076 + $0x2c] sm:$0xf]
        %v10089 = vld [vmem:[%s10076 + $0x30] sm:$0xf]
        %v10090 = vld [vmem:[%s10076 + $0x34] sm:$0xf]
        %v10091 = vld [vmem:[%s10076 + $0x38] sm:$0xf]
        %v10092 = vld [vmem:[%s10076 + $0x3c] sm:$0xf]
        %v10101 = vunpack.c.l.b16 %v10068
        %v10102 = vunpack.c.l.b16 %v10069
        %v10103 = vunpack.c.l.b16 %v10070
        %v10104 = vunpack.c.l.b16 %v10071
        %v10105 = vunpack.c.l.b16 %v10072
        %v10106 = vunpack.c.l.b16 %v10073
        %v10107 = vunpack.c.l.b16 %v10074
        %v10108 = vunpack.c.l.b16 %v10075
        %v10109 = vpack.c.b16 %v10102, %v10101
        %v10110 = vpack.c.b16 %v10104, %v10103
        %v10111 = vpack.c.b16 %v10106, %v10105
        %v10112 = vpack.c.b16 %v10108, %v10107
        %v10133 = vunpack.c.l.b16 %v10077
        %v10134 = vunpack.c.l.b16 %v10078
        %v10135 = vunpack.c.l.b16 %v10079
        %v10136 = vunpack.c.l.b16 %v10080
        %v10137 = vunpack.c.l.b16 %v10081
        %v10138 = vunpack.c.l.b16 %v10082
        %v10139 = vunpack.c.l.b16 %v10083
        %v10140 = vunpack.c.l.b16 %v10084
        %v10141 = vunpack.c.l.b16 %v10085
        %v10142 = vunpack.c.l.b16 %v10086
        %v10143 = vunpack.c.l.b16 %v10087
        %v10144 = vunpack.c.l.b16 %v10088
        %v10145 = vunpack.c.l.b16 %v10089
        %v10146 = vunpack.c.l.b16 %v10090
        %v10147 = vunpack.c.l.b16 %v10091
        %v10148 = vunpack.c.l.b16 %v10092
        %v10149 = vpack.c.b16 %v10134, %v10133
        %v10150 = vpack.c.b16 %v10136, %v10135
        %v10151 = vpack.c.b16 %v10138, %v10137
        %v10152 = vpack.c.b16 %v10140, %v10139
        %v10153 = vpack.c.b16 %v10142, %v10141
        %v10154 = vpack.c.b16 %v10144, %v10143
        %v10155 = vpack.c.b16 %v10146, %v10145
        %v10156 = vpack.c.b16 %v10148, %v10147
        %10165 = vmatprep.subr.bf16.mxu0 0
        %10166 = vmatpush1.bf16.msra.mxu0 %v10156
        %10167 = vmatprep.subr.bf16.mxu0 0
        %10168 = vmatpush1.bf16.msra.mxu0 %v10155
        %10169 = vmatprep.subr.bf16.mxu0 0
        %10170 = vmatpush1.bf16.msra.mxu0 %v10154
        %10171 = vmatprep.subr.bf16.mxu0 0
        %10172 = vmatpush1.bf16.msra.mxu0 %v10153
        %10173 = vmatprep.subr.bf16.mxu0 0
        %10174 = vmatpush1.bf16.msra.mxu0 %v10152
        %10175 = vmatprep.subr.bf16.mxu0 0
        %10176 = vmatpush1.bf16.msra.mxu0 %v10151
        %10177 = vmatprep.subr.bf16.mxu0 0
        %10178 = vmatpush1.bf16.msra.mxu0 %v10150
        %10179 = vmatprep.subr.bf16.mxu0 0
        %10180 = vmatpush1.bf16.msra.mxu0 %v10149
        %10181 = vmatprep.subr.bf16.mxu0 0
        %10182 = vmatpush2.bf16.msra.mxu0 0
        %10183 = vmatprep.subr.bf16.mxu0 0
        %10184 = vmatpush2.bf16.msra.mxu0 0
        %10185 = vmatprep.subr.bf16.mxu0 0
        %10186 = vmatpush2.bf16.msra.mxu0 0
        %10187 = vmatprep.subr.bf16.mxu0 0
        %10188 = vmatpush2.bf16.msra.mxu0 0
        %10189 = vmatprep.subr.bf16.mxu0 0
        %10190 = vmatpush2.bf16.msra.mxu0 0
        %10191 = vmatprep.subr.bf16.mxu0 0
        %10192 = vmatpush2.bf16.msra.mxu0 0
        %10193 = vmatprep.subr.bf16.mxu0 0
        %10194 = vmatpush2.bf16.msra.mxu0 0
        %10195 = vmatprep.subr.bf16.mxu0 0
        %10196 = vmatpush2.bf16.msra.mxu0 0
        %10197 = vmatprep.mubr.bf16.mxu0 0
        %10198 = vmatmul.mubr.bf16.gmra.mxu0 %v10109
        %v10199 = vpop.f32.mrf.mxu0
        %v10200 = vadd.f32 0.0, %v10199
        %v10201 = vpop.f32.mrf.mxu0
        %v10202 = vpop.f32.mrf.mxu0
        %v10203 = vadd.f32 0.0, %v10202
        %v10204 = vpop.f32.mrf.mxu0
        %10205 = vmatprep.mubr.bf16.mxu0 0
        %10206 = vmatmul.mubr.bf16.gmra.mxu0 %v10110
        %v10207 = vpop.f32.mrf.mxu0
        %v10208 = vadd.f32 0.0, %v10207
        %v10209 = vpop.f32.mrf.mxu0
        %v10210 = vpop.f32.mrf.mxu0
        %v10211 = vadd.f32 0.0, %v10210
        %v10212 = vpop.f32.mrf.mxu0
        %10213 = vmatprep.mubr.bf16.mxu0 0
        %10214 = vmatmul.mubr.bf16.gmra.mxu0 %v10111
        %v10215 = vpop.f32.mrf.mxu0
        %v10216 = vadd.f32 0.0, %v10215
        %v10217 = vpop.f32.mrf.mxu0
        %v10218 = vpop.f32.mrf.mxu0
        %v10219 = vadd.f32 0.0, %v10218
        %v10220 = vpop.f32.mrf.mxu0
        %10221 = vmatprep.mubr.bf16.mxu0 0
        %10222 = vmatmul.mubr.bf16.gmra.mxu0 %v10112
        %v10223 = vpop.f32.mrf.mxu0
        %v10224 = vadd.f32 0.0, %v10223
        %v10225 = vpop.f32.mrf.mxu0
        %v10226 = vpop.f32.mrf.mxu0
        %v10227 = vadd.f32 0.0, %v10226
        %v10228 = vpop.f32.mrf.mxu0
        %10229 = vdwg.mxu0
        %v10230 = vadd.f32 %v10060, %v10200
        %v10231 = vadd.f32 %v10061, %v10203
        %v10232 = vadd.f32 %v10062, %v10208
        %v10233 = vadd.f32 %v10063, %v10211
        %v10234 = vadd.f32 %v10064, %v10216
        %v10235 = vadd.f32 %v10065, %v10219
        %v10236 = vadd.f32 %v10066, %v10224
        %v10237 = vadd.f32 %v10067, %v10227
        %v10238 = vld [vmem:[%s7217] sm:$0xf]
        %v10239 = vld [vmem:[%s7217 + $0x4] sm:$0x1]
        %v10240 = vld [vmem:[%s7217 + $0x8] sm:$0xf]
        %v10241 = vld [vmem:[%s7217 + $0xc] sm:$0x1]
        %v10242 = vld [vmem:[%s7217 + $0x10] sm:$0xf]
        %v10243 = vld [vmem:[%s7217 + $0x14] sm:$0x1]
        %v10244 = vld [vmem:[%s7217 + $0x18] sm:$0xf]
        %v10245 = vld [vmem:[%s7217 + $0x1c] sm:$0x1]
        %v10246 = vld [vmem:[%s7217 + $0x20] sm:$0xf]
        %v10247 = vld [vmem:[%s7217 + $0x24] sm:$0x1]
        %v10248 = vld [vmem:[%s7217 + $0x28] sm:$0xf]
        %v10249 = vld [vmem:[%s7217 + $0x2c] sm:$0x1]
        %v10250 = vld [vmem:[%s7217 + $0x30] sm:$0xf]
        %v10251 = vld [vmem:[%s7217 + $0x34] sm:$0x1]
        %v10252 = vld [vmem:[%s7217 + $0x38] sm:$0xf]
        %v10253 = vld [vmem:[%s7217 + $0x3c] sm:$0x1]
        %v10255 = vshrl.u32 %v10238, 16
        %v10257 = vrot.slane %v10255, 4
        %v10258 = vshll.u32 %v10238, 16
        %v10260 = vrot.slane %v10258, 5
        %v10261 = vor.u32 %v10257, %v10260
        %v10262 = vrot.slane %v10261, 4
        %v10264 = vshll.u32 %v10239, 16
        %v10266 = vrot.slane %v10264, 5
        %v10267 = vsel %vm279, %v10262, %v10266
        %v10269 = vshrl.u32 %v10240, 16
        %v10271 = vrot.slane %v10269, 4
        %v10272 = vshll.u32 %v10240, 16
        %v10274 = vrot.slane %v10272, 5
        %v10275 = vor.u32 %v10271, %v10274
        %v10276 = vrot.slane %v10275, 4
        %v10278 = vshll.u32 %v10241, 16
        %v10280 = vrot.slane %v10278, 5
        %v10281 = vsel %vm279, %v10276, %v10280
        %v10283 = vshrl.u32 %v10242, 16
        %v10285 = vrot.slane %v10283, 4
        %v10286 = vshll.u32 %v10242, 16
        %v10288 = vrot.slane %v10286, 5
        %v10289 = vor.u32 %v10285, %v10288
        %v10290 = vrot.slane %v10289, 4
        %v10292 = vshll.u32 %v10243, 16
        %v10294 = vrot.slane %v10292, 5
        %v10295 = vsel %vm279, %v10290, %v10294
        %v10297 = vshrl.u32 %v10244, 16
        %v10299 = vrot.slane %v10297, 4
        %v10300 = vshll.u32 %v10244, 16
        %v10302 = vrot.slane %v10300, 5
        %v10303 = vor.u32 %v10299, %v10302
        %v10304 = vrot.slane %v10303, 4
        %v10306 = vshll.u32 %v10245, 16
        %v10308 = vrot.slane %v10306, 5
        %v10309 = vsel %vm279, %v10304, %v10308
        %v10311 = vshrl.u32 %v10246, 16
        %v10313 = vrot.slane %v10311, 4
        %v10314 = vshll.u32 %v10246, 16
        %v10316 = vrot.slane %v10314, 5
        %v10317 = vor.u32 %v10313, %v10316
        %v10318 = vrot.slane %v10317, 4
        %v10320 = vshll.u32 %v10247, 16
        %v10322 = vrot.slane %v10320, 5
        %v10323 = vsel %vm279, %v10318, %v10322
        %v10325 = vshrl.u32 %v10248, 16
        %v10327 = vrot.slane %v10325, 4
        %v10328 = vshll.u32 %v10248, 16
        %v10330 = vrot.slane %v10328, 5
        %v10331 = vor.u32 %v10327, %v10330
        %v10332 = vrot.slane %v10331, 4
        %v10334 = vshll.u32 %v10249, 16
        %v10336 = vrot.slane %v10334, 5
        %v10337 = vsel %vm279, %v10332, %v10336
        %v10339 = vshrl.u32 %v10250, 16
        %v10341 = vrot.slane %v10339, 4
        %v10342 = vshll.u32 %v10250, 16
        %v10344 = vrot.slane %v10342, 5
        %v10345 = vor.u32 %v10341, %v10344
        %v10346 = vrot.slane %v10345, 4
        %v10348 = vshll.u32 %v10251, 16
        %v10350 = vrot.slane %v10348, 5
        %v10351 = vsel %vm279, %v10346, %v10350
        %v10353 = vshrl.u32 %v10252, 16
        %v10355 = vrot.slane %v10353, 4
        %v10356 = vshll.u32 %v10252, 16
        %v10358 = vrot.slane %v10356, 5
        %v10359 = vor.u32 %v10355, %v10358
        %v10360 = vrot.slane %v10359, 4
        %v10362 = vshll.u32 %v10253, 16
        %v10364 = vrot.slane %v10362, 5
        %v10365 = vsel %vm279, %v10360, %v10364
        %s10366 = scalar_lea.vmem [#allocation3], 1408
        %v10367 = vld [vmem:[%s10366] sm:$0xf]
        %v10368 = vld [vmem:[%s10366 + $0x4] sm:$0xf]
        %v10369 = vld [vmem:[%s10366 + $0x8] sm:$0xf]
        %v10370 = vld [vmem:[%s10366 + $0xc] sm:$0xf]
        %v10371 = vld [vmem:[%s10366 + $0x10] sm:$0xf]
        %v10372 = vld [vmem:[%s10366 + $0x14] sm:$0xf]
        %v10373 = vld [vmem:[%s10366 + $0x18] sm:$0xf]
        %v10374 = vld [vmem:[%s10366 + $0x1c] sm:$0xf]
        %v10375 = vld [vmem:[%s10366 + $0x20] sm:$0xf]
        %v10376 = vld [vmem:[%s10366 + $0x24] sm:$0xf]
        %v10377 = vld [vmem:[%s10366 + $0x28] sm:$0xf]
        %v10378 = vld [vmem:[%s10366 + $0x2c] sm:$0xf]
        %v10379 = vld [vmem:[%s10366 + $0x30] sm:$0xf]
        %v10380 = vld [vmem:[%s10366 + $0x34] sm:$0xf]
        %v10381 = vld [vmem:[%s10366 + $0x38] sm:$0xf]
        %v10382 = vld [vmem:[%s10366 + $0x3c] sm:$0xf]
        %v10383 = vunpack.c.l.b16 %v10267
        %v10384 = vunpack.c.l.b16 %v10281
        %v10385 = vunpack.c.l.b16 %v10295
        %v10386 = vunpack.c.l.b16 %v10309
        %v10387 = vunpack.c.l.b16 %v10323
        %v10388 = vunpack.c.l.b16 %v10337
        %v10389 = vunpack.c.l.b16 %v10351
        %v10390 = vunpack.c.l.b16 %v10365
        %v10391 = vpack.c.b16 %v10384, %v10383
        %v10392 = vpack.c.b16 %v10386, %v10385
        %v10393 = vpack.c.b16 %v10388, %v10387
        %v10394 = vpack.c.b16 %v10390, %v10389
        %v10415 = vunpack.c.l.b16 %v10367
        %v10416 = vunpack.c.l.b16 %v10368
        %v10417 = vunpack.c.l.b16 %v10369
        %v10418 = vunpack.c.l.b16 %v10370
        %v10419 = vunpack.c.l.b16 %v10371
        %v10420 = vunpack.c.l.b16 %v10372
        %v10421 = vunpack.c.l.b16 %v10373
        %v10422 = vunpack.c.l.b16 %v10374
        %v10423 = vunpack.c.l.b16 %v10375
        %v10424 = vunpack.c.l.b16 %v10376
        %v10425 = vunpack.c.l.b16 %v10377
        %v10426 = vunpack.c.l.b16 %v10378
        %v10427 = vunpack.c.l.b16 %v10379
        %v10428 = vunpack.c.l.b16 %v10380
        %v10429 = vunpack.c.l.b16 %v10381
        %v10430 = vunpack.c.l.b16 %v10382
        %v10431 = vpack.c.b16 %v10416, %v10415
        %v10432 = vpack.c.b16 %v10418, %v10417
        %v10433 = vpack.c.b16 %v10420, %v10419
        %v10434 = vpack.c.b16 %v10422, %v10421
        %v10435 = vpack.c.b16 %v10424, %v10423
        %v10436 = vpack.c.b16 %v10426, %v10425
        %v10437 = vpack.c.b16 %v10428, %v10427
        %v10438 = vpack.c.b16 %v10430, %v10429
        %10447 = vmatprep.subr.bf16.mxu0 0
        %10448 = vmatpush1.bf16.msra.mxu0 %v10438
        %10449 = vmatprep.subr.bf16.mxu0 0
        %10450 = vmatpush1.bf16.msra.mxu0 %v10437
        %10451 = vmatprep.subr.bf16.mxu0 0
        %10452 = vmatpush1.bf16.msra.mxu0 %v10436
        %10453 = vmatprep.subr.bf16.mxu0 0
        %10454 = vmatpush1.bf16.msra.mxu0 %v10435
        %10455 = vmatprep.subr.bf16.mxu0 0
        %10456 = vmatpush1.bf16.msra.mxu0 %v10434
        %10457 = vmatprep.subr.bf16.mxu0 0
        %10458 = vmatpush1.bf16.msra.mxu0 %v10433
        %10459 = vmatprep.subr.bf16.mxu0 0
        %10460 = vmatpush1.bf16.msra.mxu0 %v10432
        %10461 = vmatprep.subr.bf16.mxu0 0
        %10462 = vmatpush1.bf16.msra.mxu0 %v10431
        %10463 = vmatprep.subr.bf16.mxu0 0
        %10464 = vmatpush2.bf16.msra.mxu0 0
        %10465 = vmatprep.subr.bf16.mxu0 0
        %10466 = vmatpush2.bf16.msra.mxu0 0
        %10467 = vmatprep.subr.bf16.mxu0 0
        %10468 = vmatpush2.bf16.msra.mxu0 0
        %10469 = vmatprep.subr.bf16.mxu0 0
        %10470 = vmatpush2.bf16.msra.mxu0 0
        %10471 = vmatprep.subr.bf16.mxu0 0
        %10472 = vmatpush2.bf16.msra.mxu0 0
        %10473 = vmatprep.subr.bf16.mxu0 0
        %10474 = vmatpush2.bf16.msra.mxu0 0
        %10475 = vmatprep.subr.bf16.mxu0 0
        %10476 = vmatpush2.bf16.msra.mxu0 0
        %10477 = vmatprep.subr.bf16.mxu0 0
        %10478 = vmatpush2.bf16.msra.mxu0 0
        %10479 = vmatprep.mubr.bf16.mxu0 0
        %10480 = vmatmul.mubr.bf16.gmra.mxu0 %v10391
        %v10481 = vpop.f32.mrf.mxu0
        %v10482 = vadd.f32 0.0, %v10481
        %v10483 = vpop.f32.mrf.mxu0
        %v10484 = vpop.f32.mrf.mxu0
        %v10485 = vadd.f32 0.0, %v10484
        %v10486 = vpop.f32.mrf.mxu0
        %10487 = vmatprep.mubr.bf16.mxu0 0
        %10488 = vmatmul.mubr.bf16.gmra.mxu0 %v10392
        %v10489 = vpop.f32.mrf.mxu0
        %v10490 = vadd.f32 0.0, %v10489
        %v10491 = vpop.f32.mrf.mxu0
        %v10492 = vpop.f32.mrf.mxu0
        %v10493 = vadd.f32 0.0, %v10492
        %v10494 = vpop.f32.mrf.mxu0
        %10495 = vmatprep.mubr.bf16.mxu0 0
        %10496 = vmatmul.mubr.bf16.gmra.mxu0 %v10393
        %v10497 = vpop.f32.mrf.mxu0
        %v10498 = vadd.f32 0.0, %v10497
        %v10499 = vpop.f32.mrf.mxu0
        %v10500 = vpop.f32.mrf.mxu0
        %v10501 = vadd.f32 0.0, %v10500
        %v10502 = vpop.f32.mrf.mxu0
        %10503 = vmatprep.mubr.bf16.mxu0 0
        %10504 = vmatmul.mubr.bf16.gmra.mxu0 %v10394
        %v10505 = vpop.f32.mrf.mxu0
        %v10506 = vadd.f32 0.0, %v10505
        %v10507 = vpop.f32.mrf.mxu0
        %v10508 = vpop.f32.mrf.mxu0
        %v10509 = vadd.f32 0.0, %v10508
        %v10510 = vpop.f32.mrf.mxu0
        %10511 = vdwg.mxu0
        %v10512 = vadd.f32 %v10230, %v10482
        %v10513 = vadd.f32 %v10231, %v10485
        %v10514 = vadd.f32 %v10232, %v10490
        %v10515 = vadd.f32 %v10233, %v10493
        %v10516 = vadd.f32 %v10234, %v10498
        %v10517 = vadd.f32 %v10235, %v10501
        %v10518 = vadd.f32 %v10236, %v10506
        %v10519 = vadd.f32 %v10237, %v10509
        %v10520 = vld [vmem:[%s7217] sm:$0xe]
        %v10521 = vld [vmem:[%s7217 + $0x8] sm:$0xe]
        %v10522 = vld [vmem:[%s7217 + $0x10] sm:$0xe]
        %v10523 = vld [vmem:[%s7217 + $0x18] sm:$0xe]
        %v10524 = vld [vmem:[%s7217 + $0x20] sm:$0xe]
        %v10525 = vld [vmem:[%s7217 + $0x28] sm:$0xe]
        %v10526 = vld [vmem:[%s7217 + $0x30] sm:$0xe]
        %v10527 = vld [vmem:[%s7217 + $0x38] sm:$0xe]
        %v10544 = vrot.slane %v10520, 5
        %v10545 = vrot.slane %v10544, 4
        %v10546 = vrot.slane %v10239, 5
        %v10547 = vsel %vm1309, %v10545, %v10546
        %v10548 = vrot.slane %v10521, 5
        %v10549 = vrot.slane %v10548, 4
        %v10550 = vrot.slane %v10241, 5
        %v10551 = vsel %vm1309, %v10549, %v10550
        %v10552 = vrot.slane %v10522, 5
        %v10553 = vrot.slane %v10552, 4
        %v10554 = vrot.slane %v10243, 5
        %v10555 = vsel %vm1309, %v10553, %v10554
        %v10556 = vrot.slane %v10523, 5
        %v10557 = vrot.slane %v10556, 4
        %v10558 = vrot.slane %v10245, 5
        %v10559 = vsel %vm1309, %v10557, %v10558
        %v10560 = vrot.slane %v10524, 5
        %v10561 = vrot.slane %v10560, 4
        %v10562 = vrot.slane %v10247, 5
        %v10563 = vsel %vm1309, %v10561, %v10562
        %v10564 = vrot.slane %v10525, 5
        %v10565 = vrot.slane %v10564, 4
        %v10566 = vrot.slane %v10249, 5
        %v10567 = vsel %vm1309, %v10565, %v10566
        %v10568 = vrot.slane %v10526, 5
        %v10569 = vrot.slane %v10568, 4
        %v10570 = vrot.slane %v10251, 5
        %v10571 = vsel %vm1309, %v10569, %v10570
        %v10572 = vrot.slane %v10527, 5
        %v10573 = vrot.slane %v10572, 4
        %v10574 = vrot.slane %v10253, 5
        %v10575 = vsel %vm1309, %v10573, %v10574
        %s10576 = scalar_lea.vmem [#allocation3], 1472
        %v10577 = vld [vmem:[%s10576] sm:$0xf]
        %v10578 = vld [vmem:[%s10576 + $0x4] sm:$0xf]
        %v10579 = vld [vmem:[%s10576 + $0x8] sm:$0xf]
        %v10580 = vld [vmem:[%s10576 + $0xc] sm:$0xf]
        %v10581 = vld [vmem:[%s10576 + $0x10] sm:$0xf]
        %v10582 = vld [vmem:[%s10576 + $0x14] sm:$0xf]
        %v10583 = vld [vmem:[%s10576 + $0x18] sm:$0xf]
        %v10584 = vld [vmem:[%s10576 + $0x1c] sm:$0xf]
        %v10585 = vld [vmem:[%s10576 + $0x20] sm:$0xf]
        %v10586 = vld [vmem:[%s10576 + $0x24] sm:$0xf]
        %v10587 = vld [vmem:[%s10576 + $0x28] sm:$0xf]
        %v10588 = vld [vmem:[%s10576 + $0x2c] sm:$0xf]
        %v10589 = vld [vmem:[%s10576 + $0x30] sm:$0xf]
        %v10590 = vld [vmem:[%s10576 + $0x34] sm:$0xf]
        %v10591 = vld [vmem:[%s10576 + $0x38] sm:$0xf]
        %v10592 = vld [vmem:[%s10576 + $0x3c] sm:$0xf]
        %v10593 = vunpack.c.l.b16 %v10547
        %v10594 = vunpack.c.l.b16 %v10551
        %v10595 = vunpack.c.l.b16 %v10555
        %v10596 = vunpack.c.l.b16 %v10559
        %v10597 = vunpack.c.l.b16 %v10563
        %v10598 = vunpack.c.l.b16 %v10567
        %v10599 = vunpack.c.l.b16 %v10571
        %v10600 = vunpack.c.l.b16 %v10575
        %v10601 = vpack.c.b16 %v10594, %v10593
        %v10602 = vpack.c.b16 %v10596, %v10595
        %v10603 = vpack.c.b16 %v10598, %v10597
        %v10604 = vpack.c.b16 %v10600, %v10599
        %v10625 = vunpack.c.l.b16 %v10577
        %v10626 = vunpack.c.l.b16 %v10578
        %v10627 = vunpack.c.l.b16 %v10579
        %v10628 = vunpack.c.l.b16 %v10580
        %v10629 = vunpack.c.l.b16 %v10581
        %v10630 = vunpack.c.l.b16 %v10582
        %v10631 = vunpack.c.l.b16 %v10583
        %v10632 = vunpack.c.l.b16 %v10584
        %v10633 = vunpack.c.l.b16 %v10585
        %v10634 = vunpack.c.l.b16 %v10586
        %v10635 = vunpack.c.l.b16 %v10587
        %v10636 = vunpack.c.l.b16 %v10588
        %v10637 = vunpack.c.l.b16 %v10589
        %v10638 = vunpack.c.l.b16 %v10590
        %v10639 = vunpack.c.l.b16 %v10591
        %v10640 = vunpack.c.l.b16 %v10592
        %v10641 = vpack.c.b16 %v10626, %v10625
        %v10642 = vpack.c.b16 %v10628, %v10627
        %v10643 = vpack.c.b16 %v10630, %v10629
        %v10644 = vpack.c.b16 %v10632, %v10631
        %v10645 = vpack.c.b16 %v10634, %v10633
        %v10646 = vpack.c.b16 %v10636, %v10635
        %v10647 = vpack.c.b16 %v10638, %v10637
        %v10648 = vpack.c.b16 %v10640, %v10639
        %10657 = vmatprep.subr.bf16.mxu0 0
        %10658 = vmatpush1.bf16.msra.mxu0 %v10648
        %10659 = vmatprep.subr.bf16.mxu0 0
        %10660 = vmatpush1.bf16.msra.mxu0 %v10647
        %10661 = vmatprep.subr.bf16.mxu0 0
        %10662 = vmatpush1.bf16.msra.mxu0 %v10646
        %10663 = vmatprep.subr.bf16.mxu0 0
        %10664 = vmatpush1.bf16.msra.mxu0 %v10645
        %10665 = vmatprep.subr.bf16.mxu0 0
        %10666 = vmatpush1.bf16.msra.mxu0 %v10644
        %10667 = vmatprep.subr.bf16.mxu0 0
        %10668 = vmatpush1.bf16.msra.mxu0 %v10643
        %10669 = vmatprep.subr.bf16.mxu0 0
        %10670 = vmatpush1.bf16.msra.mxu0 %v10642
        %10671 = vmatprep.subr.bf16.mxu0 0
        %10672 = vmatpush1.bf16.msra.mxu0 %v10641
        %10673 = vmatprep.subr.bf16.mxu0 0
        %10674 = vmatpush2.bf16.msra.mxu0 0
        %10675 = vmatprep.subr.bf16.mxu0 0
        %10676 = vmatpush2.bf16.msra.mxu0 0
        %10677 = vmatprep.subr.bf16.mxu0 0
        %10678 = vmatpush2.bf16.msra.mxu0 0
        %10679 = vmatprep.subr.bf16.mxu0 0
        %10680 = vmatpush2.bf16.msra.mxu0 0
        %10681 = vmatprep.subr.bf16.mxu0 0
        %10682 = vmatpush2.bf16.msra.mxu0 0
        %10683 = vmatprep.subr.bf16.mxu0 0
        %10684 = vmatpush2.bf16.msra.mxu0 0
        %10685 = vmatprep.subr.bf16.mxu0 0
        %10686 = vmatpush2.bf16.msra.mxu0 0
        %10687 = vmatprep.subr.bf16.mxu0 0
        %10688 = vmatpush2.bf16.msra.mxu0 0
        %10689 = vmatprep.mubr.bf16.mxu0 0
        %10690 = vmatmul.mubr.bf16.gmra.mxu0 %v10601
        %v10691 = vpop.f32.mrf.mxu0
        %v10692 = vadd.f32 0.0, %v10691
        %v10693 = vpop.f32.mrf.mxu0
        %v10694 = vpop.f32.mrf.mxu0
        %v10695 = vadd.f32 0.0, %v10694
        %v10696 = vpop.f32.mrf.mxu0
        %10697 = vmatprep.mubr.bf16.mxu0 0
        %10698 = vmatmul.mubr.bf16.gmra.mxu0 %v10602
        %v10699 = vpop.f32.mrf.mxu0
        %v10700 = vadd.f32 0.0, %v10699
        %v10701 = vpop.f32.mrf.mxu0
        %v10702 = vpop.f32.mrf.mxu0
        %v10703 = vadd.f32 0.0, %v10702
        %v10704 = vpop.f32.mrf.mxu0
        %10705 = vmatprep.mubr.bf16.mxu0 0
        %10706 = vmatmul.mubr.bf16.gmra.mxu0 %v10603
        %v10707 = vpop.f32.mrf.mxu0
        %v10708 = vadd.f32 0.0, %v10707
        %v10709 = vpop.f32.mrf.mxu0
        %v10710 = vpop.f32.mrf.mxu0
        %v10711 = vadd.f32 0.0, %v10710
        %v10712 = vpop.f32.mrf.mxu0
        %10713 = vmatprep.mubr.bf16.mxu0 0
        %10714 = vmatmul.mubr.bf16.gmra.mxu0 %v10604
        %v10715 = vpop.f32.mrf.mxu0
        %v10716 = vadd.f32 0.0, %v10715
        %v10717 = vpop.f32.mrf.mxu0
        %v10718 = vpop.f32.mrf.mxu0
        %v10719 = vadd.f32 0.0, %v10718
        %v10720 = vpop.f32.mrf.mxu0
        %10721 = vdwg.mxu0
        %v10722 = vadd.f32 %v10512, %v10692
        %v10723 = vadd.f32 %v10513, %v10695
        %v10724 = vadd.f32 %v10514, %v10700
        %v10725 = vadd.f32 %v10515, %v10703
        %v10726 = vadd.f32 %v10516, %v10708
        %v10727 = vadd.f32 %v10517, %v10711
        %v10728 = vadd.f32 %v10518, %v10716
        %v10729 = vadd.f32 %v10519, %v10719
        %v10730 = vld [vmem:[%s8574] sm:$0xf]
        %v10731 = vld [vmem:[%s8574 + $0x8] sm:$0xf]
        %v10732 = vld [vmem:[%s8574 + $0x10] sm:$0xf]
        %v10733 = vld [vmem:[%s8574 + $0x18] sm:$0xf]
        %v10734 = vld [vmem:[%s8574 + $0x20] sm:$0xf]
        %v10735 = vld [vmem:[%s8574 + $0x28] sm:$0xf]
        %v10736 = vld [vmem:[%s8574 + $0x30] sm:$0xf]
        %v10737 = vld [vmem:[%s8574 + $0x38] sm:$0xf]
        %s10738 = scalar_lea.vmem [#allocation3], 1536
        %v10739 = vld [vmem:[%s10738] sm:$0xf]
        %v10740 = vld [vmem:[%s10738 + $0x4] sm:$0xf]
        %v10741 = vld [vmem:[%s10738 + $0x8] sm:$0xf]
        %v10742 = vld [vmem:[%s10738 + $0xc] sm:$0xf]
        %v10743 = vld [vmem:[%s10738 + $0x10] sm:$0xf]
        %v10744 = vld [vmem:[%s10738 + $0x14] sm:$0xf]
        %v10745 = vld [vmem:[%s10738 + $0x18] sm:$0xf]
        %v10746 = vld [vmem:[%s10738 + $0x1c] sm:$0xf]
        %v10747 = vld [vmem:[%s10738 + $0x20] sm:$0xf]
        %v10748 = vld [vmem:[%s10738 + $0x24] sm:$0xf]
        %v10749 = vld [vmem:[%s10738 + $0x28] sm:$0xf]
        %v10750 = vld [vmem:[%s10738 + $0x2c] sm:$0xf]
        %v10751 = vld [vmem:[%s10738 + $0x30] sm:$0xf]
        %v10752 = vld [vmem:[%s10738 + $0x34] sm:$0xf]
        %v10753 = vld [vmem:[%s10738 + $0x38] sm:$0xf]
        %v10754 = vld [vmem:[%s10738 + $0x3c] sm:$0xf]
        %v10763 = vunpack.c.l.b16 %v10730
        %v10764 = vunpack.c.l.b16 %v10731
        %v10765 = vunpack.c.l.b16 %v10732
        %v10766 = vunpack.c.l.b16 %v10733
        %v10767 = vunpack.c.l.b16 %v10734
        %v10768 = vunpack.c.l.b16 %v10735
        %v10769 = vunpack.c.l.b16 %v10736
        %v10770 = vunpack.c.l.b16 %v10737
        %v10771 = vpack.c.b16 %v10764, %v10763
        %v10772 = vpack.c.b16 %v10766, %v10765
        %v10773 = vpack.c.b16 %v10768, %v10767
        %v10774 = vpack.c.b16 %v10770, %v10769
        %v10795 = vunpack.c.l.b16 %v10739
        %v10796 = vunpack.c.l.b16 %v10740
        %v10797 = vunpack.c.l.b16 %v10741
        %v10798 = vunpack.c.l.b16 %v10742
        %v10799 = vunpack.c.l.b16 %v10743
        %v10800 = vunpack.c.l.b16 %v10744
        %v10801 = vunpack.c.l.b16 %v10745
        %v10802 = vunpack.c.l.b16 %v10746
        %v10803 = vunpack.c.l.b16 %v10747
        %v10804 = vunpack.c.l.b16 %v10748
        %v10805 = vunpack.c.l.b16 %v10749
        %v10806 = vunpack.c.l.b16 %v10750
        %v10807 = vunpack.c.l.b16 %v10751
        %v10808 = vunpack.c.l.b16 %v10752
        %v10809 = vunpack.c.l.b16 %v10753
        %v10810 = vunpack.c.l.b16 %v10754
        %v10811 = vpack.c.b16 %v10796, %v10795
        %v10812 = vpack.c.b16 %v10798, %v10797
        %v10813 = vpack.c.b16 %v10800, %v10799
        %v10814 = vpack.c.b16 %v10802, %v10801
        %v10815 = vpack.c.b16 %v10804, %v10803
        %v10816 = vpack.c.b16 %v10806, %v10805
        %v10817 = vpack.c.b16 %v10808, %v10807
        %v10818 = vpack.c.b16 %v10810, %v10809
        %10827 = vmatprep.subr.bf16.mxu0 0
        %10828 = vmatpush1.bf16.msra.mxu0 %v10818
        %10829 = vmatprep.subr.bf16.mxu0 0
        %10830 = vmatpush1.bf16.msra.mxu0 %v10817
        %10831 = vmatprep.subr.bf16.mxu0 0
        %10832 = vmatpush1.bf16.msra.mxu0 %v10816
        %10833 = vmatprep.subr.bf16.mxu0 0
        %10834 = vmatpush1.bf16.msra.mxu0 %v10815
        %10835 = vmatprep.subr.bf16.mxu0 0
        %10836 = vmatpush1.bf16.msra.mxu0 %v10814
        %10837 = vmatprep.subr.bf16.mxu0 0
        %10838 = vmatpush1.bf16.msra.mxu0 %v10813
        %10839 = vmatprep.subr.bf16.mxu0 0
        %10840 = vmatpush1.bf16.msra.mxu0 %v10812
        %10841 = vmatprep.subr.bf16.mxu0 0
        %10842 = vmatpush1.bf16.msra.mxu0 %v10811
        %10843 = vmatprep.subr.bf16.mxu0 0
        %10844 = vmatpush2.bf16.msra.mxu0 0
        %10845 = vmatprep.subr.bf16.mxu0 0
        %10846 = vmatpush2.bf16.msra.mxu0 0
        %10847 = vmatprep.subr.bf16.mxu0 0
        %10848 = vmatpush2.bf16.msra.mxu0 0
        %10849 = vmatprep.subr.bf16.mxu0 0
        %10850 = vmatpush2.bf16.msra.mxu0 0
        %10851 = vmatprep.subr.bf16.mxu0 0
        %10852 = vmatpush2.bf16.msra.mxu0 0
        %10853 = vmatprep.subr.bf16.mxu0 0
        %10854 = vmatpush2.bf16.msra.mxu0 0
        %10855 = vmatprep.subr.bf16.mxu0 0
        %10856 = vmatpush2.bf16.msra.mxu0 0
        %10857 = vmatprep.subr.bf16.mxu0 0
        %10858 = vmatpush2.bf16.msra.mxu0 0
        %10859 = vmatprep.mubr.bf16.mxu0 0
        %10860 = vmatmul.mubr.bf16.gmra.mxu0 %v10771
        %v10861 = vpop.f32.mrf.mxu0
        %v10862 = vadd.f32 0.0, %v10861
        %v10863 = vpop.f32.mrf.mxu0
        %v10864 = vpop.f32.mrf.mxu0
        %v10865 = vadd.f32 0.0, %v10864
        %v10866 = vpop.f32.mrf.mxu0
        %10867 = vmatprep.mubr.bf16.mxu0 0
        %10868 = vmatmul.mubr.bf16.gmra.mxu0 %v10772
        %v10869 = vpop.f32.mrf.mxu0
        %v10870 = vadd.f32 0.0, %v10869
        %v10871 = vpop.f32.mrf.mxu0
        %v10872 = vpop.f32.mrf.mxu0
        %v10873 = vadd.f32 0.0, %v10872
        %v10874 = vpop.f32.mrf.mxu0
        %10875 = vmatprep.mubr.bf16.mxu0 0
        %10876 = vmatmul.mubr.bf16.gmra.mxu0 %v10773
        %v10877 = vpop.f32.mrf.mxu0
        %v10878 = vadd.f32 0.0, %v10877
        %v10879 = vpop.f32.mrf.mxu0
        %v10880 = vpop.f32.mrf.mxu0
        %v10881 = vadd.f32 0.0, %v10880
        %v10882 = vpop.f32.mrf.mxu0
        %10883 = vmatprep.mubr.bf16.mxu0 0
        %10884 = vmatmul.mubr.bf16.gmra.mxu0 %v10774
        %v10885 = vpop.f32.mrf.mxu0
        %v10886 = vadd.f32 0.0, %v10885
        %v10887 = vpop.f32.mrf.mxu0
        %v10888 = vpop.f32.mrf.mxu0
        %v10889 = vadd.f32 0.0, %v10888
        %v10890 = vpop.f32.mrf.mxu0
        %10891 = vdwg.mxu0
        %v10892 = vadd.f32 %v10722, %v10862
        %v10893 = vadd.f32 %v10723, %v10865
        %v10894 = vadd.f32 %v10724, %v10870
        %v10895 = vadd.f32 %v10725, %v10873
        %v10896 = vadd.f32 %v10726, %v10878
        %v10897 = vadd.f32 %v10727, %v10881
        %v10898 = vadd.f32 %v10728, %v10886
        %v10899 = vadd.f32 %v10729, %v10889
        %v10900 = vld [vmem:[%s8574] sm:$0xf]
        %v10901 = vld [vmem:[%s8574 + $0x4] sm:$0x1]
        %v10902 = vld [vmem:[%s8574 + $0x8] sm:$0xf]
        %v10903 = vld [vmem:[%s8574 + $0xc] sm:$0x1]
        %v10904 = vld [vmem:[%s8574 + $0x10] sm:$0xf]
        %v10905 = vld [vmem:[%s8574 + $0x14] sm:$0x1]
        %v10906 = vld [vmem:[%s8574 + $0x18] sm:$0xf]
        %v10907 = vld [vmem:[%s8574 + $0x1c] sm:$0x1]
        %v10908 = vld [vmem:[%s8574 + $0x20] sm:$0xf]
        %v10909 = vld [vmem:[%s8574 + $0x24] sm:$0x1]
        %v10910 = vld [vmem:[%s8574 + $0x28] sm:$0xf]
        %v10911 = vld [vmem:[%s8574 + $0x2c] sm:$0x1]
        %v10912 = vld [vmem:[%s8574 + $0x30] sm:$0xf]
        %v10913 = vld [vmem:[%s8574 + $0x34] sm:$0x1]
        %v10914 = vld [vmem:[%s8574 + $0x38] sm:$0xf]
        %v10915 = vld [vmem:[%s8574 + $0x3c] sm:$0x1]
        %v10917 = vshrl.u32 %v10900, 16
        %v10919 = vrot.slane %v10917, 4
        %v10920 = vshll.u32 %v10900, 16
        %v10922 = vrot.slane %v10920, 5
        %v10923 = vor.u32 %v10919, %v10922
        %v10924 = vrot.slane %v10923, 4
        %v10926 = vshll.u32 %v10901, 16
        %v10928 = vrot.slane %v10926, 5
        %v10929 = vsel %vm279, %v10924, %v10928
        %v10931 = vshrl.u32 %v10902, 16
        %v10933 = vrot.slane %v10931, 4
        %v10934 = vshll.u32 %v10902, 16
        %v10936 = vrot.slane %v10934, 5
        %v10937 = vor.u32 %v10933, %v10936
        %v10938 = vrot.slane %v10937, 4
        %v10940 = vshll.u32 %v10903, 16
        %v10942 = vrot.slane %v10940, 5
        %v10943 = vsel %vm279, %v10938, %v10942
        %v10945 = vshrl.u32 %v10904, 16
        %v10947 = vrot.slane %v10945, 4
        %v10948 = vshll.u32 %v10904, 16
        %v10950 = vrot.slane %v10948, 5
        %v10951 = vor.u32 %v10947, %v10950
        %v10952 = vrot.slane %v10951, 4
        %v10954 = vshll.u32 %v10905, 16
        %v10956 = vrot.slane %v10954, 5
        %v10957 = vsel %vm279, %v10952, %v10956
        %v10959 = vshrl.u32 %v10906, 16
        %v10961 = vrot.slane %v10959, 4
        %v10962 = vshll.u32 %v10906, 16
        %v10964 = vrot.slane %v10962, 5
        %v10965 = vor.u32 %v10961, %v10964
        %v10966 = vrot.slane %v10965, 4
        %v10968 = vshll.u32 %v10907, 16
        %v10970 = vrot.slane %v10968, 5
        %v10971 = vsel %vm279, %v10966, %v10970
        %v10973 = vshrl.u32 %v10908, 16
        %v10975 = vrot.slane %v10973, 4
        %v10976 = vshll.u32 %v10908, 16
        %v10978 = vrot.slane %v10976, 5
        %v10979 = vor.u32 %v10975, %v10978
        %v10980 = vrot.slane %v10979, 4
        %v10982 = vshll.u32 %v10909, 16
        %v10984 = vrot.slane %v10982, 5
        %v10985 = vsel %vm279, %v10980, %v10984
        %v10987 = vshrl.u32 %v10910, 16
        %v10989 = vrot.slane %v10987, 4
        %v10990 = vshll.u32 %v10910, 16
        %v10992 = vrot.slane %v10990, 5
        %v10993 = vor.u32 %v10989, %v10992
        %v10994 = vrot.slane %v10993, 4
        %v10996 = vshll.u32 %v10911, 16
        %v10998 = vrot.slane %v10996, 5
        %v10999 = vsel %vm279, %v10994, %v10998
        %v11001 = vshrl.u32 %v10912, 16
        %v11003 = vrot.slane %v11001, 4
        %v11004 = vshll.u32 %v10912, 16
        %v11006 = vrot.slane %v11004, 5
        %v11007 = vor.u32 %v11003, %v11006
        %v11008 = vrot.slane %v11007, 4
        %v11010 = vshll.u32 %v10913, 16
        %v11012 = vrot.slane %v11010, 5
        %v11013 = vsel %vm279, %v11008, %v11012
        %v11015 = vshrl.u32 %v10914, 16
        %v11017 = vrot.slane %v11015, 4
        %v11018 = vshll.u32 %v10914, 16
        %v11020 = vrot.slane %v11018, 5
        %v11021 = vor.u32 %v11017, %v11020
        %v11022 = vrot.slane %v11021, 4
        %v11024 = vshll.u32 %v10915, 16
        %v11026 = vrot.slane %v11024, 5
        %v11027 = vsel %vm279, %v11022, %v11026
        %s11028 = scalar_lea.vmem [#allocation3], 1600
        %v11029 = vld [vmem:[%s11028] sm:$0xf]
        %v11030 = vld [vmem:[%s11028 + $0x4] sm:$0xf]
        %v11031 = vld [vmem:[%s11028 + $0x8] sm:$0xf]
        %v11032 = vld [vmem:[%s11028 + $0xc] sm:$0xf]
        %v11033 = vld [vmem:[%s11028 + $0x10] sm:$0xf]
        %v11034 = vld [vmem:[%s11028 + $0x14] sm:$0xf]
        %v11035 = vld [vmem:[%s11028 + $0x18] sm:$0xf]
        %v11036 = vld [vmem:[%s11028 + $0x1c] sm:$0xf]
        %v11037 = vld [vmem:[%s11028 + $0x20] sm:$0xf]
        %v11038 = vld [vmem:[%s11028 + $0x24] sm:$0xf]
        %v11039 = vld [vmem:[%s11028 + $0x28] sm:$0xf]
        %v11040 = vld [vmem:[%s11028 + $0x2c] sm:$0xf]
        %v11041 = vld [vmem:[%s11028 + $0x30] sm:$0xf]
        %v11042 = vld [vmem:[%s11028 + $0x34] sm:$0xf]
        %v11043 = vld [vmem:[%s11028 + $0x38] sm:$0xf]
        %v11044 = vld [vmem:[%s11028 + $0x3c] sm:$0xf]
        %v11045 = vunpack.c.l.b16 %v10929
        %v11046 = vunpack.c.l.b16 %v10943
        %v11047 = vunpack.c.l.b16 %v10957
        %v11048 = vunpack.c.l.b16 %v10971
        %v11049 = vunpack.c.l.b16 %v10985
        %v11050 = vunpack.c.l.b16 %v10999
        %v11051 = vunpack.c.l.b16 %v11013
        %v11052 = vunpack.c.l.b16 %v11027
        %v11053 = vpack.c.b16 %v11046, %v11045
        %v11054 = vpack.c.b16 %v11048, %v11047
        %v11055 = vpack.c.b16 %v11050, %v11049
        %v11056 = vpack.c.b16 %v11052, %v11051
        %v11077 = vunpack.c.l.b16 %v11029
        %v11078 = vunpack.c.l.b16 %v11030
        %v11079 = vunpack.c.l.b16 %v11031
        %v11080 = vunpack.c.l.b16 %v11032
        %v11081 = vunpack.c.l.b16 %v11033
        %v11082 = vunpack.c.l.b16 %v11034
        %v11083 = vunpack.c.l.b16 %v11035
        %v11084 = vunpack.c.l.b16 %v11036
        %v11085 = vunpack.c.l.b16 %v11037
        %v11086 = vunpack.c.l.b16 %v11038
        %v11087 = vunpack.c.l.b16 %v11039
        %v11088 = vunpack.c.l.b16 %v11040
        %v11089 = vunpack.c.l.b16 %v11041
        %v11090 = vunpack.c.l.b16 %v11042
        %v11091 = vunpack.c.l.b16 %v11043
        %v11092 = vunpack.c.l.b16 %v11044
        %v11093 = vpack.c.b16 %v11078, %v11077
        %v11094 = vpack.c.b16 %v11080, %v11079
        %v11095 = vpack.c.b16 %v11082, %v11081
        %v11096 = vpack.c.b16 %v11084, %v11083
        %v11097 = vpack.c.b16 %v11086, %v11085
        %v11098 = vpack.c.b16 %v11088, %v11087
        %v11099 = vpack.c.b16 %v11090, %v11089
        %v11100 = vpack.c.b16 %v11092, %v11091
        %11109 = vmatprep.subr.bf16.mxu0 0
        %11110 = vmatpush1.bf16.msra.mxu0 %v11100
        %11111 = vmatprep.subr.bf16.mxu0 0
        %11112 = vmatpush1.bf16.msra.mxu0 %v11099
        %11113 = vmatprep.subr.bf16.mxu0 0
        %11114 = vmatpush1.bf16.msra.mxu0 %v11098
        %11115 = vmatprep.subr.bf16.mxu0 0
        %11116 = vmatpush1.bf16.msra.mxu0 %v11097
        %11117 = vmatprep.subr.bf16.mxu0 0
        %11118 = vmatpush1.bf16.msra.mxu0 %v11096
        %11119 = vmatprep.subr.bf16.mxu0 0
        %11120 = vmatpush1.bf16.msra.mxu0 %v11095
        %11121 = vmatprep.subr.bf16.mxu0 0
        %11122 = vmatpush1.bf16.msra.mxu0 %v11094
        %11123 = vmatprep.subr.bf16.mxu0 0
        %11124 = vmatpush1.bf16.msra.mxu0 %v11093
        %11125 = vmatprep.subr.bf16.mxu0 0
        %11126 = vmatpush2.bf16.msra.mxu0 0
        %11127 = vmatprep.subr.bf16.mxu0 0
        %11128 = vmatpush2.bf16.msra.mxu0 0
        %11129 = vmatprep.subr.bf16.mxu0 0
        %11130 = vmatpush2.bf16.msra.mxu0 0
        %11131 = vmatprep.subr.bf16.mxu0 0
        %11132 = vmatpush2.bf16.msra.mxu0 0
        %11133 = vmatprep.subr.bf16.mxu0 0
        %11134 = vmatpush2.bf16.msra.mxu0 0
        %11135 = vmatprep.subr.bf16.mxu0 0
        %11136 = vmatpush2.bf16.msra.mxu0 0
        %11137 = vmatprep.subr.bf16.mxu0 0
        %11138 = vmatpush2.bf16.msra.mxu0 0
        %11139 = vmatprep.subr.bf16.mxu0 0
        %11140 = vmatpush2.bf16.msra.mxu0 0
        %11141 = vmatprep.mubr.bf16.mxu0 0
        %11142 = vmatmul.mubr.bf16.gmra.mxu0 %v11053
        %v11143 = vpop.f32.mrf.mxu0
        %v11144 = vadd.f32 0.0, %v11143
        %v11145 = vpop.f32.mrf.mxu0
        %v11146 = vpop.f32.mrf.mxu0
        %v11147 = vadd.f32 0.0, %v11146
        %v11148 = vpop.f32.mrf.mxu0
        %11149 = vmatprep.mubr.bf16.mxu0 0
        %11150 = vmatmul.mubr.bf16.gmra.mxu0 %v11054
        %v11151 = vpop.f32.mrf.mxu0
        %v11152 = vadd.f32 0.0, %v11151
        %v11153 = vpop.f32.mrf.mxu0
        %v11154 = vpop.f32.mrf.mxu0
        %v11155 = vadd.f32 0.0, %v11154
        %v11156 = vpop.f32.mrf.mxu0
        %11157 = vmatprep.mubr.bf16.mxu0 0
        %11158 = vmatmul.mubr.bf16.gmra.mxu0 %v11055
        %v11159 = vpop.f32.mrf.mxu0
        %v11160 = vadd.f32 0.0, %v11159
        %v11161 = vpop.f32.mrf.mxu0
        %v11162 = vpop.f32.mrf.mxu0
        %v11163 = vadd.f32 0.0, %v11162
        %v11164 = vpop.f32.mrf.mxu0
        %11165 = vmatprep.mubr.bf16.mxu0 0
        %11166 = vmatmul.mubr.bf16.gmra.mxu0 %v11056
        %v11167 = vpop.f32.mrf.mxu0
        %v11168 = vadd.f32 0.0, %v11167
        %v11169 = vpop.f32.mrf.mxu0
        %v11170 = vpop.f32.mrf.mxu0
        %v11171 = vadd.f32 0.0, %v11170
        %v11172 = vpop.f32.mrf.mxu0
        %11173 = vdwg.mxu0
        %v11174 = vadd.f32 %v10892, %v11144
        %v11175 = vadd.f32 %v10893, %v11147
        %v11176 = vadd.f32 %v10894, %v11152
        %v11177 = vadd.f32 %v10895, %v11155
        %v11178 = vadd.f32 %v10896, %v11160
        %v11179 = vadd.f32 %v10897, %v11163
        %v11180 = vadd.f32 %v10898, %v11168
        %v11181 = vadd.f32 %v10899, %v11171
        %v11182 = vld [vmem:[%s8574] sm:$0xe]
        %v11183 = vld [vmem:[%s8574 + $0x8] sm:$0xe]
        %v11184 = vld [vmem:[%s8574 + $0x10] sm:$0xe]
        %v11185 = vld [vmem:[%s8574 + $0x18] sm:$0xe]
        %v11186 = vld [vmem:[%s8574 + $0x20] sm:$0xe]
        %v11187 = vld [vmem:[%s8574 + $0x28] sm:$0xe]
        %v11188 = vld [vmem:[%s8574 + $0x30] sm:$0xe]
        %v11189 = vld [vmem:[%s8574 + $0x38] sm:$0xe]
        %v11206 = vrot.slane %v11182, 5
        %v11207 = vrot.slane %v11206, 4
        %v11208 = vrot.slane %v10901, 5
        %v11209 = vsel %vm1309, %v11207, %v11208
        %v11210 = vrot.slane %v11183, 5
        %v11211 = vrot.slane %v11210, 4
        %v11212 = vrot.slane %v10903, 5
        %v11213 = vsel %vm1309, %v11211, %v11212
        %v11214 = vrot.slane %v11184, 5
        %v11215 = vrot.slane %v11214, 4
        %v11216 = vrot.slane %v10905, 5
        %v11217 = vsel %vm1309, %v11215, %v11216
        %v11218 = vrot.slane %v11185, 5
        %v11219 = vrot.slane %v11218, 4
        %v11220 = vrot.slane %v10907, 5
        %v11221 = vsel %vm1309, %v11219, %v11220
        %v11222 = vrot.slane %v11186, 5
        %v11223 = vrot.slane %v11222, 4
        %v11224 = vrot.slane %v10909, 5
        %v11225 = vsel %vm1309, %v11223, %v11224
        %v11226 = vrot.slane %v11187, 5
        %v11227 = vrot.slane %v11226, 4
        %v11228 = vrot.slane %v10911, 5
        %v11229 = vsel %vm1309, %v11227, %v11228
        %v11230 = vrot.slane %v11188, 5
        %v11231 = vrot.slane %v11230, 4
        %v11232 = vrot.slane %v10913, 5
        %v11233 = vsel %vm1309, %v11231, %v11232
        %v11234 = vrot.slane %v11189, 5
        %v11235 = vrot.slane %v11234, 4
        %v11236 = vrot.slane %v10915, 5
        %v11237 = vsel %vm1309, %v11235, %v11236
        %s11238 = scalar_lea.vmem [#allocation3], 1664
        %v11239 = vld [vmem:[%s11238] sm:$0xf]
        %v11240 = vld [vmem:[%s11238 + $0x4] sm:$0xf]
        %v11241 = vld [vmem:[%s11238 + $0x8] sm:$0xf]
        %v11242 = vld [vmem:[%s11238 + $0xc] sm:$0xf]
        %v11243 = vld [vmem:[%s11238 + $0x10] sm:$0xf]
        %v11244 = vld [vmem:[%s11238 + $0x14] sm:$0xf]
        %v11245 = vld [vmem:[%s11238 + $0x18] sm:$0xf]
        %v11246 = vld [vmem:[%s11238 + $0x1c] sm:$0xf]
        %v11247 = vld [vmem:[%s11238 + $0x20] sm:$0xf]
        %v11248 = vld [vmem:[%s11238 + $0x24] sm:$0xf]
        %v11249 = vld [vmem:[%s11238 + $0x28] sm:$0xf]
        %v11250 = vld [vmem:[%s11238 + $0x2c] sm:$0xf]
        %v11251 = vld [vmem:[%s11238 + $0x30] sm:$0xf]
        %v11252 = vld [vmem:[%s11238 + $0x34] sm:$0xf]
        %v11253 = vld [vmem:[%s11238 + $0x38] sm:$0xf]
        %v11254 = vld [vmem:[%s11238 + $0x3c] sm:$0xf]
        %v11255 = vunpack.c.l.b16 %v11209
        %v11256 = vunpack.c.l.b16 %v11213
        %v11257 = vunpack.c.l.b16 %v11217
        %v11258 = vunpack.c.l.b16 %v11221
        %v11259 = vunpack.c.l.b16 %v11225
        %v11260 = vunpack.c.l.b16 %v11229
        %v11261 = vunpack.c.l.b16 %v11233
        %v11262 = vunpack.c.l.b16 %v11237
        %v11263 = vpack.c.b16 %v11256, %v11255
        %v11264 = vpack.c.b16 %v11258, %v11257
        %v11265 = vpack.c.b16 %v11260, %v11259
        %v11266 = vpack.c.b16 %v11262, %v11261
        %v11287 = vunpack.c.l.b16 %v11239
        %v11288 = vunpack.c.l.b16 %v11240
        %v11289 = vunpack.c.l.b16 %v11241
        %v11290 = vunpack.c.l.b16 %v11242
        %v11291 = vunpack.c.l.b16 %v11243
        %v11292 = vunpack.c.l.b16 %v11244
        %v11293 = vunpack.c.l.b16 %v11245
        %v11294 = vunpack.c.l.b16 %v11246
        %v11295 = vunpack.c.l.b16 %v11247
        %v11296 = vunpack.c.l.b16 %v11248
        %v11297 = vunpack.c.l.b16 %v11249
        %v11298 = vunpack.c.l.b16 %v11250
        %v11299 = vunpack.c.l.b16 %v11251
        %v11300 = vunpack.c.l.b16 %v11252
        %v11301 = vunpack.c.l.b16 %v11253
        %v11302 = vunpack.c.l.b16 %v11254
        %v11303 = vpack.c.b16 %v11288, %v11287
        %v11304 = vpack.c.b16 %v11290, %v11289
        %v11305 = vpack.c.b16 %v11292, %v11291
        %v11306 = vpack.c.b16 %v11294, %v11293
        %v11307 = vpack.c.b16 %v11296, %v11295
        %v11308 = vpack.c.b16 %v11298, %v11297
        %v11309 = vpack.c.b16 %v11300, %v11299
        %v11310 = vpack.c.b16 %v11302, %v11301
        %11319 = vmatprep.subr.bf16.mxu0 0
        %11320 = vmatpush1.bf16.msra.mxu0 %v11310
        %11321 = vmatprep.subr.bf16.mxu0 0
        %11322 = vmatpush1.bf16.msra.mxu0 %v11309
        %11323 = vmatprep.subr.bf16.mxu0 0
        %11324 = vmatpush1.bf16.msra.mxu0 %v11308
        %11325 = vmatprep.subr.bf16.mxu0 0
        %11326 = vmatpush1.bf16.msra.mxu0 %v11307
        %11327 = vmatprep.subr.bf16.mxu0 0
        %11328 = vmatpush1.bf16.msra.mxu0 %v11306
        %11329 = vmatprep.subr.bf16.mxu0 0
        %11330 = vmatpush1.bf16.msra.mxu0 %v11305
        %11331 = vmatprep.subr.bf16.mxu0 0
        %11332 = vmatpush1.bf16.msra.mxu0 %v11304
        %11333 = vmatprep.subr.bf16.mxu0 0
        %11334 = vmatpush1.bf16.msra.mxu0 %v11303
        %11335 = vmatprep.subr.bf16.mxu0 0
        %11336 = vmatpush2.bf16.msra.mxu0 0
        %11337 = vmatprep.subr.bf16.mxu0 0
        %11338 = vmatpush2.bf16.msra.mxu0 0
        %11339 = vmatprep.subr.bf16.mxu0 0
        %11340 = vmatpush2.bf16.msra.mxu0 0
        %11341 = vmatprep.subr.bf16.mxu0 0
        %11342 = vmatpush2.bf16.msra.mxu0 0
        %11343 = vmatprep.subr.bf16.mxu0 0
        %11344 = vmatpush2.bf16.msra.mxu0 0
        %11345 = vmatprep.subr.bf16.mxu0 0
        %11346 = vmatpush2.bf16.msra.mxu0 0
        %11347 = vmatprep.subr.bf16.mxu0 0
        %11348 = vmatpush2.bf16.msra.mxu0 0
        %11349 = vmatprep.subr.bf16.mxu0 0
        %11350 = vmatpush2.bf16.msra.mxu0 0
        %11351 = vmatprep.mubr.bf16.mxu0 0
        %11352 = vmatmul.mubr.bf16.gmra.mxu0 %v11263
        %v11353 = vpop.f32.mrf.mxu0
        %v11354 = vadd.f32 0.0, %v11353
        %v11355 = vpop.f32.mrf.mxu0
        %v11356 = vpop.f32.mrf.mxu0
        %v11357 = vadd.f32 0.0, %v11356
        %v11358 = vpop.f32.mrf.mxu0
        %11359 = vmatprep.mubr.bf16.mxu0 0
        %11360 = vmatmul.mubr.bf16.gmra.mxu0 %v11264
        %v11361 = vpop.f32.mrf.mxu0
        %v11362 = vadd.f32 0.0, %v11361
        %v11363 = vpop.f32.mrf.mxu0
        %v11364 = vpop.f32.mrf.mxu0
        %v11365 = vadd.f32 0.0, %v11364
        %v11366 = vpop.f32.mrf.mxu0
        %11367 = vmatprep.mubr.bf16.mxu0 0
        %11368 = vmatmul.mubr.bf16.gmra.mxu0 %v11265
        %v11369 = vpop.f32.mrf.mxu0
        %v11370 = vadd.f32 0.0, %v11369
        %v11371 = vpop.f32.mrf.mxu0
        %v11372 = vpop.f32.mrf.mxu0
        %v11373 = vadd.f32 0.0, %v11372
        %v11374 = vpop.f32.mrf.mxu0
        %11375 = vmatprep.mubr.bf16.mxu0 0
        %11376 = vmatmul.mubr.bf16.gmra.mxu0 %v11266
        %v11377 = vpop.f32.mrf.mxu0
        %v11378 = vadd.f32 0.0, %v11377
        %v11379 = vpop.f32.mrf.mxu0
        %v11380 = vpop.f32.mrf.mxu0
        %v11381 = vadd.f32 0.0, %v11380
        %v11382 = vpop.f32.mrf.mxu0
        %11383 = vdwg.mxu0
        %v11384 = vadd.f32 %v11174, %v11354
        %v11385 = vadd.f32 %v11175, %v11357
        %v11386 = vadd.f32 %v11176, %v11362
        %v11387 = vadd.f32 %v11177, %v11365
        %v11388 = vadd.f32 %v11178, %v11370
        %v11389 = vadd.f32 %v11179, %v11373
        %v11390 = vadd.f32 %v11180, %v11378
        %v11391 = vadd.f32 %v11181, %v11381
        %v11392 = vlaneseq
        %v11393 = vshrl.u32 %v11392, 7
        %v11394 = vsub.s32 0, %v11393
        %v11395 = vrot.slane %v9428, %v11394
        %v11396 = vmul.f32 %v11384, %v11395
        %v11397 = vmul.f32 %v11385, %v11395
        %v11398 = vmul.f32 %v11386, %v11395
        %v11399 = vmul.f32 %v11387, %v11395
        %v11400 = vmul.f32 %v11388, %v11395
        %v11401 = vmul.f32 %v11389, %v11395
        %v11402 = vmul.f32 %v11390, %v11395
        %v11403 = vmul.f32 %v11391, %v11395
        %v11404 = vlaneseq
        %v11405 = vshrl.u32 %v11404, 7
        %v11406 = vsub.s32 0, %v11405
        %v11407 = vrot.slane %v9429, %v11406
        %v11408 = vadd.f32 %v11396, %v11407
        %v11409 = vadd.f32 %v11397, %v11407
        %v11410 = vadd.f32 %v11398, %v11407
        %v11411 = vadd.f32 %v11399, %v11407
        %v11412 = vadd.f32 %v11400, %v11407
        %v11413 = vadd.f32 %v11401, %v11407
        %v11414 = vadd.f32 %v11402, %v11407
        %v11415 = vadd.f32 %v11403, %v11407
        %v11416 = vmax.f32 %v11408, 0.0
        %v11417 = vmax.f32 %v11409, 0.0
        %v11418 = vmax.f32 %v11410, 0.0
        %v11419 = vmax.f32 %v11411, 0.0
        %v11420 = vmax.f32 %v11412, 0.0
        %v11421 = vmax.f32 %v11413, 0.0
        %v11422 = vmax.f32 %v11414, 0.0
        %v11423 = vmax.f32 %v11415, 0.0
        %v11424 = vlaneseq
        %v11425 = vand.u32 %v11424, 127
        %v11426 = vld [vmem:[%s2 + $0x6] sm:$0x1]
        %v11427 = vld [vmem:[%s3] sm:$0xff]
        %v11428 = vld [vmem:[%s3 + $0x8] sm:$0xff]
        %v11429 = vld [vmem:[%s3 + $0x10] sm:$0xff]
        %v11430 = vld [vmem:[%s3 + $0x18] sm:$0xff]
        %v11431 = vld [vmem:[%s3 + $0x20] sm:$0xff]
        %v11432 = vld [vmem:[%s3 + $0x28] sm:$0xff]
        %v11433 = vld [vmem:[%s3 + $0x30] sm:$0xff]
        %v11434 = vld [vmem:[%s3 + $0x38] sm:$0xff]
        %v11435 = vmul.f32 %v11416, %v11427
        %v11436 = vmul.f32 %v11417, %v11428
        %v11437 = vmul.f32 %v11418, %v11429
        %v11438 = vmul.f32 %v11419, %v11430
        %v11439 = vmul.f32 %v11420, %v11431
        %v11440 = vmul.f32 %v11421, %v11432
        %v11441 = vmul.f32 %v11422, %v11433
        %v11442 = vmul.f32 %v11423, %v11434
        %11443 = vadd.xlane.f32.xlu0 %v11435
        %v11444 = vpop.xlane.xlu0 %11443
        %11445 = vadd.xlane.f32.xlu0 %v11436
        %v11446 = vpop.xlane.xlu0 %11445
        %11447 = vadd.xlane.f32.xlu0 %v11437
        %v11448 = vpop.xlane.xlu0 %11447
        %11449 = vadd.xlane.f32.xlu0 %v11438
        %v11450 = vpop.xlane.xlu0 %11449
        %11451 = vadd.xlane.f32.xlu0 %v11439
        %v11452 = vpop.xlane.xlu0 %11451
        %11453 = vadd.xlane.f32.xlu0 %v11440
        %v11454 = vpop.xlane.xlu0 %11453
        %11455 = vadd.xlane.f32.xlu0 %v11441
        %v11456 = vpop.xlane.xlu0 %11455
        %11457 = vadd.xlane.f32.xlu0 %v11442
        %v11458 = vpop.xlane.xlu0 %11457
        %v11459 = vadd.f32 %v11444, %v11446
        %v11460 = vadd.f32 %v11459, %v11448
        %v11461 = vadd.f32 %v11460, %v11450
        %v11462 = vadd.f32 %v11461, %v11452
        %v11463 = vadd.f32 %v11462, %v11454
        %v11464 = vadd.f32 %v11463, %v11456
        %v11465 = vadd.f32 %v11464, %v11458
        %v11466 = vrot.slane %v11465, 4
        %v11467 = vadd.f32 %v11465, %v11466
        %v11468 = vrot.slane %v11467, 2
        %v11469 = vadd.f32 %v11467, %v11468
        %v11470 = vrot.slane %v11469, 1
        %v11471 = vadd.f32 %v11469, %v11470
        %vm11472 = vcmp.eq.s32.totalorder %v11425, 0
        %v11473 = vsel %vm11472, %v11471, 0.0
        %v11474 = vadd.f32 %v11426, %v11473
        %s11475 = scalar_lea.vmem %s3, 64
        %v11476 = vld [vmem:[%s11475] sm:$0xff]
        %v11477 = vld [vmem:[%s11475 + $0x8] sm:$0xff]
        %v11478 = vld [vmem:[%s11475 + $0x10] sm:$0xff]
        %v11479 = vld [vmem:[%s11475 + $0x18] sm:$0xff]
        %v11480 = vld [vmem:[%s11475 + $0x20] sm:$0xff]
        %v11481 = vld [vmem:[%s11475 + $0x28] sm:$0xff]
        %v11482 = vld [vmem:[%s11475 + $0x30] sm:$0xff]
        %v11483 = vld [vmem:[%s11475 + $0x38] sm:$0xff]
        %v11484 = vmul.f32 %v11416, %v11476
        %v11485 = vmul.f32 %v11417, %v11477
        %v11486 = vmul.f32 %v11418, %v11478
        %v11487 = vmul.f32 %v11419, %v11479
        %v11488 = vmul.f32 %v11420, %v11480
        %v11489 = vmul.f32 %v11421, %v11481
        %v11490 = vmul.f32 %v11422, %v11482
        %v11491 = vmul.f32 %v11423, %v11483
        %11492 = vadd.xlane.f32.xlu0 %v11484
        %v11493 = vpop.xlane.xlu0 %11492
        %11494 = vadd.xlane.f32.xlu0 %v11485
        %v11495 = vpop.xlane.xlu0 %11494
        %11496 = vadd.xlane.f32.xlu0 %v11486
        %v11497 = vpop.xlane.xlu0 %11496
        %11498 = vadd.xlane.f32.xlu0 %v11487
        %v11499 = vpop.xlane.xlu0 %11498
        %11500 = vadd.xlane.f32.xlu0 %v11488
        %v11501 = vpop.xlane.xlu0 %11500
        %11502 = vadd.xlane.f32.xlu0 %v11489
        %v11503 = vpop.xlane.xlu0 %11502
        %11504 = vadd.xlane.f32.xlu0 %v11490
        %v11505 = vpop.xlane.xlu0 %11504
        %11506 = vadd.xlane.f32.xlu0 %v11491
        %v11507 = vpop.xlane.xlu0 %11506
        %v11508 = vadd.f32 %v11493, %v11495
        %v11509 = vadd.f32 %v11508, %v11497
        %v11510 = vadd.f32 %v11509, %v11499
        %v11511 = vadd.f32 %v11510, %v11501
        %v11512 = vadd.f32 %v11511, %v11503
        %v11513 = vadd.f32 %v11512, %v11505
        %v11514 = vadd.f32 %v11513, %v11507
        %v11515 = vrot.slane %v11514, 4
        %v11516 = vadd.f32 %v11514, %v11515
        %v11517 = vrot.slane %v11516, 2
        %v11518 = vadd.f32 %v11516, %v11517
        %v11519 = vrot.slane %v11518, 1
        %v11520 = vadd.f32 %v11518, %v11519
        %vm11521 = vcmp.eq.s32.totalorder %v11425, 1
        %v11522 = vsel %vm11521, %v11520, 0.0
        %v11523 = vadd.f32 %v11474, %v11522
        %s11524 = scalar_lea.vmem %s3, 128
        %v11525 = vld [vmem:[%s11524] sm:$0xff]
        %v11526 = vld [vmem:[%s11524 + $0x8] sm:$0xff]
        %v11527 = vld [vmem:[%s11524 + $0x10] sm:$0xff]
        %v11528 = vld [vmem:[%s11524 + $0x18] sm:$0xff]
        %v11529 = vld [vmem:[%s11524 + $0x20] sm:$0xff]
        %v11530 = vld [vmem:[%s11524 + $0x28] sm:$0xff]
        %v11531 = vld [vmem:[%s11524 + $0x30] sm:$0xff]
        %v11532 = vld [vmem:[%s11524 + $0x38] sm:$0xff]
        %v11533 = vmul.f32 %v11416, %v11525
        %v11534 = vmul.f32 %v11417, %v11526
        %v11535 = vmul.f32 %v11418, %v11527
        %v11536 = vmul.f32 %v11419, %v11528
        %v11537 = vmul.f32 %v11420, %v11529
        %v11538 = vmul.f32 %v11421, %v11530
        %v11539 = vmul.f32 %v11422, %v11531
        %v11540 = vmul.f32 %v11423, %v11532
        %11541 = vadd.xlane.f32.xlu0 %v11533
        %v11542 = vpop.xlane.xlu0 %11541
        %11543 = vadd.xlane.f32.xlu0 %v11534
        %v11544 = vpop.xlane.xlu0 %11543
        %11545 = vadd.xlane.f32.xlu0 %v11535
        %v11546 = vpop.xlane.xlu0 %11545
        %11547 = vadd.xlane.f32.xlu0 %v11536
        %v11548 = vpop.xlane.xlu0 %11547
        %11549 = vadd.xlane.f32.xlu0 %v11537
        %v11550 = vpop.xlane.xlu0 %11549
        %11551 = vadd.xlane.f32.xlu0 %v11538
        %v11552 = vpop.xlane.xlu0 %11551
        %11553 = vadd.xlane.f32.xlu0 %v11539
        %v11554 = vpop.xlane.xlu0 %11553
        %11555 = vadd.xlane.f32.xlu0 %v11540
        %v11556 = vpop.xlane.xlu0 %11555
        %v11557 = vadd.f32 %v11542, %v11544
        %v11558 = vadd.f32 %v11557, %v11546
        %v11559 = vadd.f32 %v11558, %v11548
        %v11560 = vadd.f32 %v11559, %v11550
        %v11561 = vadd.f32 %v11560, %v11552
        %v11562 = vadd.f32 %v11561, %v11554
        %v11563 = vadd.f32 %v11562, %v11556
        %v11564 = vrot.slane %v11563, 4
        %v11565 = vadd.f32 %v11563, %v11564
        %v11566 = vrot.slane %v11565, 2
        %v11567 = vadd.f32 %v11565, %v11566
        %v11568 = vrot.slane %v11567, 1
        %v11569 = vadd.f32 %v11567, %v11568
        %vm11570 = vcmp.eq.s32.totalorder %v11425, 2
        %v11571 = vsel %vm11570, %v11569, 0.0
        %v11572 = vadd.f32 %v11523, %v11571
        %s11573 = scalar_lea.vmem %s3, 192
        %v11574 = vld [vmem:[%s11573] sm:$0xff]
        %v11575 = vld [vmem:[%s11573 + $0x8] sm:$0xff]
        %v11576 = vld [vmem:[%s11573 + $0x10] sm:$0xff]
        %v11577 = vld [vmem:[%s11573 + $0x18] sm:$0xff]
        %v11578 = vld [vmem:[%s11573 + $0x20] sm:$0xff]
        %v11579 = vld [vmem:[%s11573 + $0x28] sm:$0xff]
        %v11580 = vld [vmem:[%s11573 + $0x30] sm:$0xff]
        %v11581 = vld [vmem:[%s11573 + $0x38] sm:$0xff]
        %v11582 = vmul.f32 %v11416, %v11574
        %v11583 = vmul.f32 %v11417, %v11575
        %v11584 = vmul.f32 %v11418, %v11576
        %v11585 = vmul.f32 %v11419, %v11577
        %v11586 = vmul.f32 %v11420, %v11578
        %v11587 = vmul.f32 %v11421, %v11579
        %v11588 = vmul.f32 %v11422, %v11580
        %v11589 = vmul.f32 %v11423, %v11581
        %11590 = vadd.xlane.f32.xlu0 %v11582
        %v11591 = vpop.xlane.xlu0 %11590
        %11592 = vadd.xlane.f32.xlu0 %v11583
        %v11593 = vpop.xlane.xlu0 %11592
        %11594 = vadd.xlane.f32.xlu0 %v11584
        %v11595 = vpop.xlane.xlu0 %11594
        %11596 = vadd.xlane.f32.xlu0 %v11585
        %v11597 = vpop.xlane.xlu0 %11596
        %11598 = vadd.xlane.f32.xlu0 %v11586
        %v11599 = vpop.xlane.xlu0 %11598
        %11600 = vadd.xlane.f32.xlu0 %v11587
        %v11601 = vpop.xlane.xlu0 %11600
        %11602 = vadd.xlane.f32.xlu0 %v11588
        %v11603 = vpop.xlane.xlu0 %11602
        %11604 = vadd.xlane.f32.xlu0 %v11589
        %v11605 = vpop.xlane.xlu0 %11604
        %v11606 = vadd.f32 %v11591, %v11593
        %v11607 = vadd.f32 %v11606, %v11595
        %v11608 = vadd.f32 %v11607, %v11597
        %v11609 = vadd.f32 %v11608, %v11599
        %v11610 = vadd.f32 %v11609, %v11601
        %v11611 = vadd.f32 %v11610, %v11603
        %v11612 = vadd.f32 %v11611, %v11605
        %v11613 = vrot.slane %v11612, 4
        %v11614 = vadd.f32 %v11612, %v11613
        %v11615 = vrot.slane %v11614, 2
        %v11616 = vadd.f32 %v11614, %v11615
        %v11617 = vrot.slane %v11616, 1
        %v11618 = vadd.f32 %v11616, %v11617
        %vm11619 = vcmp.eq.s32.totalorder %v11425, 3
        %v11620 = vsel %vm11619, %v11618, 0.0
        %v11621 = vadd.f32 %v11572, %v11620
        %s11622 = scalar_lea.vmem %s3, 256
        %v11623 = vld [vmem:[%s11622] sm:$0xff]
        %v11624 = vld [vmem:[%s11622 + $0x8] sm:$0xff]
        %v11625 = vld [vmem:[%s11622 + $0x10] sm:$0xff]
        %v11626 = vld [vmem:[%s11622 + $0x18] sm:$0xff]
        %v11627 = vld [vmem:[%s11622 + $0x20] sm:$0xff]
        %v11628 = vld [vmem:[%s11622 + $0x28] sm:$0xff]
        %v11629 = vld [vmem:[%s11622 + $0x30] sm:$0xff]
        %v11630 = vld [vmem:[%s11622 + $0x38] sm:$0xff]
        %v11631 = vmul.f32 %v11416, %v11623
        %v11632 = vmul.f32 %v11417, %v11624
        %v11633 = vmul.f32 %v11418, %v11625
        %v11634 = vmul.f32 %v11419, %v11626
        %v11635 = vmul.f32 %v11420, %v11627
        %v11636 = vmul.f32 %v11421, %v11628
        %v11637 = vmul.f32 %v11422, %v11629
        %v11638 = vmul.f32 %v11423, %v11630
        %11639 = vadd.xlane.f32.xlu0 %v11631
        %v11640 = vpop.xlane.xlu0 %11639
        %11641 = vadd.xlane.f32.xlu0 %v11632
        %v11642 = vpop.xlane.xlu0 %11641
        %11643 = vadd.xlane.f32.xlu0 %v11633
        %v11644 = vpop.xlane.xlu0 %11643
        %11645 = vadd.xlane.f32.xlu0 %v11634
        %v11646 = vpop.xlane.xlu0 %11645
        %11647 = vadd.xlane.f32.xlu0 %v11635
        %v11648 = vpop.xlane.xlu0 %11647
        %11649 = vadd.xlane.f32.xlu0 %v11636
        %v11650 = vpop.xlane.xlu0 %11649
        %11651 = vadd.xlane.f32.xlu0 %v11637
        %v11652 = vpop.xlane.xlu0 %11651
        %11653 = vadd.xlane.f32.xlu0 %v11638
        %v11654 = vpop.xlane.xlu0 %11653
        %v11655 = vadd.f32 %v11640, %v11642
        %v11656 = vadd.f32 %v11655, %v11644
        %v11657 = vadd.f32 %v11656, %v11646
        %v11658 = vadd.f32 %v11657, %v11648
        %v11659 = vadd.f32 %v11658, %v11650
        %v11660 = vadd.f32 %v11659, %v11652
        %v11661 = vadd.f32 %v11660, %v11654
        %v11662 = vrot.slane %v11661, 4
        %v11663 = vadd.f32 %v11661, %v11662
        %v11664 = vrot.slane %v11663, 2
        %v11665 = vadd.f32 %v11663, %v11664
        %v11666 = vrot.slane %v11665, 1
        %v11667 = vadd.f32 %v11665, %v11666
        %vm11668 = vcmp.eq.s32.totalorder %v11425, 4
        %v11669 = vsel %vm11668, %v11667, 0.0
        %v11670 = vadd.f32 %v11621, %v11669
        %s11671 = scalar_lea.vmem %s3, 320
        %v11672 = vld [vmem:[%s11671] sm:$0xff]
        %v11673 = vld [vmem:[%s11671 + $0x8] sm:$0xff]
        %v11674 = vld [vmem:[%s11671 + $0x10] sm:$0xff]
        %v11675 = vld [vmem:[%s11671 + $0x18] sm:$0xff]
        %v11676 = vld [vmem:[%s11671 + $0x20] sm:$0xff]
        %v11677 = vld [vmem:[%s11671 + $0x28] sm:$0xff]
        %v11678 = vld [vmem:[%s11671 + $0x30] sm:$0xff]
        %v11679 = vld [vmem:[%s11671 + $0x38] sm:$0xff]
        %v11680 = vmul.f32 %v11416, %v11672
        %v11681 = vmul.f32 %v11417, %v11673
        %v11682 = vmul.f32 %v11418, %v11674
        %v11683 = vmul.f32 %v11419, %v11675
        %v11684 = vmul.f32 %v11420, %v11676
        %v11685 = vmul.f32 %v11421, %v11677
        %v11686 = vmul.f32 %v11422, %v11678
        %v11687 = vmul.f32 %v11423, %v11679
        %11688 = vadd.xlane.f32.xlu0 %v11680
        %v11689 = vpop.xlane.xlu0 %11688
        %11690 = vadd.xlane.f32.xlu0 %v11681
        %v11691 = vpop.xlane.xlu0 %11690
        %11692 = vadd.xlane.f32.xlu0 %v11682
        %v11693 = vpop.xlane.xlu0 %11692
        %11694 = vadd.xlane.f32.xlu0 %v11683
        %v11695 = vpop.xlane.xlu0 %11694
        %11696 = vadd.xlane.f32.xlu0 %v11684
        %v11697 = vpop.xlane.xlu0 %11696
        %11698 = vadd.xlane.f32.xlu0 %v11685
        %v11699 = vpop.xlane.xlu0 %11698
        %11700 = vadd.xlane.f32.xlu0 %v11686
        %v11701 = vpop.xlane.xlu0 %11700
        %11702 = vadd.xlane.f32.xlu0 %v11687
        %v11703 = vpop.xlane.xlu0 %11702
        %v11704 = vadd.f32 %v11689, %v11691
        %v11705 = vadd.f32 %v11704, %v11693
        %v11706 = vadd.f32 %v11705, %v11695
        %v11707 = vadd.f32 %v11706, %v11697
        %v11708 = vadd.f32 %v11707, %v11699
        %v11709 = vadd.f32 %v11708, %v11701
        %v11710 = vadd.f32 %v11709, %v11703
        %v11711 = vrot.slane %v11710, 4
        %v11712 = vadd.f32 %v11710, %v11711
        %v11713 = vrot.slane %v11712, 2
        %v11714 = vadd.f32 %v11712, %v11713
        %v11715 = vrot.slane %v11714, 1
        %v11716 = vadd.f32 %v11714, %v11715
        %vm11717 = vcmp.eq.s32.totalorder %v11425, 5
        %v11718 = vsel %vm11717, %v11716, 0.0
        %v11719 = vadd.f32 %v11670, %v11718
        %11720 = vst [vmem:[%s204] sm:$0x1] %v11719
        %s11721 = sand.u32 %s116, 1
        %s11722 = scalar_lea.sflag [#allocation5], %s11721
        %s11723 = sand.u32 %s116, 1
        %s11724 = scalar_lea.vmem [#allocation6], %s11723
        // Predicated region
        $region41: #{convnet_forward.1} parent=35 // pred_check
          %p11725 = pneg %p126
        $region42: #{convnet_forward.1} parent=35 // pred_check_branch
          %11727 = sbr.rel (%p11725) target = $region44
        $region43: #{convnet_forward.1} parent=35 // pred_region
          %s11729 = ssub.s32 16, 16
          %11730 = vsyncadd %s11722, %s11729
          %s11731 = smul.addr %s19, 16
          %s11732 = scalar_lea.hbm %s4, %s11731
          %s11734 = sshll.u32 %s11724, 4
          %s11735 = int_to_ptr.vmem [resolvable:$true] %s11734
          %11737 = dma.vmem_to_hbm [thread:$0]  %s11735, 16, %s11732, %s11722
        $region44: #{convnet_forward.1} parent=35 // pred_fallthru
          _
      $region36: #{convnet_forward.1} parent=5 // pred_fallthru
        _
      %p11738 = scmp.le.s32.totalorder 2, %s14
      // Predicated region
      $region45: #{convnet_forward.1} parent=5 // pred_check
        %p11739 = pneg %p11738
      $region46: #{convnet_forward.1} parent=5 // pred_check_branch
        %11741 = sbr.rel (%p11739) target = $region48
      $region47: #{convnet_forward.1} parent=5 // pred_region
        %s11742 = ssub.s32 %s14, 2
        // Predicated region
        $region49: #{convnet_forward.1} parent=47 // pred_check
          %p11743 = pneg %p132
        $region50: #{convnet_forward.1} parent=47 // pred_check_branch
          %11745 = sbr.rel (%p11743) target = $region52
        $region51: #{convnet_forward.1} parent=47 // pred_region
          %s11746 = sand.u32 %s117, 1
          %s11747 = scalar_lea.sflag [#allocation5], %s11746
          %s11748 = sand.u32 %s117, 1
          %s11749 = scalar_lea.vmem [#allocation6], %s11748
          %11750 = dma.done %s11747, 16
        $region52: #{convnet_forward.1} parent=47 // pred_fallthru
          _
      $region48: #{convnet_forward.1} parent=5 // pred_fallthru
        _
    $region6: #{convnet_forward.1} parent=1 // loop_footer
      %s18 = sadd.s32 1, %s14
    $region7: #{convnet_forward.1} parent=1 // loop_footer_branch
      %13 = sbr.rel target = $region3
    $region8: #{convnet_forward.1} parent=1 // loop_exit
      _
    %11751 = vsyncpa [#allocation4], 1
    %s11752 = scalar_lea.sflag [#allocation4], 1
    %11753 = vsyncpa %s11752, 1
    %11754 = vsyncpa [#allocation5], 1
    %s11755 = scalar_lea.sflag [#allocation5], 1
    %11756 = vsyncpa %s11755, 1

</llo_original>
